<compile_context>
chip_gen: v7x
topology: tpu7x:2x2x1
jax: 0.10.0
libtpu: 0.0.40
codegen_flags: <defaults>
</compile_context>

<pallas_src>
import functools

import jax
import jax.numpy as jnp
from jax import lax
from jax.experimental import pallas as pl
from jax.experimental.pallas import tpu as pltpu

POOL = 4      # MaxPool1d(4) after every conv block
LANE = 128    # TPU lane width; FC output padded to a multiple of this


# ----------------------------------------------------------------------------
# Fused whole-network kernel (built per static geometry)
# ----------------------------------------------------------------------------
def _make_m5_kernel(bt, dims):
    """dims: per conv layer (t_in, t_used, t_pool, k_eff, ci_eff, co).

    t_in   = time length of the layer input (rows per batch element)
    t_used = conv positions consumed by the floor-mode pool (= 4*t_pool)
    k_eff  = number of K-stacked tap groups, ci_eff = width of each group
    """
    n_layers = len(dims)
    t_last_pool = dims[-1][2]

    def kernel(xr_ref, w1, b1, w2, b2, w3, b3, w4, b4, fcw, fcb, o_ref, *scr):
        w_refs = (w1, w2, w3, w4)
        b_refs = (b1, b2, b3, b4)

        src = xr_ref          # 2-D, batch-folded rows: (bt * t_in, ci_eff)
        h = None
        for li, (t_in, t_used, t_pool, k_eff, ci_eff, co) in enumerate(dims):
            if li > 0:
                src = scr[3 * (li - 1) + 2]   # pooled activations of previous layer
                src[...] = h
            panel = scr[3 * li]               # (bt*t_used, k_eff*ci_eff) f32
            ystage = scr[3 * li + 1]          # (bt*t_used, co)           f32

            # ---- im2col panel: batch-folded rows, K-stacked lanes (static slices) ----
            for b in range(bt):
                base = b * t_in
                for k in range(k_eff):
                    panel[b * t_used:(b + 1) * t_used,
                          k * ci_eff:(k + 1) * ci_eff] = src[base + k:base + k + t_used, :]

            # ---- one MXU matmul per layer: bf16 operands, f32 accumulation ----
            ystage[...] = jnp.dot(panel[...].astype(jnp.bfloat16), w_refs[li][...],
                                  preferred_element_type=jnp.float32)

            # ---- MaxPool1d(4): 4 stride-4 sublane reads, balanced tree max ----
            # (pool windows never cross batch elements because t_used % 4 == 0)
            n = bt * t_pool
            m01 = jnp.maximum(ystage[pl.ds(0, n, stride=POOL), :],
                              ystage[pl.ds(1, n, stride=POOL), :])
            m23 = jnp.maximum(ystage[pl.ds(2, n, stride=POOL), :],
                              ystage[pl.ds(3, n, stride=POOL), :])
            # folded-BN bias after max (commutes), ReLU after pool (monotone)
            h = jnp.maximum(jnp.maximum(m01, m23) + b_refs[li][...], 0.0)

        # ---- head: global average over remaining time, Linear, log_softmax ----
        if t_last_pool == 1:
            feat = h                                              # (bt, C)
        else:
            h4 = scr[3 * (n_layers - 1) + 2]
            h4[...] = h
            feat = jnp.concatenate(
                [jnp.mean(h4[b * t_last_pool:(b + 1) * t_last_pool, :],
                          axis=0, keepdims=True) for b in range(bt)], axis=0)

        logits = jnp.dot(feat, fcw[...],
                         preferred_element_type=jnp.float32) + fcb[...]   # (bt, 128)
        z = logits - jnp.max(logits, axis=-1, keepdims=True)
        o_ref[...] = z - jnp.log(jnp.sum(jnp.exp(z), axis=-1, keepdims=True))

    return kernel


# ----------------------------------------------------------------------------
# Wrapper: fold BN into weights, compute static geometry, one pallas_call
# ----------------------------------------------------------------------------
def m5_forward(x_ncl, params, *, block_b=8, core_parallel=False):
    """x_ncl: (B, n_input, L) like PyTorch; returns (B, 1, n_output) log-probs."""
    B, n_in, L = x_ncl.shape
    assert n_in == 1, "kernel specialised to n_input=1 (as in the spec)"

    stride = params["layers"][0][3]
    k1 = params["layers"][0][0].shape[-1]
    assert k1 % stride == 0 and L >= k1
    # TODO(synk): k1 % stride != 0 would need zero-padding of the layer-1 taps.

    lpad = (-L) % stride
    n_rows = (L + lpad) // stride

    # ---- fold BN scale into conv weights, K-stack to (K*Ci, Co), cast to bf16 ----
    w_stacked, biases, dims = [], [], []
    t_prev = None
    for li, (w, scale, bias, st) in enumerate(params["layers"]):
        co, ci, k = w.shape
        wt = jnp.transpose(w, (2, 1, 0)) * scale[None, None, :]      # (K, Ci, Co)
        w_stacked.append(wt.reshape(k * ci, co).astype(jnp.bfloat16))
        biases.append(bias.reshape(1, co).astype(jnp.float32))
        if li == 0:
            t_in, t_conv = n_rows, (L - k) // st + 1
            k_eff, ci_eff = k // st, st          # 5 shifted groups of 16 samples
        else:
            assert st == 1
            t_in, t_conv = t_prev, t_prev - (k - 1)
            k_eff, ci_eff = k, ci
        t_pool = t_conv // POOL
        assert t_pool >= 1, "input too short for this network"
        dims.append((t_in, POOL * t_pool, t_pool, k_eff, ci_eff, co))
        t_prev = t_pool

    # ---- batch blocking: BT batch elements folded into the matmul M dimension ----
    bt = min(B, block_b)
    b_pad = pl.cdiv(B, bt) * bt
    x = x_ncl.reshape(B, L).astype(jnp.float32)
    if lpad:
        x = jnp.pad(x, ((0, 0), (0, lpad)))
    if b_pad != B:
        x = jnp.pad(x, ((0, b_pad - B), (0, 0)))
    xr = x.reshape(b_pad * n_rows, stride)   # layer-1 patches = contiguous row slices

    # ---- FC head: pad outputs to a lane-dense multiple of 128 ----
    co_last = dims[-1][5]
    n_out = params["fc_w"].shape[1]
    n_pad = pl.cdiv(n_out, LANE) * LANE
    fc_w = jnp.zeros((co_last, n_pad), jnp.float32).at[:, :n_out].set(
        params["fc_w"].astype(jnp.float32))
    # padded columns get a -1e30 bias so they drop out of the in-kernel log_softmax
    fc_b = jnp.full((1, n_pad), -1e30, jnp.float32).at[0, :n_out].set(
        params["fc_b"].astype(jnp.float32))

    kernel = _make_m5_kernel(bt, dims)

    # per layer: im2col panel, conv-output staging, pooled activations (all VMEM)
    scratch_shapes = []
    for li, (t_in, t_used, t_pool, k_eff, ci_eff, co) in enumerate(dims):
        scratch_shapes.append(pltpu.VMEM((bt * t_used, k_eff * ci_eff), jnp.float32))
        scratch_shapes.append(pltpu.VMEM((bt * t_used, co), jnp.float32))
        if li + 1 < len(dims) or t_pool > 1:
            scratch_shapes.append(pltpu.VMEM((bt * t_pool, co), jnp.float32))

    def full2(arr):
        return pl.BlockSpec(arr.shape, lambda g: (0, 0))

    in_specs = [pl.BlockSpec((bt * n_rows, stride), lambda g: (g, 0))]
    operands = [xr]
    for ws, bs in zip(w_stacked, biases):
        in_specs += [full2(ws), full2(bs)]
        operands += [ws, bs]
    in_specs += [full2(fc_w), full2(fc_b)]
    operands += [fc_w, fc_b]

    # On v7x, pass core_parallel=True so the batch-block axis is split across the
    # two TensorCores; default keeps the portable "parallel" semantics.
    dim_sem = (pltpu.CORE_PARALLEL,) if core_parallel else ("parallel",)

    out = pl.pallas_call(
        kernel,
        out_shape=jax.ShapeDtypeStruct((b_pad, n_pad), jnp.float32),
        grid=(b_pad // bt,),
        in_specs=in_specs,
        out_specs=pl.BlockSpec((bt, n_pad), lambda g: (g, 0)),
        scratch_shapes=scratch_shapes,
        compiler_params=pltpu.CompilerParams(dimension_semantics=dim_sem),
    )(*operands)

    return out[:B, :n_out].reshape(B, 1, n_out)


# ----------------------------------------------------------------------------
# Deterministic synthetic parameters (eval-mode BN folded to scale/bias)
# ----------------------------------------------------------------------------
def init_params(key, n_input=1, n_output=24, n_channel=32, stride=16):
    eps = 1e-5
    layer_defs = [
        (n_input, n_channel, 80, stride),
        (n_channel, n_channel, 3, 1),
        (n_channel, 2 * n_channel, 3, 1),
        (2 * n_channel, 2 * n_channel, 3, 1),
    ]
    layers = []
    keys = jax.random.split(key, 6 * len(layer_defs) + 2)
    ki = 0
    for (ci, co, k, st) in layer_defs:
        fan_in = ci * k
        w = jax.random.normal(keys[ki], (co, ci, k), jnp.float32) / jnp.sqrt(fan_in); ki += 1
        b_conv = 0.1 * jax.random.normal(keys[ki], (co,), jnp.float32); ki += 1
        gamma = 1.0 + 0.1 * jax.random.normal(keys[ki], (co,), jnp.float32); ki += 1
        beta = 0.1 * jax.random.normal(keys[ki], (co,), jnp.float32); ki += 1
        mean = 0.1 * jax.random.normal(keys[ki], (co,), jnp.float32); ki += 1
        var = jax.random.uniform(keys[ki], (co,), jnp.float32, 0.5, 1.5); ki += 1
        scale = gamma / jnp.sqrt(var + eps)
        bias = (b_conv - mean) * scale + beta
        layers.append((w, scale, bias, st))
    c2 = 2 * n_channel
    fc_w = jax.random.normal(keys[ki], (c2, n_output), jnp.float32) / jnp.sqrt(c2); ki += 1
    fc_b = 0.1 * jax.random.normal(keys[ki], (n_output,), jnp.float32)
    return {"layers": layers, "fc_w": fc_w, "fc_b": fc_b}


# ----------------------------------------------------------------------------
# Pure-JAX reference (mirrors the PyTorch forward, eval-mode BN, f32 everywhere)
# ----------------------------------------------------------------------------
def ref_forward(x_ncl, params):
    h = x_ncl
    for (w, scale, bias, st) in params["layers"]:
        y = lax.conv_general_dilated(h, w, (st,), "VALID",
                                     dimension_numbers=("NCH", "OIH", "NCH"))
        y = y * scale[None, :, None] + bias[None, :, None]
        y = jnp.maximum(y, 0.0)
        t = (y.shape[-1] // POOL) * POOL
        h = y[..., :t].reshape(y.shape[0], y.shape[1], t // POOL, POOL).max(-1)
    feat = h.mean(-1)
    logits = feat @ params["fc_w"] + params["fc_b"]
    return jax.nn.log_softmax(logits, axis=-1)[:, None, :]


if __name__ == "__main__":
    # L=8000 (1 s at 8 kHz) is the smallest natural length surviving the
    # conv/pool downsampling chain (final time length becomes 1).
    B, n_input, L, n_output = 2, 1, 8000, 24
    key = jax.random.PRNGKey(0)
    kx, kp = jax.random.split(key)
    x = jax.random.normal(kx, (B, n_input, L), jnp.float32)
    params = init_params(kp, n_input=n_input, n_output=n_output)

    fwd = jax.jit(functools.partial(m5_forward, params=params))
    out = jax.block_until_ready(fwd(x))

    assert out.shape == (B, 1, n_output), out.shape
    assert bool(jnp.all(jnp.isfinite(out)))
    # log_softmax rows must exponentiate to a probability distribution
    assert bool(jnp.allclose(jnp.exp(out).sum(-1), 1.0, atol=1e-3))
    ref = ref_forward(x, params)
    err = float(jnp.max(jnp.abs(out - ref)))
    # tolerance accounts for bf16 MXU operands in the conv layers (review item)
    assert err < 8e-2, err
    print("KERNEL_OK")
</pallas_src>

<mosaic_0001>
module attributes {stable_mosaic.version = 11 : i64} {
  func.func @kernel(%arg0: i32, %arg1: memref<1000x16xf32, #tpu.memory_space<vmem>>, %arg2: memref<80x32xbf16, #tpu.memory_space<vmem>>, %arg3: memref<1x32xf32, #tpu.memory_space<vmem>>, %arg4: memref<96x32xbf16, #tpu.memory_space<vmem>>, %arg5: memref<1x32xf32, #tpu.memory_space<vmem>>, %arg6: memref<96x64xbf16, #tpu.memory_space<vmem>>, %arg7: memref<1x64xf32, #tpu.memory_space<vmem>>, %arg8: memref<192x64xbf16, #tpu.memory_space<vmem>>, %arg9: memref<1x64xf32, #tpu.memory_space<vmem>>, %arg10: memref<64x128xf32, #tpu.memory_space<vmem>>, %arg11: memref<1x128xf32, #tpu.memory_space<vmem>>, %arg12: memref<2x128xf32, #tpu.memory_space<vmem>>, %arg13: memref<992x80xf32, #tpu.memory_space<vmem>>, %arg14: memref<992x32xf32, #tpu.memory_space<vmem>>, %arg15: memref<248x32xf32, #tpu.memory_space<vmem>>, %arg16: memref<240x96xf32, #tpu.memory_space<vmem>>, %arg17: memref<240x32xf32, #tpu.memory_space<vmem>>, %arg18: memref<60x32xf32, #tpu.memory_space<vmem>>, %arg19: memref<56x96xf32, #tpu.memory_space<vmem>>, %arg20: memref<56x64xf32, #tpu.memory_space<vmem>>, %arg21: memref<14x64xf32, #tpu.memory_space<vmem>>, %arg22: memref<8x192xf32, #tpu.memory_space<vmem>>, %arg23: memref<8x64xf32, #tpu.memory_space<vmem>>) attributes {dimension_semantics = [#tpu.dimension_semantics<parallel>], iteration_bounds = array<i64: 1>, scalar_prefetch = 0 : i64, scratch_operands = 11 : i64, tpu.core_type = #tpu.core_type<tc>, window_params = [{transform_indices = @transform_0, window_bounds = array<i64: 1000, 16>}, {pipeline_mode = #tpu.pipeline_mode<synchronous>, transform_indices = @transform_1, window_bounds = array<i64: 80, 32>}, {pipeline_mode = #tpu.pipeline_mode<synchronous>, transform_indices = @transform_2, window_bounds = array<i64: 1, 32>}, {pipeline_mode = #tpu.pipeline_mode<synchronous>, transform_indices = @transform_3, window_bounds = array<i64: 96, 32>}, {pipeline_mode = #tpu.pipeline_mode<synchronous>, transform_indices = @transform_4, window_bounds = array<i64: 1, 32>}, {pipeline_mode = #tpu.pipeline_mode<synchronous>, transform_indices = @transform_5, window_bounds = array<i64: 96, 64>}, {pipeline_mode = #tpu.pipeline_mode<synchronous>, transform_indices = @transform_6, window_bounds = array<i64: 1, 64>}, {pipeline_mode = #tpu.pipeline_mode<synchronous>, transform_indices = @transform_7, window_bounds = array<i64: 192, 64>}, {pipeline_mode = #tpu.pipeline_mode<synchronous>, transform_indices = @transform_8, window_bounds = array<i64: 1, 64>}, {pipeline_mode = #tpu.pipeline_mode<synchronous>, transform_indices = @transform_9, window_bounds = array<i64: 64, 128>}, {pipeline_mode = #tpu.pipeline_mode<synchronous>, transform_indices = @transform_10, window_bounds = array<i64: 1, 128>}, {transform_indices = @transform_11, window_bounds = array<i64: 2, 128>}]} {
    %c0 = arith.constant 0 : index
    %c0_0 = arith.constant 0 : index
    %0 = vector.load %arg1[%c0, %c0_0] : memref<1000x16xf32, #tpu.memory_space<vmem>>, vector<496x16xf32>
    %c0_1 = arith.constant 0 : index
    %c0_2 = arith.constant 0 : index
    %1 = vector.load %arg13[%c0_1, %c0_2] : memref<992x80xf32, #tpu.memory_space<vmem>>, vector<496x16xf32>
    tpu.vector_store %arg13[%c0_1, %c0_2], %0 {strides = array<i32>} : memref<992x80xf32, #tpu.memory_space<vmem>>, vector<496x16xf32>,
    %c1 = arith.constant 1 : index
    %c0_3 = arith.constant 0 : index
    %2 = vector.load %arg1[%c1, %c0_3] : memref<1000x16xf32, #tpu.memory_space<vmem>>, vector<496x16xf32>
    %c0_4 = arith.constant 0 : index
    %c16 = arith.constant 16 : index
    %3 = vector.load %arg13[%c0_4, %c16] : memref<992x80xf32, #tpu.memory_space<vmem>>, vector<496x16xf32>
    tpu.vector_store %arg13[%c0_4, %c16], %2 {strides = array<i32>} : memref<992x80xf32, #tpu.memory_space<vmem>>, vector<496x16xf32>,
    %c2 = arith.constant 2 : index
    %c0_5 = arith.constant 0 : index
    %4 = vector.load %arg1[%c2, %c0_5] : memref<1000x16xf32, #tpu.memory_space<vmem>>, vector<496x16xf32>
    %c0_6 = arith.constant 0 : index
    %c32 = arith.constant 32 : index
    %5 = vector.load %arg13[%c0_6, %c32] : memref<992x80xf32, #tpu.memory_space<vmem>>, vector<496x16xf32>
    tpu.vector_store %arg13[%c0_6, %c32], %4 {strides = array<i32>} : memref<992x80xf32, #tpu.memory_space<vmem>>, vector<496x16xf32>,
    %c3 = arith.constant 3 : index
    %c0_7 = arith.constant 0 : index
    %6 = vector.load %arg1[%c3, %c0_7] : memref<1000x16xf32, #tpu.memory_space<vmem>>, vector<496x16xf32>
    %c0_8 = arith.constant 0 : index
    %c48 = arith.constant 48 : index
    %7 = vector.load %arg13[%c0_8, %c48] : memref<992x80xf32, #tpu.memory_space<vmem>>, vector<496x16xf32>
    tpu.vector_store %arg13[%c0_8, %c48], %6 {strides = array<i32>} : memref<992x80xf32, #tpu.memory_space<vmem>>, vector<496x16xf32>,
    %c4 = arith.constant 4 : index
    %c0_9 = arith.constant 0 : index
    %8 = vector.load %arg1[%c4, %c0_9] : memref<1000x16xf32, #tpu.memory_space<vmem>>, vector<496x16xf32>
    %c0_10 = arith.constant 0 : index
    %c64 = arith.constant 64 : index
    %9 = vector.load %arg13[%c0_10, %c64] : memref<992x80xf32, #tpu.memory_space<vmem>>, vector<496x16xf32>
    tpu.vector_store %arg13[%c0_10, %c64], %8 {strides = array<i32>} : memref<992x80xf32, #tpu.memory_space<vmem>>, vector<496x16xf32>,
    %c500 = arith.constant 500 : index
    %c0_11 = arith.constant 0 : index
    %10 = vector.load %arg1[%c500, %c0_11] : memref<1000x16xf32, #tpu.memory_space<vmem>>, vector<496x16xf32>
    %c496 = arith.constant 496 : index
    %c0_12 = arith.constant 0 : index
    %11 = vector.load %arg13[%c496, %c0_12] : memref<992x80xf32, #tpu.memory_space<vmem>>, vector<496x16xf32>
    tpu.vector_store %arg13[%c496, %c0_12], %10 {strides = array<i32>} : memref<992x80xf32, #tpu.memory_space<vmem>>, vector<496x16xf32>,
    %c501 = arith.constant 501 : index
    %c0_13 = arith.constant 0 : index
    %12 = vector.load %arg1[%c501, %c0_13] : memref<1000x16xf32, #tpu.memory_space<vmem>>, vector<496x16xf32>
    %c496_14 = arith.constant 496 : index
    %c16_15 = arith.constant 16 : index
    %13 = vector.load %arg13[%c496_14, %c16_15] : memref<992x80xf32, #tpu.memory_space<vmem>>, vector<496x16xf32>
    tpu.vector_store %arg13[%c496_14, %c16_15], %12 {strides = array<i32>} : memref<992x80xf32, #tpu.memory_space<vmem>>, vector<496x16xf32>,
    %c502 = arith.constant 502 : index
    %c0_16 = arith.constant 0 : index
    %14 = vector.load %arg1[%c502, %c0_16] : memref<1000x16xf32, #tpu.memory_space<vmem>>, vector<496x16xf32>
    %c496_17 = arith.constant 496 : index
    %c32_18 = arith.constant 32 : index
    %15 = vector.load %arg13[%c496_17, %c32_18] : memref<992x80xf32, #tpu.memory_space<vmem>>, vector<496x16xf32>
    tpu.vector_store %arg13[%c496_17, %c32_18], %14 {strides = array<i32>} : memref<992x80xf32, #tpu.memory_space<vmem>>, vector<496x16xf32>,
    %c503 = arith.constant 503 : index
    %c0_19 = arith.constant 0 : index
    %16 = vector.load %arg1[%c503, %c0_19] : memref<1000x16xf32, #tpu.memory_space<vmem>>, vector<496x16xf32>
    %c496_20 = arith.constant 496 : index
    %c48_21 = arith.constant 48 : index
    %17 = vector.load %arg13[%c496_20, %c48_21] : memref<992x80xf32, #tpu.memory_space<vmem>>, vector<496x16xf32>
    tpu.vector_store %arg13[%c496_20, %c48_21], %16 {strides = array<i32>} : memref<992x80xf32, #tpu.memory_space<vmem>>, vector<496x16xf32>,
    %c504 = arith.constant 504 : index
    %c0_22 = arith.constant 0 : index
    %18 = vector.load %arg1[%c504, %c0_22] : memref<1000x16xf32, #tpu.memory_space<vmem>>, vector<496x16xf32>
    %c496_23 = arith.constant 496 : index
    %c64_24 = arith.constant 64 : index
    %19 = vector.load %arg13[%c496_23, %c64_24] : memref<992x80xf32, #tpu.memory_space<vmem>>, vector<496x16xf32>
    tpu.vector_store %arg13[%c496_23, %c64_24], %18 {strides = array<i32>} : memref<992x80xf32, #tpu.memory_space<vmem>>, vector<496x16xf32>,
    %c0_25 = arith.constant 0 : index
    %c0_26 = arith.constant 0 : index
    %20 = vector.load %arg13[%c0_25, %c0_26] : memref<992x80xf32, #tpu.memory_space<vmem>>, vector<992x80xf32>
    %21 = arith.truncf %20 : vector<992x80xf32> to vector<992x80xbf16>
    %c0_27 = arith.constant 0 : index
    %c0_28 = arith.constant 0 : index
    %22 = vector.load %arg2[%c0_27, %c0_28] : memref<80x32xbf16, #tpu.memory_space<vmem>>, vector<80x32xbf16>
    %cst = arith.constant dense<0.000000e+00> : vector<992x32xf32>
    %23 = tpu.matmul %21, %22, %cst {dimension_numbers = #tpu.dot_dimension_numbers<[1], [0], [0], [1], [0, 0, 1, 1], [], []>} : vector<992x80xbf16>, vector<80x32xbf16>, vector<992x32xf32> -> vector<992x32xf32>
    %c0_29 = arith.constant 0 : index
    %c0_30 = arith.constant 0 : index
    %24 = vector.load %arg14[%c0_29, %c0_30] : memref<992x32xf32, #tpu.memory_space<vmem>>, vector<992x32xf32>
    tpu.vector_store %arg14[%c0_29, %c0_30], %23 {strides = array<i32>} : memref<992x32xf32, #tpu.memory_space<vmem>>, vector<992x32xf32>,
    %c0_31 = arith.constant 0 : index
    %c0_32 = arith.constant 0 : index
    %25 = tpu.strided_load %arg14[%c0_31, %c0_32] {strides = array<i32: 4, 1>} : memref<992x32xf32, #tpu.memory_space<vmem>>, vector<248x32xf32>
    %c1_33 = arith.constant 1 : index
    %c0_34 = arith.constant 0 : index
    %26 = tpu.strided_load %arg14[%c1_33, %c0_34] {strides = array<i32: 4, 1>} : memref<992x32xf32, #tpu.memory_space<vmem>>, vector<248x32xf32>
    %27 = arith.maximumf %25, %26 : vector<248x32xf32>
    %c2_35 = arith.constant 2 : index
    %c0_36 = arith.constant 0 : index
    %28 = tpu.strided_load %arg14[%c2_35, %c0_36] {strides = array<i32: 4, 1>} : memref<992x32xf32, #tpu.memory_space<vmem>>, vector<248x32xf32>
    %c3_37 = arith.constant 3 : index
    %c0_38 = arith.constant 0 : index
    %29 = tpu.strided_load %arg14[%c3_37, %c0_38] {strides = array<i32: 4, 1>} : memref<992x32xf32, #tpu.memory_space<vmem>>, vector<248x32xf32>
    %30 = arith.maximumf %28, %29 : vector<248x32xf32>
    %31 = arith.maximumf %27, %30 : vector<248x32xf32>
    %c0_39 = arith.constant 0 : index
    %c0_40 = arith.constant 0 : index
    %32 = vector.load %arg3[%c0_39, %c0_40] : memref<1x32xf32, #tpu.memory_space<vmem>>, vector<1x32xf32>
    %33 = vector.broadcast %32 : vector<1x32xf32> to vector<248x32xf32>
    %34 = arith.addf %31, %33 : vector<248x32xf32>
    %cst_41 = arith.constant 0.000000e+00 : f32
    %35 = vector.broadcast %cst_41 : f32 to vector<248x32xf32>
    %36 = arith.maximumf %34, %35 : vector<248x32xf32>
    %c0_42 = arith.constant 0 : index
    %c0_43 = arith.constant 0 : index
    %37 = vector.load %arg15[%c0_42, %c0_43] : memref<248x32xf32, #tpu.memory_space<vmem>>, vector<248x32xf32>
    tpu.vector_store %arg15[%c0_42, %c0_43], %36 {strides = array<i32>} : memref<248x32xf32, #tpu.memory_space<vmem>>, vector<248x32xf32>,
    %c0_44 = arith.constant 0 : index
    %c0_45 = arith.constant 0 : index
    %38 = vector.load %arg15[%c0_44, %c0_45] : memref<248x32xf32, #tpu.memory_space<vmem>>, vector<120x32xf32>
    %c0_46 = arith.constant 0 : index
    %c0_47 = arith.constant 0 : index
    %39 = vector.load %arg16[%c0_46, %c0_47] : memref<240x96xf32, #tpu.memory_space<vmem>>, vector<120x32xf32>
    tpu.vector_store %arg16[%c0_46, %c0_47], %38 {strides = array<i32>} : memref<240x96xf32, #tpu.memory_space<vmem>>, vector<120x32xf32>,
    %c1_48 = arith.constant 1 : index
    %c0_49 = arith.constant 0 : index
    %40 = vector.load %arg15[%c1_48, %c0_49] : memref<248x32xf32, #tpu.memory_space<vmem>>, vector<120x32xf32>
    %c0_50 = arith.constant 0 : index
    %c32_51 = arith.constant 32 : index
    %41 = vector.load %arg16[%c0_50, %c32_51] : memref<240x96xf32, #tpu.memory_space<vmem>>, vector<120x32xf32>
    tpu.vector_store %arg16[%c0_50, %c32_51], %40 {strides = array<i32>} : memref<240x96xf32, #tpu.memory_space<vmem>>, vector<120x32xf32>,
    %c2_52 = arith.constant 2 : index
    %c0_53 = arith.constant 0 : index
    %42 = vector.load %arg15[%c2_52, %c0_53] : memref<248x32xf32, #tpu.memory_space<vmem>>, vector<120x32xf32>
    %c0_54 = arith.constant 0 : index
    %c64_55 = arith.constant 64 : index
    %43 = vector.load %arg16[%c0_54, %c64_55] : memref<240x96xf32, #tpu.memory_space<vmem>>, vector<120x32xf32>
    tpu.vector_store %arg16[%c0_54, %c64_55], %42 {strides = array<i32>} : memref<240x96xf32, #tpu.memory_space<vmem>>, vector<120x32xf32>,
    %c124 = arith.constant 124 : index
    %c0_56 = arith.constant 0 : index
    %44 = vector.load %arg15[%c124, %c0_56] : memref<248x32xf32, #tpu.memory_space<vmem>>, vector<120x32xf32>
    %c120 = arith.constant 120 : index
    %c0_57 = arith.constant 0 : index
    %45 = vector.load %arg16[%c120, %c0_57] : memref<240x96xf32, #tpu.memory_space<vmem>>, vector<120x32xf32>
    tpu.vector_store %arg16[%c120, %c0_57], %44 {strides = array<i32>} : memref<240x96xf32, #tpu.memory_space<vmem>>, vector<120x32xf32>,
    %c125 = arith.constant 125 : index
    %c0_58 = arith.constant 0 : index
    %46 = vector.load %arg15[%c125, %c0_58] : memref<248x32xf32, #tpu.memory_space<vmem>>, vector<120x32xf32>
    %c120_59 = arith.constant 120 : index
    %c32_60 = arith.constant 32 : index
    %47 = vector.load %arg16[%c120_59, %c32_60] : memref<240x96xf32, #tpu.memory_space<vmem>>, vector<120x32xf32>
    tpu.vector_store %arg16[%c120_59, %c32_60], %46 {strides = array<i32>} : memref<240x96xf32, #tpu.memory_space<vmem>>, vector<120x32xf32>,
    %c126 = arith.constant 126 : index
    %c0_61 = arith.constant 0 : index
    %48 = vector.load %arg15[%c126, %c0_61] : memref<248x32xf32, #tpu.memory_space<vmem>>, vector<120x32xf32>
    %c120_62 = arith.constant 120 : index
    %c64_63 = arith.constant 64 : index
    %49 = vector.load %arg16[%c120_62, %c64_63] : memref<240x96xf32, #tpu.memory_space<vmem>>, vector<120x32xf32>
    tpu.vector_store %arg16[%c120_62, %c64_63], %48 {strides = array<i32>} : memref<240x96xf32, #tpu.memory_space<vmem>>, vector<120x32xf32>,
    %c0_64 = arith.constant 0 : index
    %c0_65 = arith.constant 0 : index
    %50 = vector.load %arg16[%c0_64, %c0_65] : memref<240x96xf32, #tpu.memory_space<vmem>>, vector<240x96xf32>
    %51 = arith.truncf %50 : vector<240x96xf32> to vector<240x96xbf16>
    %c0_66 = arith.constant 0 : index
    %c0_67 = arith.constant 0 : index
    %52 = vector.load %arg4[%c0_66, %c0_67] : memref<96x32xbf16, #tpu.memory_space<vmem>>, vector<96x32xbf16>
    %cst_68 = arith.constant dense<0.000000e+00> : vector<240x32xf32>
    %53 = tpu.matmul %51, %52, %cst_68 {dimension_numbers = #tpu.dot_dimension_numbers<[1], [0], [0], [1], [0, 0, 1, 1], [], []>} : vector<240x96xbf16>, vector<96x32xbf16>, vector<240x32xf32> -> vector<240x32xf32>
    %c0_69 = arith.constant 0 : index
    %c0_70 = arith.constant 0 : index
    %54 = vector.load %arg17[%c0_69, %c0_70] : memref<240x32xf32, #tpu.memory_space<vmem>>, vector<240x32xf32>
    tpu.vector_store %arg17[%c0_69, %c0_70], %53 {strides = array<i32>} : memref<240x32xf32, #tpu.memory_space<vmem>>, vector<240x32xf32>,
    %c0_71 = arith.constant 0 : index
    %c0_72 = arith.constant 0 : index
    %55 = tpu.strided_load %arg17[%c0_71, %c0_72] {strides = array<i32: 4, 1>} : memref<240x32xf32, #tpu.memory_space<vmem>>, vector<60x32xf32>
    %c1_73 = arith.constant 1 : index
    %c0_74 = arith.constant 0 : index
    %56 = tpu.strided_load %arg17[%c1_73, %c0_74] {strides = array<i32: 4, 1>} : memref<240x32xf32, #tpu.memory_space<vmem>>, vector<60x32xf32>
    %57 = arith.maximumf %55, %56 : vector<60x32xf32>
    %c2_75 = arith.constant 2 : index
    %c0_76 = arith.constant 0 : index
    %58 = tpu.strided_load %arg17[%c2_75, %c0_76] {strides = array<i32: 4, 1>} : memref<240x32xf32, #tpu.memory_space<vmem>>, vector<60x32xf32>
    %c3_77 = arith.constant 3 : index
    %c0_78 = arith.constant 0 : index
    %59 = tpu.strided_load %arg17[%c3_77, %c0_78] {strides = array<i32: 4, 1>} : memref<240x32xf32, #tpu.memory_space<vmem>>, vector<60x32xf32>
    %60 = arith.maximumf %58, %59 : vector<60x32xf32>
    %61 = arith.maximumf %57, %60 : vector<60x32xf32>
    %c0_79 = arith.constant 0 : index
    %c0_80 = arith.constant 0 : index
    %62 = vector.load %arg5[%c0_79, %c0_80] : memref<1x32xf32, #tpu.memory_space<vmem>>, vector<1x32xf32>
    %63 = vector.broadcast %62 : vector<1x32xf32> to vector<60x32xf32>
    %64 = arith.addf %61, %63 : vector<60x32xf32>
    %cst_81 = arith.constant 0.000000e+00 : f32
    %65 = vector.broadcast %cst_81 : f32 to vector<60x32xf32>
    %66 = arith.maximumf %64, %65 : vector<60x32xf32>
    %c0_82 = arith.constant 0 : index
    %c0_83 = arith.constant 0 : index
    %67 = vector.load %arg18[%c0_82, %c0_83] : memref<60x32xf32, #tpu.memory_space<vmem>>, vector<60x32xf32>
    tpu.vector_store %arg18[%c0_82, %c0_83], %66 {strides = array<i32>} : memref<60x32xf32, #tpu.memory_space<vmem>>, vector<60x32xf32>,
    %c0_84 = arith.constant 0 : index
    %c0_85 = arith.constant 0 : index
    %68 = vector.load %arg18[%c0_84, %c0_85] : memref<60x32xf32, #tpu.memory_space<vmem>>, vector<28x32xf32>
    %c0_86 = arith.constant 0 : index
    %c0_87 = arith.constant 0 : index
    %69 = vector.load %arg19[%c0_86, %c0_87] : memref<56x96xf32, #tpu.memory_space<vmem>>, vector<28x32xf32>
    tpu.vector_store %arg19[%c0_86, %c0_87], %68 {strides = array<i32>} : memref<56x96xf32, #tpu.memory_space<vmem>>, vector<28x32xf32>,
    %c1_88 = arith.constant 1 : index
    %c0_89 = arith.constant 0 : index
    %70 = vector.load %arg18[%c1_88, %c0_89] : memref<60x32xf32, #tpu.memory_space<vmem>>, vector<28x32xf32>
    %c0_90 = arith.constant 0 : index
    %c32_91 = arith.constant 32 : index
    %71 = vector.load %arg19[%c0_90, %c32_91] : memref<56x96xf32, #tpu.memory_space<vmem>>, vector<28x32xf32>
    tpu.vector_store %arg19[%c0_90, %c32_91], %70 {strides = array<i32>} : memref<56x96xf32, #tpu.memory_space<vmem>>, vector<28x32xf32>,
    %c2_92 = arith.constant 2 : index
    %c0_93 = arith.constant 0 : index
    %72 = vector.load %arg18[%c2_92, %c0_93] : memref<60x32xf32, #tpu.memory_space<vmem>>, vector<28x32xf32>
    %c0_94 = arith.constant 0 : index
    %c64_95 = arith.constant 64 : index
    %73 = vector.load %arg19[%c0_94, %c64_95] : memref<56x96xf32, #tpu.memory_space<vmem>>, vector<28x32xf32>
    tpu.vector_store %arg19[%c0_94, %c64_95], %72 {strides = array<i32>} : memref<56x96xf32, #tpu.memory_space<vmem>>, vector<28x32xf32>,
    %c30 = arith.constant 30 : index
    %c0_96 = arith.constant 0 : index
    %74 = vector.load %arg18[%c30, %c0_96] : memref<60x32xf32, #tpu.memory_space<vmem>>, vector<28x32xf32>
    %c28 = arith.constant 28 : index
    %c0_97 = arith.constant 0 : index
    %75 = vector.load %arg19[%c28, %c0_97] : memref<56x96xf32, #tpu.memory_space<vmem>>, vector<28x32xf32>
    tpu.vector_store %arg19[%c28, %c0_97], %74 {strides = array<i32>} : memref<56x96xf32, #tpu.memory_space<vmem>>, vector<28x32xf32>,
    %c31 = arith.constant 31 : index
    %c0_98 = arith.constant 0 : index
    %76 = vector.load %arg18[%c31, %c0_98] : memref<60x32xf32, #tpu.memory_space<vmem>>, vector<28x32xf32>
    %c28_99 = arith.constant 28 : index
    %c32_100 = arith.constant 32 : index
    %77 = vector.load %arg19[%c28_99, %c32_100] : memref<56x96xf32, #tpu.memory_space<vmem>>, vector<28x32xf32>
    tpu.vector_store %arg19[%c28_99, %c32_100], %76 {strides = array<i32>} : memref<56x96xf32, #tpu.memory_space<vmem>>, vector<28x32xf32>,
    %c32_101 = arith.constant 32 : index
    %c0_102 = arith.constant 0 : index
    %78 = vector.load %arg18[%c32_101, %c0_102] : memref<60x32xf32, #tpu.memory_space<vmem>>, vector<28x32xf32>
    %c28_103 = arith.constant 28 : index
    %c64_104 = arith.constant 64 : index
    %79 = vector.load %arg19[%c28_103, %c64_104] : memref<56x96xf32, #tpu.memory_space<vmem>>, vector<28x32xf32>
    tpu.vector_store %arg19[%c28_103, %c64_104], %78 {strides = array<i32>} : memref<56x96xf32, #tpu.memory_space<vmem>>, vector<28x32xf32>,
    %c0_105 = arith.constant 0 : index
    %c0_106 = arith.constant 0 : index
    %80 = vector.load %arg19[%c0_105, %c0_106] : memref<56x96xf32, #tpu.memory_space<vmem>>, vector<56x96xf32>
    %81 = arith.truncf %80 : vector<56x96xf32> to vector<56x96xbf16>
    %c0_107 = arith.constant 0 : index
    %c0_108 = arith.constant 0 : index
    %82 = vector.load %arg6[%c0_107, %c0_108] : memref<96x64xbf16, #tpu.memory_space<vmem>>, vector<96x64xbf16>
    %cst_109 = arith.constant dense<0.000000e+00> : vector<56x64xf32>
    %83 = tpu.matmul %81, %82, %cst_109 {dimension_numbers = #tpu.dot_dimension_numbers<[1], [0], [0], [1], [0, 0, 1, 1], [], []>} : vector<56x96xbf16>, vector<96x64xbf16>, vector<56x64xf32> -> vector<56x64xf32>
    %c0_110 = arith.constant 0 : index
    %c0_111 = arith.constant 0 : index
    %84 = vector.load %arg20[%c0_110, %c0_111] : memref<56x64xf32, #tpu.memory_space<vmem>>, vector<56x64xf32>
    tpu.vector_store %arg20[%c0_110, %c0_111], %83 {strides = array<i32>} : memref<56x64xf32, #tpu.memory_space<vmem>>, vector<56x64xf32>,
    %c0_112 = arith.constant 0 : index
    %c0_113 = arith.constant 0 : index
    %85 = tpu.strided_load %arg20[%c0_112, %c0_113] {strides = array<i32: 4, 1>} : memref<56x64xf32, #tpu.memory_space<vmem>>, vector<14x64xf32>
    %c1_114 = arith.constant 1 : index
    %c0_115 = arith.constant 0 : index
    %86 = tpu.strided_load %arg20[%c1_114, %c0_115] {strides = array<i32: 4, 1>} : memref<56x64xf32, #tpu.memory_space<vmem>>, vector<14x64xf32>
    %87 = arith.maximumf %85, %86 : vector<14x64xf32>
    %c2_116 = arith.constant 2 : index
    %c0_117 = arith.constant 0 : index
    %88 = tpu.strided_load %arg20[%c2_116, %c0_117] {strides = array<i32: 4, 1>} : memref<56x64xf32, #tpu.memory_space<vmem>>, vector<14x64xf32>
    %c3_118 = arith.constant 3 : index
    %c0_119 = arith.constant 0 : index
    %89 = tpu.strided_load %arg20[%c3_118, %c0_119] {strides = array<i32: 4, 1>} : memref<56x64xf32, #tpu.memory_space<vmem>>, vector<14x64xf32>
    %90 = arith.maximumf %88, %89 : vector<14x64xf32>
    %91 = arith.maximumf %87, %90 : vector<14x64xf32>
    %c0_120 = arith.constant 0 : index
    %c0_121 = arith.constant 0 : index
    %92 = vector.load %arg7[%c0_120, %c0_121] : memref<1x64xf32, #tpu.memory_space<vmem>>, vector<1x64xf32>
    %93 = vector.broadcast %92 : vector<1x64xf32> to vector<14x64xf32>
    %94 = arith.addf %91, %93 : vector<14x64xf32>
    %cst_122 = arith.constant 0.000000e+00 : f32
    %95 = vector.broadcast %cst_122 : f32 to vector<14x64xf32>
    %96 = arith.maximumf %94, %95 : vector<14x64xf32>
    %c0_123 = arith.constant 0 : index
    %c0_124 = arith.constant 0 : index
    %97 = vector.load %arg21[%c0_123, %c0_124] : memref<14x64xf32, #tpu.memory_space<vmem>>, vector<14x64xf32>
    tpu.vector_store %arg21[%c0_123, %c0_124], %96 {strides = array<i32>} : memref<14x64xf32, #tpu.memory_space<vmem>>, vector<14x64xf32>,
    %c0_125 = arith.constant 0 : index
    %c0_126 = arith.constant 0 : index
    %98 = vector.load %arg21[%c0_125, %c0_126] : memref<14x64xf32, #tpu.memory_space<vmem>>, vector<4x64xf32>
    %c0_127 = arith.constant 0 : index
    %c0_128 = arith.constant 0 : index
    %99 = vector.load %arg22[%c0_127, %c0_128] : memref<8x192xf32, #tpu.memory_space<vmem>>, vector<4x64xf32>
    tpu.vector_store %arg22[%c0_127, %c0_128], %98 {strides = array<i32>} : memref<8x192xf32, #tpu.memory_space<vmem>>, vector<4x64xf32>,
    %c1_129 = arith.constant 1 : index
    %c0_130 = arith.constant 0 : index
    %100 = vector.load %arg21[%c1_129, %c0_130] : memref<14x64xf32, #tpu.memory_space<vmem>>, vector<4x64xf32>
    %c0_131 = arith.constant 0 : index
    %c64_132 = arith.constant 64 : index
    %101 = vector.load %arg22[%c0_131, %c64_132] : memref<8x192xf32, #tpu.memory_space<vmem>>, vector<4x64xf32>
    tpu.vector_store %arg22[%c0_131, %c64_132], %100 {strides = array<i32>} : memref<8x192xf32, #tpu.memory_space<vmem>>, vector<4x64xf32>,
    %c2_133 = arith.constant 2 : index
    %c0_134 = arith.constant 0 : index
    %102 = vector.load %arg21[%c2_133, %c0_134] : memref<14x64xf32, #tpu.memory_space<vmem>>, vector<4x64xf32>
    %c0_135 = arith.constant 0 : index
    %c128 = arith.constant 128 : index
    %103 = vector.load %arg22[%c0_135, %c128] : memref<8x192xf32, #tpu.memory_space<vmem>>, vector<4x64xf32>
    tpu.vector_store %arg22[%c0_135, %c128], %102 {strides = array<i32>} : memref<8x192xf32, #tpu.memory_space<vmem>>, vector<4x64xf32>,
    %c7 = arith.constant 7 : index
    %c0_136 = arith.constant 0 : index
    %104 = vector.load %arg21[%c7, %c0_136] : memref<14x64xf32, #tpu.memory_space<vmem>>, vector<4x64xf32>
    %c4_137 = arith.constant 4 : index
    %c0_138 = arith.constant 0 : index
    %105 = vector.load %arg22[%c4_137, %c0_138] : memref<8x192xf32, #tpu.memory_space<vmem>>, vector<4x64xf32>
    tpu.vector_store %arg22[%c4_137, %c0_138], %104 {strides = array<i32>} : memref<8x192xf32, #tpu.memory_space<vmem>>, vector<4x64xf32>,
    %c8 = arith.constant 8 : index
    %c0_139 = arith.constant 0 : index
    %106 = vector.load %arg21[%c8, %c0_139] : memref<14x64xf32, #tpu.memory_space<vmem>>, vector<4x64xf32>
    %c4_140 = arith.constant 4 : index
    %c64_141 = arith.constant 64 : index
    %107 = vector.load %arg22[%c4_140, %c64_141] : memref<8x192xf32, #tpu.memory_space<vmem>>, vector<4x64xf32>
    tpu.vector_store %arg22[%c4_140, %c64_141], %106 {strides = array<i32>} : memref<8x192xf32, #tpu.memory_space<vmem>>, vector<4x64xf32>,
    %c9 = arith.constant 9 : index
    %c0_142 = arith.constant 0 : index
    %108 = vector.load %arg21[%c9, %c0_142] : memref<14x64xf32, #tpu.memory_space<vmem>>, vector<4x64xf32>
    %c4_143 = arith.constant 4 : index
    %c128_144 = arith.constant 128 : index
    %109 = vector.load %arg22[%c4_143, %c128_144] : memref<8x192xf32, #tpu.memory_space<vmem>>, vector<4x64xf32>
    tpu.vector_store %arg22[%c4_143, %c128_144], %108 {strides = array<i32>} : memref<8x192xf32, #tpu.memory_space<vmem>>, vector<4x64xf32>,
    %c0_145 = arith.constant 0 : index
    %c0_146 = arith.constant 0 : index
    %110 = vector.load %arg22[%c0_145, %c0_146] : memref<8x192xf32, #tpu.memory_space<vmem>>, vector<8x192xf32>
    %111 = arith.truncf %110 : vector<8x192xf32> to vector<8x192xbf16>
    %c0_147 = arith.constant 0 : index
    %c0_148 = arith.constant 0 : index
    %112 = vector.load %arg8[%c0_147, %c0_148] : memref<192x64xbf16, #tpu.memory_space<vmem>>, vector<192x64xbf16>
    %cst_149 = arith.constant dense<0.000000e+00> : vector<8x64xf32>
    %113 = tpu.matmul %111, %112, %cst_149 {dimension_numbers = #tpu.dot_dimension_numbers<[1], [0], [0], [1], [0, 0, 1, 1], [], []>} : vector<8x192xbf16>, vector<192x64xbf16>, vector<8x64xf32> -> vector<8x64xf32>
    %c0_150 = arith.constant 0 : index
    %c0_151 = arith.constant 0 : index
    %114 = vector.load %arg23[%c0_150, %c0_151] : memref<8x64xf32, #tpu.memory_space<vmem>>, vector<8x64xf32>
    tpu.vector_store %arg23[%c0_150, %c0_151], %113 {strides = array<i32>} : memref<8x64xf32, #tpu.memory_space<vmem>>, vector<8x64xf32>,
    %c0_152 = arith.constant 0 : index
    %c0_153 = arith.constant 0 : index
    %115 = tpu.strided_load %arg23[%c0_152, %c0_153] {strides = array<i32: 4, 1>} : memref<8x64xf32, #tpu.memory_space<vmem>>, vector<2x64xf32>
    %c1_154 = arith.constant 1 : index
    %c0_155 = arith.constant 0 : index
    %116 = tpu.strided_load %arg23[%c1_154, %c0_155] {strides = array<i32: 4, 1>} : memref<8x64xf32, #tpu.memory_space<vmem>>, vector<2x64xf32>
    %117 = arith.maximumf %115, %116 : vector<2x64xf32>
    %c2_156 = arith.constant 2 : index
    %c0_157 = arith.constant 0 : index
    %118 = tpu.strided_load %arg23[%c2_156, %c0_157] {strides = array<i32: 4, 1>} : memref<8x64xf32, #tpu.memory_space<vmem>>, vector<2x64xf32>
    %c3_158 = arith.constant 3 : index
    %c0_159 = arith.constant 0 : index
    %119 = tpu.strided_load %arg23[%c3_158, %c0_159] {strides = array<i32: 4, 1>} : memref<8x64xf32, #tpu.memory_space<vmem>>, vector<2x64xf32>
    %120 = arith.maximumf %118, %119 : vector<2x64xf32>
    %121 = arith.maximumf %117, %120 : vector<2x64xf32>
    %c0_160 = arith.constant 0 : index
    %c0_161 = arith.constant 0 : index
    %122 = vector.load %arg9[%c0_160, %c0_161] : memref<1x64xf32, #tpu.memory_space<vmem>>, vector<1x64xf32>
    %123 = vector.broadcast %122 : vector<1x64xf32> to vector<2x64xf32>
    %124 = arith.addf %121, %123 : vector<2x64xf32>
    %cst_162 = arith.constant 0.000000e+00 : f32
    %125 = vector.broadcast %cst_162 : f32 to vector<2x64xf32>
    %126 = arith.maximumf %124, %125 : vector<2x64xf32>
    %c0_163 = arith.constant 0 : index
    %c0_164 = arith.constant 0 : index
    %127 = vector.load %arg10[%c0_163, %c0_164] : memref<64x128xf32, #tpu.memory_space<vmem>>, vector<64x128xf32>
    %cst_165 = arith.constant dense<0.000000e+00> : vector<2x128xf32>
    %128 = tpu.matmul %126, %127, %cst_165 {dimension_numbers = #tpu.dot_dimension_numbers<[1], [0], [0], [1], [0, 0, 1, 1], [], []>} : vector<2x64xf32>, vector<64x128xf32>, vector<2x128xf32> -> vector<2x128xf32>
    %c0_166 = arith.constant 0 : index
    %c0_167 = arith.constant 0 : index
    %129 = vector.load %arg11[%c0_166, %c0_167] : memref<1x128xf32, #tpu.memory_space<vmem>>, vector<1x128xf32>
    %130 = vector.broadcast %129 : vector<1x128xf32> to vector<2x128xf32>
    %131 = arith.addf %128, %130 : vector<2x128xf32>
    %cst_168 = arith.constant dense<0xFF800000> : vector<2xf32>
    %132 = vector.multi_reduction <maximumf>, %131, %cst_168 [1] : vector<2x128xf32> to vector<2xf32>
    %133 = vector.shape_cast %132 : vector<2xf32> to vector<2x1xf32>
    %134 = vector.broadcast %133 : vector<2x1xf32> to vector<2x128xf32>
    %135 = arith.subf %131, %134 : vector<2x128xf32>
    %136 = math.exp %135 : vector<2x128xf32>
    %cst_169 = arith.constant dense<0.000000e+00> : vector<2xf32>
    %137 = vector.multi_reduction <add>, %136, %cst_169 [1] : vector<2x128xf32> to vector<2xf32>
    %138 = vector.shape_cast %137 : vector<2xf32> to vector<2x1xf32>
    %139 = math.log %138 : vector<2x1xf32>
    %140 = vector.broadcast %139 : vector<2x1xf32> to vector<2x128xf32>
    %141 = arith.subf %135, %140 : vector<2x128xf32>
    %c0_170 = arith.constant 0 : index
    %c0_171 = arith.constant 0 : index
    %142 = vector.load %arg12[%c0_170, %c0_171] : memref<2x128xf32, #tpu.memory_space<vmem>>, vector<2x128xf32>
    tpu.vector_store %arg12[%c0_170, %c0_171], %141 {strides = array<i32>} : memref<2x128xf32, #tpu.memory_space<vmem>>, vector<2x128xf32>,
    return
  }
  func.func @transform_0(%arg0: i32) -> (i32, i32) {
    %c0_i32 = arith.constant 0 : i32
    %c0_i32_0 = arith.constant 0 : i32
    return %arg0, %c0_i32 : i32, i32
  }
  func.func @transform_1(%arg0: i32) -> (i32, i32) {
    %c0_i32 = arith.constant 0 : i32
    %c0_i32_0 = arith.constant 0 : i32
    %c0_i32_1 = arith.constant 0 : i32
    return %c0_i32, %c0_i32_0 : i32, i32
  }
  func.func @transform_2(%arg0: i32) -> (i32, i32) {
    %c0_i32 = arith.constant 0 : i32
    %c0_i32_0 = arith.constant 0 : i32
    %c0_i32_1 = arith.constant 0 : i32
    return %c0_i32, %c0_i32_0 : i32, i32
  }
  func.func @transform_3(%arg0: i32) -> (i32, i32) {
    %c0_i32 = arith.constant 0 : i32
    %c0_i32_0 = arith.constant 0 : i32
    %c0_i32_1 = arith.constant 0 : i32
    return %c0_i32, %c0_i32_0 : i32, i32
  }
  func.func @transform_4(%arg0: i32) -> (i32, i32) {
    %c0_i32 = arith.constant 0 : i32
    %c0_i32_0 = arith.constant 0 : i32
    %c0_i32_1 = arith.constant 0 : i32
    return %c0_i32, %c0_i32_0 : i32, i32
  }
  func.func @transform_5(%arg0: i32) -> (i32, i32) {
    %c0_i32 = arith.constant 0 : i32
    %c0_i32_0 = arith.constant 0 : i32
    %c0_i32_1 = arith.constant 0 : i32
    return %c0_i32, %c0_i32_0 : i32, i32
  }
  func.func @transform_6(%arg0: i32) -> (i32, i32) {
    %c0_i32 = arith.constant 0 : i32
    %c0_i32_0 = arith.constant 0 : i32
    %c0_i32_1 = arith.constant 0 : i32
    return %c0_i32, %c0_i32_0 : i32, i32
  }
  func.func @transform_7(%arg0: i32) -> (i32, i32) {
    %c0_i32 = arith.constant 0 : i32
    %c0_i32_0 = arith.constant 0 : i32
    %c0_i32_1 = arith.constant 0 : i32
    return %c0_i32, %c0_i32_0 : i32, i32
  }
  func.func @transform_8(%arg0: i32) -> (i32, i32) {
    %c0_i32 = arith.constant 0 : i32
    %c0_i32_0 = arith.constant 0 : i32
    %c0_i32_1 = arith.constant 0 : i32
    return %c0_i32, %c0_i32_0 : i32, i32
  }
  func.func @transform_9(%arg0: i32) -> (i32, i32) {
    %c0_i32 = arith.constant 0 : i32
    %c0_i32_0 = arith.constant 0 : i32
    %c0_i32_1 = arith.constant 0 : i32
    return %c0_i32, %c0_i32_0 : i32, i32
  }
  func.func @transform_10(%arg0: i32) -> (i32, i32) {
    %c0_i32 = arith.constant 0 : i32
    %c0_i32_0 = arith.constant 0 : i32
    %c0_i32_1 = arith.constant 0 : i32
    return %c0_i32, %c0_i32_0 : i32, i32
  }
  func.func @transform_11(%arg0: i32) -> (i32, i32) {
    %c0_i32 = arith.constant 0 : i32
    %c0_i32_0 = arith.constant 0 : i32
    return %arg0, %c0_i32 : i32, i32
  }
}

</mosaic_0001>

<llo_original>
// kernel: m5_forward.1
$region0: #{m5_forward.1}
  #allocation0 [shape = 'u32[]', space=smem, size = 0x4, offset = 0x4, fixed_abs, tag = 'smem constant byte address 0x4 - core index']
  #allocation1 [shape = 'u32[144,128]{1,0:T(1,128)}', space=vmem, size = 0x12000, scoped, tag = 'internal scratch']
  #allocation2 [shape = 'f32[992,80]{1,0:T(8,128)}', space=vmem, size = 0x7c000, scoped, tag = 'scratch operand']
  #allocation3 [shape = 'f32[992,32]{1,0:T(8,128)}', space=vmem, size = 0x7c000, scoped, tag = 'scratch operand']
  #allocation4 [shape = 'f32[248,32]{1,0:T(8,128)}', space=vmem, size = 0x1f000, scoped, tag = 'scratch operand']
  #allocation5 [shape = 'f32[240,96]{1,0:T(8,128)}', space=vmem, size = 0x1e000, scoped, tag = 'scratch operand']
  #allocation6 [shape = 'f32[240,32]{1,0:T(8,128)}', space=vmem, size = 0x1e000, scoped, tag = 'scratch operand']
  #allocation7 [shape = 'f32[60,32]{1,0:T(8,128)}', space=vmem, size = 0x8000, scoped, tag = 'scratch operand']
  #allocation8 [shape = 'f32[56,96]{1,0:T(8,128)}', space=vmem, size = 0x7000, scoped, tag = 'scratch operand']
  #allocation9 [shape = 'f32[56,64]{1,0:T(8,128)}', space=vmem, size = 0x7000, scoped, tag = 'scratch operand']
  #allocation10 [shape = 'f32[14,64]{1,0:T(8,128)}', space=vmem, size = 0x2000, scoped, tag = 'scratch operand']
  #allocation11 [shape = 'f32[8,192]{1,0:T(8,128)}', space=vmem, size = 0x2000, scoped, tag = 'scratch operand']
  #allocation12 [shape = 'f32[8,64]{1,0:T(8,128)}', space=vmem, size = 0x1000, scoped, tag = 'scratch operand']
  %s0 = inlined_call_operand.vmem [shape: f32[1000,16], index: 0, kind: input, shape index: {}]
  %s1 = inlined_call_operand.vmem [shape: bf16[80,32], index: 1, kind: input, shape index: {}]
  %s2 = inlined_call_operand.vmem [shape: f32[1,32], index: 2, kind: input, shape index: {}]
  %s3 = inlined_call_operand.vmem [shape: bf16[96,32], index: 3, kind: input, shape index: {}]
  %s4 = inlined_call_operand.vmem [shape: f32[1,32], index: 4, kind: input, shape index: {}]
  %s5 = inlined_call_operand.vmem [shape: bf16[96,64], index: 5, kind: input, shape index: {}]
  %s6 = inlined_call_operand.vmem [shape: f32[1,64], index: 6, kind: input, shape index: {}]
  %s7 = inlined_call_operand.vmem [shape: bf16[192,64], index: 7, kind: input, shape index: {}]
  %s8 = inlined_call_operand.vmem [shape: f32[1,64], index: 8, kind: input, shape index: {}]
  %s9 = inlined_call_operand.vmem [shape: f32[64,128], index: 9, kind: input, shape index: {}]
  %s10 = inlined_call_operand.vmem [shape: f32[1,128], index: 10, kind: input, shape index: {}]
  %s11 = inlined_call_operand.hbm [shape: f32[2,128], index: 11, kind: output, shape index: {}]
  %s12 = sld [smem:[#allocation0]]
  $region54: #{m5_forward.1} parent=0
    _
  %s14 = ssub.s32 1, %s12
  %s15 = scalar_select 0, %s14, %s12
  $region1: #{m5_forward.1} parent=0
    #allocation13 [shape = 'u8[1024]{0}', space=vmem, size = 0x400, scoped, tag = 'output window, operand 0, single buffered']
    #allocation14 [shape = 's32[1]{0}', space=sflag, size = 0x4, scoped, tag = 'scoped memory for m5_forward.1']
    %16 = vsyncpa [#allocation14], 0
    // Predicated region
    $region2: #{m5_forward.1} parent=1 // pred_check
      _
    $region3: #{m5_forward.1} parent=1 // pred_check_branch
      %18 = sbr.rel (0) target = $region5
    $region4: #{m5_forward.1} parent=1 // pred_region
      _
    $region5: #{m5_forward.1} parent=1 // pred_fallthru
      _
    // Predicated region
    $region6: #{m5_forward.1} parent=1 // pred_check
      _
    $region7: #{m5_forward.1} parent=1 // pred_check_branch
      %20 = sbr.rel (0) target = $region9
    $region8: #{m5_forward.1} parent=1 // pred_region
      _
    $region9: #{m5_forward.1} parent=1 // pred_fallthru
      _
    // Predicated region
    $region10: #{m5_forward.1} parent=1 // pred_check
      _
    $region11: #{m5_forward.1} parent=1 // pred_check_branch
      %22 = sbr.rel (0) target = $region13
    $region12: #{m5_forward.1} parent=1 // pred_region
      _
    $region13: #{m5_forward.1} parent=1 // pred_fallthru
      _
    // Predicated region
    $region14: #{m5_forward.1} parent=1 // pred_check
      _
    $region15: #{m5_forward.1} parent=1 // pred_check_branch
      %24 = sbr.rel (0) target = $region17
    $region16: #{m5_forward.1} parent=1 // pred_region
      _
    $region17: #{m5_forward.1} parent=1 // pred_fallthru
      _
    // Predicated region
    $region18: #{m5_forward.1} parent=1 // pred_check
      _
    $region19: #{m5_forward.1} parent=1 // pred_check_branch
      %26 = sbr.rel (0) target = $region21
    $region20: #{m5_forward.1} parent=1 // pred_region
      _
    $region21: #{m5_forward.1} parent=1 // pred_fallthru
      _
    // Predicated region
    $region22: #{m5_forward.1} parent=1 // pred_check
      _
    $region23: #{m5_forward.1} parent=1 // pred_check_branch
      %28 = sbr.rel (0) target = $region25
    $region24: #{m5_forward.1} parent=1 // pred_region
      _
    $region25: #{m5_forward.1} parent=1 // pred_fallthru
      _
    // Predicated region
    $region26: #{m5_forward.1} parent=1 // pred_check
      _
    $region27: #{m5_forward.1} parent=1 // pred_check_branch
      %30 = sbr.rel (0) target = $region29
    $region28: #{m5_forward.1} parent=1 // pred_region
      _
    $region29: #{m5_forward.1} parent=1 // pred_fallthru
      _
    // Predicated region
    $region30: #{m5_forward.1} parent=1 // pred_check
      _
    $region31: #{m5_forward.1} parent=1 // pred_check_branch
      %32 = sbr.rel (0) target = $region33
    $region32: #{m5_forward.1} parent=1 // pred_region
      _
    $region33: #{m5_forward.1} parent=1 // pred_fallthru
      _
    // Predicated region
    $region34: #{m5_forward.1} parent=1 // pred_check
      _
    $region35: #{m5_forward.1} parent=1 // pred_check_branch
      %34 = sbr.rel (0) target = $region37
    $region36: #{m5_forward.1} parent=1 // pred_region
      _
    $region37: #{m5_forward.1} parent=1 // pred_fallthru
      _
    // Predicated region
    $region38: #{m5_forward.1} parent=1 // pred_check
      _
    $region39: #{m5_forward.1} parent=1 // pred_check_branch
      %36 = sbr.rel (0) target = $region41
    $region40: #{m5_forward.1} parent=1 // pred_region
      _
    $region41: #{m5_forward.1} parent=1 // pred_fallthru
      _
    // Predicated region
    $region42: #{m5_forward.1} parent=1 // pred_check
      _
    $region43: #{m5_forward.1} parent=1 // pred_check_branch
      %38 = sbr.rel (0) target = $region45
    $region44: #{m5_forward.1} parent=1 // pred_region
      _
    $region45: #{m5_forward.1} parent=1 // pred_fallthru
      _
    %v40 = vld [vmem:[%s0] sm:$0xff]
    %v41 = vld [vmem:[%s0 + $0x8] sm:$0xff]
    %v42 = vld [vmem:[%s0 + $0x10] sm:$0xff]
    %v43 = vld [vmem:[%s0 + $0x18] sm:$0xff]
    %v44 = vld [vmem:[%s0 + $0x20] sm:$0xff]
    %v45 = vld [vmem:[%s0 + $0x28] sm:$0xff]
    %v46 = vld [vmem:[%s0 + $0x30] sm:$0xff]
    %v47 = vld [vmem:[%s0 + $0x38] sm:$0xff]
    %v48 = vld [vmem:[%s0 + $0x40] sm:$0xff]
    %v49 = vld [vmem:[%s0 + $0x48] sm:$0xff]
    %v50 = vld [vmem:[%s0 + $0x50] sm:$0xff]
    %v51 = vld [vmem:[%s0 + $0x58] sm:$0xff]
    %v52 = vld [vmem:[%s0 + $0x60] sm:$0xff]
    %v53 = vld [vmem:[%s0 + $0x68] sm:$0xff]
    %v54 = vld [vmem:[%s0 + $0x70] sm:$0xff]
    %v55 = vld [vmem:[%s0 + $0x78] sm:$0xff]
    %v56 = vld [vmem:[%s0 + $0x80] sm:$0xff]
    %v57 = vld [vmem:[%s0 + $0x88] sm:$0xff]
    %v58 = vld [vmem:[%s0 + $0x90] sm:$0xff]
    %v59 = vld [vmem:[%s0 + $0x98] sm:$0xff]
    %v60 = vld [vmem:[%s0 + $0xa0] sm:$0xff]
    %v61 = vld [vmem:[%s0 + $0xa8] sm:$0xff]
    %v62 = vld [vmem:[%s0 + $0xb0] sm:$0xff]
    %v63 = vld [vmem:[%s0 + $0xb8] sm:$0xff]
    %v64 = vld [vmem:[%s0 + $0xc0] sm:$0xff]
    %v65 = vld [vmem:[%s0 + $0xc8] sm:$0xff]
    %v66 = vld [vmem:[%s0 + $0xd0] sm:$0xff]
    %v67 = vld [vmem:[%s0 + $0xd8] sm:$0xff]
    %v68 = vld [vmem:[%s0 + $0xe0] sm:$0xff]
    %v69 = vld [vmem:[%s0 + $0xe8] sm:$0xff]
    %v70 = vld [vmem:[%s0 + $0xf0] sm:$0xff]
    %v71 = vld [vmem:[%s0 + $0xf8] sm:$0xff]
    %v72 = vld [vmem:[%s0 + $0x100] sm:$0xff]
    %v73 = vld [vmem:[%s0 + $0x108] sm:$0xff]
    %v74 = vld [vmem:[%s0 + $0x110] sm:$0xff]
    %v75 = vld [vmem:[%s0 + $0x118] sm:$0xff]
    %v76 = vld [vmem:[%s0 + $0x120] sm:$0xff]
    %v77 = vld [vmem:[%s0 + $0x128] sm:$0xff]
    %v78 = vld [vmem:[%s0 + $0x130] sm:$0xff]
    %v79 = vld [vmem:[%s0 + $0x138] sm:$0xff]
    %v80 = vld [vmem:[%s0 + $0x140] sm:$0xff]
    %v81 = vld [vmem:[%s0 + $0x148] sm:$0xff]
    %v82 = vld [vmem:[%s0 + $0x150] sm:$0xff]
    %v83 = vld [vmem:[%s0 + $0x158] sm:$0xff]
    %v84 = vld [vmem:[%s0 + $0x160] sm:$0xff]
    %v85 = vld [vmem:[%s0 + $0x168] sm:$0xff]
    %v86 = vld [vmem:[%s0 + $0x170] sm:$0xff]
    %v87 = vld [vmem:[%s0 + $0x178] sm:$0xff]
    %v88 = vld [vmem:[%s0 + $0x180] sm:$0xff]
    %v89 = vld [vmem:[%s0 + $0x188] sm:$0xff]
    %v90 = vld [vmem:[%s0 + $0x190] sm:$0xff]
    %v91 = vld [vmem:[%s0 + $0x198] sm:$0xff]
    %v92 = vld [vmem:[%s0 + $0x1a0] sm:$0xff]
    %v93 = vld [vmem:[%s0 + $0x1a8] sm:$0xff]
    %v94 = vld [vmem:[%s0 + $0x1b0] sm:$0xff]
    %v95 = vld [vmem:[%s0 + $0x1b8] sm:$0xff]
    %v96 = vld [vmem:[%s0 + $0x1c0] sm:$0xff]
    %v97 = vld [vmem:[%s0 + $0x1c8] sm:$0xff]
    %v98 = vld [vmem:[%s0 + $0x1d0] sm:$0xff]
    %v99 = vld [vmem:[%s0 + $0x1d8] sm:$0xff]
    %v100 = vld [vmem:[%s0 + $0x1e0] sm:$0xff]
    %v101 = vld [vmem:[%s0 + $0x1e8] sm:$0xff]
    %vm102 = vcmask 130048
    %103 = vst.msk [vmem:[#allocation2] sm:$0xff] %vm102, %v40
    %104 = vst.msk [vmem:[#allocation2 + $0x8] sm:$0xff] %vm102, %v41
    %105 = vst.msk [vmem:[#allocation2 + $0x10] sm:$0xff] %vm102, %v42
    %106 = vst.msk [vmem:[#allocation2 + $0x18] sm:$0xff] %vm102, %v43
    %107 = vst.msk [vmem:[#allocation2 + $0x20] sm:$0xff] %vm102, %v44
    %108 = vst.msk [vmem:[#allocation2 + $0x28] sm:$0xff] %vm102, %v45
    %109 = vst.msk [vmem:[#allocation2 + $0x30] sm:$0xff] %vm102, %v46
    %110 = vst.msk [vmem:[#allocation2 + $0x38] sm:$0xff] %vm102, %v47
    %111 = vst.msk [vmem:[#allocation2 + $0x40] sm:$0xff] %vm102, %v48
    %112 = vst.msk [vmem:[#allocation2 + $0x48] sm:$0xff] %vm102, %v49
    %113 = vst.msk [vmem:[#allocation2 + $0x50] sm:$0xff] %vm102, %v50
    %114 = vst.msk [vmem:[#allocation2 + $0x58] sm:$0xff] %vm102, %v51
    %115 = vst.msk [vmem:[#allocation2 + $0x60] sm:$0xff] %vm102, %v52
    %116 = vst.msk [vmem:[#allocation2 + $0x68] sm:$0xff] %vm102, %v53
    %117 = vst.msk [vmem:[#allocation2 + $0x70] sm:$0xff] %vm102, %v54
    %118 = vst.msk [vmem:[#allocation2 + $0x78] sm:$0xff] %vm102, %v55
    %119 = vst.msk [vmem:[#allocation2 + $0x80] sm:$0xff] %vm102, %v56
    %120 = vst.msk [vmem:[#allocation2 + $0x88] sm:$0xff] %vm102, %v57
    %121 = vst.msk [vmem:[#allocation2 + $0x90] sm:$0xff] %vm102, %v58
    %122 = vst.msk [vmem:[#allocation2 + $0x98] sm:$0xff] %vm102, %v59
    %123 = vst.msk [vmem:[#allocation2 + $0xa0] sm:$0xff] %vm102, %v60
    %124 = vst.msk [vmem:[#allocation2 + $0xa8] sm:$0xff] %vm102, %v61
    %125 = vst.msk [vmem:[#allocation2 + $0xb0] sm:$0xff] %vm102, %v62
    %126 = vst.msk [vmem:[#allocation2 + $0xb8] sm:$0xff] %vm102, %v63
    %127 = vst.msk [vmem:[#allocation2 + $0xc0] sm:$0xff] %vm102, %v64
    %128 = vst.msk [vmem:[#allocation2 + $0xc8] sm:$0xff] %vm102, %v65
    %129 = vst.msk [vmem:[#allocation2 + $0xd0] sm:$0xff] %vm102, %v66
    %130 = vst.msk [vmem:[#allocation2 + $0xd8] sm:$0xff] %vm102, %v67
    %131 = vst.msk [vmem:[#allocation2 + $0xe0] sm:$0xff] %vm102, %v68
    %132 = vst.msk [vmem:[#allocation2 + $0xe8] sm:$0xff] %vm102, %v69
    %133 = vst.msk [vmem:[#allocation2 + $0xf0] sm:$0xff] %vm102, %v70
    %134 = vst.msk [vmem:[#allocation2 + $0xf8] sm:$0xff] %vm102, %v71
    %135 = vst.msk [vmem:[#allocation2 + $0x100] sm:$0xff] %vm102, %v72
    %136 = vst.msk [vmem:[#allocation2 + $0x108] sm:$0xff] %vm102, %v73
    %137 = vst.msk [vmem:[#allocation2 + $0x110] sm:$0xff] %vm102, %v74
    %138 = vst.msk [vmem:[#allocation2 + $0x118] sm:$0xff] %vm102, %v75
    %139 = vst.msk [vmem:[#allocation2 + $0x120] sm:$0xff] %vm102, %v76
    %140 = vst.msk [vmem:[#allocation2 + $0x128] sm:$0xff] %vm102, %v77
    %141 = vst.msk [vmem:[#allocation2 + $0x130] sm:$0xff] %vm102, %v78
    %142 = vst.msk [vmem:[#allocation2 + $0x138] sm:$0xff] %vm102, %v79
    %143 = vst.msk [vmem:[#allocation2 + $0x140] sm:$0xff] %vm102, %v80
    %144 = vst.msk [vmem:[#allocation2 + $0x148] sm:$0xff] %vm102, %v81
    %145 = vst.msk [vmem:[#allocation2 + $0x150] sm:$0xff] %vm102, %v82
    %146 = vst.msk [vmem:[#allocation2 + $0x158] sm:$0xff] %vm102, %v83
    %147 = vst.msk [vmem:[#allocation2 + $0x160] sm:$0xff] %vm102, %v84
    %148 = vst.msk [vmem:[#allocation2 + $0x168] sm:$0xff] %vm102, %v85
    %149 = vst.msk [vmem:[#allocation2 + $0x170] sm:$0xff] %vm102, %v86
    %150 = vst.msk [vmem:[#allocation2 + $0x178] sm:$0xff] %vm102, %v87
    %151 = vst.msk [vmem:[#allocation2 + $0x180] sm:$0xff] %vm102, %v88
    %152 = vst.msk [vmem:[#allocation2 + $0x188] sm:$0xff] %vm102, %v89
    %153 = vst.msk [vmem:[#allocation2 + $0x190] sm:$0xff] %vm102, %v90
    %154 = vst.msk [vmem:[#allocation2 + $0x198] sm:$0xff] %vm102, %v91
    %155 = vst.msk [vmem:[#allocation2 + $0x1a0] sm:$0xff] %vm102, %v92
    %156 = vst.msk [vmem:[#allocation2 + $0x1a8] sm:$0xff] %vm102, %v93
    %157 = vst.msk [vmem:[#allocation2 + $0x1b0] sm:$0xff] %vm102, %v94
    %158 = vst.msk [vmem:[#allocation2 + $0x1b8] sm:$0xff] %vm102, %v95
    %159 = vst.msk [vmem:[#allocation2 + $0x1c0] sm:$0xff] %vm102, %v96
    %160 = vst.msk [vmem:[#allocation2 + $0x1c8] sm:$0xff] %vm102, %v97
    %161 = vst.msk [vmem:[#allocation2 + $0x1d0] sm:$0xff] %vm102, %v98
    %162 = vst.msk [vmem:[#allocation2 + $0x1d8] sm:$0xff] %vm102, %v99
    %163 = vst.msk [vmem:[#allocation2 + $0x1e0] sm:$0xff] %vm102, %v100
    %164 = vst.msk [vmem:[#allocation2 + $0x1e8] sm:$0xff] %vm102, %v101
    %v165 = vld [vmem:[%s0 + $0x1] sm:$0xff]
    %v166 = vld [vmem:[%s0 + $0x9] sm:$0xff]
    %v167 = vld [vmem:[%s0 + $0x11] sm:$0xff]
    %v168 = vld [vmem:[%s0 + $0x19] sm:$0xff]
    %v169 = vld [vmem:[%s0 + $0x21] sm:$0xff]
    %v170 = vld [vmem:[%s0 + $0x29] sm:$0xff]
    %v171 = vld [vmem:[%s0 + $0x31] sm:$0xff]
    %v172 = vld [vmem:[%s0 + $0x39] sm:$0xff]
    %v173 = vld [vmem:[%s0 + $0x41] sm:$0xff]
    %v174 = vld [vmem:[%s0 + $0x49] sm:$0xff]
    %v175 = vld [vmem:[%s0 + $0x51] sm:$0xff]
    %v176 = vld [vmem:[%s0 + $0x59] sm:$0xff]
    %v177 = vld [vmem:[%s0 + $0x61] sm:$0xff]
    %v178 = vld [vmem:[%s0 + $0x69] sm:$0xff]
    %v179 = vld [vmem:[%s0 + $0x71] sm:$0xff]
    %v180 = vld [vmem:[%s0 + $0x79] sm:$0xff]
    %v181 = vld [vmem:[%s0 + $0x81] sm:$0xff]
    %v182 = vld [vmem:[%s0 + $0x89] sm:$0xff]
    %v183 = vld [vmem:[%s0 + $0x91] sm:$0xff]
    %v184 = vld [vmem:[%s0 + $0x99] sm:$0xff]
    %v185 = vld [vmem:[%s0 + $0xa1] sm:$0xff]
    %v186 = vld [vmem:[%s0 + $0xa9] sm:$0xff]
    %v187 = vld [vmem:[%s0 + $0xb1] sm:$0xff]
    %v188 = vld [vmem:[%s0 + $0xb9] sm:$0xff]
    %v189 = vld [vmem:[%s0 + $0xc1] sm:$0xff]
    %v190 = vld [vmem:[%s0 + $0xc9] sm:$0xff]
    %v191 = vld [vmem:[%s0 + $0xd1] sm:$0xff]
    %v192 = vld [vmem:[%s0 + $0xd9] sm:$0xff]
    %v193 = vld [vmem:[%s0 + $0xe1] sm:$0xff]
    %v194 = vld [vmem:[%s0 + $0xe9] sm:$0xff]
    %v195 = vld [vmem:[%s0 + $0xf1] sm:$0xff]
    %v196 = vld [vmem:[%s0 + $0xf9] sm:$0xff]
    %v197 = vld [vmem:[%s0 + $0x101] sm:$0xff]
    %v198 = vld [vmem:[%s0 + $0x109] sm:$0xff]
    %v199 = vld [vmem:[%s0 + $0x111] sm:$0xff]
    %v200 = vld [vmem:[%s0 + $0x119] sm:$0xff]
    %v201 = vld [vmem:[%s0 + $0x121] sm:$0xff]
    %v202 = vld [vmem:[%s0 + $0x129] sm:$0xff]
    %v203 = vld [vmem:[%s0 + $0x131] sm:$0xff]
    %v204 = vld [vmem:[%s0 + $0x139] sm:$0xff]
    %v205 = vld [vmem:[%s0 + $0x141] sm:$0xff]
    %v206 = vld [vmem:[%s0 + $0x149] sm:$0xff]
    %v207 = vld [vmem:[%s0 + $0x151] sm:$0xff]
    %v208 = vld [vmem:[%s0 + $0x159] sm:$0xff]
    %v209 = vld [vmem:[%s0 + $0x161] sm:$0xff]
    %v210 = vld [vmem:[%s0 + $0x169] sm:$0xff]
    %v211 = vld [vmem:[%s0 + $0x171] sm:$0xff]
    %v212 = vld [vmem:[%s0 + $0x179] sm:$0xff]
    %v213 = vld [vmem:[%s0 + $0x181] sm:$0xff]
    %v214 = vld [vmem:[%s0 + $0x189] sm:$0xff]
    %v215 = vld [vmem:[%s0 + $0x191] sm:$0xff]
    %v216 = vld [vmem:[%s0 + $0x199] sm:$0xff]
    %v217 = vld [vmem:[%s0 + $0x1a1] sm:$0xff]
    %v218 = vld [vmem:[%s0 + $0x1a9] sm:$0xff]
    %v219 = vld [vmem:[%s0 + $0x1b1] sm:$0xff]
    %v220 = vld [vmem:[%s0 + $0x1b9] sm:$0xff]
    %v221 = vld [vmem:[%s0 + $0x1c1] sm:$0xff]
    %v222 = vld [vmem:[%s0 + $0x1c9] sm:$0xff]
    %v223 = vld [vmem:[%s0 + $0x1d1] sm:$0xff]
    %v224 = vld [vmem:[%s0 + $0x1d9] sm:$0xff]
    %v225 = vld [vmem:[%s0 + $0x1e1] sm:$0xff]
    %v226 = vld [vmem:[%s0 + $0x1e9] sm:$0xff]
    %289 = vrot.lane.b32.xlu0 %v165, 16
    %v290 = vpop.permute.xlu0 %289
    %291 = vrot.lane.b32.xlu0 %v166, 16
    %v292 = vpop.permute.xlu0 %291
    %293 = vrot.lane.b32.xlu0 %v167, 16
    %v294 = vpop.permute.xlu0 %293
    %295 = vrot.lane.b32.xlu0 %v168, 16
    %v296 = vpop.permute.xlu0 %295
    %297 = vrot.lane.b32.xlu0 %v169, 16
    %v298 = vpop.permute.xlu0 %297
    %299 = vrot.lane.b32.xlu0 %v170, 16
    %v300 = vpop.permute.xlu0 %299
    %301 = vrot.lane.b32.xlu0 %v171, 16
    %v302 = vpop.permute.xlu0 %301
    %303 = vrot.lane.b32.xlu0 %v172, 16
    %v304 = vpop.permute.xlu0 %303
    %305 = vrot.lane.b32.xlu0 %v173, 16
    %v306 = vpop.permute.xlu0 %305
    %307 = vrot.lane.b32.xlu0 %v174, 16
    %v308 = vpop.permute.xlu0 %307
    %309 = vrot.lane.b32.xlu0 %v175, 16
    %v310 = vpop.permute.xlu0 %309
    %311 = vrot.lane.b32.xlu0 %v176, 16
    %v312 = vpop.permute.xlu0 %311
    %313 = vrot.lane.b32.xlu0 %v177, 16
    %v314 = vpop.permute.xlu0 %313
    %315 = vrot.lane.b32.xlu0 %v178, 16
    %v316 = vpop.permute.xlu0 %315
    %317 = vrot.lane.b32.xlu0 %v179, 16
    %v318 = vpop.permute.xlu0 %317
    %319 = vrot.lane.b32.xlu0 %v180, 16
    %v320 = vpop.permute.xlu0 %319
    %321 = vrot.lane.b32.xlu0 %v181, 16
    %v322 = vpop.permute.xlu0 %321
    %323 = vrot.lane.b32.xlu0 %v182, 16
    %v324 = vpop.permute.xlu0 %323
    %325 = vrot.lane.b32.xlu0 %v183, 16
    %v326 = vpop.permute.xlu0 %325
    %327 = vrot.lane.b32.xlu0 %v184, 16
    %v328 = vpop.permute.xlu0 %327
    %329 = vrot.lane.b32.xlu0 %v185, 16
    %v330 = vpop.permute.xlu0 %329
    %331 = vrot.lane.b32.xlu0 %v186, 16
    %v332 = vpop.permute.xlu0 %331
    %333 = vrot.lane.b32.xlu0 %v187, 16
    %v334 = vpop.permute.xlu0 %333
    %335 = vrot.lane.b32.xlu0 %v188, 16
    %v336 = vpop.permute.xlu0 %335
    %337 = vrot.lane.b32.xlu0 %v189, 16
    %v338 = vpop.permute.xlu0 %337
    %339 = vrot.lane.b32.xlu0 %v190, 16
    %v340 = vpop.permute.xlu0 %339
    %341 = vrot.lane.b32.xlu0 %v191, 16
    %v342 = vpop.permute.xlu0 %341
    %343 = vrot.lane.b32.xlu0 %v192, 16
    %v344 = vpop.permute.xlu0 %343
    %345 = vrot.lane.b32.xlu0 %v193, 16
    %v346 = vpop.permute.xlu0 %345
    %347 = vrot.lane.b32.xlu0 %v194, 16
    %v348 = vpop.permute.xlu0 %347
    %349 = vrot.lane.b32.xlu0 %v195, 16
    %v350 = vpop.permute.xlu0 %349
    %351 = vrot.lane.b32.xlu0 %v196, 16
    %v352 = vpop.permute.xlu0 %351
    %353 = vrot.lane.b32.xlu0 %v197, 16
    %v354 = vpop.permute.xlu0 %353
    %355 = vrot.lane.b32.xlu0 %v198, 16
    %v356 = vpop.permute.xlu0 %355
    %357 = vrot.lane.b32.xlu0 %v199, 16
    %v358 = vpop.permute.xlu0 %357
    %359 = vrot.lane.b32.xlu0 %v200, 16
    %v360 = vpop.permute.xlu0 %359
    %361 = vrot.lane.b32.xlu0 %v201, 16
    %v362 = vpop.permute.xlu0 %361
    %363 = vrot.lane.b32.xlu0 %v202, 16
    %v364 = vpop.permute.xlu0 %363
    %365 = vrot.lane.b32.xlu0 %v203, 16
    %v366 = vpop.permute.xlu0 %365
    %367 = vrot.lane.b32.xlu0 %v204, 16
    %v368 = vpop.permute.xlu0 %367
    %369 = vrot.lane.b32.xlu0 %v205, 16
    %v370 = vpop.permute.xlu0 %369
    %371 = vrot.lane.b32.xlu0 %v206, 16
    %v372 = vpop.permute.xlu0 %371
    %373 = vrot.lane.b32.xlu0 %v207, 16
    %v374 = vpop.permute.xlu0 %373
    %375 = vrot.lane.b32.xlu0 %v208, 16
    %v376 = vpop.permute.xlu0 %375
    %377 = vrot.lane.b32.xlu0 %v209, 16
    %v378 = vpop.permute.xlu0 %377
    %379 = vrot.lane.b32.xlu0 %v210, 16
    %v380 = vpop.permute.xlu0 %379
    %381 = vrot.lane.b32.xlu0 %v211, 16
    %v382 = vpop.permute.xlu0 %381
    %383 = vrot.lane.b32.xlu0 %v212, 16
    %v384 = vpop.permute.xlu0 %383
    %385 = vrot.lane.b32.xlu0 %v213, 16
    %v386 = vpop.permute.xlu0 %385
    %387 = vrot.lane.b32.xlu0 %v214, 16
    %v388 = vpop.permute.xlu0 %387
    %389 = vrot.lane.b32.xlu0 %v215, 16
    %v390 = vpop.permute.xlu0 %389
    %391 = vrot.lane.b32.xlu0 %v216, 16
    %v392 = vpop.permute.xlu0 %391
    %393 = vrot.lane.b32.xlu0 %v217, 16
    %v394 = vpop.permute.xlu0 %393
    %395 = vrot.lane.b32.xlu0 %v218, 16
    %v396 = vpop.permute.xlu0 %395
    %397 = vrot.lane.b32.xlu0 %v219, 16
    %v398 = vpop.permute.xlu0 %397
    %399 = vrot.lane.b32.xlu0 %v220, 16
    %v400 = vpop.permute.xlu0 %399
    %401 = vrot.lane.b32.xlu0 %v221, 16
    %v402 = vpop.permute.xlu0 %401
    %403 = vrot.lane.b32.xlu0 %v222, 16
    %v404 = vpop.permute.xlu0 %403
    %405 = vrot.lane.b32.xlu0 %v223, 16
    %v406 = vpop.permute.xlu0 %405
    %407 = vrot.lane.b32.xlu0 %v224, 16
    %v408 = vpop.permute.xlu0 %407
    %409 = vrot.lane.b32.xlu0 %v225, 16
    %v410 = vpop.permute.xlu0 %409
    %411 = vrot.lane.b32.xlu0 %v226, 16
    %v412 = vpop.permute.xlu0 %411
    %vm475 = vcmask 261248
    %476 = vst.msk [vmem:[#allocation2] sm:$0xff] %vm475, %v290
    %477 = vst.msk [vmem:[#allocation2 + $0x8] sm:$0xff] %vm475, %v292
    %478 = vst.msk [vmem:[#allocation2 + $0x10] sm:$0xff] %vm475, %v294
    %479 = vst.msk [vmem:[#allocation2 + $0x18] sm:$0xff] %vm475, %v296
    %480 = vst.msk [vmem:[#allocation2 + $0x20] sm:$0xff] %vm475, %v298
    %481 = vst.msk [vmem:[#allocation2 + $0x28] sm:$0xff] %vm475, %v300
    %482 = vst.msk [vmem:[#allocation2 + $0x30] sm:$0xff] %vm475, %v302
    %483 = vst.msk [vmem:[#allocation2 + $0x38] sm:$0xff] %vm475, %v304
    %484 = vst.msk [vmem:[#allocation2 + $0x40] sm:$0xff] %vm475, %v306
    %485 = vst.msk [vmem:[#allocation2 + $0x48] sm:$0xff] %vm475, %v308
    %486 = vst.msk [vmem:[#allocation2 + $0x50] sm:$0xff] %vm475, %v310
    %487 = vst.msk [vmem:[#allocation2 + $0x58] sm:$0xff] %vm475, %v312
    %488 = vst.msk [vmem:[#allocation2 + $0x60] sm:$0xff] %vm475, %v314
    %489 = vst.msk [vmem:[#allocation2 + $0x68] sm:$0xff] %vm475, %v316
    %490 = vst.msk [vmem:[#allocation2 + $0x70] sm:$0xff] %vm475, %v318
    %491 = vst.msk [vmem:[#allocation2 + $0x78] sm:$0xff] %vm475, %v320
    %492 = vst.msk [vmem:[#allocation2 + $0x80] sm:$0xff] %vm475, %v322
    %493 = vst.msk [vmem:[#allocation2 + $0x88] sm:$0xff] %vm475, %v324
    %494 = vst.msk [vmem:[#allocation2 + $0x90] sm:$0xff] %vm475, %v326
    %495 = vst.msk [vmem:[#allocation2 + $0x98] sm:$0xff] %vm475, %v328
    %496 = vst.msk [vmem:[#allocation2 + $0xa0] sm:$0xff] %vm475, %v330
    %497 = vst.msk [vmem:[#allocation2 + $0xa8] sm:$0xff] %vm475, %v332
    %498 = vst.msk [vmem:[#allocation2 + $0xb0] sm:$0xff] %vm475, %v334
    %499 = vst.msk [vmem:[#allocation2 + $0xb8] sm:$0xff] %vm475, %v336
    %500 = vst.msk [vmem:[#allocation2 + $0xc0] sm:$0xff] %vm475, %v338
    %501 = vst.msk [vmem:[#allocation2 + $0xc8] sm:$0xff] %vm475, %v340
    %502 = vst.msk [vmem:[#allocation2 + $0xd0] sm:$0xff] %vm475, %v342
    %503 = vst.msk [vmem:[#allocation2 + $0xd8] sm:$0xff] %vm475, %v344
    %504 = vst.msk [vmem:[#allocation2 + $0xe0] sm:$0xff] %vm475, %v346
    %505 = vst.msk [vmem:[#allocation2 + $0xe8] sm:$0xff] %vm475, %v348
    %506 = vst.msk [vmem:[#allocation2 + $0xf0] sm:$0xff] %vm475, %v350
    %507 = vst.msk [vmem:[#allocation2 + $0xf8] sm:$0xff] %vm475, %v352
    %508 = vst.msk [vmem:[#allocation2 + $0x100] sm:$0xff] %vm475, %v354
    %509 = vst.msk [vmem:[#allocation2 + $0x108] sm:$0xff] %vm475, %v356
    %510 = vst.msk [vmem:[#allocation2 + $0x110] sm:$0xff] %vm475, %v358
    %511 = vst.msk [vmem:[#allocation2 + $0x118] sm:$0xff] %vm475, %v360
    %512 = vst.msk [vmem:[#allocation2 + $0x120] sm:$0xff] %vm475, %v362
    %513 = vst.msk [vmem:[#allocation2 + $0x128] sm:$0xff] %vm475, %v364
    %514 = vst.msk [vmem:[#allocation2 + $0x130] sm:$0xff] %vm475, %v366
    %515 = vst.msk [vmem:[#allocation2 + $0x138] sm:$0xff] %vm475, %v368
    %516 = vst.msk [vmem:[#allocation2 + $0x140] sm:$0xff] %vm475, %v370
    %517 = vst.msk [vmem:[#allocation2 + $0x148] sm:$0xff] %vm475, %v372
    %518 = vst.msk [vmem:[#allocation2 + $0x150] sm:$0xff] %vm475, %v374
    %519 = vst.msk [vmem:[#allocation2 + $0x158] sm:$0xff] %vm475, %v376
    %520 = vst.msk [vmem:[#allocation2 + $0x160] sm:$0xff] %vm475, %v378
    %521 = vst.msk [vmem:[#allocation2 + $0x168] sm:$0xff] %vm475, %v380
    %522 = vst.msk [vmem:[#allocation2 + $0x170] sm:$0xff] %vm475, %v382
    %523 = vst.msk [vmem:[#allocation2 + $0x178] sm:$0xff] %vm475, %v384
    %524 = vst.msk [vmem:[#allocation2 + $0x180] sm:$0xff] %vm475, %v386
    %525 = vst.msk [vmem:[#allocation2 + $0x188] sm:$0xff] %vm475, %v388
    %526 = vst.msk [vmem:[#allocation2 + $0x190] sm:$0xff] %vm475, %v390
    %527 = vst.msk [vmem:[#allocation2 + $0x198] sm:$0xff] %vm475, %v392
    %528 = vst.msk [vmem:[#allocation2 + $0x1a0] sm:$0xff] %vm475, %v394
    %529 = vst.msk [vmem:[#allocation2 + $0x1a8] sm:$0xff] %vm475, %v396
    %530 = vst.msk [vmem:[#allocation2 + $0x1b0] sm:$0xff] %vm475, %v398
    %531 = vst.msk [vmem:[#allocation2 + $0x1b8] sm:$0xff] %vm475, %v400
    %532 = vst.msk [vmem:[#allocation2 + $0x1c0] sm:$0xff] %vm475, %v402
    %533 = vst.msk [vmem:[#allocation2 + $0x1c8] sm:$0xff] %vm475, %v404
    %534 = vst.msk [vmem:[#allocation2 + $0x1d0] sm:$0xff] %vm475, %v406
    %535 = vst.msk [vmem:[#allocation2 + $0x1d8] sm:$0xff] %vm475, %v408
    %536 = vst.msk [vmem:[#allocation2 + $0x1e0] sm:$0xff] %vm475, %v410
    %537 = vst.msk [vmem:[#allocation2 + $0x1e8] sm:$0xff] %vm475, %v412
    %v538 = vld [vmem:[%s0 + $0x2] sm:$0xff]
    %v539 = vld [vmem:[%s0 + $0xa] sm:$0xff]
    %v540 = vld [vmem:[%s0 + $0x12] sm:$0xff]
    %v541 = vld [vmem:[%s0 + $0x1a] sm:$0xff]
    %v542 = vld [vmem:[%s0 + $0x22] sm:$0xff]
    %v543 = vld [vmem:[%s0 + $0x2a] sm:$0xff]
    %v544 = vld [vmem:[%s0 + $0x32] sm:$0xff]
    %v545 = vld [vmem:[%s0 + $0x3a] sm:$0xff]
    %v546 = vld [vmem:[%s0 + $0x42] sm:$0xff]
    %v547 = vld [vmem:[%s0 + $0x4a] sm:$0xff]
    %v548 = vld [vmem:[%s0 + $0x52] sm:$0xff]
    %v549 = vld [vmem:[%s0 + $0x5a] sm:$0xff]
    %v550 = vld [vmem:[%s0 + $0x62] sm:$0xff]
    %v551 = vld [vmem:[%s0 + $0x6a] sm:$0xff]
    %v552 = vld [vmem:[%s0 + $0x72] sm:$0xff]
    %v553 = vld [vmem:[%s0 + $0x7a] sm:$0xff]
    %v554 = vld [vmem:[%s0 + $0x82] sm:$0xff]
    %v555 = vld [vmem:[%s0 + $0x8a] sm:$0xff]
    %v556 = vld [vmem:[%s0 + $0x92] sm:$0xff]
    %v557 = vld [vmem:[%s0 + $0x9a] sm:$0xff]
    %v558 = vld [vmem:[%s0 + $0xa2] sm:$0xff]
    %v559 = vld [vmem:[%s0 + $0xaa] sm:$0xff]
    %v560 = vld [vmem:[%s0 + $0xb2] sm:$0xff]
    %v561 = vld [vmem:[%s0 + $0xba] sm:$0xff]
    %v562 = vld [vmem:[%s0 + $0xc2] sm:$0xff]
    %v563 = vld [vmem:[%s0 + $0xca] sm:$0xff]
    %v564 = vld [vmem:[%s0 + $0xd2] sm:$0xff]
    %v565 = vld [vmem:[%s0 + $0xda] sm:$0xff]
    %v566 = vld [vmem:[%s0 + $0xe2] sm:$0xff]
    %v567 = vld [vmem:[%s0 + $0xea] sm:$0xff]
    %v568 = vld [vmem:[%s0 + $0xf2] sm:$0xff]
    %v569 = vld [vmem:[%s0 + $0xfa] sm:$0xff]
    %v570 = vld [vmem:[%s0 + $0x102] sm:$0xff]
    %v571 = vld [vmem:[%s0 + $0x10a] sm:$0xff]
    %v572 = vld [vmem:[%s0 + $0x112] sm:$0xff]
    %v573 = vld [vmem:[%s0 + $0x11a] sm:$0xff]
    %v574 = vld [vmem:[%s0 + $0x122] sm:$0xff]
    %v575 = vld [vmem:[%s0 + $0x12a] sm:$0xff]
    %v576 = vld [vmem:[%s0 + $0x132] sm:$0xff]
    %v577 = vld [vmem:[%s0 + $0x13a] sm:$0xff]
    %v578 = vld [vmem:[%s0 + $0x142] sm:$0xff]
    %v579 = vld [vmem:[%s0 + $0x14a] sm:$0xff]
    %v580 = vld [vmem:[%s0 + $0x152] sm:$0xff]
    %v581 = vld [vmem:[%s0 + $0x15a] sm:$0xff]
    %v582 = vld [vmem:[%s0 + $0x162] sm:$0xff]
    %v583 = vld [vmem:[%s0 + $0x16a] sm:$0xff]
    %v584 = vld [vmem:[%s0 + $0x172] sm:$0xff]
    %v585 = vld [vmem:[%s0 + $0x17a] sm:$0xff]
    %v586 = vld [vmem:[%s0 + $0x182] sm:$0xff]
    %v587 = vld [vmem:[%s0 + $0x18a] sm:$0xff]
    %v588 = vld [vmem:[%s0 + $0x192] sm:$0xff]
    %v589 = vld [vmem:[%s0 + $0x19a] sm:$0xff]
    %v590 = vld [vmem:[%s0 + $0x1a2] sm:$0xff]
    %v591 = vld [vmem:[%s0 + $0x1aa] sm:$0xff]
    %v592 = vld [vmem:[%s0 + $0x1b2] sm:$0xff]
    %v593 = vld [vmem:[%s0 + $0x1ba] sm:$0xff]
    %v594 = vld [vmem:[%s0 + $0x1c2] sm:$0xff]
    %v595 = vld [vmem:[%s0 + $0x1ca] sm:$0xff]
    %v596 = vld [vmem:[%s0 + $0x1d2] sm:$0xff]
    %v597 = vld [vmem:[%s0 + $0x1da] sm:$0xff]
    %v598 = vld [vmem:[%s0 + $0x1e2] sm:$0xff]
    %v599 = vld [vmem:[%s0 + $0x1ea] sm:$0xff]
    %662 = vrot.lane.b32.xlu0 %v538, 32
    %v663 = vpop.permute.xlu0 %662
    %664 = vrot.lane.b32.xlu0 %v539, 32
    %v665 = vpop.permute.xlu0 %664
    %666 = vrot.lane.b32.xlu0 %v540, 32
    %v667 = vpop.permute.xlu0 %666
    %668 = vrot.lane.b32.xlu0 %v541, 32
    %v669 = vpop.permute.xlu0 %668
    %670 = vrot.lane.b32.xlu0 %v542, 32
    %v671 = vpop.permute.xlu0 %670
    %672 = vrot.lane.b32.xlu0 %v543, 32
    %v673 = vpop.permute.xlu0 %672
    %674 = vrot.lane.b32.xlu0 %v544, 32
    %v675 = vpop.permute.xlu0 %674
    %676 = vrot.lane.b32.xlu0 %v545, 32
    %v677 = vpop.permute.xlu0 %676
    %678 = vrot.lane.b32.xlu0 %v546, 32
    %v679 = vpop.permute.xlu0 %678
    %680 = vrot.lane.b32.xlu0 %v547, 32
    %v681 = vpop.permute.xlu0 %680
    %682 = vrot.lane.b32.xlu0 %v548, 32
    %v683 = vpop.permute.xlu0 %682
    %684 = vrot.lane.b32.xlu0 %v549, 32
    %v685 = vpop.permute.xlu0 %684
    %686 = vrot.lane.b32.xlu0 %v550, 32
    %v687 = vpop.permute.xlu0 %686
    %688 = vrot.lane.b32.xlu0 %v551, 32
    %v689 = vpop.permute.xlu0 %688
    %690 = vrot.lane.b32.xlu0 %v552, 32
    %v691 = vpop.permute.xlu0 %690
    %692 = vrot.lane.b32.xlu0 %v553, 32
    %v693 = vpop.permute.xlu0 %692
    %694 = vrot.lane.b32.xlu0 %v554, 32
    %v695 = vpop.permute.xlu0 %694
    %696 = vrot.lane.b32.xlu0 %v555, 32
    %v697 = vpop.permute.xlu0 %696
    %698 = vrot.lane.b32.xlu0 %v556, 32
    %v699 = vpop.permute.xlu0 %698
    %700 = vrot.lane.b32.xlu0 %v557, 32
    %v701 = vpop.permute.xlu0 %700
    %702 = vrot.lane.b32.xlu0 %v558, 32
    %v703 = vpop.permute.xlu0 %702
    %704 = vrot.lane.b32.xlu0 %v559, 32
    %v705 = vpop.permute.xlu0 %704
    %706 = vrot.lane.b32.xlu0 %v560, 32
    %v707 = vpop.permute.xlu0 %706
    %708 = vrot.lane.b32.xlu0 %v561, 32
    %v709 = vpop.permute.xlu0 %708
    %710 = vrot.lane.b32.xlu0 %v562, 32
    %v711 = vpop.permute.xlu0 %710
    %712 = vrot.lane.b32.xlu0 %v563, 32
    %v713 = vpop.permute.xlu0 %712
    %714 = vrot.lane.b32.xlu0 %v564, 32
    %v715 = vpop.permute.xlu0 %714
    %716 = vrot.lane.b32.xlu0 %v565, 32
    %v717 = vpop.permute.xlu0 %716
    %718 = vrot.lane.b32.xlu0 %v566, 32
    %v719 = vpop.permute.xlu0 %718
    %720 = vrot.lane.b32.xlu0 %v567, 32
    %v721 = vpop.permute.xlu0 %720
    %722 = vrot.lane.b32.xlu0 %v568, 32
    %v723 = vpop.permute.xlu0 %722
    %724 = vrot.lane.b32.xlu0 %v569, 32
    %v725 = vpop.permute.xlu0 %724
    %726 = vrot.lane.b32.xlu0 %v570, 32
    %v727 = vpop.permute.xlu0 %726
    %728 = vrot.lane.b32.xlu0 %v571, 32
    %v729 = vpop.permute.xlu0 %728
    %730 = vrot.lane.b32.xlu0 %v572, 32
    %v731 = vpop.permute.xlu0 %730
    %732 = vrot.lane.b32.xlu0 %v573, 32
    %v733 = vpop.permute.xlu0 %732
    %734 = vrot.lane.b32.xlu0 %v574, 32
    %v735 = vpop.permute.xlu0 %734
    %736 = vrot.lane.b32.xlu0 %v575, 32
    %v737 = vpop.permute.xlu0 %736
    %738 = vrot.lane.b32.xlu0 %v576, 32
    %v739 = vpop.permute.xlu0 %738
    %740 = vrot.lane.b32.xlu0 %v577, 32
    %v741 = vpop.permute.xlu0 %740
    %742 = vrot.lane.b32.xlu0 %v578, 32
    %v743 = vpop.permute.xlu0 %742
    %744 = vrot.lane.b32.xlu0 %v579, 32
    %v745 = vpop.permute.xlu0 %744
    %746 = vrot.lane.b32.xlu0 %v580, 32
    %v747 = vpop.permute.xlu0 %746
    %748 = vrot.lane.b32.xlu0 %v581, 32
    %v749 = vpop.permute.xlu0 %748
    %750 = vrot.lane.b32.xlu0 %v582, 32
    %v751 = vpop.permute.xlu0 %750
    %752 = vrot.lane.b32.xlu0 %v583, 32
    %v753 = vpop.permute.xlu0 %752
    %754 = vrot.lane.b32.xlu0 %v584, 32
    %v755 = vpop.permute.xlu0 %754
    %756 = vrot.lane.b32.xlu0 %v585, 32
    %v757 = vpop.permute.xlu0 %756
    %758 = vrot.lane.b32.xlu0 %v586, 32
    %v759 = vpop.permute.xlu0 %758
    %760 = vrot.lane.b32.xlu0 %v587, 32
    %v761 = vpop.permute.xlu0 %760
    %762 = vrot.lane.b32.xlu0 %v588, 32
    %v763 = vpop.permute.xlu0 %762
    %764 = vrot.lane.b32.xlu0 %v589, 32
    %v765 = vpop.permute.xlu0 %764
    %766 = vrot.lane.b32.xlu0 %v590, 32
    %v767 = vpop.permute.xlu0 %766
    %768 = vrot.lane.b32.xlu0 %v591, 32
    %v769 = vpop.permute.xlu0 %768
    %770 = vrot.lane.b32.xlu0 %v592, 32
    %v771 = vpop.permute.xlu0 %770
    %772 = vrot.lane.b32.xlu0 %v593, 32
    %v773 = vpop.permute.xlu0 %772
    %774 = vrot.lane.b32.xlu0 %v594, 32
    %v775 = vpop.permute.xlu0 %774
    %776 = vrot.lane.b32.xlu0 %v595, 32
    %v777 = vpop.permute.xlu0 %776
    %778 = vrot.lane.b32.xlu0 %v596, 32
    %v779 = vpop.permute.xlu0 %778
    %780 = vrot.lane.b32.xlu0 %v597, 32
    %v781 = vpop.permute.xlu0 %780
    %782 = vrot.lane.b32.xlu0 %v598, 32
    %v783 = vpop.permute.xlu0 %782
    %784 = vrot.lane.b32.xlu0 %v599, 32
    %v785 = vpop.permute.xlu0 %784
    %vm848 = vcmask 392448
    %849 = vst.msk [vmem:[#allocation2] sm:$0xff] %vm848, %v663
    %850 = vst.msk [vmem:[#allocation2 + $0x8] sm:$0xff] %vm848, %v665
    %851 = vst.msk [vmem:[#allocation2 + $0x10] sm:$0xff] %vm848, %v667
    %852 = vst.msk [vmem:[#allocation2 + $0x18] sm:$0xff] %vm848, %v669
    %853 = vst.msk [vmem:[#allocation2 + $0x20] sm:$0xff] %vm848, %v671
    %854 = vst.msk [vmem:[#allocation2 + $0x28] sm:$0xff] %vm848, %v673
    %855 = vst.msk [vmem:[#allocation2 + $0x30] sm:$0xff] %vm848, %v675
    %856 = vst.msk [vmem:[#allocation2 + $0x38] sm:$0xff] %vm848, %v677
    %857 = vst.msk [vmem:[#allocation2 + $0x40] sm:$0xff] %vm848, %v679
    %858 = vst.msk [vmem:[#allocation2 + $0x48] sm:$0xff] %vm848, %v681
    %859 = vst.msk [vmem:[#allocation2 + $0x50] sm:$0xff] %vm848, %v683
    %860 = vst.msk [vmem:[#allocation2 + $0x58] sm:$0xff] %vm848, %v685
    %861 = vst.msk [vmem:[#allocation2 + $0x60] sm:$0xff] %vm848, %v687
    %862 = vst.msk [vmem:[#allocation2 + $0x68] sm:$0xff] %vm848, %v689
    %863 = vst.msk [vmem:[#allocation2 + $0x70] sm:$0xff] %vm848, %v691
    %864 = vst.msk [vmem:[#allocation2 + $0x78] sm:$0xff] %vm848, %v693
    %865 = vst.msk [vmem:[#allocation2 + $0x80] sm:$0xff] %vm848, %v695
    %866 = vst.msk [vmem:[#allocation2 + $0x88] sm:$0xff] %vm848, %v697
    %867 = vst.msk [vmem:[#allocation2 + $0x90] sm:$0xff] %vm848, %v699
    %868 = vst.msk [vmem:[#allocation2 + $0x98] sm:$0xff] %vm848, %v701
    %869 = vst.msk [vmem:[#allocation2 + $0xa0] sm:$0xff] %vm848, %v703
    %870 = vst.msk [vmem:[#allocation2 + $0xa8] sm:$0xff] %vm848, %v705
    %871 = vst.msk [vmem:[#allocation2 + $0xb0] sm:$0xff] %vm848, %v707
    %872 = vst.msk [vmem:[#allocation2 + $0xb8] sm:$0xff] %vm848, %v709
    %873 = vst.msk [vmem:[#allocation2 + $0xc0] sm:$0xff] %vm848, %v711
    %874 = vst.msk [vmem:[#allocation2 + $0xc8] sm:$0xff] %vm848, %v713
    %875 = vst.msk [vmem:[#allocation2 + $0xd0] sm:$0xff] %vm848, %v715
    %876 = vst.msk [vmem:[#allocation2 + $0xd8] sm:$0xff] %vm848, %v717
    %877 = vst.msk [vmem:[#allocation2 + $0xe0] sm:$0xff] %vm848, %v719
    %878 = vst.msk [vmem:[#allocation2 + $0xe8] sm:$0xff] %vm848, %v721
    %879 = vst.msk [vmem:[#allocation2 + $0xf0] sm:$0xff] %vm848, %v723
    %880 = vst.msk [vmem:[#allocation2 + $0xf8] sm:$0xff] %vm848, %v725
    %881 = vst.msk [vmem:[#allocation2 + $0x100] sm:$0xff] %vm848, %v727
    %882 = vst.msk [vmem:[#allocation2 + $0x108] sm:$0xff] %vm848, %v729
    %883 = vst.msk [vmem:[#allocation2 + $0x110] sm:$0xff] %vm848, %v731
    %884 = vst.msk [vmem:[#allocation2 + $0x118] sm:$0xff] %vm848, %v733
    %885 = vst.msk [vmem:[#allocation2 + $0x120] sm:$0xff] %vm848, %v735
    %886 = vst.msk [vmem:[#allocation2 + $0x128] sm:$0xff] %vm848, %v737
    %887 = vst.msk [vmem:[#allocation2 + $0x130] sm:$0xff] %vm848, %v739
    %888 = vst.msk [vmem:[#allocation2 + $0x138] sm:$0xff] %vm848, %v741
    %889 = vst.msk [vmem:[#allocation2 + $0x140] sm:$0xff] %vm848, %v743
    %890 = vst.msk [vmem:[#allocation2 + $0x148] sm:$0xff] %vm848, %v745
    %891 = vst.msk [vmem:[#allocation2 + $0x150] sm:$0xff] %vm848, %v747
    %892 = vst.msk [vmem:[#allocation2 + $0x158] sm:$0xff] %vm848, %v749
    %893 = vst.msk [vmem:[#allocation2 + $0x160] sm:$0xff] %vm848, %v751
    %894 = vst.msk [vmem:[#allocation2 + $0x168] sm:$0xff] %vm848, %v753
    %895 = vst.msk [vmem:[#allocation2 + $0x170] sm:$0xff] %vm848, %v755
    %896 = vst.msk [vmem:[#allocation2 + $0x178] sm:$0xff] %vm848, %v757
    %897 = vst.msk [vmem:[#allocation2 + $0x180] sm:$0xff] %vm848, %v759
    %898 = vst.msk [vmem:[#allocation2 + $0x188] sm:$0xff] %vm848, %v761
    %899 = vst.msk [vmem:[#allocation2 + $0x190] sm:$0xff] %vm848, %v763
    %900 = vst.msk [vmem:[#allocation2 + $0x198] sm:$0xff] %vm848, %v765
    %901 = vst.msk [vmem:[#allocation2 + $0x1a0] sm:$0xff] %vm848, %v767
    %902 = vst.msk [vmem:[#allocation2 + $0x1a8] sm:$0xff] %vm848, %v769
    %903 = vst.msk [vmem:[#allocation2 + $0x1b0] sm:$0xff] %vm848, %v771
    %904 = vst.msk [vmem:[#allocation2 + $0x1b8] sm:$0xff] %vm848, %v773
    %905 = vst.msk [vmem:[#allocation2 + $0x1c0] sm:$0xff] %vm848, %v775
    %906 = vst.msk [vmem:[#allocation2 + $0x1c8] sm:$0xff] %vm848, %v777
    %907 = vst.msk [vmem:[#allocation2 + $0x1d0] sm:$0xff] %vm848, %v779
    %908 = vst.msk [vmem:[#allocation2 + $0x1d8] sm:$0xff] %vm848, %v781
    %909 = vst.msk [vmem:[#allocation2 + $0x1e0] sm:$0xff] %vm848, %v783
    %910 = vst.msk [vmem:[#allocation2 + $0x1e8] sm:$0xff] %vm848, %v785
    %v911 = vld [vmem:[%s0 + $0x3] sm:$0xff]
    %v912 = vld [vmem:[%s0 + $0xb] sm:$0xff]
    %v913 = vld [vmem:[%s0 + $0x13] sm:$0xff]
    %v914 = vld [vmem:[%s0 + $0x1b] sm:$0xff]
    %v915 = vld [vmem:[%s0 + $0x23] sm:$0xff]
    %v916 = vld [vmem:[%s0 + $0x2b] sm:$0xff]
    %v917 = vld [vmem:[%s0 + $0x33] sm:$0xff]
    %v918 = vld [vmem:[%s0 + $0x3b] sm:$0xff]
    %v919 = vld [vmem:[%s0 + $0x43] sm:$0xff]
    %v920 = vld [vmem:[%s0 + $0x4b] sm:$0xff]
    %v921 = vld [vmem:[%s0 + $0x53] sm:$0xff]
    %v922 = vld [vmem:[%s0 + $0x5b] sm:$0xff]
    %v923 = vld [vmem:[%s0 + $0x63] sm:$0xff]
    %v924 = vld [vmem:[%s0 + $0x6b] sm:$0xff]
    %v925 = vld [vmem:[%s0 + $0x73] sm:$0xff]
    %v926 = vld [vmem:[%s0 + $0x7b] sm:$0xff]
    %v927 = vld [vmem:[%s0 + $0x83] sm:$0xff]
    %v928 = vld [vmem:[%s0 + $0x8b] sm:$0xff]
    %v929 = vld [vmem:[%s0 + $0x93] sm:$0xff]
    %v930 = vld [vmem:[%s0 + $0x9b] sm:$0xff]
    %v931 = vld [vmem:[%s0 + $0xa3] sm:$0xff]
    %v932 = vld [vmem:[%s0 + $0xab] sm:$0xff]
    %v933 = vld [vmem:[%s0 + $0xb3] sm:$0xff]
    %v934 = vld [vmem:[%s0 + $0xbb] sm:$0xff]
    %v935 = vld [vmem:[%s0 + $0xc3] sm:$0xff]
    %v936 = vld [vmem:[%s0 + $0xcb] sm:$0xff]
    %v937 = vld [vmem:[%s0 + $0xd3] sm:$0xff]
    %v938 = vld [vmem:[%s0 + $0xdb] sm:$0xff]
    %v939 = vld [vmem:[%s0 + $0xe3] sm:$0xff]
    %v940 = vld [vmem:[%s0 + $0xeb] sm:$0xff]
    %v941 = vld [vmem:[%s0 + $0xf3] sm:$0xff]
    %v942 = vld [vmem:[%s0 + $0xfb] sm:$0xff]
    %v943 = vld [vmem:[%s0 + $0x103] sm:$0xff]
    %v944 = vld [vmem:[%s0 + $0x10b] sm:$0xff]
    %v945 = vld [vmem:[%s0 + $0x113] sm:$0xff]
    %v946 = vld [vmem:[%s0 + $0x11b] sm:$0xff]
    %v947 = vld [vmem:[%s0 + $0x123] sm:$0xff]
    %v948 = vld [vmem:[%s0 + $0x12b] sm:$0xff]
    %v949 = vld [vmem:[%s0 + $0x133] sm:$0xff]
    %v950 = vld [vmem:[%s0 + $0x13b] sm:$0xff]
    %v951 = vld [vmem:[%s0 + $0x143] sm:$0xff]
    %v952 = vld [vmem:[%s0 + $0x14b] sm:$0xff]
    %v953 = vld [vmem:[%s0 + $0x153] sm:$0xff]
    %v954 = vld [vmem:[%s0 + $0x15b] sm:$0xff]
    %v955 = vld [vmem:[%s0 + $0x163] sm:$0xff]
    %v956 = vld [vmem:[%s0 + $0x16b] sm:$0xff]
    %v957 = vld [vmem:[%s0 + $0x173] sm:$0xff]
    %v958 = vld [vmem:[%s0 + $0x17b] sm:$0xff]
    %v959 = vld [vmem:[%s0 + $0x183] sm:$0xff]
    %v960 = vld [vmem:[%s0 + $0x18b] sm:$0xff]
    %v961 = vld [vmem:[%s0 + $0x193] sm:$0xff]
    %v962 = vld [vmem:[%s0 + $0x19b] sm:$0xff]
    %v963 = vld [vmem:[%s0 + $0x1a3] sm:$0xff]
    %v964 = vld [vmem:[%s0 + $0x1ab] sm:$0xff]
    %v965 = vld [vmem:[%s0 + $0x1b3] sm:$0xff]
    %v966 = vld [vmem:[%s0 + $0x1bb] sm:$0xff]
    %v967 = vld [vmem:[%s0 + $0x1c3] sm:$0xff]
    %v968 = vld [vmem:[%s0 + $0x1cb] sm:$0xff]
    %v969 = vld [vmem:[%s0 + $0x1d3] sm:$0xff]
    %v970 = vld [vmem:[%s0 + $0x1db] sm:$0xff]
    %v971 = vld [vmem:[%s0 + $0x1e3] sm:$0xff]
    %v972 = vld [vmem:[%s0 + $0x1eb] sm:$0xff]
    %1035 = vrot.lane.b32.xlu0 %v911, 48
    %v1036 = vpop.permute.xlu0 %1035
    %1037 = vrot.lane.b32.xlu0 %v912, 48
    %v1038 = vpop.permute.xlu0 %1037
    %1039 = vrot.lane.b32.xlu0 %v913, 48
    %v1040 = vpop.permute.xlu0 %1039
    %1041 = vrot.lane.b32.xlu0 %v914, 48
    %v1042 = vpop.permute.xlu0 %1041
    %1043 = vrot.lane.b32.xlu0 %v915, 48
    %v1044 = vpop.permute.xlu0 %1043
    %1045 = vrot.lane.b32.xlu0 %v916, 48
    %v1046 = vpop.permute.xlu0 %1045
    %1047 = vrot.lane.b32.xlu0 %v917, 48
    %v1048 = vpop.permute.xlu0 %1047
    %1049 = vrot.lane.b32.xlu0 %v918, 48
    %v1050 = vpop.permute.xlu0 %1049
    %1051 = vrot.lane.b32.xlu0 %v919, 48
    %v1052 = vpop.permute.xlu0 %1051
    %1053 = vrot.lane.b32.xlu0 %v920, 48
    %v1054 = vpop.permute.xlu0 %1053
    %1055 = vrot.lane.b32.xlu0 %v921, 48
    %v1056 = vpop.permute.xlu0 %1055
    %1057 = vrot.lane.b32.xlu0 %v922, 48
    %v1058 = vpop.permute.xlu0 %1057
    %1059 = vrot.lane.b32.xlu0 %v923, 48
    %v1060 = vpop.permute.xlu0 %1059
    %1061 = vrot.lane.b32.xlu0 %v924, 48
    %v1062 = vpop.permute.xlu0 %1061
    %1063 = vrot.lane.b32.xlu0 %v925, 48
    %v1064 = vpop.permute.xlu0 %1063
    %1065 = vrot.lane.b32.xlu0 %v926, 48
    %v1066 = vpop.permute.xlu0 %1065
    %1067 = vrot.lane.b32.xlu0 %v927, 48
    %v1068 = vpop.permute.xlu0 %1067
    %1069 = vrot.lane.b32.xlu0 %v928, 48
    %v1070 = vpop.permute.xlu0 %1069
    %1071 = vrot.lane.b32.xlu0 %v929, 48
    %v1072 = vpop.permute.xlu0 %1071
    %1073 = vrot.lane.b32.xlu0 %v930, 48
    %v1074 = vpop.permute.xlu0 %1073
    %1075 = vrot.lane.b32.xlu0 %v931, 48
    %v1076 = vpop.permute.xlu0 %1075
    %1077 = vrot.lane.b32.xlu0 %v932, 48
    %v1078 = vpop.permute.xlu0 %1077
    %1079 = vrot.lane.b32.xlu0 %v933, 48
    %v1080 = vpop.permute.xlu0 %1079
    %1081 = vrot.lane.b32.xlu0 %v934, 48
    %v1082 = vpop.permute.xlu0 %1081
    %1083 = vrot.lane.b32.xlu0 %v935, 48
    %v1084 = vpop.permute.xlu0 %1083
    %1085 = vrot.lane.b32.xlu0 %v936, 48
    %v1086 = vpop.permute.xlu0 %1085
    %1087 = vrot.lane.b32.xlu0 %v937, 48
    %v1088 = vpop.permute.xlu0 %1087
    %1089 = vrot.lane.b32.xlu0 %v938, 48
    %v1090 = vpop.permute.xlu0 %1089
    %1091 = vrot.lane.b32.xlu0 %v939, 48
    %v1092 = vpop.permute.xlu0 %1091
    %1093 = vrot.lane.b32.xlu0 %v940, 48
    %v1094 = vpop.permute.xlu0 %1093
    %1095 = vrot.lane.b32.xlu0 %v941, 48
    %v1096 = vpop.permute.xlu0 %1095
    %1097 = vrot.lane.b32.xlu0 %v942, 48
    %v1098 = vpop.permute.xlu0 %1097
    %1099 = vrot.lane.b32.xlu0 %v943, 48
    %v1100 = vpop.permute.xlu0 %1099
    %1101 = vrot.lane.b32.xlu0 %v944, 48
    %v1102 = vpop.permute.xlu0 %1101
    %1103 = vrot.lane.b32.xlu0 %v945, 48
    %v1104 = vpop.permute.xlu0 %1103
    %1105 = vrot.lane.b32.xlu0 %v946, 48
    %v1106 = vpop.permute.xlu0 %1105
    %1107 = vrot.lane.b32.xlu0 %v947, 48
    %v1108 = vpop.permute.xlu0 %1107
    %1109 = vrot.lane.b32.xlu0 %v948, 48
    %v1110 = vpop.permute.xlu0 %1109
    %1111 = vrot.lane.b32.xlu0 %v949, 48
    %v1112 = vpop.permute.xlu0 %1111
    %1113 = vrot.lane.b32.xlu0 %v950, 48
    %v1114 = vpop.permute.xlu0 %1113
    %1115 = vrot.lane.b32.xlu0 %v951, 48
    %v1116 = vpop.permute.xlu0 %1115
    %1117 = vrot.lane.b32.xlu0 %v952, 48
    %v1118 = vpop.permute.xlu0 %1117
    %1119 = vrot.lane.b32.xlu0 %v953, 48
    %v1120 = vpop.permute.xlu0 %1119
    %1121 = vrot.lane.b32.xlu0 %v954, 48
    %v1122 = vpop.permute.xlu0 %1121
    %1123 = vrot.lane.b32.xlu0 %v955, 48
    %v1124 = vpop.permute.xlu0 %1123
    %1125 = vrot.lane.b32.xlu0 %v956, 48
    %v1126 = vpop.permute.xlu0 %1125
    %1127 = vrot.lane.b32.xlu0 %v957, 48
    %v1128 = vpop.permute.xlu0 %1127
    %1129 = vrot.lane.b32.xlu0 %v958, 48
    %v1130 = vpop.permute.xlu0 %1129
    %1131 = vrot.lane.b32.xlu0 %v959, 48
    %v1132 = vpop.permute.xlu0 %1131
    %1133 = vrot.lane.b32.xlu0 %v960, 48
    %v1134 = vpop.permute.xlu0 %1133
    %1135 = vrot.lane.b32.xlu0 %v961, 48
    %v1136 = vpop.permute.xlu0 %1135
    %1137 = vrot.lane.b32.xlu0 %v962, 48
    %v1138 = vpop.permute.xlu0 %1137
    %1139 = vrot.lane.b32.xlu0 %v963, 48
    %v1140 = vpop.permute.xlu0 %1139
    %1141 = vrot.lane.b32.xlu0 %v964, 48
    %v1142 = vpop.permute.xlu0 %1141
    %1143 = vrot.lane.b32.xlu0 %v965, 48
    %v1144 = vpop.permute.xlu0 %1143
    %1145 = vrot.lane.b32.xlu0 %v966, 48
    %v1146 = vpop.permute.xlu0 %1145
    %1147 = vrot.lane.b32.xlu0 %v967, 48
    %v1148 = vpop.permute.xlu0 %1147
    %1149 = vrot.lane.b32.xlu0 %v968, 48
    %v1150 = vpop.permute.xlu0 %1149
    %1151 = vrot.lane.b32.xlu0 %v969, 48
    %v1152 = vpop.permute.xlu0 %1151
    %1153 = vrot.lane.b32.xlu0 %v970, 48
    %v1154 = vpop.permute.xlu0 %1153
    %1155 = vrot.lane.b32.xlu0 %v971, 48
    %v1156 = vpop.permute.xlu0 %1155
    %1157 = vrot.lane.b32.xlu0 %v972, 48
    %v1158 = vpop.permute.xlu0 %1157
    %vm1221 = vcmask 523648
    %1222 = vst.msk [vmem:[#allocation2] sm:$0xff] %vm1221, %v1036
    %1223 = vst.msk [vmem:[#allocation2 + $0x8] sm:$0xff] %vm1221, %v1038
    %1224 = vst.msk [vmem:[#allocation2 + $0x10] sm:$0xff] %vm1221, %v1040
    %1225 = vst.msk [vmem:[#allocation2 + $0x18] sm:$0xff] %vm1221, %v1042
    %1226 = vst.msk [vmem:[#allocation2 + $0x20] sm:$0xff] %vm1221, %v1044
    %1227 = vst.msk [vmem:[#allocation2 + $0x28] sm:$0xff] %vm1221, %v1046
    %1228 = vst.msk [vmem:[#allocation2 + $0x30] sm:$0xff] %vm1221, %v1048
    %1229 = vst.msk [vmem:[#allocation2 + $0x38] sm:$0xff] %vm1221, %v1050
    %1230 = vst.msk [vmem:[#allocation2 + $0x40] sm:$0xff] %vm1221, %v1052
    %1231 = vst.msk [vmem:[#allocation2 + $0x48] sm:$0xff] %vm1221, %v1054
    %1232 = vst.msk [vmem:[#allocation2 + $0x50] sm:$0xff] %vm1221, %v1056
    %1233 = vst.msk [vmem:[#allocation2 + $0x58] sm:$0xff] %vm1221, %v1058
    %1234 = vst.msk [vmem:[#allocation2 + $0x60] sm:$0xff] %vm1221, %v1060
    %1235 = vst.msk [vmem:[#allocation2 + $0x68] sm:$0xff] %vm1221, %v1062
    %1236 = vst.msk [vmem:[#allocation2 + $0x70] sm:$0xff] %vm1221, %v1064
    %1237 = vst.msk [vmem:[#allocation2 + $0x78] sm:$0xff] %vm1221, %v1066
    %1238 = vst.msk [vmem:[#allocation2 + $0x80] sm:$0xff] %vm1221, %v1068
    %1239 = vst.msk [vmem:[#allocation2 + $0x88] sm:$0xff] %vm1221, %v1070
    %1240 = vst.msk [vmem:[#allocation2 + $0x90] sm:$0xff] %vm1221, %v1072
    %1241 = vst.msk [vmem:[#allocation2 + $0x98] sm:$0xff] %vm1221, %v1074
    %1242 = vst.msk [vmem:[#allocation2 + $0xa0] sm:$0xff] %vm1221, %v1076
    %1243 = vst.msk [vmem:[#allocation2 + $0xa8] sm:$0xff] %vm1221, %v1078
    %1244 = vst.msk [vmem:[#allocation2 + $0xb0] sm:$0xff] %vm1221, %v1080
    %1245 = vst.msk [vmem:[#allocation2 + $0xb8] sm:$0xff] %vm1221, %v1082
    %1246 = vst.msk [vmem:[#allocation2 + $0xc0] sm:$0xff] %vm1221, %v1084
    %1247 = vst.msk [vmem:[#allocation2 + $0xc8] sm:$0xff] %vm1221, %v1086
    %1248 = vst.msk [vmem:[#allocation2 + $0xd0] sm:$0xff] %vm1221, %v1088
    %1249 = vst.msk [vmem:[#allocation2 + $0xd8] sm:$0xff] %vm1221, %v1090
    %1250 = vst.msk [vmem:[#allocation2 + $0xe0] sm:$0xff] %vm1221, %v1092
    %1251 = vst.msk [vmem:[#allocation2 + $0xe8] sm:$0xff] %vm1221, %v1094
    %1252 = vst.msk [vmem:[#allocation2 + $0xf0] sm:$0xff] %vm1221, %v1096
    %1253 = vst.msk [vmem:[#allocation2 + $0xf8] sm:$0xff] %vm1221, %v1098
    %1254 = vst.msk [vmem:[#allocation2 + $0x100] sm:$0xff] %vm1221, %v1100
    %1255 = vst.msk [vmem:[#allocation2 + $0x108] sm:$0xff] %vm1221, %v1102
    %1256 = vst.msk [vmem:[#allocation2 + $0x110] sm:$0xff] %vm1221, %v1104
    %1257 = vst.msk [vmem:[#allocation2 + $0x118] sm:$0xff] %vm1221, %v1106
    %1258 = vst.msk [vmem:[#allocation2 + $0x120] sm:$0xff] %vm1221, %v1108
    %1259 = vst.msk [vmem:[#allocation2 + $0x128] sm:$0xff] %vm1221, %v1110
    %1260 = vst.msk [vmem:[#allocation2 + $0x130] sm:$0xff] %vm1221, %v1112
    %1261 = vst.msk [vmem:[#allocation2 + $0x138] sm:$0xff] %vm1221, %v1114
    %1262 = vst.msk [vmem:[#allocation2 + $0x140] sm:$0xff] %vm1221, %v1116
    %1263 = vst.msk [vmem:[#allocation2 + $0x148] sm:$0xff] %vm1221, %v1118
    %1264 = vst.msk [vmem:[#allocation2 + $0x150] sm:$0xff] %vm1221, %v1120
    %1265 = vst.msk [vmem:[#allocation2 + $0x158] sm:$0xff] %vm1221, %v1122
    %1266 = vst.msk [vmem:[#allocation2 + $0x160] sm:$0xff] %vm1221, %v1124
    %1267 = vst.msk [vmem:[#allocation2 + $0x168] sm:$0xff] %vm1221, %v1126
    %1268 = vst.msk [vmem:[#allocation2 + $0x170] sm:$0xff] %vm1221, %v1128
    %1269 = vst.msk [vmem:[#allocation2 + $0x178] sm:$0xff] %vm1221, %v1130
    %1270 = vst.msk [vmem:[#allocation2 + $0x180] sm:$0xff] %vm1221, %v1132
    %1271 = vst.msk [vmem:[#allocation2 + $0x188] sm:$0xff] %vm1221, %v1134
    %1272 = vst.msk [vmem:[#allocation2 + $0x190] sm:$0xff] %vm1221, %v1136
    %1273 = vst.msk [vmem:[#allocation2 + $0x198] sm:$0xff] %vm1221, %v1138
    %1274 = vst.msk [vmem:[#allocation2 + $0x1a0] sm:$0xff] %vm1221, %v1140
    %1275 = vst.msk [vmem:[#allocation2 + $0x1a8] sm:$0xff] %vm1221, %v1142
    %1276 = vst.msk [vmem:[#allocation2 + $0x1b0] sm:$0xff] %vm1221, %v1144
    %1277 = vst.msk [vmem:[#allocation2 + $0x1b8] sm:$0xff] %vm1221, %v1146
    %1278 = vst.msk [vmem:[#allocation2 + $0x1c0] sm:$0xff] %vm1221, %v1148
    %1279 = vst.msk [vmem:[#allocation2 + $0x1c8] sm:$0xff] %vm1221, %v1150
    %1280 = vst.msk [vmem:[#allocation2 + $0x1d0] sm:$0xff] %vm1221, %v1152
    %1281 = vst.msk [vmem:[#allocation2 + $0x1d8] sm:$0xff] %vm1221, %v1154
    %1282 = vst.msk [vmem:[#allocation2 + $0x1e0] sm:$0xff] %vm1221, %v1156
    %1283 = vst.msk [vmem:[#allocation2 + $0x1e8] sm:$0xff] %vm1221, %v1158
    %v1284 = vld [vmem:[%s0 + $0x4] sm:$0xff]
    %v1285 = vld [vmem:[%s0 + $0xc] sm:$0xff]
    %v1286 = vld [vmem:[%s0 + $0x14] sm:$0xff]
    %v1287 = vld [vmem:[%s0 + $0x1c] sm:$0xff]
    %v1288 = vld [vmem:[%s0 + $0x24] sm:$0xff]
    %v1289 = vld [vmem:[%s0 + $0x2c] sm:$0xff]
    %v1290 = vld [vmem:[%s0 + $0x34] sm:$0xff]
    %v1291 = vld [vmem:[%s0 + $0x3c] sm:$0xff]
    %v1292 = vld [vmem:[%s0 + $0x44] sm:$0xff]
    %v1293 = vld [vmem:[%s0 + $0x4c] sm:$0xff]
    %v1294 = vld [vmem:[%s0 + $0x54] sm:$0xff]
    %v1295 = vld [vmem:[%s0 + $0x5c] sm:$0xff]
    %v1296 = vld [vmem:[%s0 + $0x64] sm:$0xff]
    %v1297 = vld [vmem:[%s0 + $0x6c] sm:$0xff]
    %v1298 = vld [vmem:[%s0 + $0x74] sm:$0xff]
    %v1299 = vld [vmem:[%s0 + $0x7c] sm:$0xff]
    %v1300 = vld [vmem:[%s0 + $0x84] sm:$0xff]
    %v1301 = vld [vmem:[%s0 + $0x8c] sm:$0xff]
    %v1302 = vld [vmem:[%s0 + $0x94] sm:$0xff]
    %v1303 = vld [vmem:[%s0 + $0x9c] sm:$0xff]
    %v1304 = vld [vmem:[%s0 + $0xa4] sm:$0xff]
    %v1305 = vld [vmem:[%s0 + $0xac] sm:$0xff]
    %v1306 = vld [vmem:[%s0 + $0xb4] sm:$0xff]
    %v1307 = vld [vmem:[%s0 + $0xbc] sm:$0xff]
    %v1308 = vld [vmem:[%s0 + $0xc4] sm:$0xff]
    %v1309 = vld [vmem:[%s0 + $0xcc] sm:$0xff]
    %v1310 = vld [vmem:[%s0 + $0xd4] sm:$0xff]
    %v1311 = vld [vmem:[%s0 + $0xdc] sm:$0xff]
    %v1312 = vld [vmem:[%s0 + $0xe4] sm:$0xff]
    %v1313 = vld [vmem:[%s0 + $0xec] sm:$0xff]
    %v1314 = vld [vmem:[%s0 + $0xf4] sm:$0xff]
    %v1315 = vld [vmem:[%s0 + $0xfc] sm:$0xff]
    %v1316 = vld [vmem:[%s0 + $0x104] sm:$0xff]
    %v1317 = vld [vmem:[%s0 + $0x10c] sm:$0xff]
    %v1318 = vld [vmem:[%s0 + $0x114] sm:$0xff]
    %v1319 = vld [vmem:[%s0 + $0x11c] sm:$0xff]
    %v1320 = vld [vmem:[%s0 + $0x124] sm:$0xff]
    %v1321 = vld [vmem:[%s0 + $0x12c] sm:$0xff]
    %v1322 = vld [vmem:[%s0 + $0x134] sm:$0xff]
    %v1323 = vld [vmem:[%s0 + $0x13c] sm:$0xff]
    %v1324 = vld [vmem:[%s0 + $0x144] sm:$0xff]
    %v1325 = vld [vmem:[%s0 + $0x14c] sm:$0xff]
    %v1326 = vld [vmem:[%s0 + $0x154] sm:$0xff]
    %v1327 = vld [vmem:[%s0 + $0x15c] sm:$0xff]
    %v1328 = vld [vmem:[%s0 + $0x164] sm:$0xff]
    %v1329 = vld [vmem:[%s0 + $0x16c] sm:$0xff]
    %v1330 = vld [vmem:[%s0 + $0x174] sm:$0xff]
    %v1331 = vld [vmem:[%s0 + $0x17c] sm:$0xff]
    %v1332 = vld [vmem:[%s0 + $0x184] sm:$0xff]
    %v1333 = vld [vmem:[%s0 + $0x18c] sm:$0xff]
    %v1334 = vld [vmem:[%s0 + $0x194] sm:$0xff]
    %v1335 = vld [vmem:[%s0 + $0x19c] sm:$0xff]
    %v1336 = vld [vmem:[%s0 + $0x1a4] sm:$0xff]
    %v1337 = vld [vmem:[%s0 + $0x1ac] sm:$0xff]
    %v1338 = vld [vmem:[%s0 + $0x1b4] sm:$0xff]
    %v1339 = vld [vmem:[%s0 + $0x1bc] sm:$0xff]
    %v1340 = vld [vmem:[%s0 + $0x1c4] sm:$0xff]
    %v1341 = vld [vmem:[%s0 + $0x1cc] sm:$0xff]
    %v1342 = vld [vmem:[%s0 + $0x1d4] sm:$0xff]
    %v1343 = vld [vmem:[%s0 + $0x1dc] sm:$0xff]
    %v1344 = vld [vmem:[%s0 + $0x1e4] sm:$0xff]
    %v1345 = vld [vmem:[%s0 + $0x1ec] sm:$0xff]
    %1408 = vrot.lane.b32.xlu0 %v1284, 64
    %v1409 = vpop.permute.xlu0 %1408
    %1410 = vrot.lane.b32.xlu0 %v1285, 64
    %v1411 = vpop.permute.xlu0 %1410
    %1412 = vrot.lane.b32.xlu0 %v1286, 64
    %v1413 = vpop.permute.xlu0 %1412
    %1414 = vrot.lane.b32.xlu0 %v1287, 64
    %v1415 = vpop.permute.xlu0 %1414
    %1416 = vrot.lane.b32.xlu0 %v1288, 64
    %v1417 = vpop.permute.xlu0 %1416
    %1418 = vrot.lane.b32.xlu0 %v1289, 64
    %v1419 = vpop.permute.xlu0 %1418
    %1420 = vrot.lane.b32.xlu0 %v1290, 64
    %v1421 = vpop.permute.xlu0 %1420
    %1422 = vrot.lane.b32.xlu0 %v1291, 64
    %v1423 = vpop.permute.xlu0 %1422
    %1424 = vrot.lane.b32.xlu0 %v1292, 64
    %v1425 = vpop.permute.xlu0 %1424
    %1426 = vrot.lane.b32.xlu0 %v1293, 64
    %v1427 = vpop.permute.xlu0 %1426
    %1428 = vrot.lane.b32.xlu0 %v1294, 64
    %v1429 = vpop.permute.xlu0 %1428
    %1430 = vrot.lane.b32.xlu0 %v1295, 64
    %v1431 = vpop.permute.xlu0 %1430
    %1432 = vrot.lane.b32.xlu0 %v1296, 64
    %v1433 = vpop.permute.xlu0 %1432
    %1434 = vrot.lane.b32.xlu0 %v1297, 64
    %v1435 = vpop.permute.xlu0 %1434
    %1436 = vrot.lane.b32.xlu0 %v1298, 64
    %v1437 = vpop.permute.xlu0 %1436
    %1438 = vrot.lane.b32.xlu0 %v1299, 64
    %v1439 = vpop.permute.xlu0 %1438
    %1440 = vrot.lane.b32.xlu0 %v1300, 64
    %v1441 = vpop.permute.xlu0 %1440
    %1442 = vrot.lane.b32.xlu0 %v1301, 64
    %v1443 = vpop.permute.xlu0 %1442
    %1444 = vrot.lane.b32.xlu0 %v1302, 64
    %v1445 = vpop.permute.xlu0 %1444
    %1446 = vrot.lane.b32.xlu0 %v1303, 64
    %v1447 = vpop.permute.xlu0 %1446
    %1448 = vrot.lane.b32.xlu0 %v1304, 64
    %v1449 = vpop.permute.xlu0 %1448
    %1450 = vrot.lane.b32.xlu0 %v1305, 64
    %v1451 = vpop.permute.xlu0 %1450
    %1452 = vrot.lane.b32.xlu0 %v1306, 64
    %v1453 = vpop.permute.xlu0 %1452
    %1454 = vrot.lane.b32.xlu0 %v1307, 64
    %v1455 = vpop.permute.xlu0 %1454
    %1456 = vrot.lane.b32.xlu0 %v1308, 64
    %v1457 = vpop.permute.xlu0 %1456
    %1458 = vrot.lane.b32.xlu0 %v1309, 64
    %v1459 = vpop.permute.xlu0 %1458
    %1460 = vrot.lane.b32.xlu0 %v1310, 64
    %v1461 = vpop.permute.xlu0 %1460
    %1462 = vrot.lane.b32.xlu0 %v1311, 64
    %v1463 = vpop.permute.xlu0 %1462
    %1464 = vrot.lane.b32.xlu0 %v1312, 64
    %v1465 = vpop.permute.xlu0 %1464
    %1466 = vrot.lane.b32.xlu0 %v1313, 64
    %v1467 = vpop.permute.xlu0 %1466
    %1468 = vrot.lane.b32.xlu0 %v1314, 64
    %v1469 = vpop.permute.xlu0 %1468
    %1470 = vrot.lane.b32.xlu0 %v1315, 64
    %v1471 = vpop.permute.xlu0 %1470
    %1472 = vrot.lane.b32.xlu0 %v1316, 64
    %v1473 = vpop.permute.xlu0 %1472
    %1474 = vrot.lane.b32.xlu0 %v1317, 64
    %v1475 = vpop.permute.xlu0 %1474
    %1476 = vrot.lane.b32.xlu0 %v1318, 64
    %v1477 = vpop.permute.xlu0 %1476
    %1478 = vrot.lane.b32.xlu0 %v1319, 64
    %v1479 = vpop.permute.xlu0 %1478
    %1480 = vrot.lane.b32.xlu0 %v1320, 64
    %v1481 = vpop.permute.xlu0 %1480
    %1482 = vrot.lane.b32.xlu0 %v1321, 64
    %v1483 = vpop.permute.xlu0 %1482
    %1484 = vrot.lane.b32.xlu0 %v1322, 64
    %v1485 = vpop.permute.xlu0 %1484
    %1486 = vrot.lane.b32.xlu0 %v1323, 64
    %v1487 = vpop.permute.xlu0 %1486
    %1488 = vrot.lane.b32.xlu0 %v1324, 64
    %v1489 = vpop.permute.xlu0 %1488
    %1490 = vrot.lane.b32.xlu0 %v1325, 64
    %v1491 = vpop.permute.xlu0 %1490
    %1492 = vrot.lane.b32.xlu0 %v1326, 64
    %v1493 = vpop.permute.xlu0 %1492
    %1494 = vrot.lane.b32.xlu0 %v1327, 64
    %v1495 = vpop.permute.xlu0 %1494
    %1496 = vrot.lane.b32.xlu0 %v1328, 64
    %v1497 = vpop.permute.xlu0 %1496
    %1498 = vrot.lane.b32.xlu0 %v1329, 64
    %v1499 = vpop.permute.xlu0 %1498
    %1500 = vrot.lane.b32.xlu0 %v1330, 64
    %v1501 = vpop.permute.xlu0 %1500
    %1502 = vrot.lane.b32.xlu0 %v1331, 64
    %v1503 = vpop.permute.xlu0 %1502
    %1504 = vrot.lane.b32.xlu0 %v1332, 64
    %v1505 = vpop.permute.xlu0 %1504
    %1506 = vrot.lane.b32.xlu0 %v1333, 64
    %v1507 = vpop.permute.xlu0 %1506
    %1508 = vrot.lane.b32.xlu0 %v1334, 64
    %v1509 = vpop.permute.xlu0 %1508
    %1510 = vrot.lane.b32.xlu0 %v1335, 64
    %v1511 = vpop.permute.xlu0 %1510
    %1512 = vrot.lane.b32.xlu0 %v1336, 64
    %v1513 = vpop.permute.xlu0 %1512
    %1514 = vrot.lane.b32.xlu0 %v1337, 64
    %v1515 = vpop.permute.xlu0 %1514
    %1516 = vrot.lane.b32.xlu0 %v1338, 64
    %v1517 = vpop.permute.xlu0 %1516
    %1518 = vrot.lane.b32.xlu0 %v1339, 64
    %v1519 = vpop.permute.xlu0 %1518
    %1520 = vrot.lane.b32.xlu0 %v1340, 64
    %v1521 = vpop.permute.xlu0 %1520
    %1522 = vrot.lane.b32.xlu0 %v1341, 64
    %v1523 = vpop.permute.xlu0 %1522
    %1524 = vrot.lane.b32.xlu0 %v1342, 64
    %v1525 = vpop.permute.xlu0 %1524
    %1526 = vrot.lane.b32.xlu0 %v1343, 64
    %v1527 = vpop.permute.xlu0 %1526
    %1528 = vrot.lane.b32.xlu0 %v1344, 64
    %v1529 = vpop.permute.xlu0 %1528
    %1530 = vrot.lane.b32.xlu0 %v1345, 64
    %v1531 = vpop.permute.xlu0 %1530
    %vm1594 = vcmask 654848
    %1595 = vst.msk [vmem:[#allocation2] sm:$0xff] %vm1594, %v1409
    %1596 = vst.msk [vmem:[#allocation2 + $0x8] sm:$0xff] %vm1594, %v1411
    %1597 = vst.msk [vmem:[#allocation2 + $0x10] sm:$0xff] %vm1594, %v1413
    %1598 = vst.msk [vmem:[#allocation2 + $0x18] sm:$0xff] %vm1594, %v1415
    %1599 = vst.msk [vmem:[#allocation2 + $0x20] sm:$0xff] %vm1594, %v1417
    %1600 = vst.msk [vmem:[#allocation2 + $0x28] sm:$0xff] %vm1594, %v1419
    %1601 = vst.msk [vmem:[#allocation2 + $0x30] sm:$0xff] %vm1594, %v1421
    %1602 = vst.msk [vmem:[#allocation2 + $0x38] sm:$0xff] %vm1594, %v1423
    %1603 = vst.msk [vmem:[#allocation2 + $0x40] sm:$0xff] %vm1594, %v1425
    %1604 = vst.msk [vmem:[#allocation2 + $0x48] sm:$0xff] %vm1594, %v1427
    %1605 = vst.msk [vmem:[#allocation2 + $0x50] sm:$0xff] %vm1594, %v1429
    %1606 = vst.msk [vmem:[#allocation2 + $0x58] sm:$0xff] %vm1594, %v1431
    %1607 = vst.msk [vmem:[#allocation2 + $0x60] sm:$0xff] %vm1594, %v1433
    %1608 = vst.msk [vmem:[#allocation2 + $0x68] sm:$0xff] %vm1594, %v1435
    %1609 = vst.msk [vmem:[#allocation2 + $0x70] sm:$0xff] %vm1594, %v1437
    %1610 = vst.msk [vmem:[#allocation2 + $0x78] sm:$0xff] %vm1594, %v1439
    %1611 = vst.msk [vmem:[#allocation2 + $0x80] sm:$0xff] %vm1594, %v1441
    %1612 = vst.msk [vmem:[#allocation2 + $0x88] sm:$0xff] %vm1594, %v1443
    %1613 = vst.msk [vmem:[#allocation2 + $0x90] sm:$0xff] %vm1594, %v1445
    %1614 = vst.msk [vmem:[#allocation2 + $0x98] sm:$0xff] %vm1594, %v1447
    %1615 = vst.msk [vmem:[#allocation2 + $0xa0] sm:$0xff] %vm1594, %v1449
    %1616 = vst.msk [vmem:[#allocation2 + $0xa8] sm:$0xff] %vm1594, %v1451
    %1617 = vst.msk [vmem:[#allocation2 + $0xb0] sm:$0xff] %vm1594, %v1453
    %1618 = vst.msk [vmem:[#allocation2 + $0xb8] sm:$0xff] %vm1594, %v1455
    %1619 = vst.msk [vmem:[#allocation2 + $0xc0] sm:$0xff] %vm1594, %v1457
    %1620 = vst.msk [vmem:[#allocation2 + $0xc8] sm:$0xff] %vm1594, %v1459
    %1621 = vst.msk [vmem:[#allocation2 + $0xd0] sm:$0xff] %vm1594, %v1461
    %1622 = vst.msk [vmem:[#allocation2 + $0xd8] sm:$0xff] %vm1594, %v1463
    %1623 = vst.msk [vmem:[#allocation2 + $0xe0] sm:$0xff] %vm1594, %v1465
    %1624 = vst.msk [vmem:[#allocation2 + $0xe8] sm:$0xff] %vm1594, %v1467
    %1625 = vst.msk [vmem:[#allocation2 + $0xf0] sm:$0xff] %vm1594, %v1469
    %1626 = vst.msk [vmem:[#allocation2 + $0xf8] sm:$0xff] %vm1594, %v1471
    %1627 = vst.msk [vmem:[#allocation2 + $0x100] sm:$0xff] %vm1594, %v1473
    %1628 = vst.msk [vmem:[#allocation2 + $0x108] sm:$0xff] %vm1594, %v1475
    %1629 = vst.msk [vmem:[#allocation2 + $0x110] sm:$0xff] %vm1594, %v1477
    %1630 = vst.msk [vmem:[#allocation2 + $0x118] sm:$0xff] %vm1594, %v1479
    %1631 = vst.msk [vmem:[#allocation2 + $0x120] sm:$0xff] %vm1594, %v1481
    %1632 = vst.msk [vmem:[#allocation2 + $0x128] sm:$0xff] %vm1594, %v1483
    %1633 = vst.msk [vmem:[#allocation2 + $0x130] sm:$0xff] %vm1594, %v1485
    %1634 = vst.msk [vmem:[#allocation2 + $0x138] sm:$0xff] %vm1594, %v1487
    %1635 = vst.msk [vmem:[#allocation2 + $0x140] sm:$0xff] %vm1594, %v1489
    %1636 = vst.msk [vmem:[#allocation2 + $0x148] sm:$0xff] %vm1594, %v1491
    %1637 = vst.msk [vmem:[#allocation2 + $0x150] sm:$0xff] %vm1594, %v1493
    %1638 = vst.msk [vmem:[#allocation2 + $0x158] sm:$0xff] %vm1594, %v1495
    %1639 = vst.msk [vmem:[#allocation2 + $0x160] sm:$0xff] %vm1594, %v1497
    %1640 = vst.msk [vmem:[#allocation2 + $0x168] sm:$0xff] %vm1594, %v1499
    %1641 = vst.msk [vmem:[#allocation2 + $0x170] sm:$0xff] %vm1594, %v1501
    %1642 = vst.msk [vmem:[#allocation2 + $0x178] sm:$0xff] %vm1594, %v1503
    %1643 = vst.msk [vmem:[#allocation2 + $0x180] sm:$0xff] %vm1594, %v1505
    %1644 = vst.msk [vmem:[#allocation2 + $0x188] sm:$0xff] %vm1594, %v1507
    %1645 = vst.msk [vmem:[#allocation2 + $0x190] sm:$0xff] %vm1594, %v1509
    %1646 = vst.msk [vmem:[#allocation2 + $0x198] sm:$0xff] %vm1594, %v1511
    %1647 = vst.msk [vmem:[#allocation2 + $0x1a0] sm:$0xff] %vm1594, %v1513
    %1648 = vst.msk [vmem:[#allocation2 + $0x1a8] sm:$0xff] %vm1594, %v1515
    %1649 = vst.msk [vmem:[#allocation2 + $0x1b0] sm:$0xff] %vm1594, %v1517
    %1650 = vst.msk [vmem:[#allocation2 + $0x1b8] sm:$0xff] %vm1594, %v1519
    %1651 = vst.msk [vmem:[#allocation2 + $0x1c0] sm:$0xff] %vm1594, %v1521
    %1652 = vst.msk [vmem:[#allocation2 + $0x1c8] sm:$0xff] %vm1594, %v1523
    %1653 = vst.msk [vmem:[#allocation2 + $0x1d0] sm:$0xff] %vm1594, %v1525
    %1654 = vst.msk [vmem:[#allocation2 + $0x1d8] sm:$0xff] %vm1594, %v1527
    %1655 = vst.msk [vmem:[#allocation2 + $0x1e0] sm:$0xff] %vm1594, %v1529
    %1656 = vst.msk [vmem:[#allocation2 + $0x1e8] sm:$0xff] %vm1594, %v1531
    %v1657 = vld [vmem:[%s0 + $0x1f4] sm:$0xff]
    %v1658 = vld [vmem:[%s0 + $0x1fc] sm:$0xff]
    %v1659 = vld [vmem:[%s0 + $0x204] sm:$0xff]
    %v1660 = vld [vmem:[%s0 + $0x20c] sm:$0xff]
    %v1661 = vld [vmem:[%s0 + $0x214] sm:$0xff]
    %v1662 = vld [vmem:[%s0 + $0x21c] sm:$0xff]
    %v1663 = vld [vmem:[%s0 + $0x224] sm:$0xff]
    %v1664 = vld [vmem:[%s0 + $0x22c] sm:$0xff]
    %v1665 = vld [vmem:[%s0 + $0x234] sm:$0xff]
    %v1666 = vld [vmem:[%s0 + $0x23c] sm:$0xff]
    %v1667 = vld [vmem:[%s0 + $0x244] sm:$0xff]
    %v1668 = vld [vmem:[%s0 + $0x24c] sm:$0xff]
    %v1669 = vld [vmem:[%s0 + $0x254] sm:$0xff]
    %v1670 = vld [vmem:[%s0 + $0x25c] sm:$0xff]
    %v1671 = vld [vmem:[%s0 + $0x264] sm:$0xff]
    %v1672 = vld [vmem:[%s0 + $0x26c] sm:$0xff]
    %v1673 = vld [vmem:[%s0 + $0x274] sm:$0xff]
    %v1674 = vld [vmem:[%s0 + $0x27c] sm:$0xff]
    %v1675 = vld [vmem:[%s0 + $0x284] sm:$0xff]
    %v1676 = vld [vmem:[%s0 + $0x28c] sm:$0xff]
    %v1677 = vld [vmem:[%s0 + $0x294] sm:$0xff]
    %v1678 = vld [vmem:[%s0 + $0x29c] sm:$0xff]
    %v1679 = vld [vmem:[%s0 + $0x2a4] sm:$0xff]
    %v1680 = vld [vmem:[%s0 + $0x2ac] sm:$0xff]
    %v1681 = vld [vmem:[%s0 + $0x2b4] sm:$0xff]
    %v1682 = vld [vmem:[%s0 + $0x2bc] sm:$0xff]
    %v1683 = vld [vmem:[%s0 + $0x2c4] sm:$0xff]
    %v1684 = vld [vmem:[%s0 + $0x2cc] sm:$0xff]
    %v1685 = vld [vmem:[%s0 + $0x2d4] sm:$0xff]
    %v1686 = vld [vmem:[%s0 + $0x2dc] sm:$0xff]
    %v1687 = vld [vmem:[%s0 + $0x2e4] sm:$0xff]
    %v1688 = vld [vmem:[%s0 + $0x2ec] sm:$0xff]
    %v1689 = vld [vmem:[%s0 + $0x2f4] sm:$0xff]
    %v1690 = vld [vmem:[%s0 + $0x2fc] sm:$0xff]
    %v1691 = vld [vmem:[%s0 + $0x304] sm:$0xff]
    %v1692 = vld [vmem:[%s0 + $0x30c] sm:$0xff]
    %v1693 = vld [vmem:[%s0 + $0x314] sm:$0xff]
    %v1694 = vld [vmem:[%s0 + $0x31c] sm:$0xff]
    %v1695 = vld [vmem:[%s0 + $0x324] sm:$0xff]
    %v1696 = vld [vmem:[%s0 + $0x32c] sm:$0xff]
    %v1697 = vld [vmem:[%s0 + $0x334] sm:$0xff]
    %v1698 = vld [vmem:[%s0 + $0x33c] sm:$0xff]
    %v1699 = vld [vmem:[%s0 + $0x344] sm:$0xff]
    %v1700 = vld [vmem:[%s0 + $0x34c] sm:$0xff]
    %v1701 = vld [vmem:[%s0 + $0x354] sm:$0xff]
    %v1702 = vld [vmem:[%s0 + $0x35c] sm:$0xff]
    %v1703 = vld [vmem:[%s0 + $0x364] sm:$0xff]
    %v1704 = vld [vmem:[%s0 + $0x36c] sm:$0xff]
    %v1705 = vld [vmem:[%s0 + $0x374] sm:$0xff]
    %v1706 = vld [vmem:[%s0 + $0x37c] sm:$0xff]
    %v1707 = vld [vmem:[%s0 + $0x384] sm:$0xff]
    %v1708 = vld [vmem:[%s0 + $0x38c] sm:$0xff]
    %v1709 = vld [vmem:[%s0 + $0x394] sm:$0xff]
    %v1710 = vld [vmem:[%s0 + $0x39c] sm:$0xff]
    %v1711 = vld [vmem:[%s0 + $0x3a4] sm:$0xff]
    %v1712 = vld [vmem:[%s0 + $0x3ac] sm:$0xff]
    %v1713 = vld [vmem:[%s0 + $0x3b4] sm:$0xff]
    %v1714 = vld [vmem:[%s0 + $0x3bc] sm:$0xff]
    %v1715 = vld [vmem:[%s0 + $0x3c4] sm:$0xff]
    %v1716 = vld [vmem:[%s0 + $0x3cc] sm:$0xff]
    %v1717 = vld [vmem:[%s0 + $0x3d4] sm:$0xff]
    %v1718 = vld [vmem:[%s0 + $0x3dc] sm:$0xff]
    %1719 = vst.msk [vmem:[#allocation2 + $0x1f0] sm:$0xff] %vm102, %v1657
    %1720 = vst.msk [vmem:[#allocation2 + $0x1f8] sm:$0xff] %vm102, %v1658
    %1721 = vst.msk [vmem:[#allocation2 + $0x200] sm:$0xff] %vm102, %v1659
    %1722 = vst.msk [vmem:[#allocation2 + $0x208] sm:$0xff] %vm102, %v1660
    %1723 = vst.msk [vmem:[#allocation2 + $0x210] sm:$0xff] %vm102, %v1661
    %1724 = vst.msk [vmem:[#allocation2 + $0x218] sm:$0xff] %vm102, %v1662
    %1725 = vst.msk [vmem:[#allocation2 + $0x220] sm:$0xff] %vm102, %v1663
    %1726 = vst.msk [vmem:[#allocation2 + $0x228] sm:$0xff] %vm102, %v1664
    %1727 = vst.msk [vmem:[#allocation2 + $0x230] sm:$0xff] %vm102, %v1665
    %1728 = vst.msk [vmem:[#allocation2 + $0x238] sm:$0xff] %vm102, %v1666
    %1729 = vst.msk [vmem:[#allocation2 + $0x240] sm:$0xff] %vm102, %v1667
    %1730 = vst.msk [vmem:[#allocation2 + $0x248] sm:$0xff] %vm102, %v1668
    %1731 = vst.msk [vmem:[#allocation2 + $0x250] sm:$0xff] %vm102, %v1669
    %1732 = vst.msk [vmem:[#allocation2 + $0x258] sm:$0xff] %vm102, %v1670
    %1733 = vst.msk [vmem:[#allocation2 + $0x260] sm:$0xff] %vm102, %v1671
    %1734 = vst.msk [vmem:[#allocation2 + $0x268] sm:$0xff] %vm102, %v1672
    %1735 = vst.msk [vmem:[#allocation2 + $0x270] sm:$0xff] %vm102, %v1673
    %1736 = vst.msk [vmem:[#allocation2 + $0x278] sm:$0xff] %vm102, %v1674
    %1737 = vst.msk [vmem:[#allocation2 + $0x280] sm:$0xff] %vm102, %v1675
    %1738 = vst.msk [vmem:[#allocation2 + $0x288] sm:$0xff] %vm102, %v1676
    %1739 = vst.msk [vmem:[#allocation2 + $0x290] sm:$0xff] %vm102, %v1677
    %1740 = vst.msk [vmem:[#allocation2 + $0x298] sm:$0xff] %vm102, %v1678
    %1741 = vst.msk [vmem:[#allocation2 + $0x2a0] sm:$0xff] %vm102, %v1679
    %1742 = vst.msk [vmem:[#allocation2 + $0x2a8] sm:$0xff] %vm102, %v1680
    %1743 = vst.msk [vmem:[#allocation2 + $0x2b0] sm:$0xff] %vm102, %v1681
    %1744 = vst.msk [vmem:[#allocation2 + $0x2b8] sm:$0xff] %vm102, %v1682
    %1745 = vst.msk [vmem:[#allocation2 + $0x2c0] sm:$0xff] %vm102, %v1683
    %1746 = vst.msk [vmem:[#allocation2 + $0x2c8] sm:$0xff] %vm102, %v1684
    %1747 = vst.msk [vmem:[#allocation2 + $0x2d0] sm:$0xff] %vm102, %v1685
    %1748 = vst.msk [vmem:[#allocation2 + $0x2d8] sm:$0xff] %vm102, %v1686
    %1749 = vst.msk [vmem:[#allocation2 + $0x2e0] sm:$0xff] %vm102, %v1687
    %1750 = vst.msk [vmem:[#allocation2 + $0x2e8] sm:$0xff] %vm102, %v1688
    %1751 = vst.msk [vmem:[#allocation2 + $0x2f0] sm:$0xff] %vm102, %v1689
    %1752 = vst.msk [vmem:[#allocation2 + $0x2f8] sm:$0xff] %vm102, %v1690
    %1753 = vst.msk [vmem:[#allocation2 + $0x300] sm:$0xff] %vm102, %v1691
    %1754 = vst.msk [vmem:[#allocation2 + $0x308] sm:$0xff] %vm102, %v1692
    %1755 = vst.msk [vmem:[#allocation2 + $0x310] sm:$0xff] %vm102, %v1693
    %1756 = vst.msk [vmem:[#allocation2 + $0x318] sm:$0xff] %vm102, %v1694
    %1757 = vst.msk [vmem:[#allocation2 + $0x320] sm:$0xff] %vm102, %v1695
    %1758 = vst.msk [vmem:[#allocation2 + $0x328] sm:$0xff] %vm102, %v1696
    %1759 = vst.msk [vmem:[#allocation2 + $0x330] sm:$0xff] %vm102, %v1697
    %1760 = vst.msk [vmem:[#allocation2 + $0x338] sm:$0xff] %vm102, %v1698
    %1761 = vst.msk [vmem:[#allocation2 + $0x340] sm:$0xff] %vm102, %v1699
    %1762 = vst.msk [vmem:[#allocation2 + $0x348] sm:$0xff] %vm102, %v1700
    %1763 = vst.msk [vmem:[#allocation2 + $0x350] sm:$0xff] %vm102, %v1701
    %1764 = vst.msk [vmem:[#allocation2 + $0x358] sm:$0xff] %vm102, %v1702
    %1765 = vst.msk [vmem:[#allocation2 + $0x360] sm:$0xff] %vm102, %v1703
    %1766 = vst.msk [vmem:[#allocation2 + $0x368] sm:$0xff] %vm102, %v1704
    %1767 = vst.msk [vmem:[#allocation2 + $0x370] sm:$0xff] %vm102, %v1705
    %1768 = vst.msk [vmem:[#allocation2 + $0x378] sm:$0xff] %vm102, %v1706
    %1769 = vst.msk [vmem:[#allocation2 + $0x380] sm:$0xff] %vm102, %v1707
    %1770 = vst.msk [vmem:[#allocation2 + $0x388] sm:$0xff] %vm102, %v1708
    %1771 = vst.msk [vmem:[#allocation2 + $0x390] sm:$0xff] %vm102, %v1709
    %1772 = vst.msk [vmem:[#allocation2 + $0x398] sm:$0xff] %vm102, %v1710
    %1773 = vst.msk [vmem:[#allocation2 + $0x3a0] sm:$0xff] %vm102, %v1711
    %1774 = vst.msk [vmem:[#allocation2 + $0x3a8] sm:$0xff] %vm102, %v1712
    %1775 = vst.msk [vmem:[#allocation2 + $0x3b0] sm:$0xff] %vm102, %v1713
    %1776 = vst.msk [vmem:[#allocation2 + $0x3b8] sm:$0xff] %vm102, %v1714
    %1777 = vst.msk [vmem:[#allocation2 + $0x3c0] sm:$0xff] %vm102, %v1715
    %1778 = vst.msk [vmem:[#allocation2 + $0x3c8] sm:$0xff] %vm102, %v1716
    %1779 = vst.msk [vmem:[#allocation2 + $0x3d0] sm:$0xff] %vm102, %v1717
    %1780 = vst.msk [vmem:[#allocation2 + $0x3d8] sm:$0xff] %vm102, %v1718
    %v1781 = vld [vmem:[%s0 + $0x1f5] sm:$0xff]
    %v1782 = vld [vmem:[%s0 + $0x1fd] sm:$0xff]
    %v1783 = vld [vmem:[%s0 + $0x205] sm:$0xff]
    %v1784 = vld [vmem:[%s0 + $0x20d] sm:$0xff]
    %v1785 = vld [vmem:[%s0 + $0x215] sm:$0xff]
    %v1786 = vld [vmem:[%s0 + $0x21d] sm:$0xff]
    %v1787 = vld [vmem:[%s0 + $0x225] sm:$0xff]
    %v1788 = vld [vmem:[%s0 + $0x22d] sm:$0xff]
    %v1789 = vld [vmem:[%s0 + $0x235] sm:$0xff]
    %v1790 = vld [vmem:[%s0 + $0x23d] sm:$0xff]
    %v1791 = vld [vmem:[%s0 + $0x245] sm:$0xff]
    %v1792 = vld [vmem:[%s0 + $0x24d] sm:$0xff]
    %v1793 = vld [vmem:[%s0 + $0x255] sm:$0xff]
    %v1794 = vld [vmem:[%s0 + $0x25d] sm:$0xff]
    %v1795 = vld [vmem:[%s0 + $0x265] sm:$0xff]
    %v1796 = vld [vmem:[%s0 + $0x26d] sm:$0xff]
    %v1797 = vld [vmem:[%s0 + $0x275] sm:$0xff]
    %v1798 = vld [vmem:[%s0 + $0x27d] sm:$0xff]
    %v1799 = vld [vmem:[%s0 + $0x285] sm:$0xff]
    %v1800 = vld [vmem:[%s0 + $0x28d] sm:$0xff]
    %v1801 = vld [vmem:[%s0 + $0x295] sm:$0xff]
    %v1802 = vld [vmem:[%s0 + $0x29d] sm:$0xff]
    %v1803 = vld [vmem:[%s0 + $0x2a5] sm:$0xff]
    %v1804 = vld [vmem:[%s0 + $0x2ad] sm:$0xff]
    %v1805 = vld [vmem:[%s0 + $0x2b5] sm:$0xff]
    %v1806 = vld [vmem:[%s0 + $0x2bd] sm:$0xff]
    %v1807 = vld [vmem:[%s0 + $0x2c5] sm:$0xff]
    %v1808 = vld [vmem:[%s0 + $0x2cd] sm:$0xff]
    %v1809 = vld [vmem:[%s0 + $0x2d5] sm:$0xff]
    %v1810 = vld [vmem:[%s0 + $0x2dd] sm:$0xff]
    %v1811 = vld [vmem:[%s0 + $0x2e5] sm:$0xff]
    %v1812 = vld [vmem:[%s0 + $0x2ed] sm:$0xff]
    %v1813 = vld [vmem:[%s0 + $0x2f5] sm:$0xff]
    %v1814 = vld [vmem:[%s0 + $0x2fd] sm:$0xff]
    %v1815 = vld [vmem:[%s0 + $0x305] sm:$0xff]
    %v1816 = vld [vmem:[%s0 + $0x30d] sm:$0xff]
    %v1817 = vld [vmem:[%s0 + $0x315] sm:$0xff]
    %v1818 = vld [vmem:[%s0 + $0x31d] sm:$0xff]
    %v1819 = vld [vmem:[%s0 + $0x325] sm:$0xff]
    %v1820 = vld [vmem:[%s0 + $0x32d] sm:$0xff]
    %v1821 = vld [vmem:[%s0 + $0x335] sm:$0xff]
    %v1822 = vld [vmem:[%s0 + $0x33d] sm:$0xff]
    %v1823 = vld [vmem:[%s0 + $0x345] sm:$0xff]
    %v1824 = vld [vmem:[%s0 + $0x34d] sm:$0xff]
    %v1825 = vld [vmem:[%s0 + $0x355] sm:$0xff]
    %v1826 = vld [vmem:[%s0 + $0x35d] sm:$0xff]
    %v1827 = vld [vmem:[%s0 + $0x365] sm:$0xff]
    %v1828 = vld [vmem:[%s0 + $0x36d] sm:$0xff]
    %v1829 = vld [vmem:[%s0 + $0x375] sm:$0xff]
    %v1830 = vld [vmem:[%s0 + $0x37d] sm:$0xff]
    %v1831 = vld [vmem:[%s0 + $0x385] sm:$0xff]
    %v1832 = vld [vmem:[%s0 + $0x38d] sm:$0xff]
    %v1833 = vld [vmem:[%s0 + $0x395] sm:$0xff]
    %v1834 = vld [vmem:[%s0 + $0x39d] sm:$0xff]
    %v1835 = vld [vmem:[%s0 + $0x3a5] sm:$0xff]
    %v1836 = vld [vmem:[%s0 + $0x3ad] sm:$0xff]
    %v1837 = vld [vmem:[%s0 + $0x3b5] sm:$0xff]
    %v1838 = vld [vmem:[%s0 + $0x3bd] sm:$0xff]
    %v1839 = vld [vmem:[%s0 + $0x3c5] sm:$0xff]
    %v1840 = vld [vmem:[%s0 + $0x3cd] sm:$0xff]
    %v1841 = vld [vmem:[%s0 + $0x3d5] sm:$0xff]
    %v1842 = vld [vmem:[%s0 + $0x3dd] sm:$0xff]
    %1905 = vrot.lane.b32.xlu0 %v1781, 16
    %v1906 = vpop.permute.xlu0 %1905
    %1907 = vrot.lane.b32.xlu0 %v1782, 16
    %v1908 = vpop.permute.xlu0 %1907
    %1909 = vrot.lane.b32.xlu0 %v1783, 16
    %v1910 = vpop.permute.xlu0 %1909
    %1911 = vrot.lane.b32.xlu0 %v1784, 16
    %v1912 = vpop.permute.xlu0 %1911
    %1913 = vrot.lane.b32.xlu0 %v1785, 16
    %v1914 = vpop.permute.xlu0 %1913
    %1915 = vrot.lane.b32.xlu0 %v1786, 16
    %v1916 = vpop.permute.xlu0 %1915
    %1917 = vrot.lane.b32.xlu0 %v1787, 16
    %v1918 = vpop.permute.xlu0 %1917
    %1919 = vrot.lane.b32.xlu0 %v1788, 16
    %v1920 = vpop.permute.xlu0 %1919
    %1921 = vrot.lane.b32.xlu0 %v1789, 16
    %v1922 = vpop.permute.xlu0 %1921
    %1923 = vrot.lane.b32.xlu0 %v1790, 16
    %v1924 = vpop.permute.xlu0 %1923
    %1925 = vrot.lane.b32.xlu0 %v1791, 16
    %v1926 = vpop.permute.xlu0 %1925
    %1927 = vrot.lane.b32.xlu0 %v1792, 16
    %v1928 = vpop.permute.xlu0 %1927
    %1929 = vrot.lane.b32.xlu0 %v1793, 16
    %v1930 = vpop.permute.xlu0 %1929
    %1931 = vrot.lane.b32.xlu0 %v1794, 16
    %v1932 = vpop.permute.xlu0 %1931
    %1933 = vrot.lane.b32.xlu0 %v1795, 16
    %v1934 = vpop.permute.xlu0 %1933
    %1935 = vrot.lane.b32.xlu0 %v1796, 16
    %v1936 = vpop.permute.xlu0 %1935
    %1937 = vrot.lane.b32.xlu0 %v1797, 16
    %v1938 = vpop.permute.xlu0 %1937
    %1939 = vrot.lane.b32.xlu0 %v1798, 16
    %v1940 = vpop.permute.xlu0 %1939
    %1941 = vrot.lane.b32.xlu0 %v1799, 16
    %v1942 = vpop.permute.xlu0 %1941
    %1943 = vrot.lane.b32.xlu0 %v1800, 16
    %v1944 = vpop.permute.xlu0 %1943
    %1945 = vrot.lane.b32.xlu0 %v1801, 16
    %v1946 = vpop.permute.xlu0 %1945
    %1947 = vrot.lane.b32.xlu0 %v1802, 16
    %v1948 = vpop.permute.xlu0 %1947
    %1949 = vrot.lane.b32.xlu0 %v1803, 16
    %v1950 = vpop.permute.xlu0 %1949
    %1951 = vrot.lane.b32.xlu0 %v1804, 16
    %v1952 = vpop.permute.xlu0 %1951
    %1953 = vrot.lane.b32.xlu0 %v1805, 16
    %v1954 = vpop.permute.xlu0 %1953
    %1955 = vrot.lane.b32.xlu0 %v1806, 16
    %v1956 = vpop.permute.xlu0 %1955
    %1957 = vrot.lane.b32.xlu0 %v1807, 16
    %v1958 = vpop.permute.xlu0 %1957
    %1959 = vrot.lane.b32.xlu0 %v1808, 16
    %v1960 = vpop.permute.xlu0 %1959
    %1961 = vrot.lane.b32.xlu0 %v1809, 16
    %v1962 = vpop.permute.xlu0 %1961
    %1963 = vrot.lane.b32.xlu0 %v1810, 16
    %v1964 = vpop.permute.xlu0 %1963
    %1965 = vrot.lane.b32.xlu0 %v1811, 16
    %v1966 = vpop.permute.xlu0 %1965
    %1967 = vrot.lane.b32.xlu0 %v1812, 16
    %v1968 = vpop.permute.xlu0 %1967
    %1969 = vrot.lane.b32.xlu0 %v1813, 16
    %v1970 = vpop.permute.xlu0 %1969
    %1971 = vrot.lane.b32.xlu0 %v1814, 16
    %v1972 = vpop.permute.xlu0 %1971
    %1973 = vrot.lane.b32.xlu0 %v1815, 16
    %v1974 = vpop.permute.xlu0 %1973
    %1975 = vrot.lane.b32.xlu0 %v1816, 16
    %v1976 = vpop.permute.xlu0 %1975
    %1977 = vrot.lane.b32.xlu0 %v1817, 16
    %v1978 = vpop.permute.xlu0 %1977
    %1979 = vrot.lane.b32.xlu0 %v1818, 16
    %v1980 = vpop.permute.xlu0 %1979
    %1981 = vrot.lane.b32.xlu0 %v1819, 16
    %v1982 = vpop.permute.xlu0 %1981
    %1983 = vrot.lane.b32.xlu0 %v1820, 16
    %v1984 = vpop.permute.xlu0 %1983
    %1985 = vrot.lane.b32.xlu0 %v1821, 16
    %v1986 = vpop.permute.xlu0 %1985
    %1987 = vrot.lane.b32.xlu0 %v1822, 16
    %v1988 = vpop.permute.xlu0 %1987
    %1989 = vrot.lane.b32.xlu0 %v1823, 16
    %v1990 = vpop.permute.xlu0 %1989
    %1991 = vrot.lane.b32.xlu0 %v1824, 16
    %v1992 = vpop.permute.xlu0 %1991
    %1993 = vrot.lane.b32.xlu0 %v1825, 16
    %v1994 = vpop.permute.xlu0 %1993
    %1995 = vrot.lane.b32.xlu0 %v1826, 16
    %v1996 = vpop.permute.xlu0 %1995
    %1997 = vrot.lane.b32.xlu0 %v1827, 16
    %v1998 = vpop.permute.xlu0 %1997
    %1999 = vrot.lane.b32.xlu0 %v1828, 16
    %v2000 = vpop.permute.xlu0 %1999
    %2001 = vrot.lane.b32.xlu0 %v1829, 16
    %v2002 = vpop.permute.xlu0 %2001
    %2003 = vrot.lane.b32.xlu0 %v1830, 16
    %v2004 = vpop.permute.xlu0 %2003
    %2005 = vrot.lane.b32.xlu0 %v1831, 16
    %v2006 = vpop.permute.xlu0 %2005
    %2007 = vrot.lane.b32.xlu0 %v1832, 16
    %v2008 = vpop.permute.xlu0 %2007
    %2009 = vrot.lane.b32.xlu0 %v1833, 16
    %v2010 = vpop.permute.xlu0 %2009
    %2011 = vrot.lane.b32.xlu0 %v1834, 16
    %v2012 = vpop.permute.xlu0 %2011
    %2013 = vrot.lane.b32.xlu0 %v1835, 16
    %v2014 = vpop.permute.xlu0 %2013
    %2015 = vrot.lane.b32.xlu0 %v1836, 16
    %v2016 = vpop.permute.xlu0 %2015
    %2017 = vrot.lane.b32.xlu0 %v1837, 16
    %v2018 = vpop.permute.xlu0 %2017
    %2019 = vrot.lane.b32.xlu0 %v1838, 16
    %v2020 = vpop.permute.xlu0 %2019
    %2021 = vrot.lane.b32.xlu0 %v1839, 16
    %v2022 = vpop.permute.xlu0 %2021
    %2023 = vrot.lane.b32.xlu0 %v1840, 16
    %v2024 = vpop.permute.xlu0 %2023
    %2025 = vrot.lane.b32.xlu0 %v1841, 16
    %v2026 = vpop.permute.xlu0 %2025
    %2027 = vrot.lane.b32.xlu0 %v1842, 16
    %v2028 = vpop.permute.xlu0 %2027
    %2091 = vst.msk [vmem:[#allocation2 + $0x1f0] sm:$0xff] %vm475, %v1906
    %2092 = vst.msk [vmem:[#allocation2 + $0x1f8] sm:$0xff] %vm475, %v1908
    %2093 = vst.msk [vmem:[#allocation2 + $0x200] sm:$0xff] %vm475, %v1910
    %2094 = vst.msk [vmem:[#allocation2 + $0x208] sm:$0xff] %vm475, %v1912
    %2095 = vst.msk [vmem:[#allocation2 + $0x210] sm:$0xff] %vm475, %v1914
    %2096 = vst.msk [vmem:[#allocation2 + $0x218] sm:$0xff] %vm475, %v1916
    %2097 = vst.msk [vmem:[#allocation2 + $0x220] sm:$0xff] %vm475, %v1918
    %2098 = vst.msk [vmem:[#allocation2 + $0x228] sm:$0xff] %vm475, %v1920
    %2099 = vst.msk [vmem:[#allocation2 + $0x230] sm:$0xff] %vm475, %v1922
    %2100 = vst.msk [vmem:[#allocation2 + $0x238] sm:$0xff] %vm475, %v1924
    %2101 = vst.msk [vmem:[#allocation2 + $0x240] sm:$0xff] %vm475, %v1926
    %2102 = vst.msk [vmem:[#allocation2 + $0x248] sm:$0xff] %vm475, %v1928
    %2103 = vst.msk [vmem:[#allocation2 + $0x250] sm:$0xff] %vm475, %v1930
    %2104 = vst.msk [vmem:[#allocation2 + $0x258] sm:$0xff] %vm475, %v1932
    %2105 = vst.msk [vmem:[#allocation2 + $0x260] sm:$0xff] %vm475, %v1934
    %2106 = vst.msk [vmem:[#allocation2 + $0x268] sm:$0xff] %vm475, %v1936
    %2107 = vst.msk [vmem:[#allocation2 + $0x270] sm:$0xff] %vm475, %v1938
    %2108 = vst.msk [vmem:[#allocation2 + $0x278] sm:$0xff] %vm475, %v1940
    %2109 = vst.msk [vmem:[#allocation2 + $0x280] sm:$0xff] %vm475, %v1942
    %2110 = vst.msk [vmem:[#allocation2 + $0x288] sm:$0xff] %vm475, %v1944
    %2111 = vst.msk [vmem:[#allocation2 + $0x290] sm:$0xff] %vm475, %v1946
    %2112 = vst.msk [vmem:[#allocation2 + $0x298] sm:$0xff] %vm475, %v1948
    %2113 = vst.msk [vmem:[#allocation2 + $0x2a0] sm:$0xff] %vm475, %v1950
    %2114 = vst.msk [vmem:[#allocation2 + $0x2a8] sm:$0xff] %vm475, %v1952
    %2115 = vst.msk [vmem:[#allocation2 + $0x2b0] sm:$0xff] %vm475, %v1954
    %2116 = vst.msk [vmem:[#allocation2 + $0x2b8] sm:$0xff] %vm475, %v1956
    %2117 = vst.msk [vmem:[#allocation2 + $0x2c0] sm:$0xff] %vm475, %v1958
    %2118 = vst.msk [vmem:[#allocation2 + $0x2c8] sm:$0xff] %vm475, %v1960
    %2119 = vst.msk [vmem:[#allocation2 + $0x2d0] sm:$0xff] %vm475, %v1962
    %2120 = vst.msk [vmem:[#allocation2 + $0x2d8] sm:$0xff] %vm475, %v1964
    %2121 = vst.msk [vmem:[#allocation2 + $0x2e0] sm:$0xff] %vm475, %v1966
    %2122 = vst.msk [vmem:[#allocation2 + $0x2e8] sm:$0xff] %vm475, %v1968
    %2123 = vst.msk [vmem:[#allocation2 + $0x2f0] sm:$0xff] %vm475, %v1970
    %2124 = vst.msk [vmem:[#allocation2 + $0x2f8] sm:$0xff] %vm475, %v1972
    %2125 = vst.msk [vmem:[#allocation2 + $0x300] sm:$0xff] %vm475, %v1974
    %2126 = vst.msk [vmem:[#allocation2 + $0x308] sm:$0xff] %vm475, %v1976
    %2127 = vst.msk [vmem:[#allocation2 + $0x310] sm:$0xff] %vm475, %v1978
    %2128 = vst.msk [vmem:[#allocation2 + $0x318] sm:$0xff] %vm475, %v1980
    %2129 = vst.msk [vmem:[#allocation2 + $0x320] sm:$0xff] %vm475, %v1982
    %2130 = vst.msk [vmem:[#allocation2 + $0x328] sm:$0xff] %vm475, %v1984
    %2131 = vst.msk [vmem:[#allocation2 + $0x330] sm:$0xff] %vm475, %v1986
    %2132 = vst.msk [vmem:[#allocation2 + $0x338] sm:$0xff] %vm475, %v1988
    %2133 = vst.msk [vmem:[#allocation2 + $0x340] sm:$0xff] %vm475, %v1990
    %2134 = vst.msk [vmem:[#allocation2 + $0x348] sm:$0xff] %vm475, %v1992
    %2135 = vst.msk [vmem:[#allocation2 + $0x350] sm:$0xff] %vm475, %v1994
    %2136 = vst.msk [vmem:[#allocation2 + $0x358] sm:$0xff] %vm475, %v1996
    %2137 = vst.msk [vmem:[#allocation2 + $0x360] sm:$0xff] %vm475, %v1998
    %2138 = vst.msk [vmem:[#allocation2 + $0x368] sm:$0xff] %vm475, %v2000
    %2139 = vst.msk [vmem:[#allocation2 + $0x370] sm:$0xff] %vm475, %v2002
    %2140 = vst.msk [vmem:[#allocation2 + $0x378] sm:$0xff] %vm475, %v2004
    %2141 = vst.msk [vmem:[#allocation2 + $0x380] sm:$0xff] %vm475, %v2006
    %2142 = vst.msk [vmem:[#allocation2 + $0x388] sm:$0xff] %vm475, %v2008
    %2143 = vst.msk [vmem:[#allocation2 + $0x390] sm:$0xff] %vm475, %v2010
    %2144 = vst.msk [vmem:[#allocation2 + $0x398] sm:$0xff] %vm475, %v2012
    %2145 = vst.msk [vmem:[#allocation2 + $0x3a0] sm:$0xff] %vm475, %v2014
    %2146 = vst.msk [vmem:[#allocation2 + $0x3a8] sm:$0xff] %vm475, %v2016
    %2147 = vst.msk [vmem:[#allocation2 + $0x3b0] sm:$0xff] %vm475, %v2018
    %2148 = vst.msk [vmem:[#allocation2 + $0x3b8] sm:$0xff] %vm475, %v2020
    %2149 = vst.msk [vmem:[#allocation2 + $0x3c0] sm:$0xff] %vm475, %v2022
    %2150 = vst.msk [vmem:[#allocation2 + $0x3c8] sm:$0xff] %vm475, %v2024
    %2151 = vst.msk [vmem:[#allocation2 + $0x3d0] sm:$0xff] %vm475, %v2026
    %2152 = vst.msk [vmem:[#allocation2 + $0x3d8] sm:$0xff] %vm475, %v2028
    %v2153 = vld [vmem:[%s0 + $0x1f6] sm:$0xff]
    %v2154 = vld [vmem:[%s0 + $0x1fe] sm:$0xff]
    %v2155 = vld [vmem:[%s0 + $0x206] sm:$0xff]
    %v2156 = vld [vmem:[%s0 + $0x20e] sm:$0xff]
    %v2157 = vld [vmem:[%s0 + $0x216] sm:$0xff]
    %v2158 = vld [vmem:[%s0 + $0x21e] sm:$0xff]
    %v2159 = vld [vmem:[%s0 + $0x226] sm:$0xff]
    %v2160 = vld [vmem:[%s0 + $0x22e] sm:$0xff]
    %v2161 = vld [vmem:[%s0 + $0x236] sm:$0xff]
    %v2162 = vld [vmem:[%s0 + $0x23e] sm:$0xff]
    %v2163 = vld [vmem:[%s0 + $0x246] sm:$0xff]
    %v2164 = vld [vmem:[%s0 + $0x24e] sm:$0xff]
    %v2165 = vld [vmem:[%s0 + $0x256] sm:$0xff]
    %v2166 = vld [vmem:[%s0 + $0x25e] sm:$0xff]
    %v2167 = vld [vmem:[%s0 + $0x266] sm:$0xff]
    %v2168 = vld [vmem:[%s0 + $0x26e] sm:$0xff]
    %v2169 = vld [vmem:[%s0 + $0x276] sm:$0xff]
    %v2170 = vld [vmem:[%s0 + $0x27e] sm:$0xff]
    %v2171 = vld [vmem:[%s0 + $0x286] sm:$0xff]
    %v2172 = vld [vmem:[%s0 + $0x28e] sm:$0xff]
    %v2173 = vld [vmem:[%s0 + $0x296] sm:$0xff]
    %v2174 = vld [vmem:[%s0 + $0x29e] sm:$0xff]
    %v2175 = vld [vmem:[%s0 + $0x2a6] sm:$0xff]
    %v2176 = vld [vmem:[%s0 + $0x2ae] sm:$0xff]
    %v2177 = vld [vmem:[%s0 + $0x2b6] sm:$0xff]
    %v2178 = vld [vmem:[%s0 + $0x2be] sm:$0xff]
    %v2179 = vld [vmem:[%s0 + $0x2c6] sm:$0xff]
    %v2180 = vld [vmem:[%s0 + $0x2ce] sm:$0xff]
    %v2181 = vld [vmem:[%s0 + $0x2d6] sm:$0xff]
    %v2182 = vld [vmem:[%s0 + $0x2de] sm:$0xff]
    %v2183 = vld [vmem:[%s0 + $0x2e6] sm:$0xff]
    %v2184 = vld [vmem:[%s0 + $0x2ee] sm:$0xff]
    %v2185 = vld [vmem:[%s0 + $0x2f6] sm:$0xff]
    %v2186 = vld [vmem:[%s0 + $0x2fe] sm:$0xff]
    %v2187 = vld [vmem:[%s0 + $0x306] sm:$0xff]
    %v2188 = vld [vmem:[%s0 + $0x30e] sm:$0xff]
    %v2189 = vld [vmem:[%s0 + $0x316] sm:$0xff]
    %v2190 = vld [vmem:[%s0 + $0x31e] sm:$0xff]
    %v2191 = vld [vmem:[%s0 + $0x326] sm:$0xff]
    %v2192 = vld [vmem:[%s0 + $0x32e] sm:$0xff]
    %v2193 = vld [vmem:[%s0 + $0x336] sm:$0xff]
    %v2194 = vld [vmem:[%s0 + $0x33e] sm:$0xff]
    %v2195 = vld [vmem:[%s0 + $0x346] sm:$0xff]
    %v2196 = vld [vmem:[%s0 + $0x34e] sm:$0xff]
    %v2197 = vld [vmem:[%s0 + $0x356] sm:$0xff]
    %v2198 = vld [vmem:[%s0 + $0x35e] sm:$0xff]
    %v2199 = vld [vmem:[%s0 + $0x366] sm:$0xff]
    %v2200 = vld [vmem:[%s0 + $0x36e] sm:$0xff]
    %v2201 = vld [vmem:[%s0 + $0x376] sm:$0xff]
    %v2202 = vld [vmem:[%s0 + $0x37e] sm:$0xff]
    %v2203 = vld [vmem:[%s0 + $0x386] sm:$0xff]
    %v2204 = vld [vmem:[%s0 + $0x38e] sm:$0xff]
    %v2205 = vld [vmem:[%s0 + $0x396] sm:$0xff]
    %v2206 = vld [vmem:[%s0 + $0x39e] sm:$0xff]
    %v2207 = vld [vmem:[%s0 + $0x3a6] sm:$0xff]
    %v2208 = vld [vmem:[%s0 + $0x3ae] sm:$0xff]
    %v2209 = vld [vmem:[%s0 + $0x3b6] sm:$0xff]
    %v2210 = vld [vmem:[%s0 + $0x3be] sm:$0xff]
    %v2211 = vld [vmem:[%s0 + $0x3c6] sm:$0xff]
    %v2212 = vld [vmem:[%s0 + $0x3ce] sm:$0xff]
    %v2213 = vld [vmem:[%s0 + $0x3d6] sm:$0xff]
    %v2214 = vld [vmem:[%s0 + $0x3de] sm:$0xff]
    %2277 = vrot.lane.b32.xlu0 %v2153, 32
    %v2278 = vpop.permute.xlu0 %2277
    %2279 = vrot.lane.b32.xlu0 %v2154, 32
    %v2280 = vpop.permute.xlu0 %2279
    %2281 = vrot.lane.b32.xlu0 %v2155, 32
    %v2282 = vpop.permute.xlu0 %2281
    %2283 = vrot.lane.b32.xlu0 %v2156, 32
    %v2284 = vpop.permute.xlu0 %2283
    %2285 = vrot.lane.b32.xlu0 %v2157, 32
    %v2286 = vpop.permute.xlu0 %2285
    %2287 = vrot.lane.b32.xlu0 %v2158, 32
    %v2288 = vpop.permute.xlu0 %2287
    %2289 = vrot.lane.b32.xlu0 %v2159, 32
    %v2290 = vpop.permute.xlu0 %2289
    %2291 = vrot.lane.b32.xlu0 %v2160, 32
    %v2292 = vpop.permute.xlu0 %2291
    %2293 = vrot.lane.b32.xlu0 %v2161, 32
    %v2294 = vpop.permute.xlu0 %2293
    %2295 = vrot.lane.b32.xlu0 %v2162, 32
    %v2296 = vpop.permute.xlu0 %2295
    %2297 = vrot.lane.b32.xlu0 %v2163, 32
    %v2298 = vpop.permute.xlu0 %2297
    %2299 = vrot.lane.b32.xlu0 %v2164, 32
    %v2300 = vpop.permute.xlu0 %2299
    %2301 = vrot.lane.b32.xlu0 %v2165, 32
    %v2302 = vpop.permute.xlu0 %2301
    %2303 = vrot.lane.b32.xlu0 %v2166, 32
    %v2304 = vpop.permute.xlu0 %2303
    %2305 = vrot.lane.b32.xlu0 %v2167, 32
    %v2306 = vpop.permute.xlu0 %2305
    %2307 = vrot.lane.b32.xlu0 %v2168, 32
    %v2308 = vpop.permute.xlu0 %2307
    %2309 = vrot.lane.b32.xlu0 %v2169, 32
    %v2310 = vpop.permute.xlu0 %2309
    %2311 = vrot.lane.b32.xlu0 %v2170, 32
    %v2312 = vpop.permute.xlu0 %2311
    %2313 = vrot.lane.b32.xlu0 %v2171, 32
    %v2314 = vpop.permute.xlu0 %2313
    %2315 = vrot.lane.b32.xlu0 %v2172, 32
    %v2316 = vpop.permute.xlu0 %2315
    %2317 = vrot.lane.b32.xlu0 %v2173, 32
    %v2318 = vpop.permute.xlu0 %2317
    %2319 = vrot.lane.b32.xlu0 %v2174, 32
    %v2320 = vpop.permute.xlu0 %2319
    %2321 = vrot.lane.b32.xlu0 %v2175, 32
    %v2322 = vpop.permute.xlu0 %2321
    %2323 = vrot.lane.b32.xlu0 %v2176, 32
    %v2324 = vpop.permute.xlu0 %2323
    %2325 = vrot.lane.b32.xlu0 %v2177, 32
    %v2326 = vpop.permute.xlu0 %2325
    %2327 = vrot.lane.b32.xlu0 %v2178, 32
    %v2328 = vpop.permute.xlu0 %2327
    %2329 = vrot.lane.b32.xlu0 %v2179, 32
    %v2330 = vpop.permute.xlu0 %2329
    %2331 = vrot.lane.b32.xlu0 %v2180, 32
    %v2332 = vpop.permute.xlu0 %2331
    %2333 = vrot.lane.b32.xlu0 %v2181, 32
    %v2334 = vpop.permute.xlu0 %2333
    %2335 = vrot.lane.b32.xlu0 %v2182, 32
    %v2336 = vpop.permute.xlu0 %2335
    %2337 = vrot.lane.b32.xlu0 %v2183, 32
    %v2338 = vpop.permute.xlu0 %2337
    %2339 = vrot.lane.b32.xlu0 %v2184, 32
    %v2340 = vpop.permute.xlu0 %2339
    %2341 = vrot.lane.b32.xlu0 %v2185, 32
    %v2342 = vpop.permute.xlu0 %2341
    %2343 = vrot.lane.b32.xlu0 %v2186, 32
    %v2344 = vpop.permute.xlu0 %2343
    %2345 = vrot.lane.b32.xlu0 %v2187, 32
    %v2346 = vpop.permute.xlu0 %2345
    %2347 = vrot.lane.b32.xlu0 %v2188, 32
    %v2348 = vpop.permute.xlu0 %2347
    %2349 = vrot.lane.b32.xlu0 %v2189, 32
    %v2350 = vpop.permute.xlu0 %2349
    %2351 = vrot.lane.b32.xlu0 %v2190, 32
    %v2352 = vpop.permute.xlu0 %2351
    %2353 = vrot.lane.b32.xlu0 %v2191, 32
    %v2354 = vpop.permute.xlu0 %2353
    %2355 = vrot.lane.b32.xlu0 %v2192, 32
    %v2356 = vpop.permute.xlu0 %2355
    %2357 = vrot.lane.b32.xlu0 %v2193, 32
    %v2358 = vpop.permute.xlu0 %2357
    %2359 = vrot.lane.b32.xlu0 %v2194, 32
    %v2360 = vpop.permute.xlu0 %2359
    %2361 = vrot.lane.b32.xlu0 %v2195, 32
    %v2362 = vpop.permute.xlu0 %2361
    %2363 = vrot.lane.b32.xlu0 %v2196, 32
    %v2364 = vpop.permute.xlu0 %2363
    %2365 = vrot.lane.b32.xlu0 %v2197, 32
    %v2366 = vpop.permute.xlu0 %2365
    %2367 = vrot.lane.b32.xlu0 %v2198, 32
    %v2368 = vpop.permute.xlu0 %2367
    %2369 = vrot.lane.b32.xlu0 %v2199, 32
    %v2370 = vpop.permute.xlu0 %2369
    %2371 = vrot.lane.b32.xlu0 %v2200, 32
    %v2372 = vpop.permute.xlu0 %2371
    %2373 = vrot.lane.b32.xlu0 %v2201, 32
    %v2374 = vpop.permute.xlu0 %2373
    %2375 = vrot.lane.b32.xlu0 %v2202, 32
    %v2376 = vpop.permute.xlu0 %2375
    %2377 = vrot.lane.b32.xlu0 %v2203, 32
    %v2378 = vpop.permute.xlu0 %2377
    %2379 = vrot.lane.b32.xlu0 %v2204, 32
    %v2380 = vpop.permute.xlu0 %2379
    %2381 = vrot.lane.b32.xlu0 %v2205, 32
    %v2382 = vpop.permute.xlu0 %2381
    %2383 = vrot.lane.b32.xlu0 %v2206, 32
    %v2384 = vpop.permute.xlu0 %2383
    %2385 = vrot.lane.b32.xlu0 %v2207, 32
    %v2386 = vpop.permute.xlu0 %2385
    %2387 = vrot.lane.b32.xlu0 %v2208, 32
    %v2388 = vpop.permute.xlu0 %2387
    %2389 = vrot.lane.b32.xlu0 %v2209, 32
    %v2390 = vpop.permute.xlu0 %2389
    %2391 = vrot.lane.b32.xlu0 %v2210, 32
    %v2392 = vpop.permute.xlu0 %2391
    %2393 = vrot.lane.b32.xlu0 %v2211, 32
    %v2394 = vpop.permute.xlu0 %2393
    %2395 = vrot.lane.b32.xlu0 %v2212, 32
    %v2396 = vpop.permute.xlu0 %2395
    %2397 = vrot.lane.b32.xlu0 %v2213, 32
    %v2398 = vpop.permute.xlu0 %2397
    %2399 = vrot.lane.b32.xlu0 %v2214, 32
    %v2400 = vpop.permute.xlu0 %2399
    %2463 = vst.msk [vmem:[#allocation2 + $0x1f0] sm:$0xff] %vm848, %v2278
    %2464 = vst.msk [vmem:[#allocation2 + $0x1f8] sm:$0xff] %vm848, %v2280
    %2465 = vst.msk [vmem:[#allocation2 + $0x200] sm:$0xff] %vm848, %v2282
    %2466 = vst.msk [vmem:[#allocation2 + $0x208] sm:$0xff] %vm848, %v2284
    %2467 = vst.msk [vmem:[#allocation2 + $0x210] sm:$0xff] %vm848, %v2286
    %2468 = vst.msk [vmem:[#allocation2 + $0x218] sm:$0xff] %vm848, %v2288
    %2469 = vst.msk [vmem:[#allocation2 + $0x220] sm:$0xff] %vm848, %v2290
    %2470 = vst.msk [vmem:[#allocation2 + $0x228] sm:$0xff] %vm848, %v2292
    %2471 = vst.msk [vmem:[#allocation2 + $0x230] sm:$0xff] %vm848, %v2294
    %2472 = vst.msk [vmem:[#allocation2 + $0x238] sm:$0xff] %vm848, %v2296
    %2473 = vst.msk [vmem:[#allocation2 + $0x240] sm:$0xff] %vm848, %v2298
    %2474 = vst.msk [vmem:[#allocation2 + $0x248] sm:$0xff] %vm848, %v2300
    %2475 = vst.msk [vmem:[#allocation2 + $0x250] sm:$0xff] %vm848, %v2302
    %2476 = vst.msk [vmem:[#allocation2 + $0x258] sm:$0xff] %vm848, %v2304
    %2477 = vst.msk [vmem:[#allocation2 + $0x260] sm:$0xff] %vm848, %v2306
    %2478 = vst.msk [vmem:[#allocation2 + $0x268] sm:$0xff] %vm848, %v2308
    %2479 = vst.msk [vmem:[#allocation2 + $0x270] sm:$0xff] %vm848, %v2310
    %2480 = vst.msk [vmem:[#allocation2 + $0x278] sm:$0xff] %vm848, %v2312
    %2481 = vst.msk [vmem:[#allocation2 + $0x280] sm:$0xff] %vm848, %v2314
    %2482 = vst.msk [vmem:[#allocation2 + $0x288] sm:$0xff] %vm848, %v2316
    %2483 = vst.msk [vmem:[#allocation2 + $0x290] sm:$0xff] %vm848, %v2318
    %2484 = vst.msk [vmem:[#allocation2 + $0x298] sm:$0xff] %vm848, %v2320
    %2485 = vst.msk [vmem:[#allocation2 + $0x2a0] sm:$0xff] %vm848, %v2322
    %2486 = vst.msk [vmem:[#allocation2 + $0x2a8] sm:$0xff] %vm848, %v2324
    %2487 = vst.msk [vmem:[#allocation2 + $0x2b0] sm:$0xff] %vm848, %v2326
    %2488 = vst.msk [vmem:[#allocation2 + $0x2b8] sm:$0xff] %vm848, %v2328
    %2489 = vst.msk [vmem:[#allocation2 + $0x2c0] sm:$0xff] %vm848, %v2330
    %2490 = vst.msk [vmem:[#allocation2 + $0x2c8] sm:$0xff] %vm848, %v2332
    %2491 = vst.msk [vmem:[#allocation2 + $0x2d0] sm:$0xff] %vm848, %v2334
    %2492 = vst.msk [vmem:[#allocation2 + $0x2d8] sm:$0xff] %vm848, %v2336
    %2493 = vst.msk [vmem:[#allocation2 + $0x2e0] sm:$0xff] %vm848, %v2338
    %2494 = vst.msk [vmem:[#allocation2 + $0x2e8] sm:$0xff] %vm848, %v2340
    %2495 = vst.msk [vmem:[#allocation2 + $0x2f0] sm:$0xff] %vm848, %v2342
    %2496 = vst.msk [vmem:[#allocation2 + $0x2f8] sm:$0xff] %vm848, %v2344
    %2497 = vst.msk [vmem:[#allocation2 + $0x300] sm:$0xff] %vm848, %v2346
    %2498 = vst.msk [vmem:[#allocation2 + $0x308] sm:$0xff] %vm848, %v2348
    %2499 = vst.msk [vmem:[#allocation2 + $0x310] sm:$0xff] %vm848, %v2350
    %2500 = vst.msk [vmem:[#allocation2 + $0x318] sm:$0xff] %vm848, %v2352
    %2501 = vst.msk [vmem:[#allocation2 + $0x320] sm:$0xff] %vm848, %v2354
    %2502 = vst.msk [vmem:[#allocation2 + $0x328] sm:$0xff] %vm848, %v2356
    %2503 = vst.msk [vmem:[#allocation2 + $0x330] sm:$0xff] %vm848, %v2358
    %2504 = vst.msk [vmem:[#allocation2 + $0x338] sm:$0xff] %vm848, %v2360
    %2505 = vst.msk [vmem:[#allocation2 + $0x340] sm:$0xff] %vm848, %v2362
    %2506 = vst.msk [vmem:[#allocation2 + $0x348] sm:$0xff] %vm848, %v2364
    %2507 = vst.msk [vmem:[#allocation2 + $0x350] sm:$0xff] %vm848, %v2366
    %2508 = vst.msk [vmem:[#allocation2 + $0x358] sm:$0xff] %vm848, %v2368
    %2509 = vst.msk [vmem:[#allocation2 + $0x360] sm:$0xff] %vm848, %v2370
    %2510 = vst.msk [vmem:[#allocation2 + $0x368] sm:$0xff] %vm848, %v2372
    %2511 = vst.msk [vmem:[#allocation2 + $0x370] sm:$0xff] %vm848, %v2374
    %2512 = vst.msk [vmem:[#allocation2 + $0x378] sm:$0xff] %vm848, %v2376
    %2513 = vst.msk [vmem:[#allocation2 + $0x380] sm:$0xff] %vm848, %v2378
    %2514 = vst.msk [vmem:[#allocation2 + $0x388] sm:$0xff] %vm848, %v2380
    %2515 = vst.msk [vmem:[#allocation2 + $0x390] sm:$0xff] %vm848, %v2382
    %2516 = vst.msk [vmem:[#allocation2 + $0x398] sm:$0xff] %vm848, %v2384
    %2517 = vst.msk [vmem:[#allocation2 + $0x3a0] sm:$0xff] %vm848, %v2386
    %2518 = vst.msk [vmem:[#allocation2 + $0x3a8] sm:$0xff] %vm848, %v2388
    %2519 = vst.msk [vmem:[#allocation2 + $0x3b0] sm:$0xff] %vm848, %v2390
    %2520 = vst.msk [vmem:[#allocation2 + $0x3b8] sm:$0xff] %vm848, %v2392
    %2521 = vst.msk [vmem:[#allocation2 + $0x3c0] sm:$0xff] %vm848, %v2394
    %2522 = vst.msk [vmem:[#allocation2 + $0x3c8] sm:$0xff] %vm848, %v2396
    %2523 = vst.msk [vmem:[#allocation2 + $0x3d0] sm:$0xff] %vm848, %v2398
    %2524 = vst.msk [vmem:[#allocation2 + $0x3d8] sm:$0xff] %vm848, %v2400
    %v2525 = vld [vmem:[%s0 + $0x1f7] sm:$0xff]
    %v2526 = vld [vmem:[%s0 + $0x1ff] sm:$0xff]
    %v2527 = vld [vmem:[%s0 + $0x207] sm:$0xff]
    %v2528 = vld [vmem:[%s0 + $0x20f] sm:$0xff]
    %v2529 = vld [vmem:[%s0 + $0x217] sm:$0xff]
    %v2530 = vld [vmem:[%s0 + $0x21f] sm:$0xff]
    %v2531 = vld [vmem:[%s0 + $0x227] sm:$0xff]
    %v2532 = vld [vmem:[%s0 + $0x22f] sm:$0xff]
    %v2533 = vld [vmem:[%s0 + $0x237] sm:$0xff]
    %v2534 = vld [vmem:[%s0 + $0x23f] sm:$0xff]
    %v2535 = vld [vmem:[%s0 + $0x247] sm:$0xff]
    %v2536 = vld [vmem:[%s0 + $0x24f] sm:$0xff]
    %v2537 = vld [vmem:[%s0 + $0x257] sm:$0xff]
    %v2538 = vld [vmem:[%s0 + $0x25f] sm:$0xff]
    %v2539 = vld [vmem:[%s0 + $0x267] sm:$0xff]
    %v2540 = vld [vmem:[%s0 + $0x26f] sm:$0xff]
    %v2541 = vld [vmem:[%s0 + $0x277] sm:$0xff]
    %v2542 = vld [vmem:[%s0 + $0x27f] sm:$0xff]
    %v2543 = vld [vmem:[%s0 + $0x287] sm:$0xff]
    %v2544 = vld [vmem:[%s0 + $0x28f] sm:$0xff]
    %v2545 = vld [vmem:[%s0 + $0x297] sm:$0xff]
    %v2546 = vld [vmem:[%s0 + $0x29f] sm:$0xff]
    %v2547 = vld [vmem:[%s0 + $0x2a7] sm:$0xff]
    %v2548 = vld [vmem:[%s0 + $0x2af] sm:$0xff]
    %v2549 = vld [vmem:[%s0 + $0x2b7] sm:$0xff]
    %v2550 = vld [vmem:[%s0 + $0x2bf] sm:$0xff]
    %v2551 = vld [vmem:[%s0 + $0x2c7] sm:$0xff]
    %v2552 = vld [vmem:[%s0 + $0x2cf] sm:$0xff]
    %v2553 = vld [vmem:[%s0 + $0x2d7] sm:$0xff]
    %v2554 = vld [vmem:[%s0 + $0x2df] sm:$0xff]
    %v2555 = vld [vmem:[%s0 + $0x2e7] sm:$0xff]
    %v2556 = vld [vmem:[%s0 + $0x2ef] sm:$0xff]
    %v2557 = vld [vmem:[%s0 + $0x2f7] sm:$0xff]
    %v2558 = vld [vmem:[%s0 + $0x2ff] sm:$0xff]
    %v2559 = vld [vmem:[%s0 + $0x307] sm:$0xff]
    %v2560 = vld [vmem:[%s0 + $0x30f] sm:$0xff]
    %v2561 = vld [vmem:[%s0 + $0x317] sm:$0xff]
    %v2562 = vld [vmem:[%s0 + $0x31f] sm:$0xff]
    %v2563 = vld [vmem:[%s0 + $0x327] sm:$0xff]
    %v2564 = vld [vmem:[%s0 + $0x32f] sm:$0xff]
    %v2565 = vld [vmem:[%s0 + $0x337] sm:$0xff]
    %v2566 = vld [vmem:[%s0 + $0x33f] sm:$0xff]
    %v2567 = vld [vmem:[%s0 + $0x347] sm:$0xff]
    %v2568 = vld [vmem:[%s0 + $0x34f] sm:$0xff]
    %v2569 = vld [vmem:[%s0 + $0x357] sm:$0xff]
    %v2570 = vld [vmem:[%s0 + $0x35f] sm:$0xff]
    %v2571 = vld [vmem:[%s0 + $0x367] sm:$0xff]
    %v2572 = vld [vmem:[%s0 + $0x36f] sm:$0xff]
    %v2573 = vld [vmem:[%s0 + $0x377] sm:$0xff]
    %v2574 = vld [vmem:[%s0 + $0x37f] sm:$0xff]
    %v2575 = vld [vmem:[%s0 + $0x387] sm:$0xff]
    %v2576 = vld [vmem:[%s0 + $0x38f] sm:$0xff]
    %v2577 = vld [vmem:[%s0 + $0x397] sm:$0xff]
    %v2578 = vld [vmem:[%s0 + $0x39f] sm:$0xff]
    %v2579 = vld [vmem:[%s0 + $0x3a7] sm:$0xff]
    %v2580 = vld [vmem:[%s0 + $0x3af] sm:$0xff]
    %v2581 = vld [vmem:[%s0 + $0x3b7] sm:$0xff]
    %v2582 = vld [vmem:[%s0 + $0x3bf] sm:$0xff]
    %v2583 = vld [vmem:[%s0 + $0x3c7] sm:$0xff]
    %v2584 = vld [vmem:[%s0 + $0x3cf] sm:$0xff]
    %v2585 = vld [vmem:[%s0 + $0x3d7] sm:$0xff]
    %v2586 = vld [vmem:[%s0 + $0x3df] sm:$0xff]
    %2649 = vrot.lane.b32.xlu0 %v2525, 48
    %v2650 = vpop.permute.xlu0 %2649
    %2651 = vrot.lane.b32.xlu0 %v2526, 48
    %v2652 = vpop.permute.xlu0 %2651
    %2653 = vrot.lane.b32.xlu0 %v2527, 48
    %v2654 = vpop.permute.xlu0 %2653
    %2655 = vrot.lane.b32.xlu0 %v2528, 48
    %v2656 = vpop.permute.xlu0 %2655
    %2657 = vrot.lane.b32.xlu0 %v2529, 48
    %v2658 = vpop.permute.xlu0 %2657
    %2659 = vrot.lane.b32.xlu0 %v2530, 48
    %v2660 = vpop.permute.xlu0 %2659
    %2661 = vrot.lane.b32.xlu0 %v2531, 48
    %v2662 = vpop.permute.xlu0 %2661
    %2663 = vrot.lane.b32.xlu0 %v2532, 48
    %v2664 = vpop.permute.xlu0 %2663
    %2665 = vrot.lane.b32.xlu0 %v2533, 48
    %v2666 = vpop.permute.xlu0 %2665
    %2667 = vrot.lane.b32.xlu0 %v2534, 48
    %v2668 = vpop.permute.xlu0 %2667
    %2669 = vrot.lane.b32.xlu0 %v2535, 48
    %v2670 = vpop.permute.xlu0 %2669
    %2671 = vrot.lane.b32.xlu0 %v2536, 48
    %v2672 = vpop.permute.xlu0 %2671
    %2673 = vrot.lane.b32.xlu0 %v2537, 48
    %v2674 = vpop.permute.xlu0 %2673
    %2675 = vrot.lane.b32.xlu0 %v2538, 48
    %v2676 = vpop.permute.xlu0 %2675
    %2677 = vrot.lane.b32.xlu0 %v2539, 48
    %v2678 = vpop.permute.xlu0 %2677
    %2679 = vrot.lane.b32.xlu0 %v2540, 48
    %v2680 = vpop.permute.xlu0 %2679
    %2681 = vrot.lane.b32.xlu0 %v2541, 48
    %v2682 = vpop.permute.xlu0 %2681
    %2683 = vrot.lane.b32.xlu0 %v2542, 48
    %v2684 = vpop.permute.xlu0 %2683
    %2685 = vrot.lane.b32.xlu0 %v2543, 48
    %v2686 = vpop.permute.xlu0 %2685
    %2687 = vrot.lane.b32.xlu0 %v2544, 48
    %v2688 = vpop.permute.xlu0 %2687
    %2689 = vrot.lane.b32.xlu0 %v2545, 48
    %v2690 = vpop.permute.xlu0 %2689
    %2691 = vrot.lane.b32.xlu0 %v2546, 48
    %v2692 = vpop.permute.xlu0 %2691
    %2693 = vrot.lane.b32.xlu0 %v2547, 48
    %v2694 = vpop.permute.xlu0 %2693
    %2695 = vrot.lane.b32.xlu0 %v2548, 48
    %v2696 = vpop.permute.xlu0 %2695
    %2697 = vrot.lane.b32.xlu0 %v2549, 48
    %v2698 = vpop.permute.xlu0 %2697
    %2699 = vrot.lane.b32.xlu0 %v2550, 48
    %v2700 = vpop.permute.xlu0 %2699
    %2701 = vrot.lane.b32.xlu0 %v2551, 48
    %v2702 = vpop.permute.xlu0 %2701
    %2703 = vrot.lane.b32.xlu0 %v2552, 48
    %v2704 = vpop.permute.xlu0 %2703
    %2705 = vrot.lane.b32.xlu0 %v2553, 48
    %v2706 = vpop.permute.xlu0 %2705
    %2707 = vrot.lane.b32.xlu0 %v2554, 48
    %v2708 = vpop.permute.xlu0 %2707
    %2709 = vrot.lane.b32.xlu0 %v2555, 48
    %v2710 = vpop.permute.xlu0 %2709
    %2711 = vrot.lane.b32.xlu0 %v2556, 48
    %v2712 = vpop.permute.xlu0 %2711
    %2713 = vrot.lane.b32.xlu0 %v2557, 48
    %v2714 = vpop.permute.xlu0 %2713
    %2715 = vrot.lane.b32.xlu0 %v2558, 48
    %v2716 = vpop.permute.xlu0 %2715
    %2717 = vrot.lane.b32.xlu0 %v2559, 48
    %v2718 = vpop.permute.xlu0 %2717
    %2719 = vrot.lane.b32.xlu0 %v2560, 48
    %v2720 = vpop.permute.xlu0 %2719
    %2721 = vrot.lane.b32.xlu0 %v2561, 48
    %v2722 = vpop.permute.xlu0 %2721
    %2723 = vrot.lane.b32.xlu0 %v2562, 48
    %v2724 = vpop.permute.xlu0 %2723
    %2725 = vrot.lane.b32.xlu0 %v2563, 48
    %v2726 = vpop.permute.xlu0 %2725
    %2727 = vrot.lane.b32.xlu0 %v2564, 48
    %v2728 = vpop.permute.xlu0 %2727
    %2729 = vrot.lane.b32.xlu0 %v2565, 48
    %v2730 = vpop.permute.xlu0 %2729
    %2731 = vrot.lane.b32.xlu0 %v2566, 48
    %v2732 = vpop.permute.xlu0 %2731
    %2733 = vrot.lane.b32.xlu0 %v2567, 48
    %v2734 = vpop.permute.xlu0 %2733
    %2735 = vrot.lane.b32.xlu0 %v2568, 48
    %v2736 = vpop.permute.xlu0 %2735
    %2737 = vrot.lane.b32.xlu0 %v2569, 48
    %v2738 = vpop.permute.xlu0 %2737
    %2739 = vrot.lane.b32.xlu0 %v2570, 48
    %v2740 = vpop.permute.xlu0 %2739
    %2741 = vrot.lane.b32.xlu0 %v2571, 48
    %v2742 = vpop.permute.xlu0 %2741
    %2743 = vrot.lane.b32.xlu0 %v2572, 48
    %v2744 = vpop.permute.xlu0 %2743
    %2745 = vrot.lane.b32.xlu0 %v2573, 48
    %v2746 = vpop.permute.xlu0 %2745
    %2747 = vrot.lane.b32.xlu0 %v2574, 48
    %v2748 = vpop.permute.xlu0 %2747
    %2749 = vrot.lane.b32.xlu0 %v2575, 48
    %v2750 = vpop.permute.xlu0 %2749
    %2751 = vrot.lane.b32.xlu0 %v2576, 48
    %v2752 = vpop.permute.xlu0 %2751
    %2753 = vrot.lane.b32.xlu0 %v2577, 48
    %v2754 = vpop.permute.xlu0 %2753
    %2755 = vrot.lane.b32.xlu0 %v2578, 48
    %v2756 = vpop.permute.xlu0 %2755
    %2757 = vrot.lane.b32.xlu0 %v2579, 48
    %v2758 = vpop.permute.xlu0 %2757
    %2759 = vrot.lane.b32.xlu0 %v2580, 48
    %v2760 = vpop.permute.xlu0 %2759
    %2761 = vrot.lane.b32.xlu0 %v2581, 48
    %v2762 = vpop.permute.xlu0 %2761
    %2763 = vrot.lane.b32.xlu0 %v2582, 48
    %v2764 = vpop.permute.xlu0 %2763
    %2765 = vrot.lane.b32.xlu0 %v2583, 48
    %v2766 = vpop.permute.xlu0 %2765
    %2767 = vrot.lane.b32.xlu0 %v2584, 48
    %v2768 = vpop.permute.xlu0 %2767
    %2769 = vrot.lane.b32.xlu0 %v2585, 48
    %v2770 = vpop.permute.xlu0 %2769
    %2771 = vrot.lane.b32.xlu0 %v2586, 48
    %v2772 = vpop.permute.xlu0 %2771
    %2835 = vst.msk [vmem:[#allocation2 + $0x1f0] sm:$0xff] %vm1221, %v2650
    %2836 = vst.msk [vmem:[#allocation2 + $0x1f8] sm:$0xff] %vm1221, %v2652
    %2837 = vst.msk [vmem:[#allocation2 + $0x200] sm:$0xff] %vm1221, %v2654
    %2838 = vst.msk [vmem:[#allocation2 + $0x208] sm:$0xff] %vm1221, %v2656
    %2839 = vst.msk [vmem:[#allocation2 + $0x210] sm:$0xff] %vm1221, %v2658
    %2840 = vst.msk [vmem:[#allocation2 + $0x218] sm:$0xff] %vm1221, %v2660
    %2841 = vst.msk [vmem:[#allocation2 + $0x220] sm:$0xff] %vm1221, %v2662
    %2842 = vst.msk [vmem:[#allocation2 + $0x228] sm:$0xff] %vm1221, %v2664
    %2843 = vst.msk [vmem:[#allocation2 + $0x230] sm:$0xff] %vm1221, %v2666
    %2844 = vst.msk [vmem:[#allocation2 + $0x238] sm:$0xff] %vm1221, %v2668
    %2845 = vst.msk [vmem:[#allocation2 + $0x240] sm:$0xff] %vm1221, %v2670
    %2846 = vst.msk [vmem:[#allocation2 + $0x248] sm:$0xff] %vm1221, %v2672
    %2847 = vst.msk [vmem:[#allocation2 + $0x250] sm:$0xff] %vm1221, %v2674
    %2848 = vst.msk [vmem:[#allocation2 + $0x258] sm:$0xff] %vm1221, %v2676
    %2849 = vst.msk [vmem:[#allocation2 + $0x260] sm:$0xff] %vm1221, %v2678
    %2850 = vst.msk [vmem:[#allocation2 + $0x268] sm:$0xff] %vm1221, %v2680
    %2851 = vst.msk [vmem:[#allocation2 + $0x270] sm:$0xff] %vm1221, %v2682
    %2852 = vst.msk [vmem:[#allocation2 + $0x278] sm:$0xff] %vm1221, %v2684
    %2853 = vst.msk [vmem:[#allocation2 + $0x280] sm:$0xff] %vm1221, %v2686
    %2854 = vst.msk [vmem:[#allocation2 + $0x288] sm:$0xff] %vm1221, %v2688
    %2855 = vst.msk [vmem:[#allocation2 + $0x290] sm:$0xff] %vm1221, %v2690
    %2856 = vst.msk [vmem:[#allocation2 + $0x298] sm:$0xff] %vm1221, %v2692
    %2857 = vst.msk [vmem:[#allocation2 + $0x2a0] sm:$0xff] %vm1221, %v2694
    %2858 = vst.msk [vmem:[#allocation2 + $0x2a8] sm:$0xff] %vm1221, %v2696
    %2859 = vst.msk [vmem:[#allocation2 + $0x2b0] sm:$0xff] %vm1221, %v2698
    %2860 = vst.msk [vmem:[#allocation2 + $0x2b8] sm:$0xff] %vm1221, %v2700
    %2861 = vst.msk [vmem:[#allocation2 + $0x2c0] sm:$0xff] %vm1221, %v2702
    %2862 = vst.msk [vmem:[#allocation2 + $0x2c8] sm:$0xff] %vm1221, %v2704
    %2863 = vst.msk [vmem:[#allocation2 + $0x2d0] sm:$0xff] %vm1221, %v2706
    %2864 = vst.msk [vmem:[#allocation2 + $0x2d8] sm:$0xff] %vm1221, %v2708
    %2865 = vst.msk [vmem:[#allocation2 + $0x2e0] sm:$0xff] %vm1221, %v2710
    %2866 = vst.msk [vmem:[#allocation2 + $0x2e8] sm:$0xff] %vm1221, %v2712
    %2867 = vst.msk [vmem:[#allocation2 + $0x2f0] sm:$0xff] %vm1221, %v2714
    %2868 = vst.msk [vmem:[#allocation2 + $0x2f8] sm:$0xff] %vm1221, %v2716
    %2869 = vst.msk [vmem:[#allocation2 + $0x300] sm:$0xff] %vm1221, %v2718
    %2870 = vst.msk [vmem:[#allocation2 + $0x308] sm:$0xff] %vm1221, %v2720
    %2871 = vst.msk [vmem:[#allocation2 + $0x310] sm:$0xff] %vm1221, %v2722
    %2872 = vst.msk [vmem:[#allocation2 + $0x318] sm:$0xff] %vm1221, %v2724
    %2873 = vst.msk [vmem:[#allocation2 + $0x320] sm:$0xff] %vm1221, %v2726
    %2874 = vst.msk [vmem:[#allocation2 + $0x328] sm:$0xff] %vm1221, %v2728
    %2875 = vst.msk [vmem:[#allocation2 + $0x330] sm:$0xff] %vm1221, %v2730
    %2876 = vst.msk [vmem:[#allocation2 + $0x338] sm:$0xff] %vm1221, %v2732
    %2877 = vst.msk [vmem:[#allocation2 + $0x340] sm:$0xff] %vm1221, %v2734
    %2878 = vst.msk [vmem:[#allocation2 + $0x348] sm:$0xff] %vm1221, %v2736
    %2879 = vst.msk [vmem:[#allocation2 + $0x350] sm:$0xff] %vm1221, %v2738
    %2880 = vst.msk [vmem:[#allocation2 + $0x358] sm:$0xff] %vm1221, %v2740
    %2881 = vst.msk [vmem:[#allocation2 + $0x360] sm:$0xff] %vm1221, %v2742
    %2882 = vst.msk [vmem:[#allocation2 + $0x368] sm:$0xff] %vm1221, %v2744
    %2883 = vst.msk [vmem:[#allocation2 + $0x370] sm:$0xff] %vm1221, %v2746
    %2884 = vst.msk [vmem:[#allocation2 + $0x378] sm:$0xff] %vm1221, %v2748
    %2885 = vst.msk [vmem:[#allocation2 + $0x380] sm:$0xff] %vm1221, %v2750
    %2886 = vst.msk [vmem:[#allocation2 + $0x388] sm:$0xff] %vm1221, %v2752
    %2887 = vst.msk [vmem:[#allocation2 + $0x390] sm:$0xff] %vm1221, %v2754
    %2888 = vst.msk [vmem:[#allocation2 + $0x398] sm:$0xff] %vm1221, %v2756
    %2889 = vst.msk [vmem:[#allocation2 + $0x3a0] sm:$0xff] %vm1221, %v2758
    %2890 = vst.msk [vmem:[#allocation2 + $0x3a8] sm:$0xff] %vm1221, %v2760
    %2891 = vst.msk [vmem:[#allocation2 + $0x3b0] sm:$0xff] %vm1221, %v2762
    %2892 = vst.msk [vmem:[#allocation2 + $0x3b8] sm:$0xff] %vm1221, %v2764
    %2893 = vst.msk [vmem:[#allocation2 + $0x3c0] sm:$0xff] %vm1221, %v2766
    %2894 = vst.msk [vmem:[#allocation2 + $0x3c8] sm:$0xff] %vm1221, %v2768
    %2895 = vst.msk [vmem:[#allocation2 + $0x3d0] sm:$0xff] %vm1221, %v2770
    %2896 = vst.msk [vmem:[#allocation2 + $0x3d8] sm:$0xff] %vm1221, %v2772
    %v2897 = vld [vmem:[%s0 + $0x1f8] sm:$0xff]
    %v2898 = vld [vmem:[%s0 + $0x200] sm:$0xff]
    %v2899 = vld [vmem:[%s0 + $0x208] sm:$0xff]
    %v2900 = vld [vmem:[%s0 + $0x210] sm:$0xff]
    %v2901 = vld [vmem:[%s0 + $0x218] sm:$0xff]
    %v2902 = vld [vmem:[%s0 + $0x220] sm:$0xff]
    %v2903 = vld [vmem:[%s0 + $0x228] sm:$0xff]
    %v2904 = vld [vmem:[%s0 + $0x230] sm:$0xff]
    %v2905 = vld [vmem:[%s0 + $0x238] sm:$0xff]
    %v2906 = vld [vmem:[%s0 + $0x240] sm:$0xff]
    %v2907 = vld [vmem:[%s0 + $0x248] sm:$0xff]
    %v2908 = vld [vmem:[%s0 + $0x250] sm:$0xff]
    %v2909 = vld [vmem:[%s0 + $0x258] sm:$0xff]
    %v2910 = vld [vmem:[%s0 + $0x260] sm:$0xff]
    %v2911 = vld [vmem:[%s0 + $0x268] sm:$0xff]
    %v2912 = vld [vmem:[%s0 + $0x270] sm:$0xff]
    %v2913 = vld [vmem:[%s0 + $0x278] sm:$0xff]
    %v2914 = vld [vmem:[%s0 + $0x280] sm:$0xff]
    %v2915 = vld [vmem:[%s0 + $0x288] sm:$0xff]
    %v2916 = vld [vmem:[%s0 + $0x290] sm:$0xff]
    %v2917 = vld [vmem:[%s0 + $0x298] sm:$0xff]
    %v2918 = vld [vmem:[%s0 + $0x2a0] sm:$0xff]
    %v2919 = vld [vmem:[%s0 + $0x2a8] sm:$0xff]
    %v2920 = vld [vmem:[%s0 + $0x2b0] sm:$0xff]
    %v2921 = vld [vmem:[%s0 + $0x2b8] sm:$0xff]
    %v2922 = vld [vmem:[%s0 + $0x2c0] sm:$0xff]
    %v2923 = vld [vmem:[%s0 + $0x2c8] sm:$0xff]
    %v2924 = vld [vmem:[%s0 + $0x2d0] sm:$0xff]
    %v2925 = vld [vmem:[%s0 + $0x2d8] sm:$0xff]
    %v2926 = vld [vmem:[%s0 + $0x2e0] sm:$0xff]
    %v2927 = vld [vmem:[%s0 + $0x2e8] sm:$0xff]
    %v2928 = vld [vmem:[%s0 + $0x2f0] sm:$0xff]
    %v2929 = vld [vmem:[%s0 + $0x2f8] sm:$0xff]
    %v2930 = vld [vmem:[%s0 + $0x300] sm:$0xff]
    %v2931 = vld [vmem:[%s0 + $0x308] sm:$0xff]
    %v2932 = vld [vmem:[%s0 + $0x310] sm:$0xff]
    %v2933 = vld [vmem:[%s0 + $0x318] sm:$0xff]
    %v2934 = vld [vmem:[%s0 + $0x320] sm:$0xff]
    %v2935 = vld [vmem:[%s0 + $0x328] sm:$0xff]
    %v2936 = vld [vmem:[%s0 + $0x330] sm:$0xff]
    %v2937 = vld [vmem:[%s0 + $0x338] sm:$0xff]
    %v2938 = vld [vmem:[%s0 + $0x340] sm:$0xff]
    %v2939 = vld [vmem:[%s0 + $0x348] sm:$0xff]
    %v2940 = vld [vmem:[%s0 + $0x350] sm:$0xff]
    %v2941 = vld [vmem:[%s0 + $0x358] sm:$0xff]
    %v2942 = vld [vmem:[%s0 + $0x360] sm:$0xff]
    %v2943 = vld [vmem:[%s0 + $0x368] sm:$0xff]
    %v2944 = vld [vmem:[%s0 + $0x370] sm:$0xff]
    %v2945 = vld [vmem:[%s0 + $0x378] sm:$0xff]
    %v2946 = vld [vmem:[%s0 + $0x380] sm:$0xff]
    %v2947 = vld [vmem:[%s0 + $0x388] sm:$0xff]
    %v2948 = vld [vmem:[%s0 + $0x390] sm:$0xff]
    %v2949 = vld [vmem:[%s0 + $0x398] sm:$0xff]
    %v2950 = vld [vmem:[%s0 + $0x3a0] sm:$0xff]
    %v2951 = vld [vmem:[%s0 + $0x3a8] sm:$0xff]
    %v2952 = vld [vmem:[%s0 + $0x3b0] sm:$0xff]
    %v2953 = vld [vmem:[%s0 + $0x3b8] sm:$0xff]
    %v2954 = vld [vmem:[%s0 + $0x3c0] sm:$0xff]
    %v2955 = vld [vmem:[%s0 + $0x3c8] sm:$0xff]
    %v2956 = vld [vmem:[%s0 + $0x3d0] sm:$0xff]
    %v2957 = vld [vmem:[%s0 + $0x3d8] sm:$0xff]
    %v2958 = vld [vmem:[%s0 + $0x3e0] sm:$0xff]
    %3021 = vrot.lane.b32.xlu0 %v2897, 64
    %v3022 = vpop.permute.xlu0 %3021
    %3023 = vrot.lane.b32.xlu0 %v2898, 64
    %v3024 = vpop.permute.xlu0 %3023
    %3025 = vrot.lane.b32.xlu0 %v2899, 64
    %v3026 = vpop.permute.xlu0 %3025
    %3027 = vrot.lane.b32.xlu0 %v2900, 64
    %v3028 = vpop.permute.xlu0 %3027
    %3029 = vrot.lane.b32.xlu0 %v2901, 64
    %v3030 = vpop.permute.xlu0 %3029
    %3031 = vrot.lane.b32.xlu0 %v2902, 64
    %v3032 = vpop.permute.xlu0 %3031
    %3033 = vrot.lane.b32.xlu0 %v2903, 64
    %v3034 = vpop.permute.xlu0 %3033
    %3035 = vrot.lane.b32.xlu0 %v2904, 64
    %v3036 = vpop.permute.xlu0 %3035
    %3037 = vrot.lane.b32.xlu0 %v2905, 64
    %v3038 = vpop.permute.xlu0 %3037
    %3039 = vrot.lane.b32.xlu0 %v2906, 64
    %v3040 = vpop.permute.xlu0 %3039
    %3041 = vrot.lane.b32.xlu0 %v2907, 64
    %v3042 = vpop.permute.xlu0 %3041
    %3043 = vrot.lane.b32.xlu0 %v2908, 64
    %v3044 = vpop.permute.xlu0 %3043
    %3045 = vrot.lane.b32.xlu0 %v2909, 64
    %v3046 = vpop.permute.xlu0 %3045
    %3047 = vrot.lane.b32.xlu0 %v2910, 64
    %v3048 = vpop.permute.xlu0 %3047
    %3049 = vrot.lane.b32.xlu0 %v2911, 64
    %v3050 = vpop.permute.xlu0 %3049
    %3051 = vrot.lane.b32.xlu0 %v2912, 64
    %v3052 = vpop.permute.xlu0 %3051
    %3053 = vrot.lane.b32.xlu0 %v2913, 64
    %v3054 = vpop.permute.xlu0 %3053
    %3055 = vrot.lane.b32.xlu0 %v2914, 64
    %v3056 = vpop.permute.xlu0 %3055
    %3057 = vrot.lane.b32.xlu0 %v2915, 64
    %v3058 = vpop.permute.xlu0 %3057
    %3059 = vrot.lane.b32.xlu0 %v2916, 64
    %v3060 = vpop.permute.xlu0 %3059
    %3061 = vrot.lane.b32.xlu0 %v2917, 64
    %v3062 = vpop.permute.xlu0 %3061
    %3063 = vrot.lane.b32.xlu0 %v2918, 64
    %v3064 = vpop.permute.xlu0 %3063
    %3065 = vrot.lane.b32.xlu0 %v2919, 64
    %v3066 = vpop.permute.xlu0 %3065
    %3067 = vrot.lane.b32.xlu0 %v2920, 64
    %v3068 = vpop.permute.xlu0 %3067
    %3069 = vrot.lane.b32.xlu0 %v2921, 64
    %v3070 = vpop.permute.xlu0 %3069
    %3071 = vrot.lane.b32.xlu0 %v2922, 64
    %v3072 = vpop.permute.xlu0 %3071
    %3073 = vrot.lane.b32.xlu0 %v2923, 64
    %v3074 = vpop.permute.xlu0 %3073
    %3075 = vrot.lane.b32.xlu0 %v2924, 64
    %v3076 = vpop.permute.xlu0 %3075
    %3077 = vrot.lane.b32.xlu0 %v2925, 64
    %v3078 = vpop.permute.xlu0 %3077
    %3079 = vrot.lane.b32.xlu0 %v2926, 64
    %v3080 = vpop.permute.xlu0 %3079
    %3081 = vrot.lane.b32.xlu0 %v2927, 64
    %v3082 = vpop.permute.xlu0 %3081
    %3083 = vrot.lane.b32.xlu0 %v2928, 64
    %v3084 = vpop.permute.xlu0 %3083
    %3085 = vrot.lane.b32.xlu0 %v2929, 64
    %v3086 = vpop.permute.xlu0 %3085
    %3087 = vrot.lane.b32.xlu0 %v2930, 64
    %v3088 = vpop.permute.xlu0 %3087
    %3089 = vrot.lane.b32.xlu0 %v2931, 64
    %v3090 = vpop.permute.xlu0 %3089
    %3091 = vrot.lane.b32.xlu0 %v2932, 64
    %v3092 = vpop.permute.xlu0 %3091
    %3093 = vrot.lane.b32.xlu0 %v2933, 64
    %v3094 = vpop.permute.xlu0 %3093
    %3095 = vrot.lane.b32.xlu0 %v2934, 64
    %v3096 = vpop.permute.xlu0 %3095
    %3097 = vrot.lane.b32.xlu0 %v2935, 64
    %v3098 = vpop.permute.xlu0 %3097
    %3099 = vrot.lane.b32.xlu0 %v2936, 64
    %v3100 = vpop.permute.xlu0 %3099
    %3101 = vrot.lane.b32.xlu0 %v2937, 64
    %v3102 = vpop.permute.xlu0 %3101
    %3103 = vrot.lane.b32.xlu0 %v2938, 64
    %v3104 = vpop.permute.xlu0 %3103
    %3105 = vrot.lane.b32.xlu0 %v2939, 64
    %v3106 = vpop.permute.xlu0 %3105
    %3107 = vrot.lane.b32.xlu0 %v2940, 64
    %v3108 = vpop.permute.xlu0 %3107
    %3109 = vrot.lane.b32.xlu0 %v2941, 64
    %v3110 = vpop.permute.xlu0 %3109
    %3111 = vrot.lane.b32.xlu0 %v2942, 64
    %v3112 = vpop.permute.xlu0 %3111
    %3113 = vrot.lane.b32.xlu0 %v2943, 64
    %v3114 = vpop.permute.xlu0 %3113
    %3115 = vrot.lane.b32.xlu0 %v2944, 64
    %v3116 = vpop.permute.xlu0 %3115
    %3117 = vrot.lane.b32.xlu0 %v2945, 64
    %v3118 = vpop.permute.xlu0 %3117
    %3119 = vrot.lane.b32.xlu0 %v2946, 64
    %v3120 = vpop.permute.xlu0 %3119
    %3121 = vrot.lane.b32.xlu0 %v2947, 64
    %v3122 = vpop.permute.xlu0 %3121
    %3123 = vrot.lane.b32.xlu0 %v2948, 64
    %v3124 = vpop.permute.xlu0 %3123
    %3125 = vrot.lane.b32.xlu0 %v2949, 64
    %v3126 = vpop.permute.xlu0 %3125
    %3127 = vrot.lane.b32.xlu0 %v2950, 64
    %v3128 = vpop.permute.xlu0 %3127
    %3129 = vrot.lane.b32.xlu0 %v2951, 64
    %v3130 = vpop.permute.xlu0 %3129
    %3131 = vrot.lane.b32.xlu0 %v2952, 64
    %v3132 = vpop.permute.xlu0 %3131
    %3133 = vrot.lane.b32.xlu0 %v2953, 64
    %v3134 = vpop.permute.xlu0 %3133
    %3135 = vrot.lane.b32.xlu0 %v2954, 64
    %v3136 = vpop.permute.xlu0 %3135
    %3137 = vrot.lane.b32.xlu0 %v2955, 64
    %v3138 = vpop.permute.xlu0 %3137
    %3139 = vrot.lane.b32.xlu0 %v2956, 64
    %v3140 = vpop.permute.xlu0 %3139
    %3141 = vrot.lane.b32.xlu0 %v2957, 64
    %v3142 = vpop.permute.xlu0 %3141
    %3143 = vrot.lane.b32.xlu0 %v2958, 64
    %v3144 = vpop.permute.xlu0 %3143
    %3207 = vst.msk [vmem:[#allocation2 + $0x1f0] sm:$0xff] %vm1594, %v3022
    %3208 = vst.msk [vmem:[#allocation2 + $0x1f8] sm:$0xff] %vm1594, %v3024
    %3209 = vst.msk [vmem:[#allocation2 + $0x200] sm:$0xff] %vm1594, %v3026
    %3210 = vst.msk [vmem:[#allocation2 + $0x208] sm:$0xff] %vm1594, %v3028
    %3211 = vst.msk [vmem:[#allocation2 + $0x210] sm:$0xff] %vm1594, %v3030
    %3212 = vst.msk [vmem:[#allocation2 + $0x218] sm:$0xff] %vm1594, %v3032
    %3213 = vst.msk [vmem:[#allocation2 + $0x220] sm:$0xff] %vm1594, %v3034
    %3214 = vst.msk [vmem:[#allocation2 + $0x228] sm:$0xff] %vm1594, %v3036
    %3215 = vst.msk [vmem:[#allocation2 + $0x230] sm:$0xff] %vm1594, %v3038
    %3216 = vst.msk [vmem:[#allocation2 + $0x238] sm:$0xff] %vm1594, %v3040
    %3217 = vst.msk [vmem:[#allocation2 + $0x240] sm:$0xff] %vm1594, %v3042
    %3218 = vst.msk [vmem:[#allocation2 + $0x248] sm:$0xff] %vm1594, %v3044
    %3219 = vst.msk [vmem:[#allocation2 + $0x250] sm:$0xff] %vm1594, %v3046
    %3220 = vst.msk [vmem:[#allocation2 + $0x258] sm:$0xff] %vm1594, %v3048
    %3221 = vst.msk [vmem:[#allocation2 + $0x260] sm:$0xff] %vm1594, %v3050
    %3222 = vst.msk [vmem:[#allocation2 + $0x268] sm:$0xff] %vm1594, %v3052
    %3223 = vst.msk [vmem:[#allocation2 + $0x270] sm:$0xff] %vm1594, %v3054
    %3224 = vst.msk [vmem:[#allocation2 + $0x278] sm:$0xff] %vm1594, %v3056
    %3225 = vst.msk [vmem:[#allocation2 + $0x280] sm:$0xff] %vm1594, %v3058
    %3226 = vst.msk [vmem:[#allocation2 + $0x288] sm:$0xff] %vm1594, %v3060
    %3227 = vst.msk [vmem:[#allocation2 + $0x290] sm:$0xff] %vm1594, %v3062
    %3228 = vst.msk [vmem:[#allocation2 + $0x298] sm:$0xff] %vm1594, %v3064
    %3229 = vst.msk [vmem:[#allocation2 + $0x2a0] sm:$0xff] %vm1594, %v3066
    %3230 = vst.msk [vmem:[#allocation2 + $0x2a8] sm:$0xff] %vm1594, %v3068
    %3231 = vst.msk [vmem:[#allocation2 + $0x2b0] sm:$0xff] %vm1594, %v3070
    %3232 = vst.msk [vmem:[#allocation2 + $0x2b8] sm:$0xff] %vm1594, %v3072
    %3233 = vst.msk [vmem:[#allocation2 + $0x2c0] sm:$0xff] %vm1594, %v3074
    %3234 = vst.msk [vmem:[#allocation2 + $0x2c8] sm:$0xff] %vm1594, %v3076
    %3235 = vst.msk [vmem:[#allocation2 + $0x2d0] sm:$0xff] %vm1594, %v3078
    %3236 = vst.msk [vmem:[#allocation2 + $0x2d8] sm:$0xff] %vm1594, %v3080
    %3237 = vst.msk [vmem:[#allocation2 + $0x2e0] sm:$0xff] %vm1594, %v3082
    %3238 = vst.msk [vmem:[#allocation2 + $0x2e8] sm:$0xff] %vm1594, %v3084
    %3239 = vst.msk [vmem:[#allocation2 + $0x2f0] sm:$0xff] %vm1594, %v3086
    %3240 = vst.msk [vmem:[#allocation2 + $0x2f8] sm:$0xff] %vm1594, %v3088
    %3241 = vst.msk [vmem:[#allocation2 + $0x300] sm:$0xff] %vm1594, %v3090
    %3242 = vst.msk [vmem:[#allocation2 + $0x308] sm:$0xff] %vm1594, %v3092
    %3243 = vst.msk [vmem:[#allocation2 + $0x310] sm:$0xff] %vm1594, %v3094
    %3244 = vst.msk [vmem:[#allocation2 + $0x318] sm:$0xff] %vm1594, %v3096
    %3245 = vst.msk [vmem:[#allocation2 + $0x320] sm:$0xff] %vm1594, %v3098
    %3246 = vst.msk [vmem:[#allocation2 + $0x328] sm:$0xff] %vm1594, %v3100
    %3247 = vst.msk [vmem:[#allocation2 + $0x330] sm:$0xff] %vm1594, %v3102
    %3248 = vst.msk [vmem:[#allocation2 + $0x338] sm:$0xff] %vm1594, %v3104
    %3249 = vst.msk [vmem:[#allocation2 + $0x340] sm:$0xff] %vm1594, %v3106
    %3250 = vst.msk [vmem:[#allocation2 + $0x348] sm:$0xff] %vm1594, %v3108
    %3251 = vst.msk [vmem:[#allocation2 + $0x350] sm:$0xff] %vm1594, %v3110
    %3252 = vst.msk [vmem:[#allocation2 + $0x358] sm:$0xff] %vm1594, %v3112
    %3253 = vst.msk [vmem:[#allocation2 + $0x360] sm:$0xff] %vm1594, %v3114
    %3254 = vst.msk [vmem:[#allocation2 + $0x368] sm:$0xff] %vm1594, %v3116
    %3255 = vst.msk [vmem:[#allocation2 + $0x370] sm:$0xff] %vm1594, %v3118
    %3256 = vst.msk [vmem:[#allocation2 + $0x378] sm:$0xff] %vm1594, %v3120
    %3257 = vst.msk [vmem:[#allocation2 + $0x380] sm:$0xff] %vm1594, %v3122
    %3258 = vst.msk [vmem:[#allocation2 + $0x388] sm:$0xff] %vm1594, %v3124
    %3259 = vst.msk [vmem:[#allocation2 + $0x390] sm:$0xff] %vm1594, %v3126
    %3260 = vst.msk [vmem:[#allocation2 + $0x398] sm:$0xff] %vm1594, %v3128
    %3261 = vst.msk [vmem:[#allocation2 + $0x3a0] sm:$0xff] %vm1594, %v3130
    %3262 = vst.msk [vmem:[#allocation2 + $0x3a8] sm:$0xff] %vm1594, %v3132
    %3263 = vst.msk [vmem:[#allocation2 + $0x3b0] sm:$0xff] %vm1594, %v3134
    %3264 = vst.msk [vmem:[#allocation2 + $0x3b8] sm:$0xff] %vm1594, %v3136
    %3265 = vst.msk [vmem:[#allocation2 + $0x3c0] sm:$0xff] %vm1594, %v3138
    %3266 = vst.msk [vmem:[#allocation2 + $0x3c8] sm:$0xff] %vm1594, %v3140
    %3267 = vst.msk [vmem:[#allocation2 + $0x3d0] sm:$0xff] %vm1594, %v3142
    %3268 = vst.msk [vmem:[#allocation2 + $0x3d8] sm:$0xff] %vm1594, %v3144
    %v3269 = vld [vmem:[#allocation2] sm:$0xff]
    %v3270 = vld [vmem:[#allocation2 + $0x8] sm:$0xff]
    %v3271 = vld [vmem:[#allocation2 + $0x10] sm:$0xff]
    %v3272 = vld [vmem:[#allocation2 + $0x18] sm:$0xff]
    %v3273 = vld [vmem:[#allocation2 + $0x20] sm:$0xff]
    %v3274 = vld [vmem:[#allocation2 + $0x28] sm:$0xff]
    %v3275 = vld [vmem:[#allocation2 + $0x30] sm:$0xff]
    %v3276 = vld [vmem:[#allocation2 + $0x38] sm:$0xff]
    %v3277 = vld [vmem:[#allocation2 + $0x40] sm:$0xff]
    %v3278 = vld [vmem:[#allocation2 + $0x48] sm:$0xff]
    %v3279 = vld [vmem:[#allocation2 + $0x50] sm:$0xff]
    %v3280 = vld [vmem:[#allocation2 + $0x58] sm:$0xff]
    %v3281 = vld [vmem:[#allocation2 + $0x60] sm:$0xff]
    %v3282 = vld [vmem:[#allocation2 + $0x68] sm:$0xff]
    %v3283 = vld [vmem:[#allocation2 + $0x70] sm:$0xff]
    %v3284 = vld [vmem:[#allocation2 + $0x78] sm:$0xff]
    %v3285 = vld [vmem:[#allocation2 + $0x80] sm:$0xff]
    %v3286 = vld [vmem:[#allocation2 + $0x88] sm:$0xff]
    %v3287 = vld [vmem:[#allocation2 + $0x90] sm:$0xff]
    %v3288 = vld [vmem:[#allocation2 + $0x98] sm:$0xff]
    %v3289 = vld [vmem:[#allocation2 + $0xa0] sm:$0xff]
    %v3290 = vld [vmem:[#allocation2 + $0xa8] sm:$0xff]
    %v3291 = vld [vmem:[#allocation2 + $0xb0] sm:$0xff]
    %v3292 = vld [vmem:[#allocation2 + $0xb8] sm:$0xff]
    %v3293 = vld [vmem:[#allocation2 + $0xc0] sm:$0xff]
    %v3294 = vld [vmem:[#allocation2 + $0xc8] sm:$0xff]
    %v3295 = vld [vmem:[#allocation2 + $0xd0] sm:$0xff]
    %v3296 = vld [vmem:[#allocation2 + $0xd8] sm:$0xff]
    %v3297 = vld [vmem:[#allocation2 + $0xe0] sm:$0xff]
    %v3298 = vld [vmem:[#allocation2 + $0xe8] sm:$0xff]
    %v3299 = vld [vmem:[#allocation2 + $0xf0] sm:$0xff]
    %v3300 = vld [vmem:[#allocation2 + $0xf8] sm:$0xff]
    %v3301 = vld [vmem:[#allocation2 + $0x100] sm:$0xff]
    %v3302 = vld [vmem:[#allocation2 + $0x108] sm:$0xff]
    %v3303 = vld [vmem:[#allocation2 + $0x110] sm:$0xff]
    %v3304 = vld [vmem:[#allocation2 + $0x118] sm:$0xff]
    %v3305 = vld [vmem:[#allocation2 + $0x120] sm:$0xff]
    %v3306 = vld [vmem:[#allocation2 + $0x128] sm:$0xff]
    %v3307 = vld [vmem:[#allocation2 + $0x130] sm:$0xff]
    %v3308 = vld [vmem:[#allocation2 + $0x138] sm:$0xff]
    %v3309 = vld [vmem:[#allocation2 + $0x140] sm:$0xff]
    %v3310 = vld [vmem:[#allocation2 + $0x148] sm:$0xff]
    %v3311 = vld [vmem:[#allocation2 + $0x150] sm:$0xff]
    %v3312 = vld [vmem:[#allocation2 + $0x158] sm:$0xff]
    %v3313 = vld [vmem:[#allocation2 + $0x160] sm:$0xff]
    %v3314 = vld [vmem:[#allocation2 + $0x168] sm:$0xff]
    %v3315 = vld [vmem:[#allocation2 + $0x170] sm:$0xff]
    %v3316 = vld [vmem:[#allocation2 + $0x178] sm:$0xff]
    %v3317 = vld [vmem:[#allocation2 + $0x180] sm:$0xff]
    %v3318 = vld [vmem:[#allocation2 + $0x188] sm:$0xff]
    %v3319 = vld [vmem:[#allocation2 + $0x190] sm:$0xff]
    %v3320 = vld [vmem:[#allocation2 + $0x198] sm:$0xff]
    %v3321 = vld [vmem:[#allocation2 + $0x1a0] sm:$0xff]
    %v3322 = vld [vmem:[#allocation2 + $0x1a8] sm:$0xff]
    %v3323 = vld [vmem:[#allocation2 + $0x1b0] sm:$0xff]
    %v3324 = vld [vmem:[#allocation2 + $0x1b8] sm:$0xff]
    %v3325 = vld [vmem:[#allocation2 + $0x1c0] sm:$0xff]
    %v3326 = vld [vmem:[#allocation2 + $0x1c8] sm:$0xff]
    %v3327 = vld [vmem:[#allocation2 + $0x1d0] sm:$0xff]
    %v3328 = vld [vmem:[#allocation2 + $0x1d8] sm:$0xff]
    %v3329 = vld [vmem:[#allocation2 + $0x1e0] sm:$0xff]
    %v3330 = vld [vmem:[#allocation2 + $0x1e8] sm:$0xff]
    %v3331 = vld [vmem:[#allocation2 + $0x1f0] sm:$0xff]
    %v3332 = vld [vmem:[#allocation2 + $0x1f8] sm:$0xff]
    %v3333 = vld [vmem:[#allocation2 + $0x200] sm:$0xff]
    %v3334 = vld [vmem:[#allocation2 + $0x208] sm:$0xff]
    %v3335 = vld [vmem:[#allocation2 + $0x210] sm:$0xff]
    %v3336 = vld [vmem:[#allocation2 + $0x218] sm:$0xff]
    %v3337 = vld [vmem:[#allocation2 + $0x220] sm:$0xff]
    %v3338 = vld [vmem:[#allocation2 + $0x228] sm:$0xff]
    %v3339 = vld [vmem:[#allocation2 + $0x230] sm:$0xff]
    %v3340 = vld [vmem:[#allocation2 + $0x238] sm:$0xff]
    %v3341 = vld [vmem:[#allocation2 + $0x240] sm:$0xff]
    %v3342 = vld [vmem:[#allocation2 + $0x248] sm:$0xff]
    %v3343 = vld [vmem:[#allocation2 + $0x250] sm:$0xff]
    %v3344 = vld [vmem:[#allocation2 + $0x258] sm:$0xff]
    %v3345 = vld [vmem:[#allocation2 + $0x260] sm:$0xff]
    %v3346 = vld [vmem:[#allocation2 + $0x268] sm:$0xff]
    %v3347 = vld [vmem:[#allocation2 + $0x270] sm:$0xff]
    %v3348 = vld [vmem:[#allocation2 + $0x278] sm:$0xff]
    %v3349 = vld [vmem:[#allocation2 + $0x280] sm:$0xff]
    %v3350 = vld [vmem:[#allocation2 + $0x288] sm:$0xff]
    %v3351 = vld [vmem:[#allocation2 + $0x290] sm:$0xff]
    %v3352 = vld [vmem:[#allocation2 + $0x298] sm:$0xff]
    %v3353 = vld [vmem:[#allocation2 + $0x2a0] sm:$0xff]
    %v3354 = vld [vmem:[#allocation2 + $0x2a8] sm:$0xff]
    %v3355 = vld [vmem:[#allocation2 + $0x2b0] sm:$0xff]
    %v3356 = vld [vmem:[#allocation2 + $0x2b8] sm:$0xff]
    %v3357 = vld [vmem:[#allocation2 + $0x2c0] sm:$0xff]
    %v3358 = vld [vmem:[#allocation2 + $0x2c8] sm:$0xff]
    %v3359 = vld [vmem:[#allocation2 + $0x2d0] sm:$0xff]
    %v3360 = vld [vmem:[#allocation2 + $0x2d8] sm:$0xff]
    %v3361 = vld [vmem:[#allocation2 + $0x2e0] sm:$0xff]
    %v3362 = vld [vmem:[#allocation2 + $0x2e8] sm:$0xff]
    %v3363 = vld [vmem:[#allocation2 + $0x2f0] sm:$0xff]
    %v3364 = vld [vmem:[#allocation2 + $0x2f8] sm:$0xff]
    %v3365 = vld [vmem:[#allocation2 + $0x300] sm:$0xff]
    %v3366 = vld [vmem:[#allocation2 + $0x308] sm:$0xff]
    %v3367 = vld [vmem:[#allocation2 + $0x310] sm:$0xff]
    %v3368 = vld [vmem:[#allocation2 + $0x318] sm:$0xff]
    %v3369 = vld [vmem:[#allocation2 + $0x320] sm:$0xff]
    %v3370 = vld [vmem:[#allocation2 + $0x328] sm:$0xff]
    %v3371 = vld [vmem:[#allocation2 + $0x330] sm:$0xff]
    %v3372 = vld [vmem:[#allocation2 + $0x338] sm:$0xff]
    %v3373 = vld [vmem:[#allocation2 + $0x340] sm:$0xff]
    %v3374 = vld [vmem:[#allocation2 + $0x348] sm:$0xff]
    %v3375 = vld [vmem:[#allocation2 + $0x350] sm:$0xff]
    %v3376 = vld [vmem:[#allocation2 + $0x358] sm:$0xff]
    %v3377 = vld [vmem:[#allocation2 + $0x360] sm:$0xff]
    %v3378 = vld [vmem:[#allocation2 + $0x368] sm:$0xff]
    %v3379 = vld [vmem:[#allocation2 + $0x370] sm:$0xff]
    %v3380 = vld [vmem:[#allocation2 + $0x378] sm:$0xff]
    %v3381 = vld [vmem:[#allocation2 + $0x380] sm:$0xff]
    %v3382 = vld [vmem:[#allocation2 + $0x388] sm:$0xff]
    %v3383 = vld [vmem:[#allocation2 + $0x390] sm:$0xff]
    %v3384 = vld [vmem:[#allocation2 + $0x398] sm:$0xff]
    %v3385 = vld [vmem:[#allocation2 + $0x3a0] sm:$0xff]
    %v3386 = vld [vmem:[#allocation2 + $0x3a8] sm:$0xff]
    %v3387 = vld [vmem:[#allocation2 + $0x3b0] sm:$0xff]
    %v3388 = vld [vmem:[#allocation2 + $0x3b8] sm:$0xff]
    %v3389 = vld [vmem:[#allocation2 + $0x3c0] sm:$0xff]
    %v3390 = vld [vmem:[#allocation2 + $0x3c8] sm:$0xff]
    %v3391 = vld [vmem:[#allocation2 + $0x3d0] sm:$0xff]
    %v3392 = vld [vmem:[#allocation2 + $0x3d8] sm:$0xff]
    %v3393 = vpack.c.bf16 %v3270, %v3269
    %v3394 = vpack.c.bf16 %v3272, %v3271
    %v3395 = vpack.c.bf16 %v3274, %v3273
    %v3396 = vpack.c.bf16 %v3276, %v3275
    %v3397 = vpack.c.bf16 %v3278, %v3277
    %v3398 = vpack.c.bf16 %v3280, %v3279
    %v3399 = vpack.c.bf16 %v3282, %v3281
    %v3400 = vpack.c.bf16 %v3284, %v3283
    %v3401 = vpack.c.bf16 %v3286, %v3285
    %v3402 = vpack.c.bf16 %v3288, %v3287
    %v3403 = vpack.c.bf16 %v3290, %v3289
    %v3404 = vpack.c.bf16 %v3292, %v3291
    %v3405 = vpack.c.bf16 %v3294, %v3293
    %v3406 = vpack.c.bf16 %v3296, %v3295
    %v3407 = vpack.c.bf16 %v3298, %v3297
    %v3408 = vpack.c.bf16 %v3300, %v3299
    %v3409 = vpack.c.bf16 %v3302, %v3301
    %v3410 = vpack.c.bf16 %v3304, %v3303
    %v3411 = vpack.c.bf16 %v3306, %v3305
    %v3412 = vpack.c.bf16 %v3308, %v3307
    %v3413 = vpack.c.bf16 %v3310, %v3309
    %v3414 = vpack.c.bf16 %v3312, %v3311
    %v3415 = vpack.c.bf16 %v3314, %v3313
    %v3416 = vpack.c.bf16 %v3316, %v3315
    %v3417 = vpack.c.bf16 %v3318, %v3317
    %v3418 = vpack.c.bf16 %v3320, %v3319
    %v3419 = vpack.c.bf16 %v3322, %v3321
    %v3420 = vpack.c.bf16 %v3324, %v3323
    %v3421 = vpack.c.bf16 %v3326, %v3325
    %v3422 = vpack.c.bf16 %v3328, %v3327
    %v3423 = vpack.c.bf16 %v3330, %v3329
    %v3424 = vpack.c.bf16 %v3332, %v3331
    %v3425 = vpack.c.bf16 %v3334, %v3333
    %v3426 = vpack.c.bf16 %v3336, %v3335
    %v3427 = vpack.c.bf16 %v3338, %v3337
    %v3428 = vpack.c.bf16 %v3340, %v3339
    %v3429 = vpack.c.bf16 %v3342, %v3341
    %v3430 = vpack.c.bf16 %v3344, %v3343
    %v3431 = vpack.c.bf16 %v3346, %v3345
    %v3432 = vpack.c.bf16 %v3348, %v3347
    %v3433 = vpack.c.bf16 %v3350, %v3349
    %v3434 = vpack.c.bf16 %v3352, %v3351
    %v3435 = vpack.c.bf16 %v3354, %v3353
    %v3436 = vpack.c.bf16 %v3356, %v3355
    %v3437 = vpack.c.bf16 %v3358, %v3357
    %v3438 = vpack.c.bf16 %v3360, %v3359
    %v3439 = vpack.c.bf16 %v3362, %v3361
    %v3440 = vpack.c.bf16 %v3364, %v3363
    %v3441 = vpack.c.bf16 %v3366, %v3365
    %v3442 = vpack.c.bf16 %v3368, %v3367
    %v3443 = vpack.c.bf16 %v3370, %v3369
    %v3444 = vpack.c.bf16 %v3372, %v3371
    %v3445 = vpack.c.bf16 %v3374, %v3373
    %v3446 = vpack.c.bf16 %v3376, %v3375
    %v3447 = vpack.c.bf16 %v3378, %v3377
    %v3448 = vpack.c.bf16 %v3380, %v3379
    %v3449 = vpack.c.bf16 %v3382, %v3381
    %v3450 = vpack.c.bf16 %v3384, %v3383
    %v3451 = vpack.c.bf16 %v3386, %v3385
    %v3452 = vpack.c.bf16 %v3388, %v3387
    %v3453 = vpack.c.bf16 %v3390, %v3389
    %v3454 = vpack.c.bf16 %v3392, %v3391
    %v3455 = vld [vmem:[%s1] sm:$0xf]
    %v3456 = vld [vmem:[%s1 + $0x4] sm:$0xf]
    %v3457 = vld [vmem:[%s1 + $0x8] sm:$0xf]
    %v3458 = vld [vmem:[%s1 + $0xc] sm:$0xf]
    %v3459 = vld [vmem:[%s1 + $0x10] sm:$0xf]
    %v3460 = vld [vmem:[%s1 + $0x14] sm:$0xf]
    %v3461 = vld [vmem:[%s1 + $0x18] sm:$0xf]
    %v3462 = vld [vmem:[%s1 + $0x1c] sm:$0xf]
    %v3463 = vld [vmem:[%s1 + $0x20] sm:$0xf]
    %v3464 = vld [vmem:[%s1 + $0x24] sm:$0xf]
    %v3475 = vunpack.c.l.b16 %v3455
    %v3476 = vunpack.c.l.b16 %v3456
    %v3477 = vunpack.c.l.b16 %v3457
    %v3478 = vunpack.c.l.b16 %v3458
    %v3479 = vunpack.c.l.b16 %v3459
    %v3480 = vunpack.c.l.b16 %v3460
    %v3481 = vunpack.c.l.b16 %v3461
    %v3482 = vunpack.c.l.b16 %v3462
    %v3483 = vunpack.c.l.b16 %v3463
    %v3484 = vunpack.c.l.b16 %v3464
    %v3485 = vpack.c.b16 %v3476, %v3475
    %v3486 = vpack.c.b16 %v3478, %v3477
    %v3487 = vpack.c.b16 %v3480, %v3479
    %v3488 = vpack.c.b16 %v3482, %v3481
    %v3489 = vpack.c.b16 %v3484, %v3483
    %vm3495 = vcmask 654336
    %v3497 = vsel %vm3495, %v3393, 0
    %v3500 = vsel %vm3495, %v3394, 0
    %v3503 = vsel %vm3495, %v3395, 0
    %v3506 = vsel %vm3495, %v3396, 0
    %v3509 = vsel %vm3495, %v3397, 0
    %v3512 = vsel %vm3495, %v3398, 0
    %v3515 = vsel %vm3495, %v3399, 0
    %v3518 = vsel %vm3495, %v3400, 0
    %v3521 = vsel %vm3495, %v3401, 0
    %v3524 = vsel %vm3495, %v3402, 0
    %v3527 = vsel %vm3495, %v3403, 0
    %v3530 = vsel %vm3495, %v3404, 0
    %v3533 = vsel %vm3495, %v3405, 0
    %v3536 = vsel %vm3495, %v3406, 0
    %v3539 = vsel %vm3495, %v3407, 0
    %v3542 = vsel %vm3495, %v3408, 0
    %v3545 = vsel %vm3495, %v3409, 0
    %v3548 = vsel %vm3495, %v3410, 0
    %v3551 = vsel %vm3495, %v3411, 0
    %v3554 = vsel %vm3495, %v3412, 0
    %v3557 = vsel %vm3495, %v3413, 0
    %v3560 = vsel %vm3495, %v3414, 0
    %v3563 = vsel %vm3495, %v3415, 0
    %v3566 = vsel %vm3495, %v3416, 0
    %v3569 = vsel %vm3495, %v3417, 0
    %v3572 = vsel %vm3495, %v3418, 0
    %v3575 = vsel %vm3495, %v3419, 0
    %v3578 = vsel %vm3495, %v3420, 0
    %v3581 = vsel %vm3495, %v3421, 0
    %v3584 = vsel %vm3495, %v3422, 0
    %v3587 = vsel %vm3495, %v3423, 0
    %v3590 = vsel %vm3495, %v3424, 0
    %v3593 = vsel %vm3495, %v3425, 0
    %v3596 = vsel %vm3495, %v3426, 0
    %v3599 = vsel %vm3495, %v3427, 0
    %v3602 = vsel %vm3495, %v3428, 0
    %v3605 = vsel %vm3495, %v3429, 0
    %v3608 = vsel %vm3495, %v3430, 0
    %v3611 = vsel %vm3495, %v3431, 0
    %v3614 = vsel %vm3495, %v3432, 0
    %v3617 = vsel %vm3495, %v3433, 0
    %v3620 = vsel %vm3495, %v3434, 0
    %v3623 = vsel %vm3495, %v3435, 0
    %v3626 = vsel %vm3495, %v3436, 0
    %v3629 = vsel %vm3495, %v3437, 0
    %v3632 = vsel %vm3495, %v3438, 0
    %v3635 = vsel %vm3495, %v3439, 0
    %v3638 = vsel %vm3495, %v3440, 0
    %v3641 = vsel %vm3495, %v3441, 0
    %v3644 = vsel %vm3495, %v3442, 0
    %v3647 = vsel %vm3495, %v3443, 0
    %v3650 = vsel %vm3495, %v3444, 0
    %v3653 = vsel %vm3495, %v3445, 0
    %v3656 = vsel %vm3495, %v3446, 0
    %v3659 = vsel %vm3495, %v3447, 0
    %v3662 = vsel %vm3495, %v3448, 0
    %v3665 = vsel %vm3495, %v3449, 0
    %v3668 = vsel %vm3495, %v3450, 0
    %v3671 = vsel %vm3495, %v3451, 0
    %v3674 = vsel %vm3495, %v3452, 0
    %v3677 = vsel %vm3495, %v3453, 0
    %v3680 = vsel %vm3495, %v3454, 0
    %3682 = vmatprep.subr.bf16.mxu0 0
    %3683 = vmatpush1.bf16.msra.mxu0 %v3485
    %3684 = vmatprep.subr.bf16.mxu0 0
    %3685 = vmatpush1.bf16.msra.mxu0 %v3486
    %3686 = vmatprep.subr.bf16.mxu0 0
    %3687 = vmatpush1.bf16.msra.mxu0 %v3487
    %3688 = vmatprep.subr.bf16.mxu0 0
    %3689 = vmatpush1.bf16.msra.mxu0 %v3488
    %3690 = vmatprep.subr.bf16.mxu0 0
    %3691 = vmatpush1.bf16.msra.mxu0 %v3489
    %3692 = vmatprep.subr.bf16.mxu0 0
    %3693 = vmatpush1.bf16.msra.mxu0 0
    %3694 = vmatprep.subr.bf16.mxu0 0
    %3695 = vmatpush1.bf16.msra.mxu0 0
    %3696 = vmatprep.subr.bf16.mxu0 0
    %3697 = vmatpush1.bf16.msra.mxu0 0
    %3698 = vmatprep.subr.bf16.mxu0 0
    %3699 = vmatpush1.bf16.msra.mxu0 0
    %3700 = vmatprep.subr.bf16.mxu0 0
    %3701 = vmatpush1.bf16.msra.mxu0 0
    %3702 = vmatprep.subr.bf16.mxu0 0
    %3703 = vmatpush1.bf16.msra.mxu0 0
    %3704 = vmatprep.subr.bf16.mxu0 0
    %3705 = vmatpush1.bf16.msra.mxu0 0
    %3706 = vmatprep.subr.bf16.mxu0 0
    %3707 = vmatpush1.bf16.msra.mxu0 0
    %3708 = vmatprep.subr.bf16.mxu0 0
    %3709 = vmatpush1.bf16.msra.mxu0 0
    %3710 = vmatprep.subr.bf16.mxu0 0
    %3711 = vmatpush1.bf16.msra.mxu0 0
    %3712 = vmatprep.subr.bf16.mxu0 0
    %3713 = vmatpush1.bf16.msra.mxu0 0
    %3714 = vmatprep.mubr.bf16.mxu0 0
    %3715 = vmatmul.mubr.bf16.gmra.mrb[0].mxu0 %v3497
    %v3716 = vpop.f32.mrb[0].mxu0
    %v3717 = vadd.f32 0.0, %v3716
    %v3718 = vpop.f32.mrb[0].mxu0
    %v3719 = vpop.f32.mrb[0].mxu0
    %v3720 = vadd.f32 0.0, %v3719
    %v3721 = vpop.f32.mrb[0].mxu0
    %3722 = vmatprep.mubr.bf16.mxu0 0
    %3723 = vmatmul.mubr.bf16.gmra.mrb[0].mxu0 %v3500
    %v3724 = vpop.f32.mrb[0].mxu0
    %v3725 = vadd.f32 0.0, %v3724
    %v3726 = vpop.f32.mrb[0].mxu0
    %v3727 = vpop.f32.mrb[0].mxu0
    %v3728 = vadd.f32 0.0, %v3727
    %v3729 = vpop.f32.mrb[0].mxu0
    %3730 = vmatprep.mubr.bf16.mxu0 0
    %3731 = vmatmul.mubr.bf16.gmra.mrb[0].mxu0 %v3503
    %v3732 = vpop.f32.mrb[0].mxu0
    %v3733 = vadd.f32 0.0, %v3732
    %v3734 = vpop.f32.mrb[0].mxu0
    %v3735 = vpop.f32.mrb[0].mxu0
    %v3736 = vadd.f32 0.0, %v3735
    %v3737 = vpop.f32.mrb[0].mxu0
    %3738 = vmatprep.mubr.bf16.mxu0 0
    %3739 = vmatmul.mubr.bf16.gmra.mrb[0].mxu0 %v3506
    %v3740 = vpop.f32.mrb[0].mxu0
    %v3741 = vadd.f32 0.0, %v3740
    %v3742 = vpop.f32.mrb[0].mxu0
    %v3743 = vpop.f32.mrb[0].mxu0
    %v3744 = vadd.f32 0.0, %v3743
    %v3745 = vpop.f32.mrb[0].mxu0
    %3746 = vmatprep.mubr.bf16.mxu0 0
    %3747 = vmatmul.mubr.bf16.gmra.mrb[0].mxu0 %v3509
    %v3748 = vpop.f32.mrb[0].mxu0
    %v3749 = vadd.f32 0.0, %v3748
    %v3750 = vpop.f32.mrb[0].mxu0
    %v3751 = vpop.f32.mrb[0].mxu0
    %v3752 = vadd.f32 0.0, %v3751
    %v3753 = vpop.f32.mrb[0].mxu0
    %3754 = vmatprep.mubr.bf16.mxu0 0
    %3755 = vmatmul.mubr.bf16.gmra.mrb[0].mxu0 %v3512
    %v3756 = vpop.f32.mrb[0].mxu0
    %v3757 = vadd.f32 0.0, %v3756
    %v3758 = vpop.f32.mrb[0].mxu0
    %v3759 = vpop.f32.mrb[0].mxu0
    %v3760 = vadd.f32 0.0, %v3759
    %v3761 = vpop.f32.mrb[0].mxu0
    %3762 = vmatprep.mubr.bf16.mxu0 0
    %3763 = vmatmul.mubr.bf16.gmra.mrb[0].mxu0 %v3515
    %v3764 = vpop.f32.mrb[0].mxu0
    %v3765 = vadd.f32 0.0, %v3764
    %v3766 = vpop.f32.mrb[0].mxu0
    %v3767 = vpop.f32.mrb[0].mxu0
    %v3768 = vadd.f32 0.0, %v3767
    %v3769 = vpop.f32.mrb[0].mxu0
    %3770 = vmatprep.mubr.bf16.mxu0 0
    %3771 = vmatmul.mubr.bf16.gmra.mrb[0].mxu0 %v3518
    %v3772 = vpop.f32.mrb[0].mxu0
    %v3773 = vadd.f32 0.0, %v3772
    %v3774 = vpop.f32.mrb[0].mxu0
    %v3775 = vpop.f32.mrb[0].mxu0
    %v3776 = vadd.f32 0.0, %v3775
    %v3777 = vpop.f32.mrb[0].mxu0
    %3778 = vmatprep.mubr.bf16.mxu0 0
    %3779 = vmatmul.mubr.bf16.gmra.mrb[0].mxu0 %v3521
    %v3780 = vpop.f32.mrb[0].mxu0
    %v3781 = vadd.f32 0.0, %v3780
    %v3782 = vpop.f32.mrb[0].mxu0
    %v3783 = vpop.f32.mrb[0].mxu0
    %v3784 = vadd.f32 0.0, %v3783
    %v3785 = vpop.f32.mrb[0].mxu0
    %3786 = vmatprep.mubr.bf16.mxu0 0
    %3787 = vmatmul.mubr.bf16.gmra.mrb[0].mxu0 %v3524
    %v3788 = vpop.f32.mrb[0].mxu0
    %v3789 = vadd.f32 0.0, %v3788
    %v3790 = vpop.f32.mrb[0].mxu0
    %v3791 = vpop.f32.mrb[0].mxu0
    %v3792 = vadd.f32 0.0, %v3791
    %v3793 = vpop.f32.mrb[0].mxu0
    %3794 = vmatprep.mubr.bf16.mxu0 0
    %3795 = vmatmul.mubr.bf16.gmra.mrb[0].mxu0 %v3527
    %v3796 = vpop.f32.mrb[0].mxu0
    %v3797 = vadd.f32 0.0, %v3796
    %v3798 = vpop.f32.mrb[0].mxu0
    %v3799 = vpop.f32.mrb[0].mxu0
    %v3800 = vadd.f32 0.0, %v3799
    %v3801 = vpop.f32.mrb[0].mxu0
    %3802 = vmatprep.mubr.bf16.mxu0 0
    %3803 = vmatmul.mubr.bf16.gmra.mrb[0].mxu0 %v3530
    %v3804 = vpop.f32.mrb[0].mxu0
    %v3805 = vadd.f32 0.0, %v3804
    %v3806 = vpop.f32.mrb[0].mxu0
    %v3807 = vpop.f32.mrb[0].mxu0
    %v3808 = vadd.f32 0.0, %v3807
    %v3809 = vpop.f32.mrb[0].mxu0
    %3810 = vmatprep.mubr.bf16.mxu0 0
    %3811 = vmatmul.mubr.bf16.gmra.mrb[0].mxu0 %v3533
    %v3812 = vpop.f32.mrb[0].mxu0
    %v3813 = vadd.f32 0.0, %v3812
    %v3814 = vpop.f32.mrb[0].mxu0
    %v3815 = vpop.f32.mrb[0].mxu0
    %v3816 = vadd.f32 0.0, %v3815
    %v3817 = vpop.f32.mrb[0].mxu0
    %3818 = vmatprep.mubr.bf16.mxu0 0
    %3819 = vmatmul.mubr.bf16.gmra.mrb[0].mxu0 %v3536
    %v3820 = vpop.f32.mrb[0].mxu0
    %v3821 = vadd.f32 0.0, %v3820
    %v3822 = vpop.f32.mrb[0].mxu0
    %v3823 = vpop.f32.mrb[0].mxu0
    %v3824 = vadd.f32 0.0, %v3823
    %v3825 = vpop.f32.mrb[0].mxu0
    %3826 = vmatprep.mubr.bf16.mxu0 0
    %3827 = vmatmul.mubr.bf16.gmra.mrb[0].mxu0 %v3539
    %v3828 = vpop.f32.mrb[0].mxu0
    %v3829 = vadd.f32 0.0, %v3828
    %v3830 = vpop.f32.mrb[0].mxu0
    %v3831 = vpop.f32.mrb[0].mxu0
    %v3832 = vadd.f32 0.0, %v3831
    %v3833 = vpop.f32.mrb[0].mxu0
    %3834 = vmatprep.mubr.bf16.mxu0 0
    %3835 = vmatmul.mubr.bf16.gmra.mrb[0].mxu0 %v3542
    %v3836 = vpop.f32.mrb[0].mxu0
    %v3837 = vadd.f32 0.0, %v3836
    %v3838 = vpop.f32.mrb[0].mxu0
    %v3839 = vpop.f32.mrb[0].mxu0
    %v3840 = vadd.f32 0.0, %v3839
    %v3841 = vpop.f32.mrb[0].mxu0
    %3842 = vmatprep.mubr.bf16.mxu0 0
    %3843 = vmatmul.mubr.bf16.gmra.mrb[0].mxu0 %v3545
    %v3844 = vpop.f32.mrb[0].mxu0
    %v3845 = vadd.f32 0.0, %v3844
    %v3846 = vpop.f32.mrb[0].mxu0
    %v3847 = vpop.f32.mrb[0].mxu0
    %v3848 = vadd.f32 0.0, %v3847
    %v3849 = vpop.f32.mrb[0].mxu0
    %3850 = vmatprep.mubr.bf16.mxu0 0
    %3851 = vmatmul.mubr.bf16.gmra.mrb[0].mxu0 %v3548
    %v3852 = vpop.f32.mrb[0].mxu0
    %v3853 = vadd.f32 0.0, %v3852
    %v3854 = vpop.f32.mrb[0].mxu0
    %v3855 = vpop.f32.mrb[0].mxu0
    %v3856 = vadd.f32 0.0, %v3855
    %v3857 = vpop.f32.mrb[0].mxu0
    %3858 = vmatprep.mubr.bf16.mxu0 0
    %3859 = vmatmul.mubr.bf16.gmra.mrb[0].mxu0 %v3551
    %v3860 = vpop.f32.mrb[0].mxu0
    %v3861 = vadd.f32 0.0, %v3860
    %v3862 = vpop.f32.mrb[0].mxu0
    %v3863 = vpop.f32.mrb[0].mxu0
    %v3864 = vadd.f32 0.0, %v3863
    %v3865 = vpop.f32.mrb[0].mxu0
    %3866 = vmatprep.mubr.bf16.mxu0 0
    %3867 = vmatmul.mubr.bf16.gmra.mrb[0].mxu0 %v3554
    %v3868 = vpop.f32.mrb[0].mxu0
    %v3869 = vadd.f32 0.0, %v3868
    %v3870 = vpop.f32.mrb[0].mxu0
    %v3871 = vpop.f32.mrb[0].mxu0
    %v3872 = vadd.f32 0.0, %v3871
    %v3873 = vpop.f32.mrb[0].mxu0
    %3874 = vmatprep.mubr.bf16.mxu0 0
    %3875 = vmatmul.mubr.bf16.gmra.mrb[0].mxu0 %v3557
    %v3876 = vpop.f32.mrb[0].mxu0
    %v3877 = vadd.f32 0.0, %v3876
    %v3878 = vpop.f32.mrb[0].mxu0
    %v3879 = vpop.f32.mrb[0].mxu0
    %v3880 = vadd.f32 0.0, %v3879
    %v3881 = vpop.f32.mrb[0].mxu0
    %3882 = vmatprep.mubr.bf16.mxu0 0
    %3883 = vmatmul.mubr.bf16.gmra.mrb[0].mxu0 %v3560
    %v3884 = vpop.f32.mrb[0].mxu0
    %v3885 = vadd.f32 0.0, %v3884
    %v3886 = vpop.f32.mrb[0].mxu0
    %v3887 = vpop.f32.mrb[0].mxu0
    %v3888 = vadd.f32 0.0, %v3887
    %v3889 = vpop.f32.mrb[0].mxu0
    %3890 = vmatprep.mubr.bf16.mxu0 0
    %3891 = vmatmul.mubr.bf16.gmra.mrb[0].mxu0 %v3563
    %v3892 = vpop.f32.mrb[0].mxu0
    %v3893 = vadd.f32 0.0, %v3892
    %v3894 = vpop.f32.mrb[0].mxu0
    %v3895 = vpop.f32.mrb[0].mxu0
    %v3896 = vadd.f32 0.0, %v3895
    %v3897 = vpop.f32.mrb[0].mxu0
    %3898 = vmatprep.mubr.bf16.mxu0 0
    %3899 = vmatmul.mubr.bf16.gmra.mrb[0].mxu0 %v3566
    %v3900 = vpop.f32.mrb[0].mxu0
    %v3901 = vadd.f32 0.0, %v3900
    %v3902 = vpop.f32.mrb[0].mxu0
    %v3903 = vpop.f32.mrb[0].mxu0
    %v3904 = vadd.f32 0.0, %v3903
    %v3905 = vpop.f32.mrb[0].mxu0
    %3906 = vmatprep.mubr.bf16.mxu0 0
    %3907 = vmatmul.mubr.bf16.gmra.mrb[0].mxu0 %v3569
    %v3908 = vpop.f32.mrb[0].mxu0
    %v3909 = vadd.f32 0.0, %v3908
    %v3910 = vpop.f32.mrb[0].mxu0
    %v3911 = vpop.f32.mrb[0].mxu0
    %v3912 = vadd.f32 0.0, %v3911
    %v3913 = vpop.f32.mrb[0].mxu0
    %3914 = vmatprep.mubr.bf16.mxu0 0
    %3915 = vmatmul.mubr.bf16.gmra.mrb[0].mxu0 %v3572
    %v3916 = vpop.f32.mrb[0].mxu0
    %v3917 = vadd.f32 0.0, %v3916
    %v3918 = vpop.f32.mrb[0].mxu0
    %v3919 = vpop.f32.mrb[0].mxu0
    %v3920 = vadd.f32 0.0, %v3919
    %v3921 = vpop.f32.mrb[0].mxu0
    %3922 = vmatprep.mubr.bf16.mxu0 0
    %3923 = vmatmul.mubr.bf16.gmra.mrb[0].mxu0 %v3575
    %v3924 = vpop.f32.mrb[0].mxu0
    %v3925 = vadd.f32 0.0, %v3924
    %v3926 = vpop.f32.mrb[0].mxu0
    %v3927 = vpop.f32.mrb[0].mxu0
    %v3928 = vadd.f32 0.0, %v3927
    %v3929 = vpop.f32.mrb[0].mxu0
    %3930 = vmatprep.mubr.bf16.mxu0 0
    %3931 = vmatmul.mubr.bf16.gmra.mrb[0].mxu0 %v3578
    %v3932 = vpop.f32.mrb[0].mxu0
    %v3933 = vadd.f32 0.0, %v3932
    %v3934 = vpop.f32.mrb[0].mxu0
    %v3935 = vpop.f32.mrb[0].mxu0
    %v3936 = vadd.f32 0.0, %v3935
    %v3937 = vpop.f32.mrb[0].mxu0
    %3938 = vmatprep.mubr.bf16.mxu0 0
    %3939 = vmatmul.mubr.bf16.gmra.mrb[0].mxu0 %v3581
    %v3940 = vpop.f32.mrb[0].mxu0
    %v3941 = vadd.f32 0.0, %v3940
    %v3942 = vpop.f32.mrb[0].mxu0
    %v3943 = vpop.f32.mrb[0].mxu0
    %v3944 = vadd.f32 0.0, %v3943
    %v3945 = vpop.f32.mrb[0].mxu0
    %3946 = vmatprep.mubr.bf16.mxu0 0
    %3947 = vmatmul.mubr.bf16.gmra.mrb[0].mxu0 %v3584
    %v3948 = vpop.f32.mrb[0].mxu0
    %v3949 = vadd.f32 0.0, %v3948
    %v3950 = vpop.f32.mrb[0].mxu0
    %v3951 = vpop.f32.mrb[0].mxu0
    %v3952 = vadd.f32 0.0, %v3951
    %v3953 = vpop.f32.mrb[0].mxu0
    %3954 = vmatprep.mubr.bf16.mxu0 0
    %3955 = vmatmul.mubr.bf16.gmra.mrb[0].mxu0 %v3587
    %v3956 = vpop.f32.mrb[0].mxu0
    %v3957 = vadd.f32 0.0, %v3956
    %v3958 = vpop.f32.mrb[0].mxu0
    %v3959 = vpop.f32.mrb[0].mxu0
    %v3960 = vadd.f32 0.0, %v3959
    %v3961 = vpop.f32.mrb[0].mxu0
    %3962 = vmatprep.mubr.bf16.mxu0 0
    %3963 = vmatmul.mubr.bf16.gmra.mrb[0].mxu0 %v3590
    %v3964 = vpop.f32.mrb[0].mxu0
    %v3965 = vadd.f32 0.0, %v3964
    %v3966 = vpop.f32.mrb[0].mxu0
    %v3967 = vpop.f32.mrb[0].mxu0
    %v3968 = vadd.f32 0.0, %v3967
    %v3969 = vpop.f32.mrb[0].mxu0
    %3970 = vmatprep.mubr.bf16.mxu0 0
    %3971 = vmatmul.mubr.bf16.gmra.mrb[0].mxu0 %v3593
    %v3972 = vpop.f32.mrb[0].mxu0
    %v3973 = vadd.f32 0.0, %v3972
    %v3974 = vpop.f32.mrb[0].mxu0
    %v3975 = vpop.f32.mrb[0].mxu0
    %v3976 = vadd.f32 0.0, %v3975
    %v3977 = vpop.f32.mrb[0].mxu0
    %3978 = vmatprep.mubr.bf16.mxu0 0
    %3979 = vmatmul.mubr.bf16.gmra.mrb[0].mxu0 %v3596
    %v3980 = vpop.f32.mrb[0].mxu0
    %v3981 = vadd.f32 0.0, %v3980
    %v3982 = vpop.f32.mrb[0].mxu0
    %v3983 = vpop.f32.mrb[0].mxu0
    %v3984 = vadd.f32 0.0, %v3983
    %v3985 = vpop.f32.mrb[0].mxu0
    %3986 = vmatprep.mubr.bf16.mxu0 0
    %3987 = vmatmul.mubr.bf16.gmra.mrb[0].mxu0 %v3599
    %v3988 = vpop.f32.mrb[0].mxu0
    %v3989 = vadd.f32 0.0, %v3988
    %v3990 = vpop.f32.mrb[0].mxu0
    %v3991 = vpop.f32.mrb[0].mxu0
    %v3992 = vadd.f32 0.0, %v3991
    %v3993 = vpop.f32.mrb[0].mxu0
    %3994 = vmatprep.mubr.bf16.mxu0 0
    %3995 = vmatmul.mubr.bf16.gmra.mrb[0].mxu0 %v3602
    %v3996 = vpop.f32.mrb[0].mxu0
    %v3997 = vadd.f32 0.0, %v3996
    %v3998 = vpop.f32.mrb[0].mxu0
    %v3999 = vpop.f32.mrb[0].mxu0
    %v4000 = vadd.f32 0.0, %v3999
    %v4001 = vpop.f32.mrb[0].mxu0
    %4002 = vmatprep.mubr.bf16.mxu0 0
    %4003 = vmatmul.mubr.bf16.gmra.mrb[0].mxu0 %v3605
    %v4004 = vpop.f32.mrb[0].mxu0
    %v4005 = vadd.f32 0.0, %v4004
    %v4006 = vpop.f32.mrb[0].mxu0
    %v4007 = vpop.f32.mrb[0].mxu0
    %v4008 = vadd.f32 0.0, %v4007
    %v4009 = vpop.f32.mrb[0].mxu0
    %4010 = vmatprep.mubr.bf16.mxu0 0
    %4011 = vmatmul.mubr.bf16.gmra.mrb[0].mxu0 %v3608
    %v4012 = vpop.f32.mrb[0].mxu0
    %v4013 = vadd.f32 0.0, %v4012
    %v4014 = vpop.f32.mrb[0].mxu0
    %v4015 = vpop.f32.mrb[0].mxu0
    %v4016 = vadd.f32 0.0, %v4015
    %v4017 = vpop.f32.mrb[0].mxu0
    %4018 = vmatprep.mubr.bf16.mxu0 0
    %4019 = vmatmul.mubr.bf16.gmra.mrb[0].mxu0 %v3611
    %v4020 = vpop.f32.mrb[0].mxu0
    %v4021 = vadd.f32 0.0, %v4020
    %v4022 = vpop.f32.mrb[0].mxu0
    %v4023 = vpop.f32.mrb[0].mxu0
    %v4024 = vadd.f32 0.0, %v4023
    %v4025 = vpop.f32.mrb[0].mxu0
    %4026 = vmatprep.mubr.bf16.mxu0 0
    %4027 = vmatmul.mubr.bf16.gmra.mrb[0].mxu0 %v3614
    %v4028 = vpop.f32.mrb[0].mxu0
    %v4029 = vadd.f32 0.0, %v4028
    %v4030 = vpop.f32.mrb[0].mxu0
    %v4031 = vpop.f32.mrb[0].mxu0
    %v4032 = vadd.f32 0.0, %v4031
    %v4033 = vpop.f32.mrb[0].mxu0
    %4034 = vmatprep.mubr.bf16.mxu0 0
    %4035 = vmatmul.mubr.bf16.gmra.mrb[0].mxu0 %v3617
    %v4036 = vpop.f32.mrb[0].mxu0
    %v4037 = vadd.f32 0.0, %v4036
    %v4038 = vpop.f32.mrb[0].mxu0
    %v4039 = vpop.f32.mrb[0].mxu0
    %v4040 = vadd.f32 0.0, %v4039
    %v4041 = vpop.f32.mrb[0].mxu0
    %4042 = vmatprep.mubr.bf16.mxu0 0
    %4043 = vmatmul.mubr.bf16.gmra.mrb[0].mxu0 %v3620
    %v4044 = vpop.f32.mrb[0].mxu0
    %v4045 = vadd.f32 0.0, %v4044
    %v4046 = vpop.f32.mrb[0].mxu0
    %v4047 = vpop.f32.mrb[0].mxu0
    %v4048 = vadd.f32 0.0, %v4047
    %v4049 = vpop.f32.mrb[0].mxu0
    %4050 = vmatprep.mubr.bf16.mxu0 0
    %4051 = vmatmul.mubr.bf16.gmra.mrb[0].mxu0 %v3623
    %v4052 = vpop.f32.mrb[0].mxu0
    %v4053 = vadd.f32 0.0, %v4052
    %v4054 = vpop.f32.mrb[0].mxu0
    %v4055 = vpop.f32.mrb[0].mxu0
    %v4056 = vadd.f32 0.0, %v4055
    %v4057 = vpop.f32.mrb[0].mxu0
    %4058 = vmatprep.mubr.bf16.mxu0 0
    %4059 = vmatmul.mubr.bf16.gmra.mrb[0].mxu0 %v3626
    %v4060 = vpop.f32.mrb[0].mxu0
    %v4061 = vadd.f32 0.0, %v4060
    %v4062 = vpop.f32.mrb[0].mxu0
    %v4063 = vpop.f32.mrb[0].mxu0
    %v4064 = vadd.f32 0.0, %v4063
    %v4065 = vpop.f32.mrb[0].mxu0
    %4066 = vmatprep.mubr.bf16.mxu0 0
    %4067 = vmatmul.mubr.bf16.gmra.mrb[0].mxu0 %v3629
    %v4068 = vpop.f32.mrb[0].mxu0
    %v4069 = vadd.f32 0.0, %v4068
    %v4070 = vpop.f32.mrb[0].mxu0
    %v4071 = vpop.f32.mrb[0].mxu0
    %v4072 = vadd.f32 0.0, %v4071
    %v4073 = vpop.f32.mrb[0].mxu0
    %4074 = vmatprep.mubr.bf16.mxu0 0
    %4075 = vmatmul.mubr.bf16.gmra.mrb[0].mxu0 %v3632
    %v4076 = vpop.f32.mrb[0].mxu0
    %v4077 = vadd.f32 0.0, %v4076
    %v4078 = vpop.f32.mrb[0].mxu0
    %v4079 = vpop.f32.mrb[0].mxu0
    %v4080 = vadd.f32 0.0, %v4079
    %v4081 = vpop.f32.mrb[0].mxu0
    %4082 = vmatprep.mubr.bf16.mxu0 0
    %4083 = vmatmul.mubr.bf16.gmra.mrb[0].mxu0 %v3635
    %v4084 = vpop.f32.mrb[0].mxu0
    %v4085 = vadd.f32 0.0, %v4084
    %v4086 = vpop.f32.mrb[0].mxu0
    %v4087 = vpop.f32.mrb[0].mxu0
    %v4088 = vadd.f32 0.0, %v4087
    %v4089 = vpop.f32.mrb[0].mxu0
    %4090 = vmatprep.mubr.bf16.mxu0 0
    %4091 = vmatmul.mubr.bf16.gmra.mrb[0].mxu0 %v3638
    %v4092 = vpop.f32.mrb[0].mxu0
    %v4093 = vadd.f32 0.0, %v4092
    %v4094 = vpop.f32.mrb[0].mxu0
    %v4095 = vpop.f32.mrb[0].mxu0
    %v4096 = vadd.f32 0.0, %v4095
    %v4097 = vpop.f32.mrb[0].mxu0
    %4098 = vmatprep.mubr.bf16.mxu0 0
    %4099 = vmatmul.mubr.bf16.gmra.mrb[0].mxu0 %v3641
    %v4100 = vpop.f32.mrb[0].mxu0
    %v4101 = vadd.f32 0.0, %v4100
    %v4102 = vpop.f32.mrb[0].mxu0
    %v4103 = vpop.f32.mrb[0].mxu0
    %v4104 = vadd.f32 0.0, %v4103
    %v4105 = vpop.f32.mrb[0].mxu0
    %4106 = vmatprep.mubr.bf16.mxu0 0
    %4107 = vmatmul.mubr.bf16.gmra.mrb[0].mxu0 %v3644
    %v4108 = vpop.f32.mrb[0].mxu0
    %v4109 = vadd.f32 0.0, %v4108
    %v4110 = vpop.f32.mrb[0].mxu0
    %v4111 = vpop.f32.mrb[0].mxu0
    %v4112 = vadd.f32 0.0, %v4111
    %v4113 = vpop.f32.mrb[0].mxu0
    %4114 = vmatprep.mubr.bf16.mxu0 0
    %4115 = vmatmul.mubr.bf16.gmra.mrb[0].mxu0 %v3647
    %v4116 = vpop.f32.mrb[0].mxu0
    %v4117 = vadd.f32 0.0, %v4116
    %v4118 = vpop.f32.mrb[0].mxu0
    %v4119 = vpop.f32.mrb[0].mxu0
    %v4120 = vadd.f32 0.0, %v4119
    %v4121 = vpop.f32.mrb[0].mxu0
    %4122 = vmatprep.mubr.bf16.mxu0 0
    %4123 = vmatmul.mubr.bf16.gmra.mrb[0].mxu0 %v3650
    %v4124 = vpop.f32.mrb[0].mxu0
    %v4125 = vadd.f32 0.0, %v4124
    %v4126 = vpop.f32.mrb[0].mxu0
    %v4127 = vpop.f32.mrb[0].mxu0
    %v4128 = vadd.f32 0.0, %v4127
    %v4129 = vpop.f32.mrb[0].mxu0
    %4130 = vmatprep.mubr.bf16.mxu0 0
    %4131 = vmatmul.mubr.bf16.gmra.mrb[0].mxu0 %v3653
    %v4132 = vpop.f32.mrb[0].mxu0
    %v4133 = vadd.f32 0.0, %v4132
    %v4134 = vpop.f32.mrb[0].mxu0
    %v4135 = vpop.f32.mrb[0].mxu0
    %v4136 = vadd.f32 0.0, %v4135
    %v4137 = vpop.f32.mrb[0].mxu0
    %4138 = vmatprep.mubr.bf16.mxu0 0
    %4139 = vmatmul.mubr.bf16.gmra.mrb[0].mxu0 %v3656
    %v4140 = vpop.f32.mrb[0].mxu0
    %v4141 = vadd.f32 0.0, %v4140
    %v4142 = vpop.f32.mrb[0].mxu0
    %v4143 = vpop.f32.mrb[0].mxu0
    %v4144 = vadd.f32 0.0, %v4143
    %v4145 = vpop.f32.mrb[0].mxu0
    %4146 = vmatprep.mubr.bf16.mxu0 0
    %4147 = vmatmul.mubr.bf16.gmra.mrb[0].mxu0 %v3659
    %v4148 = vpop.f32.mrb[0].mxu0
    %v4149 = vadd.f32 0.0, %v4148
    %v4150 = vpop.f32.mrb[0].mxu0
    %v4151 = vpop.f32.mrb[0].mxu0
    %v4152 = vadd.f32 0.0, %v4151
    %v4153 = vpop.f32.mrb[0].mxu0
    %4154 = vmatprep.mubr.bf16.mxu0 0
    %4155 = vmatmul.mubr.bf16.gmra.mrb[0].mxu0 %v3662
    %v4156 = vpop.f32.mrb[0].mxu0
    %v4157 = vadd.f32 0.0, %v4156
    %v4158 = vpop.f32.mrb[0].mxu0
    %v4159 = vpop.f32.mrb[0].mxu0
    %v4160 = vadd.f32 0.0, %v4159
    %v4161 = vpop.f32.mrb[0].mxu0
    %4162 = vmatprep.mubr.bf16.mxu0 0
    %4163 = vmatmul.mubr.bf16.gmra.mrb[0].mxu0 %v3665
    %v4164 = vpop.f32.mrb[0].mxu0
    %v4165 = vadd.f32 0.0, %v4164
    %v4166 = vpop.f32.mrb[0].mxu0
    %v4167 = vpop.f32.mrb[0].mxu0
    %v4168 = vadd.f32 0.0, %v4167
    %v4169 = vpop.f32.mrb[0].mxu0
    %4170 = vmatprep.mubr.bf16.mxu0 0
    %4171 = vmatmul.mubr.bf16.gmra.mrb[0].mxu0 %v3668
    %v4172 = vpop.f32.mrb[0].mxu0
    %v4173 = vadd.f32 0.0, %v4172
    %v4174 = vpop.f32.mrb[0].mxu0
    %v4175 = vpop.f32.mrb[0].mxu0
    %v4176 = vadd.f32 0.0, %v4175
    %v4177 = vpop.f32.mrb[0].mxu0
    %4178 = vmatprep.mubr.bf16.mxu0 0
    %4179 = vmatmul.mubr.bf16.gmra.mrb[0].mxu0 %v3671
    %v4180 = vpop.f32.mrb[0].mxu0
    %v4181 = vadd.f32 0.0, %v4180
    %v4182 = vpop.f32.mrb[0].mxu0
    %v4183 = vpop.f32.mrb[0].mxu0
    %v4184 = vadd.f32 0.0, %v4183
    %v4185 = vpop.f32.mrb[0].mxu0
    %4186 = vmatprep.mubr.bf16.mxu0 0
    %4187 = vmatmul.mubr.bf16.gmra.mrb[0].mxu0 %v3674
    %v4188 = vpop.f32.mrb[0].mxu0
    %v4189 = vadd.f32 0.0, %v4188
    %v4190 = vpop.f32.mrb[0].mxu0
    %v4191 = vpop.f32.mrb[0].mxu0
    %v4192 = vadd.f32 0.0, %v4191
    %v4193 = vpop.f32.mrb[0].mxu0
    %4194 = vmatprep.mubr.bf16.mxu0 0
    %4195 = vmatmul.mubr.bf16.gmra.mrb[0].mxu0 %v3677
    %v4196 = vpop.f32.mrb[0].mxu0
    %v4197 = vadd.f32 0.0, %v4196
    %v4198 = vpop.f32.mrb[0].mxu0
    %v4199 = vpop.f32.mrb[0].mxu0
    %v4200 = vadd.f32 0.0, %v4199
    %v4201 = vpop.f32.mrb[0].mxu0
    %4202 = vmatprep.mubr.bf16.mxu0 0
    %4203 = vmatmul.mubr.bf16.gmra.mrb[0].mxu0 %v3680
    %v4204 = vpop.f32.mrb[0].mxu0
    %v4205 = vadd.f32 0.0, %v4204
    %v4206 = vpop.f32.mrb[0].mxu0
    %v4207 = vpop.f32.mrb[0].mxu0
    %v4208 = vadd.f32 0.0, %v4207
    %v4209 = vpop.f32.mrb[0].mxu0
    %4210 = vdwg.mxu0
    %vm4211 = vcmask 261120
    %4212 = vst.msk [vmem:[#allocation3] sm:$0xff] %vm4211, %v3717
    %4213 = vst.msk [vmem:[#allocation3 + $0x8] sm:$0xff] %vm4211, %v3720
    %4214 = vst.msk [vmem:[#allocation3 + $0x10] sm:$0xff] %vm4211, %v3725
    %4215 = vst.msk [vmem:[#allocation3 + $0x18] sm:$0xff] %vm4211, %v3728
    %4216 = vst.msk [vmem:[#allocation3 + $0x20] sm:$0xff] %vm4211, %v3733
    %4217 = vst.msk [vmem:[#allocation3 + $0x28] sm:$0xff] %vm4211, %v3736
    %4218 = vst.msk [vmem:[#allocation3 + $0x30] sm:$0xff] %vm4211, %v3741
    %4219 = vst.msk [vmem:[#allocation3 + $0x38] sm:$0xff] %vm4211, %v3744
    %4220 = vst.msk [vmem:[#allocation3 + $0x40] sm:$0xff] %vm4211, %v3749
    %4221 = vst.msk [vmem:[#allocation3 + $0x48] sm:$0xff] %vm4211, %v3752
    %4222 = vst.msk [vmem:[#allocation3 + $0x50] sm:$0xff] %vm4211, %v3757
    %4223 = vst.msk [vmem:[#allocation3 + $0x58] sm:$0xff] %vm4211, %v3760
    %4224 = vst.msk [vmem:[#allocation3 + $0x60] sm:$0xff] %vm4211, %v3765
    %4225 = vst.msk [vmem:[#allocation3 + $0x68] sm:$0xff] %vm4211, %v3768
    %4226 = vst.msk [vmem:[#allocation3 + $0x70] sm:$0xff] %vm4211, %v3773
    %4227 = vst.msk [vmem:[#allocation3 + $0x78] sm:$0xff] %vm4211, %v3776
    %4228 = vst.msk [vmem:[#allocation3 + $0x80] sm:$0xff] %vm4211, %v3781
    %4229 = vst.msk [vmem:[#allocation3 + $0x88] sm:$0xff] %vm4211, %v3784
    %4230 = vst.msk [vmem:[#allocation3 + $0x90] sm:$0xff] %vm4211, %v3789
    %4231 = vst.msk [vmem:[#allocation3 + $0x98] sm:$0xff] %vm4211, %v3792
    %4232 = vst.msk [vmem:[#allocation3 + $0xa0] sm:$0xff] %vm4211, %v3797
    %4233 = vst.msk [vmem:[#allocation3 + $0xa8] sm:$0xff] %vm4211, %v3800
    %4234 = vst.msk [vmem:[#allocation3 + $0xb0] sm:$0xff] %vm4211, %v3805
    %4235 = vst.msk [vmem:[#allocation3 + $0xb8] sm:$0xff] %vm4211, %v3808
    %4236 = vst.msk [vmem:[#allocation3 + $0xc0] sm:$0xff] %vm4211, %v3813
    %4237 = vst.msk [vmem:[#allocation3 + $0xc8] sm:$0xff] %vm4211, %v3816
    %4238 = vst.msk [vmem:[#allocation3 + $0xd0] sm:$0xff] %vm4211, %v3821
    %4239 = vst.msk [vmem:[#allocation3 + $0xd8] sm:$0xff] %vm4211, %v3824
    %4240 = vst.msk [vmem:[#allocation3 + $0xe0] sm:$0xff] %vm4211, %v3829
    %4241 = vst.msk [vmem:[#allocation3 + $0xe8] sm:$0xff] %vm4211, %v3832
    %4242 = vst.msk [vmem:[#allocation3 + $0xf0] sm:$0xff] %vm4211, %v3837
    %4243 = vst.msk [vmem:[#allocation3 + $0xf8] sm:$0xff] %vm4211, %v3840
    %4244 = vst.msk [vmem:[#allocation3 + $0x100] sm:$0xff] %vm4211, %v3845
    %4245 = vst.msk [vmem:[#allocation3 + $0x108] sm:$0xff] %vm4211, %v3848
    %4246 = vst.msk [vmem:[#allocation3 + $0x110] sm:$0xff] %vm4211, %v3853
    %4247 = vst.msk [vmem:[#allocation3 + $0x118] sm:$0xff] %vm4211, %v3856
    %4248 = vst.msk [vmem:[#allocation3 + $0x120] sm:$0xff] %vm4211, %v3861
    %4249 = vst.msk [vmem:[#allocation3 + $0x128] sm:$0xff] %vm4211, %v3864
    %4250 = vst.msk [vmem:[#allocation3 + $0x130] sm:$0xff] %vm4211, %v3869
    %4251 = vst.msk [vmem:[#allocation3 + $0x138] sm:$0xff] %vm4211, %v3872
    %4252 = vst.msk [vmem:[#allocation3 + $0x140] sm:$0xff] %vm4211, %v3877
    %4253 = vst.msk [vmem:[#allocation3 + $0x148] sm:$0xff] %vm4211, %v3880
    %4254 = vst.msk [vmem:[#allocation3 + $0x150] sm:$0xff] %vm4211, %v3885
    %4255 = vst.msk [vmem:[#allocation3 + $0x158] sm:$0xff] %vm4211, %v3888
    %4256 = vst.msk [vmem:[#allocation3 + $0x160] sm:$0xff] %vm4211, %v3893
    %4257 = vst.msk [vmem:[#allocation3 + $0x168] sm:$0xff] %vm4211, %v3896
    %4258 = vst.msk [vmem:[#allocation3 + $0x170] sm:$0xff] %vm4211, %v3901
    %4259 = vst.msk [vmem:[#allocation3 + $0x178] sm:$0xff] %vm4211, %v3904
    %4260 = vst.msk [vmem:[#allocation3 + $0x180] sm:$0xff] %vm4211, %v3909
    %4261 = vst.msk [vmem:[#allocation3 + $0x188] sm:$0xff] %vm4211, %v3912
    %4262 = vst.msk [vmem:[#allocation3 + $0x190] sm:$0xff] %vm4211, %v3917
    %4263 = vst.msk [vmem:[#allocation3 + $0x198] sm:$0xff] %vm4211, %v3920
    %4264 = vst.msk [vmem:[#allocation3 + $0x1a0] sm:$0xff] %vm4211, %v3925
    %4265 = vst.msk [vmem:[#allocation3 + $0x1a8] sm:$0xff] %vm4211, %v3928
    %4266 = vst.msk [vmem:[#allocation3 + $0x1b0] sm:$0xff] %vm4211, %v3933
    %4267 = vst.msk [vmem:[#allocation3 + $0x1b8] sm:$0xff] %vm4211, %v3936
    %4268 = vst.msk [vmem:[#allocation3 + $0x1c0] sm:$0xff] %vm4211, %v3941
    %4269 = vst.msk [vmem:[#allocation3 + $0x1c8] sm:$0xff] %vm4211, %v3944
    %4270 = vst.msk [vmem:[#allocation3 + $0x1d0] sm:$0xff] %vm4211, %v3949
    %4271 = vst.msk [vmem:[#allocation3 + $0x1d8] sm:$0xff] %vm4211, %v3952
    %4272 = vst.msk [vmem:[#allocation3 + $0x1e0] sm:$0xff] %vm4211, %v3957
    %4273 = vst.msk [vmem:[#allocation3 + $0x1e8] sm:$0xff] %vm4211, %v3960
    %4274 = vst.msk [vmem:[#allocation3 + $0x1f0] sm:$0xff] %vm4211, %v3965
    %4275 = vst.msk [vmem:[#allocation3 + $0x1f8] sm:$0xff] %vm4211, %v3968
    %4276 = vst.msk [vmem:[#allocation3 + $0x200] sm:$0xff] %vm4211, %v3973
    %4277 = vst.msk [vmem:[#allocation3 + $0x208] sm:$0xff] %vm4211, %v3976
    %4278 = vst.msk [vmem:[#allocation3 + $0x210] sm:$0xff] %vm4211, %v3981
    %4279 = vst.msk [vmem:[#allocation3 + $0x218] sm:$0xff] %vm4211, %v3984
    %4280 = vst.msk [vmem:[#allocation3 + $0x220] sm:$0xff] %vm4211, %v3989
    %4281 = vst.msk [vmem:[#allocation3 + $0x228] sm:$0xff] %vm4211, %v3992
    %4282 = vst.msk [vmem:[#allocation3 + $0x230] sm:$0xff] %vm4211, %v3997
    %4283 = vst.msk [vmem:[#allocation3 + $0x238] sm:$0xff] %vm4211, %v4000
    %4284 = vst.msk [vmem:[#allocation3 + $0x240] sm:$0xff] %vm4211, %v4005
    %4285 = vst.msk [vmem:[#allocation3 + $0x248] sm:$0xff] %vm4211, %v4008
    %4286 = vst.msk [vmem:[#allocation3 + $0x250] sm:$0xff] %vm4211, %v4013
    %4287 = vst.msk [vmem:[#allocation3 + $0x258] sm:$0xff] %vm4211, %v4016
    %4288 = vst.msk [vmem:[#allocation3 + $0x260] sm:$0xff] %vm4211, %v4021
    %4289 = vst.msk [vmem:[#allocation3 + $0x268] sm:$0xff] %vm4211, %v4024
    %4290 = vst.msk [vmem:[#allocation3 + $0x270] sm:$0xff] %vm4211, %v4029
    %4291 = vst.msk [vmem:[#allocation3 + $0x278] sm:$0xff] %vm4211, %v4032
    %4292 = vst.msk [vmem:[#allocation3 + $0x280] sm:$0xff] %vm4211, %v4037
    %4293 = vst.msk [vmem:[#allocation3 + $0x288] sm:$0xff] %vm4211, %v4040
    %4294 = vst.msk [vmem:[#allocation3 + $0x290] sm:$0xff] %vm4211, %v4045
    %4295 = vst.msk [vmem:[#allocation3 + $0x298] sm:$0xff] %vm4211, %v4048
    %4296 = vst.msk [vmem:[#allocation3 + $0x2a0] sm:$0xff] %vm4211, %v4053
    %4297 = vst.msk [vmem:[#allocation3 + $0x2a8] sm:$0xff] %vm4211, %v4056
    %4298 = vst.msk [vmem:[#allocation3 + $0x2b0] sm:$0xff] %vm4211, %v4061
    %4299 = vst.msk [vmem:[#allocation3 + $0x2b8] sm:$0xff] %vm4211, %v4064
    %4300 = vst.msk [vmem:[#allocation3 + $0x2c0] sm:$0xff] %vm4211, %v4069
    %4301 = vst.msk [vmem:[#allocation3 + $0x2c8] sm:$0xff] %vm4211, %v4072
    %4302 = vst.msk [vmem:[#allocation3 + $0x2d0] sm:$0xff] %vm4211, %v4077
    %4303 = vst.msk [vmem:[#allocation3 + $0x2d8] sm:$0xff] %vm4211, %v4080
    %4304 = vst.msk [vmem:[#allocation3 + $0x2e0] sm:$0xff] %vm4211, %v4085
    %4305 = vst.msk [vmem:[#allocation3 + $0x2e8] sm:$0xff] %vm4211, %v4088
    %4306 = vst.msk [vmem:[#allocation3 + $0x2f0] sm:$0xff] %vm4211, %v4093
    %4307 = vst.msk [vmem:[#allocation3 + $0x2f8] sm:$0xff] %vm4211, %v4096
    %4308 = vst.msk [vmem:[#allocation3 + $0x300] sm:$0xff] %vm4211, %v4101
    %4309 = vst.msk [vmem:[#allocation3 + $0x308] sm:$0xff] %vm4211, %v4104
    %4310 = vst.msk [vmem:[#allocation3 + $0x310] sm:$0xff] %vm4211, %v4109
    %4311 = vst.msk [vmem:[#allocation3 + $0x318] sm:$0xff] %vm4211, %v4112
    %4312 = vst.msk [vmem:[#allocation3 + $0x320] sm:$0xff] %vm4211, %v4117
    %4313 = vst.msk [vmem:[#allocation3 + $0x328] sm:$0xff] %vm4211, %v4120
    %4314 = vst.msk [vmem:[#allocation3 + $0x330] sm:$0xff] %vm4211, %v4125
    %4315 = vst.msk [vmem:[#allocation3 + $0x338] sm:$0xff] %vm4211, %v4128
    %4316 = vst.msk [vmem:[#allocation3 + $0x340] sm:$0xff] %vm4211, %v4133
    %4317 = vst.msk [vmem:[#allocation3 + $0x348] sm:$0xff] %vm4211, %v4136
    %4318 = vst.msk [vmem:[#allocation3 + $0x350] sm:$0xff] %vm4211, %v4141
    %4319 = vst.msk [vmem:[#allocation3 + $0x358] sm:$0xff] %vm4211, %v4144
    %4320 = vst.msk [vmem:[#allocation3 + $0x360] sm:$0xff] %vm4211, %v4149
    %4321 = vst.msk [vmem:[#allocation3 + $0x368] sm:$0xff] %vm4211, %v4152
    %4322 = vst.msk [vmem:[#allocation3 + $0x370] sm:$0xff] %vm4211, %v4157
    %4323 = vst.msk [vmem:[#allocation3 + $0x378] sm:$0xff] %vm4211, %v4160
    %4324 = vst.msk [vmem:[#allocation3 + $0x380] sm:$0xff] %vm4211, %v4165
    %4325 = vst.msk [vmem:[#allocation3 + $0x388] sm:$0xff] %vm4211, %v4168
    %4326 = vst.msk [vmem:[#allocation3 + $0x390] sm:$0xff] %vm4211, %v4173
    %4327 = vst.msk [vmem:[#allocation3 + $0x398] sm:$0xff] %vm4211, %v4176
    %4328 = vst.msk [vmem:[#allocation3 + $0x3a0] sm:$0xff] %vm4211, %v4181
    %4329 = vst.msk [vmem:[#allocation3 + $0x3a8] sm:$0xff] %vm4211, %v4184
    %4330 = vst.msk [vmem:[#allocation3 + $0x3b0] sm:$0xff] %vm4211, %v4189
    %4331 = vst.msk [vmem:[#allocation3 + $0x3b8] sm:$0xff] %vm4211, %v4192
    %4332 = vst.msk [vmem:[#allocation3 + $0x3c0] sm:$0xff] %vm4211, %v4197
    %4333 = vst.msk [vmem:[#allocation3 + $0x3c8] sm:$0xff] %vm4211, %v4200
    %4334 = vst.msk [vmem:[#allocation3 + $0x3d0] sm:$0xff] %vm4211, %v4205
    %4335 = vst.msk [vmem:[#allocation3 + $0x3d8] sm:$0xff] %vm4211, %v4208
    %v4336 = vld [vmem:[#allocation3] ss:$4 sm:$0xff]
    %s4337 = scalar_lea.vmem [#allocation3], 32
    %v4338 = vld [vmem:[%s4337] ss:$4 sm:$0xff]
    %s4339 = scalar_lea.vmem [#allocation3], 64
    %v4340 = vld [vmem:[%s4339] ss:$4 sm:$0xff]
    %s4341 = scalar_lea.vmem [#allocation3], 96
    %v4342 = vld [vmem:[%s4341] ss:$4 sm:$0xff]
    %s4343 = scalar_lea.vmem [#allocation3], 128
    %v4344 = vld [vmem:[%s4343] ss:$4 sm:$0xff]
    %s4345 = scalar_lea.vmem [#allocation3], 160
    %v4346 = vld [vmem:[%s4345] ss:$4 sm:$0xff]
    %s4347 = scalar_lea.vmem [#allocation3], 192
    %v4348 = vld [vmem:[%s4347] ss:$4 sm:$0xff]
    %s4349 = scalar_lea.vmem [#allocation3], 224
    %v4350 = vld [vmem:[%s4349] ss:$4 sm:$0xff]
    %s4351 = scalar_lea.vmem [#allocation3], 256
    %v4352 = vld [vmem:[%s4351] ss:$4 sm:$0xff]
    %s4353 = scalar_lea.vmem [#allocation3], 288
    %v4354 = vld [vmem:[%s4353] ss:$4 sm:$0xff]
    %s4355 = scalar_lea.vmem [#allocation3], 320
    %v4356 = vld [vmem:[%s4355] ss:$4 sm:$0xff]
    %s4357 = scalar_lea.vmem [#allocation3], 352
    %v4358 = vld [vmem:[%s4357] ss:$4 sm:$0xff]
    %s4359 = scalar_lea.vmem [#allocation3], 384
    %v4360 = vld [vmem:[%s4359] ss:$4 sm:$0xff]
    %s4361 = scalar_lea.vmem [#allocation3], 416
    %v4362 = vld [vmem:[%s4361] ss:$4 sm:$0xff]
    %s4363 = scalar_lea.vmem [#allocation3], 448
    %v4364 = vld [vmem:[%s4363] ss:$4 sm:$0xff]
    %s4365 = scalar_lea.vmem [#allocation3], 480
    %v4366 = vld [vmem:[%s4365] ss:$4 sm:$0xff]
    %s4367 = scalar_lea.vmem [#allocation3], 512
    %v4368 = vld [vmem:[%s4367] ss:$4 sm:$0xff]
    %s4369 = scalar_lea.vmem [#allocation3], 544
    %v4370 = vld [vmem:[%s4369] ss:$4 sm:$0xff]
    %s4371 = scalar_lea.vmem [#allocation3], 576
    %v4372 = vld [vmem:[%s4371] ss:$4 sm:$0xff]
    %s4373 = scalar_lea.vmem [#allocation3], 608
    %v4374 = vld [vmem:[%s4373] ss:$4 sm:$0xff]
    %s4375 = scalar_lea.vmem [#allocation3], 640
    %v4376 = vld [vmem:[%s4375] ss:$4 sm:$0xff]
    %s4377 = scalar_lea.vmem [#allocation3], 672
    %v4378 = vld [vmem:[%s4377] ss:$4 sm:$0xff]
    %s4379 = scalar_lea.vmem [#allocation3], 704
    %v4380 = vld [vmem:[%s4379] ss:$4 sm:$0xff]
    %s4381 = scalar_lea.vmem [#allocation3], 736
    %v4382 = vld [vmem:[%s4381] ss:$4 sm:$0xff]
    %s4383 = scalar_lea.vmem [#allocation3], 768
    %v4384 = vld [vmem:[%s4383] ss:$4 sm:$0xff]
    %s4385 = scalar_lea.vmem [#allocation3], 800
    %v4386 = vld [vmem:[%s4385] ss:$4 sm:$0xff]
    %s4387 = scalar_lea.vmem [#allocation3], 832
    %v4388 = vld [vmem:[%s4387] ss:$4 sm:$0xff]
    %s4389 = scalar_lea.vmem [#allocation3], 864
    %v4390 = vld [vmem:[%s4389] ss:$4 sm:$0xff]
    %s4391 = scalar_lea.vmem [#allocation3], 896
    %v4392 = vld [vmem:[%s4391] ss:$4 sm:$0xff]
    %s4393 = scalar_lea.vmem [#allocation3], 928
    %v4394 = vld [vmem:[%s4393] ss:$4 sm:$0xff]
    %s4395 = scalar_lea.vmem [#allocation3], 960
    %v4396 = vld [vmem:[%s4395] ss:$4 sm:$0xff]
    %s4397 = scalar_lea.vmem [#allocation3], 1
    %v4398 = vld [vmem:[%s4397] ss:$4 sm:$0xff]
    %s4399 = scalar_lea.vmem [#allocation3], 33
    %v4400 = vld [vmem:[%s4399] ss:$4 sm:$0xff]
    %s4401 = scalar_lea.vmem [#allocation3], 65
    %v4402 = vld [vmem:[%s4401] ss:$4 sm:$0xff]
    %s4403 = scalar_lea.vmem [#allocation3], 97
    %v4404 = vld [vmem:[%s4403] ss:$4 sm:$0xff]
    %s4405 = scalar_lea.vmem [#allocation3], 129
    %v4406 = vld [vmem:[%s4405] ss:$4 sm:$0xff]
    %s4407 = scalar_lea.vmem [#allocation3], 161
    %v4408 = vld [vmem:[%s4407] ss:$4 sm:$0xff]
    %s4409 = scalar_lea.vmem [#allocation3], 193
    %v4410 = vld [vmem:[%s4409] ss:$4 sm:$0xff]
    %s4411 = scalar_lea.vmem [#allocation3], 225
    %v4412 = vld [vmem:[%s4411] ss:$4 sm:$0xff]
    %s4413 = scalar_lea.vmem [#allocation3], 257
    %v4414 = vld [vmem:[%s4413] ss:$4 sm:$0xff]
    %s4415 = scalar_lea.vmem [#allocation3], 289
    %v4416 = vld [vmem:[%s4415] ss:$4 sm:$0xff]
    %s4417 = scalar_lea.vmem [#allocation3], 321
    %v4418 = vld [vmem:[%s4417] ss:$4 sm:$0xff]
    %s4419 = scalar_lea.vmem [#allocation3], 353
    %v4420 = vld [vmem:[%s4419] ss:$4 sm:$0xff]
    %s4421 = scalar_lea.vmem [#allocation3], 385
    %v4422 = vld [vmem:[%s4421] ss:$4 sm:$0xff]
    %s4423 = scalar_lea.vmem [#allocation3], 417
    %v4424 = vld [vmem:[%s4423] ss:$4 sm:$0xff]
    %s4425 = scalar_lea.vmem [#allocation3], 449
    %v4426 = vld [vmem:[%s4425] ss:$4 sm:$0xff]
    %s4427 = scalar_lea.vmem [#allocation3], 481
    %v4428 = vld [vmem:[%s4427] ss:$4 sm:$0xff]
    %s4429 = scalar_lea.vmem [#allocation3], 513
    %v4430 = vld [vmem:[%s4429] ss:$4 sm:$0xff]
    %s4431 = scalar_lea.vmem [#allocation3], 545
    %v4432 = vld [vmem:[%s4431] ss:$4 sm:$0xff]
    %s4433 = scalar_lea.vmem [#allocation3], 577
    %v4434 = vld [vmem:[%s4433] ss:$4 sm:$0xff]
    %s4435 = scalar_lea.vmem [#allocation3], 609
    %v4436 = vld [vmem:[%s4435] ss:$4 sm:$0xff]
    %s4437 = scalar_lea.vmem [#allocation3], 641
    %v4438 = vld [vmem:[%s4437] ss:$4 sm:$0xff]
    %s4439 = scalar_lea.vmem [#allocation3], 673
    %v4440 = vld [vmem:[%s4439] ss:$4 sm:$0xff]
    %s4441 = scalar_lea.vmem [#allocation3], 705
    %v4442 = vld [vmem:[%s4441] ss:$4 sm:$0xff]
    %s4443 = scalar_lea.vmem [#allocation3], 737
    %v4444 = vld [vmem:[%s4443] ss:$4 sm:$0xff]
    %s4445 = scalar_lea.vmem [#allocation3], 769
    %v4446 = vld [vmem:[%s4445] ss:$4 sm:$0xff]
    %s4447 = scalar_lea.vmem [#allocation3], 801
    %v4448 = vld [vmem:[%s4447] ss:$4 sm:$0xff]
    %s4449 = scalar_lea.vmem [#allocation3], 833
    %v4450 = vld [vmem:[%s4449] ss:$4 sm:$0xff]
    %s4451 = scalar_lea.vmem [#allocation3], 865
    %v4452 = vld [vmem:[%s4451] ss:$4 sm:$0xff]
    %s4453 = scalar_lea.vmem [#allocation3], 897
    %v4454 = vld [vmem:[%s4453] ss:$4 sm:$0xff]
    %s4455 = scalar_lea.vmem [#allocation3], 929
    %v4456 = vld [vmem:[%s4455] ss:$4 sm:$0xff]
    %s4457 = scalar_lea.vmem [#allocation3], 961
    %v4458 = vld [vmem:[%s4457] ss:$4 sm:$0xff]
    %v4459 = vmax.f32 %v4336, %v4398
    %v4460 = vmax.f32 %v4338, %v4400
    %v4461 = vmax.f32 %v4340, %v4402
    %v4462 = vmax.f32 %v4342, %v4404
    %v4463 = vmax.f32 %v4344, %v4406
    %v4464 = vmax.f32 %v4346, %v4408
    %v4465 = vmax.f32 %v4348, %v4410
    %v4466 = vmax.f32 %v4350, %v4412
    %v4467 = vmax.f32 %v4352, %v4414
    %v4468 = vmax.f32 %v4354, %v4416
    %v4469 = vmax.f32 %v4356, %v4418
    %v4470 = vmax.f32 %v4358, %v4420
    %v4471 = vmax.f32 %v4360, %v4422
    %v4472 = vmax.f32 %v4362, %v4424
    %v4473 = vmax.f32 %v4364, %v4426
    %v4474 = vmax.f32 %v4366, %v4428
    %v4475 = vmax.f32 %v4368, %v4430
    %v4476 = vmax.f32 %v4370, %v4432
    %v4477 = vmax.f32 %v4372, %v4434
    %v4478 = vmax.f32 %v4374, %v4436
    %v4479 = vmax.f32 %v4376, %v4438
    %v4480 = vmax.f32 %v4378, %v4440
    %v4481 = vmax.f32 %v4380, %v4442
    %v4482 = vmax.f32 %v4382, %v4444
    %v4483 = vmax.f32 %v4384, %v4446
    %v4484 = vmax.f32 %v4386, %v4448
    %v4485 = vmax.f32 %v4388, %v4450
    %v4486 = vmax.f32 %v4390, %v4452
    %v4487 = vmax.f32 %v4392, %v4454
    %v4488 = vmax.f32 %v4394, %v4456
    %v4489 = vmax.f32 %v4396, %v4458
    %s4490 = scalar_lea.vmem [#allocation3], 2
    %v4491 = vld [vmem:[%s4490] ss:$4 sm:$0xff]
    %s4492 = scalar_lea.vmem [#allocation3], 34
    %v4493 = vld [vmem:[%s4492] ss:$4 sm:$0xff]
    %s4494 = scalar_lea.vmem [#allocation3], 66
    %v4495 = vld [vmem:[%s4494] ss:$4 sm:$0xff]
    %s4496 = scalar_lea.vmem [#allocation3], 98
    %v4497 = vld [vmem:[%s4496] ss:$4 sm:$0xff]
    %s4498 = scalar_lea.vmem [#allocation3], 130
    %v4499 = vld [vmem:[%s4498] ss:$4 sm:$0xff]
    %s4500 = scalar_lea.vmem [#allocation3], 162
    %v4501 = vld [vmem:[%s4500] ss:$4 sm:$0xff]
    %s4502 = scalar_lea.vmem [#allocation3], 194
    %v4503 = vld [vmem:[%s4502] ss:$4 sm:$0xff]
    %s4504 = scalar_lea.vmem [#allocation3], 226
    %v4505 = vld [vmem:[%s4504] ss:$4 sm:$0xff]
    %s4506 = scalar_lea.vmem [#allocation3], 258
    %v4507 = vld [vmem:[%s4506] ss:$4 sm:$0xff]
    %s4508 = scalar_lea.vmem [#allocation3], 290
    %v4509 = vld [vmem:[%s4508] ss:$4 sm:$0xff]
    %s4510 = scalar_lea.vmem [#allocation3], 322
    %v4511 = vld [vmem:[%s4510] ss:$4 sm:$0xff]
    %s4512 = scalar_lea.vmem [#allocation3], 354
    %v4513 = vld [vmem:[%s4512] ss:$4 sm:$0xff]
    %s4514 = scalar_lea.vmem [#allocation3], 386
    %v4515 = vld [vmem:[%s4514] ss:$4 sm:$0xff]
    %s4516 = scalar_lea.vmem [#allocation3], 418
    %v4517 = vld [vmem:[%s4516] ss:$4 sm:$0xff]
    %s4518 = scalar_lea.vmem [#allocation3], 450
    %v4519 = vld [vmem:[%s4518] ss:$4 sm:$0xff]
    %s4520 = scalar_lea.vmem [#allocation3], 482
    %v4521 = vld [vmem:[%s4520] ss:$4 sm:$0xff]
    %s4522 = scalar_lea.vmem [#allocation3], 514
    %v4523 = vld [vmem:[%s4522] ss:$4 sm:$0xff]
    %s4524 = scalar_lea.vmem [#allocation3], 546
    %v4525 = vld [vmem:[%s4524] ss:$4 sm:$0xff]
    %s4526 = scalar_lea.vmem [#allocation3], 578
    %v4527 = vld [vmem:[%s4526] ss:$4 sm:$0xff]
    %s4528 = scalar_lea.vmem [#allocation3], 610
    %v4529 = vld [vmem:[%s4528] ss:$4 sm:$0xff]
    %s4530 = scalar_lea.vmem [#allocation3], 642
    %v4531 = vld [vmem:[%s4530] ss:$4 sm:$0xff]
    %s4532 = scalar_lea.vmem [#allocation3], 674
    %v4533 = vld [vmem:[%s4532] ss:$4 sm:$0xff]
    %s4534 = scalar_lea.vmem [#allocation3], 706
    %v4535 = vld [vmem:[%s4534] ss:$4 sm:$0xff]
    %s4536 = scalar_lea.vmem [#allocation3], 738
    %v4537 = vld [vmem:[%s4536] ss:$4 sm:$0xff]
    %s4538 = scalar_lea.vmem [#allocation3], 770
    %v4539 = vld [vmem:[%s4538] ss:$4 sm:$0xff]
    %s4540 = scalar_lea.vmem [#allocation3], 802
    %v4541 = vld [vmem:[%s4540] ss:$4 sm:$0xff]
    %s4542 = scalar_lea.vmem [#allocation3], 834
    %v4543 = vld [vmem:[%s4542] ss:$4 sm:$0xff]
    %s4544 = scalar_lea.vmem [#allocation3], 866
    %v4545 = vld [vmem:[%s4544] ss:$4 sm:$0xff]
    %s4546 = scalar_lea.vmem [#allocation3], 898
    %v4547 = vld [vmem:[%s4546] ss:$4 sm:$0xff]
    %s4548 = scalar_lea.vmem [#allocation3], 930
    %v4549 = vld [vmem:[%s4548] ss:$4 sm:$0xff]
    %s4550 = scalar_lea.vmem [#allocation3], 962
    %v4551 = vld [vmem:[%s4550] ss:$4 sm:$0xff]
    %s4552 = scalar_lea.vmem [#allocation3], 3
    %v4553 = vld [vmem:[%s4552] ss:$4 sm:$0xff]
    %s4554 = scalar_lea.vmem [#allocation3], 35
    %v4555 = vld [vmem:[%s4554] ss:$4 sm:$0xff]
    %s4556 = scalar_lea.vmem [#allocation3], 67
    %v4557 = vld [vmem:[%s4556] ss:$4 sm:$0xff]
    %s4558 = scalar_lea.vmem [#allocation3], 99
    %v4559 = vld [vmem:[%s4558] ss:$4 sm:$0xff]
    %s4560 = scalar_lea.vmem [#allocation3], 131
    %v4561 = vld [vmem:[%s4560] ss:$4 sm:$0xff]
    %s4562 = scalar_lea.vmem [#allocation3], 163
    %v4563 = vld [vmem:[%s4562] ss:$4 sm:$0xff]
    %s4564 = scalar_lea.vmem [#allocation3], 195
    %v4565 = vld [vmem:[%s4564] ss:$4 sm:$0xff]
    %s4566 = scalar_lea.vmem [#allocation3], 227
    %v4567 = vld [vmem:[%s4566] ss:$4 sm:$0xff]
    %s4568 = scalar_lea.vmem [#allocation3], 259
    %v4569 = vld [vmem:[%s4568] ss:$4 sm:$0xff]
    %s4570 = scalar_lea.vmem [#allocation3], 291
    %v4571 = vld [vmem:[%s4570] ss:$4 sm:$0xff]
    %s4572 = scalar_lea.vmem [#allocation3], 323
    %v4573 = vld [vmem:[%s4572] ss:$4 sm:$0xff]
    %s4574 = scalar_lea.vmem [#allocation3], 355
    %v4575 = vld [vmem:[%s4574] ss:$4 sm:$0xff]
    %s4576 = scalar_lea.vmem [#allocation3], 387
    %v4577 = vld [vmem:[%s4576] ss:$4 sm:$0xff]
    %s4578 = scalar_lea.vmem [#allocation3], 419
    %v4579 = vld [vmem:[%s4578] ss:$4 sm:$0xff]
    %s4580 = scalar_lea.vmem [#allocation3], 451
    %v4581 = vld [vmem:[%s4580] ss:$4 sm:$0xff]
    %s4582 = scalar_lea.vmem [#allocation3], 483
    %v4583 = vld [vmem:[%s4582] ss:$4 sm:$0xff]
    %s4584 = scalar_lea.vmem [#allocation3], 515
    %v4585 = vld [vmem:[%s4584] ss:$4 sm:$0xff]
    %s4586 = scalar_lea.vmem [#allocation3], 547
    %v4587 = vld [vmem:[%s4586] ss:$4 sm:$0xff]
    %s4588 = scalar_lea.vmem [#allocation3], 579
    %v4589 = vld [vmem:[%s4588] ss:$4 sm:$0xff]
    %s4590 = scalar_lea.vmem [#allocation3], 611
    %v4591 = vld [vmem:[%s4590] ss:$4 sm:$0xff]
    %s4592 = scalar_lea.vmem [#allocation3], 643
    %v4593 = vld [vmem:[%s4592] ss:$4 sm:$0xff]
    %s4594 = scalar_lea.vmem [#allocation3], 675
    %v4595 = vld [vmem:[%s4594] ss:$4 sm:$0xff]
    %s4596 = scalar_lea.vmem [#allocation3], 707
    %v4597 = vld [vmem:[%s4596] ss:$4 sm:$0xff]
    %s4598 = scalar_lea.vmem [#allocation3], 739
    %v4599 = vld [vmem:[%s4598] ss:$4 sm:$0xff]
    %s4600 = scalar_lea.vmem [#allocation3], 771
    %v4601 = vld [vmem:[%s4600] ss:$4 sm:$0xff]
    %s4602 = scalar_lea.vmem [#allocation3], 803
    %v4603 = vld [vmem:[%s4602] ss:$4 sm:$0xff]
    %s4604 = scalar_lea.vmem [#allocation3], 835
    %v4605 = vld [vmem:[%s4604] ss:$4 sm:$0xff]
    %s4606 = scalar_lea.vmem [#allocation3], 867
    %v4607 = vld [vmem:[%s4606] ss:$4 sm:$0xff]
    %s4608 = scalar_lea.vmem [#allocation3], 899
    %v4609 = vld [vmem:[%s4608] ss:$4 sm:$0xff]
    %s4610 = scalar_lea.vmem [#allocation3], 931
    %v4611 = vld [vmem:[%s4610] ss:$4 sm:$0xff]
    %s4612 = scalar_lea.vmem [#allocation3], 963
    %v4613 = vld [vmem:[%s4612] ss:$4 sm:$0xff]
    %v4614 = vmax.f32 %v4491, %v4553
    %v4615 = vmax.f32 %v4493, %v4555
    %v4616 = vmax.f32 %v4495, %v4557
    %v4617 = vmax.f32 %v4497, %v4559
    %v4618 = vmax.f32 %v4499, %v4561
    %v4619 = vmax.f32 %v4501, %v4563
    %v4620 = vmax.f32 %v4503, %v4565
    %v4621 = vmax.f32 %v4505, %v4567
    %v4622 = vmax.f32 %v4507, %v4569
    %v4623 = vmax.f32 %v4509, %v4571
    %v4624 = vmax.f32 %v4511, %v4573
    %v4625 = vmax.f32 %v4513, %v4575
    %v4626 = vmax.f32 %v4515, %v4577
    %v4627 = vmax.f32 %v4517, %v4579
    %v4628 = vmax.f32 %v4519, %v4581
    %v4629 = vmax.f32 %v4521, %v4583
    %v4630 = vmax.f32 %v4523, %v4585
    %v4631 = vmax.f32 %v4525, %v4587
    %v4632 = vmax.f32 %v4527, %v4589
    %v4633 = vmax.f32 %v4529, %v4591
    %v4634 = vmax.f32 %v4531, %v4593
    %v4635 = vmax.f32 %v4533, %v4595
    %v4636 = vmax.f32 %v4535, %v4597
    %v4637 = vmax.f32 %v4537, %v4599
    %v4638 = vmax.f32 %v4539, %v4601
    %v4639 = vmax.f32 %v4541, %v4603
    %v4640 = vmax.f32 %v4543, %v4605
    %v4641 = vmax.f32 %v4545, %v4607
    %v4642 = vmax.f32 %v4547, %v4609
    %v4643 = vmax.f32 %v4549, %v4611
    %v4644 = vmax.f32 %v4551, %v4613
    %v4645 = vmax.f32 %v4459, %v4614
    %v4646 = vmax.f32 %v4460, %v4615
    %v4647 = vmax.f32 %v4461, %v4616
    %v4648 = vmax.f32 %v4462, %v4617
    %v4649 = vmax.f32 %v4463, %v4618
    %v4650 = vmax.f32 %v4464, %v4619
    %v4651 = vmax.f32 %v4465, %v4620
    %v4652 = vmax.f32 %v4466, %v4621
    %v4653 = vmax.f32 %v4467, %v4622
    %v4654 = vmax.f32 %v4468, %v4623
    %v4655 = vmax.f32 %v4469, %v4624
    %v4656 = vmax.f32 %v4470, %v4625
    %v4657 = vmax.f32 %v4471, %v4626
    %v4658 = vmax.f32 %v4472, %v4627
    %v4659 = vmax.f32 %v4473, %v4628
    %v4660 = vmax.f32 %v4474, %v4629
    %v4661 = vmax.f32 %v4475, %v4630
    %v4662 = vmax.f32 %v4476, %v4631
    %v4663 = vmax.f32 %v4477, %v4632
    %v4664 = vmax.f32 %v4478, %v4633
    %v4665 = vmax.f32 %v4479, %v4634
    %v4666 = vmax.f32 %v4480, %v4635
    %v4667 = vmax.f32 %v4481, %v4636
    %v4668 = vmax.f32 %v4482, %v4637
    %v4669 = vmax.f32 %v4483, %v4638
    %v4670 = vmax.f32 %v4484, %v4639
    %v4671 = vmax.f32 %v4485, %v4640
    %v4672 = vmax.f32 %v4486, %v4641
    %v4673 = vmax.f32 %v4487, %v4642
    %v4674 = vmax.f32 %v4488, %v4643
    %v4675 = vmax.f32 %v4489, %v4644
    %v4676 = vld [vmem:[%s2] sm:$0x1]
    %v4678 = vlaneseq
    %v4679 = vshrl.u32 %v4678, 7
    %v4680 = vsub.s32 0, %v4679
    %v4681 = vrot.slane %v4676, %v4680
    %v4683 = vadd.f32 %v4645, %v4681
    %v4684 = vadd.f32 %v4646, %v4681
    %v4685 = vadd.f32 %v4647, %v4681
    %v4686 = vadd.f32 %v4648, %v4681
    %v4687 = vadd.f32 %v4649, %v4681
    %v4688 = vadd.f32 %v4650, %v4681
    %v4689 = vadd.f32 %v4651, %v4681
    %v4690 = vadd.f32 %v4652, %v4681
    %v4691 = vadd.f32 %v4653, %v4681
    %v4692 = vadd.f32 %v4654, %v4681
    %v4693 = vadd.f32 %v4655, %v4681
    %v4694 = vadd.f32 %v4656, %v4681
    %v4695 = vadd.f32 %v4657, %v4681
    %v4696 = vadd.f32 %v4658, %v4681
    %v4697 = vadd.f32 %v4659, %v4681
    %v4698 = vadd.f32 %v4660, %v4681
    %v4699 = vadd.f32 %v4661, %v4681
    %v4700 = vadd.f32 %v4662, %v4681
    %v4701 = vadd.f32 %v4663, %v4681
    %v4702 = vadd.f32 %v4664, %v4681
    %v4703 = vadd.f32 %v4665, %v4681
    %v4704 = vadd.f32 %v4666, %v4681
    %v4705 = vadd.f32 %v4667, %v4681
    %v4706 = vadd.f32 %v4668, %v4681
    %v4707 = vadd.f32 %v4669, %v4681
    %v4708 = vadd.f32 %v4670, %v4681
    %v4709 = vadd.f32 %v4671, %v4681
    %v4710 = vadd.f32 %v4672, %v4681
    %v4711 = vadd.f32 %v4673, %v4681
    %v4712 = vadd.f32 %v4674, %v4681
    %v4713 = vadd.f32 %v4675, %v4681
    %v4714 = vmax.f32 %v4683, 0.0
    %v4715 = vmax.f32 %v4684, 0.0
    %v4716 = vmax.f32 %v4685, 0.0
    %v4717 = vmax.f32 %v4686, 0.0
    %v4718 = vmax.f32 %v4687, 0.0
    %v4719 = vmax.f32 %v4688, 0.0
    %v4720 = vmax.f32 %v4689, 0.0
    %v4721 = vmax.f32 %v4690, 0.0
    %v4722 = vmax.f32 %v4691, 0.0
    %v4723 = vmax.f32 %v4692, 0.0
    %v4724 = vmax.f32 %v4693, 0.0
    %v4725 = vmax.f32 %v4694, 0.0
    %v4726 = vmax.f32 %v4695, 0.0
    %v4727 = vmax.f32 %v4696, 0.0
    %v4728 = vmax.f32 %v4697, 0.0
    %v4729 = vmax.f32 %v4698, 0.0
    %v4730 = vmax.f32 %v4699, 0.0
    %v4731 = vmax.f32 %v4700, 0.0
    %v4732 = vmax.f32 %v4701, 0.0
    %v4733 = vmax.f32 %v4702, 0.0
    %v4734 = vmax.f32 %v4703, 0.0
    %v4735 = vmax.f32 %v4704, 0.0
    %v4736 = vmax.f32 %v4705, 0.0
    %v4737 = vmax.f32 %v4706, 0.0
    %v4738 = vmax.f32 %v4707, 0.0
    %v4739 = vmax.f32 %v4708, 0.0
    %v4740 = vmax.f32 %v4709, 0.0
    %v4741 = vmax.f32 %v4710, 0.0
    %v4742 = vmax.f32 %v4711, 0.0
    %v4743 = vmax.f32 %v4712, 0.0
    %v4744 = vmax.f32 %v4713, 0.0
    %4745 = vst.msk [vmem:[#allocation4] sm:$0xff] %vm4211, %v4714
    %4746 = vst.msk [vmem:[#allocation4 + $0x8] sm:$0xff] %vm4211, %v4715
    %4747 = vst.msk [vmem:[#allocation4 + $0x10] sm:$0xff] %vm4211, %v4716
    %4748 = vst.msk [vmem:[#allocation4 + $0x18] sm:$0xff] %vm4211, %v4717
    %4749 = vst.msk [vmem:[#allocation4 + $0x20] sm:$0xff] %vm4211, %v4718
    %4750 = vst.msk [vmem:[#allocation4 + $0x28] sm:$0xff] %vm4211, %v4719
    %4751 = vst.msk [vmem:[#allocation4 + $0x30] sm:$0xff] %vm4211, %v4720
    %4752 = vst.msk [vmem:[#allocation4 + $0x38] sm:$0xff] %vm4211, %v4721
    %4753 = vst.msk [vmem:[#allocation4 + $0x40] sm:$0xff] %vm4211, %v4722
    %4754 = vst.msk [vmem:[#allocation4 + $0x48] sm:$0xff] %vm4211, %v4723
    %4755 = vst.msk [vmem:[#allocation4 + $0x50] sm:$0xff] %vm4211, %v4724
    %4756 = vst.msk [vmem:[#allocation4 + $0x58] sm:$0xff] %vm4211, %v4725
    %4757 = vst.msk [vmem:[#allocation4 + $0x60] sm:$0xff] %vm4211, %v4726
    %4758 = vst.msk [vmem:[#allocation4 + $0x68] sm:$0xff] %vm4211, %v4727
    %4759 = vst.msk [vmem:[#allocation4 + $0x70] sm:$0xff] %vm4211, %v4728
    %4760 = vst.msk [vmem:[#allocation4 + $0x78] sm:$0xff] %vm4211, %v4729
    %4761 = vst.msk [vmem:[#allocation4 + $0x80] sm:$0xff] %vm4211, %v4730
    %4762 = vst.msk [vmem:[#allocation4 + $0x88] sm:$0xff] %vm4211, %v4731
    %4763 = vst.msk [vmem:[#allocation4 + $0x90] sm:$0xff] %vm4211, %v4732
    %4764 = vst.msk [vmem:[#allocation4 + $0x98] sm:$0xff] %vm4211, %v4733
    %4765 = vst.msk [vmem:[#allocation4 + $0xa0] sm:$0xff] %vm4211, %v4734
    %4766 = vst.msk [vmem:[#allocation4 + $0xa8] sm:$0xff] %vm4211, %v4735
    %4767 = vst.msk [vmem:[#allocation4 + $0xb0] sm:$0xff] %vm4211, %v4736
    %4768 = vst.msk [vmem:[#allocation4 + $0xb8] sm:$0xff] %vm4211, %v4737
    %4769 = vst.msk [vmem:[#allocation4 + $0xc0] sm:$0xff] %vm4211, %v4738
    %4770 = vst.msk [vmem:[#allocation4 + $0xc8] sm:$0xff] %vm4211, %v4739
    %4771 = vst.msk [vmem:[#allocation4 + $0xd0] sm:$0xff] %vm4211, %v4740
    %4772 = vst.msk [vmem:[#allocation4 + $0xd8] sm:$0xff] %vm4211, %v4741
    %4773 = vst.msk [vmem:[#allocation4 + $0xe0] sm:$0xff] %vm4211, %v4742
    %4774 = vst.msk [vmem:[#allocation4 + $0xe8] sm:$0xff] %vm4211, %v4743
    %4775 = vst.msk [vmem:[#allocation4 + $0xf0] sm:$0xff] %vm4211, %v4744
    %v4776 = vld [vmem:[#allocation4] sm:$0xff]
    %v4777 = vld [vmem:[#allocation4 + $0x8] sm:$0xff]
    %v4778 = vld [vmem:[#allocation4 + $0x10] sm:$0xff]
    %v4779 = vld [vmem:[#allocation4 + $0x18] sm:$0xff]
    %v4780 = vld [vmem:[#allocation4 + $0x20] sm:$0xff]
    %v4781 = vld [vmem:[#allocation4 + $0x28] sm:$0xff]
    %v4782 = vld [vmem:[#allocation4 + $0x30] sm:$0xff]
    %v4783 = vld [vmem:[#allocation4 + $0x38] sm:$0xff]
    %v4784 = vld [vmem:[#allocation4 + $0x40] sm:$0xff]
    %v4785 = vld [vmem:[#allocation4 + $0x48] sm:$0xff]
    %v4786 = vld [vmem:[#allocation4 + $0x50] sm:$0xff]
    %v4787 = vld [vmem:[#allocation4 + $0x58] sm:$0xff]
    %v4788 = vld [vmem:[#allocation4 + $0x60] sm:$0xff]
    %v4789 = vld [vmem:[#allocation4 + $0x68] sm:$0xff]
    %v4790 = vld [vmem:[#allocation4 + $0x70] sm:$0xff]
    %4791 = vst.msk [vmem:[#allocation5] sm:$0xff] %vm4211, %v4776
    %4792 = vst.msk [vmem:[#allocation5 + $0x8] sm:$0xff] %vm4211, %v4777
    %4793 = vst.msk [vmem:[#allocation5 + $0x10] sm:$0xff] %vm4211, %v4778
    %4794 = vst.msk [vmem:[#allocation5 + $0x18] sm:$0xff] %vm4211, %v4779
    %4795 = vst.msk [vmem:[#allocation5 + $0x20] sm:$0xff] %vm4211, %v4780
    %4796 = vst.msk [vmem:[#allocation5 + $0x28] sm:$0xff] %vm4211, %v4781
    %4797 = vst.msk [vmem:[#allocation5 + $0x30] sm:$0xff] %vm4211, %v4782
    %4798 = vst.msk [vmem:[#allocation5 + $0x38] sm:$0xff] %vm4211, %v4783
    %4799 = vst.msk [vmem:[#allocation5 + $0x40] sm:$0xff] %vm4211, %v4784
    %4800 = vst.msk [vmem:[#allocation5 + $0x48] sm:$0xff] %vm4211, %v4785
    %4801 = vst.msk [vmem:[#allocation5 + $0x50] sm:$0xff] %vm4211, %v4786
    %4802 = vst.msk [vmem:[#allocation5 + $0x58] sm:$0xff] %vm4211, %v4787
    %4803 = vst.msk [vmem:[#allocation5 + $0x60] sm:$0xff] %vm4211, %v4788
    %4804 = vst.msk [vmem:[#allocation5 + $0x68] sm:$0xff] %vm4211, %v4789
    %4805 = vst.msk [vmem:[#allocation5 + $0x70] sm:$0xff] %vm4211, %v4790
    %v4806 = vld [vmem:[#allocation4 + $0x1] sm:$0xff]
    %v4807 = vld [vmem:[#allocation4 + $0x9] sm:$0xff]
    %v4808 = vld [vmem:[#allocation4 + $0x11] sm:$0xff]
    %v4809 = vld [vmem:[#allocation4 + $0x19] sm:$0xff]
    %v4810 = vld [vmem:[#allocation4 + $0x21] sm:$0xff]
    %v4811 = vld [vmem:[#allocation4 + $0x29] sm:$0xff]
    %v4812 = vld [vmem:[#allocation4 + $0x31] sm:$0xff]
    %v4813 = vld [vmem:[#allocation4 + $0x39] sm:$0xff]
    %v4814 = vld [vmem:[#allocation4 + $0x41] sm:$0xff]
    %v4815 = vld [vmem:[#allocation4 + $0x49] sm:$0xff]
    %v4816 = vld [vmem:[#allocation4 + $0x51] sm:$0xff]
    %v4817 = vld [vmem:[#allocation4 + $0x59] sm:$0xff]
    %v4818 = vld [vmem:[#allocation4 + $0x61] sm:$0xff]
    %v4819 = vld [vmem:[#allocation4 + $0x69] sm:$0xff]
    %v4820 = vld [vmem:[#allocation4 + $0x71] sm:$0xff]
    %4836 = vrot.lane.b32.xlu0 %v4806, 32
    %v4837 = vpop.permute.xlu0 %4836
    %4838 = vrot.lane.b32.xlu0 %v4807, 32
    %v4839 = vpop.permute.xlu0 %4838
    %4840 = vrot.lane.b32.xlu0 %v4808, 32
    %v4841 = vpop.permute.xlu0 %4840
    %4842 = vrot.lane.b32.xlu0 %v4809, 32
    %v4843 = vpop.permute.xlu0 %4842
    %4844 = vrot.lane.b32.xlu0 %v4810, 32
    %v4845 = vpop.permute.xlu0 %4844
    %4846 = vrot.lane.b32.xlu0 %v4811, 32
    %v4847 = vpop.permute.xlu0 %4846
    %4848 = vrot.lane.b32.xlu0 %v4812, 32
    %v4849 = vpop.permute.xlu0 %4848
    %4850 = vrot.lane.b32.xlu0 %v4813, 32
    %v4851 = vpop.permute.xlu0 %4850
    %4852 = vrot.lane.b32.xlu0 %v4814, 32
    %v4853 = vpop.permute.xlu0 %4852
    %4854 = vrot.lane.b32.xlu0 %v4815, 32
    %v4855 = vpop.permute.xlu0 %4854
    %4856 = vrot.lane.b32.xlu0 %v4816, 32
    %v4857 = vpop.permute.xlu0 %4856
    %4858 = vrot.lane.b32.xlu0 %v4817, 32
    %v4859 = vpop.permute.xlu0 %4858
    %4860 = vrot.lane.b32.xlu0 %v4818, 32
    %v4861 = vpop.permute.xlu0 %4860
    %4862 = vrot.lane.b32.xlu0 %v4819, 32
    %v4863 = vpop.permute.xlu0 %4862
    %4864 = vrot.lane.b32.xlu0 %v4820, 32
    %v4865 = vpop.permute.xlu0 %4864
    %vm4881 = vcmask 523520
    %4882 = vst.msk [vmem:[#allocation5] sm:$0xff] %vm4881, %v4837
    %4883 = vst.msk [vmem:[#allocation5 + $0x8] sm:$0xff] %vm4881, %v4839
    %4884 = vst.msk [vmem:[#allocation5 + $0x10] sm:$0xff] %vm4881, %v4841
    %4885 = vst.msk [vmem:[#allocation5 + $0x18] sm:$0xff] %vm4881, %v4843
    %4886 = vst.msk [vmem:[#allocation5 + $0x20] sm:$0xff] %vm4881, %v4845
    %4887 = vst.msk [vmem:[#allocation5 + $0x28] sm:$0xff] %vm4881, %v4847
    %4888 = vst.msk [vmem:[#allocation5 + $0x30] sm:$0xff] %vm4881, %v4849
    %4889 = vst.msk [vmem:[#allocation5 + $0x38] sm:$0xff] %vm4881, %v4851
    %4890 = vst.msk [vmem:[#allocation5 + $0x40] sm:$0xff] %vm4881, %v4853
    %4891 = vst.msk [vmem:[#allocation5 + $0x48] sm:$0xff] %vm4881, %v4855
    %4892 = vst.msk [vmem:[#allocation5 + $0x50] sm:$0xff] %vm4881, %v4857
    %4893 = vst.msk [vmem:[#allocation5 + $0x58] sm:$0xff] %vm4881, %v4859
    %4894 = vst.msk [vmem:[#allocation5 + $0x60] sm:$0xff] %vm4881, %v4861
    %4895 = vst.msk [vmem:[#allocation5 + $0x68] sm:$0xff] %vm4881, %v4863
    %4896 = vst.msk [vmem:[#allocation5 + $0x70] sm:$0xff] %vm4881, %v4865
    %v4897 = vld [vmem:[#allocation4 + $0x2] sm:$0xff]
    %v4898 = vld [vmem:[#allocation4 + $0xa] sm:$0xff]
    %v4899 = vld [vmem:[#allocation4 + $0x12] sm:$0xff]
    %v4900 = vld [vmem:[#allocation4 + $0x1a] sm:$0xff]
    %v4901 = vld [vmem:[#allocation4 + $0x22] sm:$0xff]
    %v4902 = vld [vmem:[#allocation4 + $0x2a] sm:$0xff]
    %v4903 = vld [vmem:[#allocation4 + $0x32] sm:$0xff]
    %v4904 = vld [vmem:[#allocation4 + $0x3a] sm:$0xff]
    %v4905 = vld [vmem:[#allocation4 + $0x42] sm:$0xff]
    %v4906 = vld [vmem:[#allocation4 + $0x4a] sm:$0xff]
    %v4907 = vld [vmem:[#allocation4 + $0x52] sm:$0xff]
    %v4908 = vld [vmem:[#allocation4 + $0x5a] sm:$0xff]
    %v4909 = vld [vmem:[#allocation4 + $0x62] sm:$0xff]
    %v4910 = vld [vmem:[#allocation4 + $0x6a] sm:$0xff]
    %v4911 = vld [vmem:[#allocation4 + $0x72] sm:$0xff]
    %4927 = vrot.lane.b32.xlu0 %v4897, 64
    %v4928 = vpop.permute.xlu0 %4927
    %4929 = vrot.lane.b32.xlu0 %v4898, 64
    %v4930 = vpop.permute.xlu0 %4929
    %4931 = vrot.lane.b32.xlu0 %v4899, 64
    %v4932 = vpop.permute.xlu0 %4931
    %4933 = vrot.lane.b32.xlu0 %v4900, 64
    %v4934 = vpop.permute.xlu0 %4933
    %4935 = vrot.lane.b32.xlu0 %v4901, 64
    %v4936 = vpop.permute.xlu0 %4935
    %4937 = vrot.lane.b32.xlu0 %v4902, 64
    %v4938 = vpop.permute.xlu0 %4937
    %4939 = vrot.lane.b32.xlu0 %v4903, 64
    %v4940 = vpop.permute.xlu0 %4939
    %4941 = vrot.lane.b32.xlu0 %v4904, 64
    %v4942 = vpop.permute.xlu0 %4941
    %4943 = vrot.lane.b32.xlu0 %v4905, 64
    %v4944 = vpop.permute.xlu0 %4943
    %4945 = vrot.lane.b32.xlu0 %v4906, 64
    %v4946 = vpop.permute.xlu0 %4945
    %4947 = vrot.lane.b32.xlu0 %v4907, 64
    %v4948 = vpop.permute.xlu0 %4947
    %4949 = vrot.lane.b32.xlu0 %v4908, 64
    %v4950 = vpop.permute.xlu0 %4949
    %4951 = vrot.lane.b32.xlu0 %v4909, 64
    %v4952 = vpop.permute.xlu0 %4951
    %4953 = vrot.lane.b32.xlu0 %v4910, 64
    %v4954 = vpop.permute.xlu0 %4953
    %4955 = vrot.lane.b32.xlu0 %v4911, 64
    %v4956 = vpop.permute.xlu0 %4955
    %vm4972 = vcmask 785920
    %4973 = vst.msk [vmem:[#allocation5] sm:$0xff] %vm4972, %v4928
    %4974 = vst.msk [vmem:[#allocation5 + $0x8] sm:$0xff] %vm4972, %v4930
    %4975 = vst.msk [vmem:[#allocation5 + $0x10] sm:$0xff] %vm4972, %v4932
    %4976 = vst.msk [vmem:[#allocation5 + $0x18] sm:$0xff] %vm4972, %v4934
    %4977 = vst.msk [vmem:[#allocation5 + $0x20] sm:$0xff] %vm4972, %v4936
    %4978 = vst.msk [vmem:[#allocation5 + $0x28] sm:$0xff] %vm4972, %v4938
    %4979 = vst.msk [vmem:[#allocation5 + $0x30] sm:$0xff] %vm4972, %v4940
    %4980 = vst.msk [vmem:[#allocation5 + $0x38] sm:$0xff] %vm4972, %v4942
    %4981 = vst.msk [vmem:[#allocation5 + $0x40] sm:$0xff] %vm4972, %v4944
    %4982 = vst.msk [vmem:[#allocation5 + $0x48] sm:$0xff] %vm4972, %v4946
    %4983 = vst.msk [vmem:[#allocation5 + $0x50] sm:$0xff] %vm4972, %v4948
    %4984 = vst.msk [vmem:[#allocation5 + $0x58] sm:$0xff] %vm4972, %v4950
    %4985 = vst.msk [vmem:[#allocation5 + $0x60] sm:$0xff] %vm4972, %v4952
    %4986 = vst.msk [vmem:[#allocation5 + $0x68] sm:$0xff] %vm4972, %v4954
    %4987 = vst.msk [vmem:[#allocation5 + $0x70] sm:$0xff] %vm4972, %v4956
    %v4988 = vld [vmem:[#allocation4 + $0x7c] sm:$0xff]
    %v4989 = vld [vmem:[#allocation4 + $0x84] sm:$0xff]
    %v4990 = vld [vmem:[#allocation4 + $0x8c] sm:$0xff]
    %v4991 = vld [vmem:[#allocation4 + $0x94] sm:$0xff]
    %v4992 = vld [vmem:[#allocation4 + $0x9c] sm:$0xff]
    %v4993 = vld [vmem:[#allocation4 + $0xa4] sm:$0xff]
    %v4994 = vld [vmem:[#allocation4 + $0xac] sm:$0xff]
    %v4995 = vld [vmem:[#allocation4 + $0xb4] sm:$0xff]
    %v4996 = vld [vmem:[#allocation4 + $0xbc] sm:$0xff]
    %v4997 = vld [vmem:[#allocation4 + $0xc4] sm:$0xff]
    %v4998 = vld [vmem:[#allocation4 + $0xcc] sm:$0xff]
    %v4999 = vld [vmem:[#allocation4 + $0xd4] sm:$0xff]
    %v5000 = vld [vmem:[#allocation4 + $0xdc] sm:$0xff]
    %v5001 = vld [vmem:[#allocation4 + $0xe4] sm:$0xff]
    %v5002 = vld [vmem:[#allocation4 + $0xec] sm:$0xff]
    %5003 = vst.msk [vmem:[#allocation5 + $0x78] sm:$0xff] %vm4211, %v4988
    %5004 = vst.msk [vmem:[#allocation5 + $0x80] sm:$0xff] %vm4211, %v4989
    %5005 = vst.msk [vmem:[#allocation5 + $0x88] sm:$0xff] %vm4211, %v4990
    %5006 = vst.msk [vmem:[#allocation5 + $0x90] sm:$0xff] %vm4211, %v4991
    %5007 = vst.msk [vmem:[#allocation5 + $0x98] sm:$0xff] %vm4211, %v4992
    %5008 = vst.msk [vmem:[#allocation5 + $0xa0] sm:$0xff] %vm4211, %v4993
    %5009 = vst.msk [vmem:[#allocation5 + $0xa8] sm:$0xff] %vm4211, %v4994
    %5010 = vst.msk [vmem:[#allocation5 + $0xb0] sm:$0xff] %vm4211, %v4995
    %5011 = vst.msk [vmem:[#allocation5 + $0xb8] sm:$0xff] %vm4211, %v4996
    %5012 = vst.msk [vmem:[#allocation5 + $0xc0] sm:$0xff] %vm4211, %v4997
    %5013 = vst.msk [vmem:[#allocation5 + $0xc8] sm:$0xff] %vm4211, %v4998
    %5014 = vst.msk [vmem:[#allocation5 + $0xd0] sm:$0xff] %vm4211, %v4999
    %5015 = vst.msk [vmem:[#allocation5 + $0xd8] sm:$0xff] %vm4211, %v5000
    %5016 = vst.msk [vmem:[#allocation5 + $0xe0] sm:$0xff] %vm4211, %v5001
    %5017 = vst.msk [vmem:[#allocation5 + $0xe8] sm:$0xff] %vm4211, %v5002
    %v5018 = vld [vmem:[#allocation4 + $0x7d] sm:$0xff]
    %v5019 = vld [vmem:[#allocation4 + $0x85] sm:$0xff]
    %v5020 = vld [vmem:[#allocation4 + $0x8d] sm:$0xff]
    %v5021 = vld [vmem:[#allocation4 + $0x95] sm:$0xff]
    %v5022 = vld [vmem:[#allocation4 + $0x9d] sm:$0xff]
    %v5023 = vld [vmem:[#allocation4 + $0xa5] sm:$0xff]
    %v5024 = vld [vmem:[#allocation4 + $0xad] sm:$0xff]
    %v5025 = vld [vmem:[#allocation4 + $0xb5] sm:$0xff]
    %v5026 = vld [vmem:[#allocation4 + $0xbd] sm:$0xff]
    %v5027 = vld [vmem:[#allocation4 + $0xc5] sm:$0xff]
    %v5028 = vld [vmem:[#allocation4 + $0xcd] sm:$0xff]
    %v5029 = vld [vmem:[#allocation4 + $0xd5] sm:$0xff]
    %v5030 = vld [vmem:[#allocation4 + $0xdd] sm:$0xff]
    %v5031 = vld [vmem:[#allocation4 + $0xe5] sm:$0xff]
    %v5032 = vld [vmem:[#allocation4 + $0xed] sm:$0xff]
    %5048 = vrot.lane.b32.xlu0 %v5018, 32
    %v5049 = vpop.permute.xlu0 %5048
    %5050 = vrot.lane.b32.xlu0 %v5019, 32
    %v5051 = vpop.permute.xlu0 %5050
    %5052 = vrot.lane.b32.xlu0 %v5020, 32
    %v5053 = vpop.permute.xlu0 %5052
    %5054 = vrot.lane.b32.xlu0 %v5021, 32
    %v5055 = vpop.permute.xlu0 %5054
    %5056 = vrot.lane.b32.xlu0 %v5022, 32
    %v5057 = vpop.permute.xlu0 %5056
    %5058 = vrot.lane.b32.xlu0 %v5023, 32
    %v5059 = vpop.permute.xlu0 %5058
    %5060 = vrot.lane.b32.xlu0 %v5024, 32
    %v5061 = vpop.permute.xlu0 %5060
    %5062 = vrot.lane.b32.xlu0 %v5025, 32
    %v5063 = vpop.permute.xlu0 %5062
    %5064 = vrot.lane.b32.xlu0 %v5026, 32
    %v5065 = vpop.permute.xlu0 %5064
    %5066 = vrot.lane.b32.xlu0 %v5027, 32
    %v5067 = vpop.permute.xlu0 %5066
    %5068 = vrot.lane.b32.xlu0 %v5028, 32
    %v5069 = vpop.permute.xlu0 %5068
    %5070 = vrot.lane.b32.xlu0 %v5029, 32
    %v5071 = vpop.permute.xlu0 %5070
    %5072 = vrot.lane.b32.xlu0 %v5030, 32
    %v5073 = vpop.permute.xlu0 %5072
    %5074 = vrot.lane.b32.xlu0 %v5031, 32
    %v5075 = vpop.permute.xlu0 %5074
    %5076 = vrot.lane.b32.xlu0 %v5032, 32
    %v5077 = vpop.permute.xlu0 %5076
    %5093 = vst.msk [vmem:[#allocation5 + $0x78] sm:$0xff] %vm4881, %v5049
    %5094 = vst.msk [vmem:[#allocation5 + $0x80] sm:$0xff] %vm4881, %v5051
    %5095 = vst.msk [vmem:[#allocation5 + $0x88] sm:$0xff] %vm4881, %v5053
    %5096 = vst.msk [vmem:[#allocation5 + $0x90] sm:$0xff] %vm4881, %v5055
    %5097 = vst.msk [vmem:[#allocation5 + $0x98] sm:$0xff] %vm4881, %v5057
    %5098 = vst.msk [vmem:[#allocation5 + $0xa0] sm:$0xff] %vm4881, %v5059
    %5099 = vst.msk [vmem:[#allocation5 + $0xa8] sm:$0xff] %vm4881, %v5061
    %5100 = vst.msk [vmem:[#allocation5 + $0xb0] sm:$0xff] %vm4881, %v5063
    %5101 = vst.msk [vmem:[#allocation5 + $0xb8] sm:$0xff] %vm4881, %v5065
    %5102 = vst.msk [vmem:[#allocation5 + $0xc0] sm:$0xff] %vm4881, %v5067
    %5103 = vst.msk [vmem:[#allocation5 + $0xc8] sm:$0xff] %vm4881, %v5069
    %5104 = vst.msk [vmem:[#allocation5 + $0xd0] sm:$0xff] %vm4881, %v5071
    %5105 = vst.msk [vmem:[#allocation5 + $0xd8] sm:$0xff] %vm4881, %v5073
    %5106 = vst.msk [vmem:[#allocation5 + $0xe0] sm:$0xff] %vm4881, %v5075
    %5107 = vst.msk [vmem:[#allocation5 + $0xe8] sm:$0xff] %vm4881, %v5077
    %v5108 = vld [vmem:[#allocation4 + $0x7e] sm:$0xff]
    %v5109 = vld [vmem:[#allocation4 + $0x86] sm:$0xff]
    %v5110 = vld [vmem:[#allocation4 + $0x8e] sm:$0xff]
    %v5111 = vld [vmem:[#allocation4 + $0x96] sm:$0xff]
    %v5112 = vld [vmem:[#allocation4 + $0x9e] sm:$0xff]
    %v5113 = vld [vmem:[#allocation4 + $0xa6] sm:$0xff]
    %v5114 = vld [vmem:[#allocation4 + $0xae] sm:$0xff]
    %v5115 = vld [vmem:[#allocation4 + $0xb6] sm:$0xff]
    %v5116 = vld [vmem:[#allocation4 + $0xbe] sm:$0xff]
    %v5117 = vld [vmem:[#allocation4 + $0xc6] sm:$0xff]
    %v5118 = vld [vmem:[#allocation4 + $0xce] sm:$0xff]
    %v5119 = vld [vmem:[#allocation4 + $0xd6] sm:$0xff]
    %v5120 = vld [vmem:[#allocation4 + $0xde] sm:$0xff]
    %v5121 = vld [vmem:[#allocation4 + $0xe6] sm:$0xff]
    %v5122 = vld [vmem:[#allocation4 + $0xee] sm:$0xff]
    %5138 = vrot.lane.b32.xlu0 %v5108, 64
    %v5139 = vpop.permute.xlu0 %5138
    %5140 = vrot.lane.b32.xlu0 %v5109, 64
    %v5141 = vpop.permute.xlu0 %5140
    %5142 = vrot.lane.b32.xlu0 %v5110, 64
    %v5143 = vpop.permute.xlu0 %5142
    %5144 = vrot.lane.b32.xlu0 %v5111, 64
    %v5145 = vpop.permute.xlu0 %5144
    %5146 = vrot.lane.b32.xlu0 %v5112, 64
    %v5147 = vpop.permute.xlu0 %5146
    %5148 = vrot.lane.b32.xlu0 %v5113, 64
    %v5149 = vpop.permute.xlu0 %5148
    %5150 = vrot.lane.b32.xlu0 %v5114, 64
    %v5151 = vpop.permute.xlu0 %5150
    %5152 = vrot.lane.b32.xlu0 %v5115, 64
    %v5153 = vpop.permute.xlu0 %5152
    %5154 = vrot.lane.b32.xlu0 %v5116, 64
    %v5155 = vpop.permute.xlu0 %5154
    %5156 = vrot.lane.b32.xlu0 %v5117, 64
    %v5157 = vpop.permute.xlu0 %5156
    %5158 = vrot.lane.b32.xlu0 %v5118, 64
    %v5159 = vpop.permute.xlu0 %5158
    %5160 = vrot.lane.b32.xlu0 %v5119, 64
    %v5161 = vpop.permute.xlu0 %5160
    %5162 = vrot.lane.b32.xlu0 %v5120, 64
    %v5163 = vpop.permute.xlu0 %5162
    %5164 = vrot.lane.b32.xlu0 %v5121, 64
    %v5165 = vpop.permute.xlu0 %5164
    %5166 = vrot.lane.b32.xlu0 %v5122, 64
    %v5167 = vpop.permute.xlu0 %5166
    %5183 = vst.msk [vmem:[#allocation5 + $0x78] sm:$0xff] %vm4972, %v5139
    %5184 = vst.msk [vmem:[#allocation5 + $0x80] sm:$0xff] %vm4972, %v5141
    %5185 = vst.msk [vmem:[#allocation5 + $0x88] sm:$0xff] %vm4972, %v5143
    %5186 = vst.msk [vmem:[#allocation5 + $0x90] sm:$0xff] %vm4972, %v5145
    %5187 = vst.msk [vmem:[#allocation5 + $0x98] sm:$0xff] %vm4972, %v5147
    %5188 = vst.msk [vmem:[#allocation5 + $0xa0] sm:$0xff] %vm4972, %v5149
    %5189 = vst.msk [vmem:[#allocation5 + $0xa8] sm:$0xff] %vm4972, %v5151
    %5190 = vst.msk [vmem:[#allocation5 + $0xb0] sm:$0xff] %vm4972, %v5153
    %5191 = vst.msk [vmem:[#allocation5 + $0xb8] sm:$0xff] %vm4972, %v5155
    %5192 = vst.msk [vmem:[#allocation5 + $0xc0] sm:$0xff] %vm4972, %v5157
    %5193 = vst.msk [vmem:[#allocation5 + $0xc8] sm:$0xff] %vm4972, %v5159
    %5194 = vst.msk [vmem:[#allocation5 + $0xd0] sm:$0xff] %vm4972, %v5161
    %5195 = vst.msk [vmem:[#allocation5 + $0xd8] sm:$0xff] %vm4972, %v5163
    %5196 = vst.msk [vmem:[#allocation5 + $0xe0] sm:$0xff] %vm4972, %v5165
    %5197 = vst.msk [vmem:[#allocation5 + $0xe8] sm:$0xff] %vm4972, %v5167
    %v5198 = vld [vmem:[#allocation5] sm:$0xff]
    %v5199 = vld [vmem:[#allocation5 + $0x8] sm:$0xff]
    %v5200 = vld [vmem:[#allocation5 + $0x10] sm:$0xff]
    %v5201 = vld [vmem:[#allocation5 + $0x18] sm:$0xff]
    %v5202 = vld [vmem:[#allocation5 + $0x20] sm:$0xff]
    %v5203 = vld [vmem:[#allocation5 + $0x28] sm:$0xff]
    %v5204 = vld [vmem:[#allocation5 + $0x30] sm:$0xff]
    %v5205 = vld [vmem:[#allocation5 + $0x38] sm:$0xff]
    %v5206 = vld [vmem:[#allocation5 + $0x40] sm:$0xff]
    %v5207 = vld [vmem:[#allocation5 + $0x48] sm:$0xff]
    %v5208 = vld [vmem:[#allocation5 + $0x50] sm:$0xff]
    %v5209 = vld [vmem:[#allocation5 + $0x58] sm:$0xff]
    %v5210 = vld [vmem:[#allocation5 + $0x60] sm:$0xff]
    %v5211 = vld [vmem:[#allocation5 + $0x68] sm:$0xff]
    %v5212 = vld [vmem:[#allocation5 + $0x70] sm:$0xff]
    %v5213 = vld [vmem:[#allocation5 + $0x78] sm:$0xff]
    %v5214 = vld [vmem:[#allocation5 + $0x80] sm:$0xff]
    %v5215 = vld [vmem:[#allocation5 + $0x88] sm:$0xff]
    %v5216 = vld [vmem:[#allocation5 + $0x90] sm:$0xff]
    %v5217 = vld [vmem:[#allocation5 + $0x98] sm:$0xff]
    %v5218 = vld [vmem:[#allocation5 + $0xa0] sm:$0xff]
    %v5219 = vld [vmem:[#allocation5 + $0xa8] sm:$0xff]
    %v5220 = vld [vmem:[#allocation5 + $0xb0] sm:$0xff]
    %v5221 = vld [vmem:[#allocation5 + $0xb8] sm:$0xff]
    %v5222 = vld [vmem:[#allocation5 + $0xc0] sm:$0xff]
    %v5223 = vld [vmem:[#allocation5 + $0xc8] sm:$0xff]
    %v5224 = vld [vmem:[#allocation5 + $0xd0] sm:$0xff]
    %v5225 = vld [vmem:[#allocation5 + $0xd8] sm:$0xff]
    %v5226 = vld [vmem:[#allocation5 + $0xe0] sm:$0xff]
    %v5227 = vld [vmem:[#allocation5 + $0xe8] sm:$0xff]
    %v5228 = vpack.c.bf16 %v5199, %v5198
    %v5229 = vpack.c.bf16 %v5201, %v5200
    %v5230 = vpack.c.bf16 %v5203, %v5202
    %v5231 = vpack.c.bf16 %v5205, %v5204
    %v5232 = vpack.c.bf16 %v5207, %v5206
    %v5233 = vpack.c.bf16 %v5209, %v5208
    %v5234 = vpack.c.bf16 %v5211, %v5210
    %v5235 = vpack.c.bf16 %v5213, %v5212
    %v5236 = vpack.c.bf16 %v5215, %v5214
    %v5237 = vpack.c.bf16 %v5217, %v5216
    %v5238 = vpack.c.bf16 %v5219, %v5218
    %v5239 = vpack.c.bf16 %v5221, %v5220
    %v5240 = vpack.c.bf16 %v5223, %v5222
    %v5241 = vpack.c.bf16 %v5225, %v5224
    %v5242 = vpack.c.bf16 %v5227, %v5226
    %v5243 = vld [vmem:[%s3] sm:$0xf]
    %v5244 = vld [vmem:[%s3 + $0x4] sm:$0xf]
    %v5245 = vld [vmem:[%s3 + $0x8] sm:$0xf]
    %v5246 = vld [vmem:[%s3 + $0xc] sm:$0xf]
    %v5247 = vld [vmem:[%s3 + $0x10] sm:$0xf]
    %v5248 = vld [vmem:[%s3 + $0x14] sm:$0xf]
    %v5249 = vld [vmem:[%s3 + $0x18] sm:$0xf]
    %v5250 = vld [vmem:[%s3 + $0x1c] sm:$0xf]
    %v5251 = vld [vmem:[%s3 + $0x20] sm:$0xf]
    %v5252 = vld [vmem:[%s3 + $0x24] sm:$0xf]
    %v5253 = vld [vmem:[%s3 + $0x28] sm:$0xf]
    %v5254 = vld [vmem:[%s3 + $0x2c] sm:$0xf]
    %v5267 = vunpack.c.l.b16 %v5243
    %v5268 = vunpack.c.l.b16 %v5244
    %v5269 = vunpack.c.l.b16 %v5245
    %v5270 = vunpack.c.l.b16 %v5246
    %v5271 = vunpack.c.l.b16 %v5247
    %v5272 = vunpack.c.l.b16 %v5248
    %v5273 = vunpack.c.l.b16 %v5249
    %v5274 = vunpack.c.l.b16 %v5250
    %v5275 = vunpack.c.l.b16 %v5251
    %v5276 = vunpack.c.l.b16 %v5252
    %v5277 = vunpack.c.l.b16 %v5253
    %v5278 = vunpack.c.l.b16 %v5254
    %v5279 = vpack.c.b16 %v5268, %v5267
    %v5280 = vpack.c.b16 %v5270, %v5269
    %v5281 = vpack.c.b16 %v5272, %v5271
    %v5282 = vpack.c.b16 %v5274, %v5273
    %v5283 = vpack.c.b16 %v5276, %v5275
    %v5284 = vpack.c.b16 %v5278, %v5277
    %vm5291 = vcmask 785408
    %v5293 = vsel %vm5291, %v5228, 0
    %v5296 = vsel %vm5291, %v5229, 0
    %v5299 = vsel %vm5291, %v5230, 0
    %v5302 = vsel %vm5291, %v5231, 0
    %v5305 = vsel %vm5291, %v5232, 0
    %v5308 = vsel %vm5291, %v5233, 0
    %v5311 = vsel %vm5291, %v5234, 0
    %v5314 = vsel %vm5291, %v5235, 0
    %v5317 = vsel %vm5291, %v5236, 0
    %v5320 = vsel %vm5291, %v5237, 0
    %v5323 = vsel %vm5291, %v5238, 0
    %v5326 = vsel %vm5291, %v5239, 0
    %v5329 = vsel %vm5291, %v5240, 0
    %v5332 = vsel %vm5291, %v5241, 0
    %v5335 = vsel %vm5291, %v5242, 0
    %5337 = vmatprep.subr.bf16.mxu0 0
    %5338 = vmatpush1.bf16.msra.mxu0 %v5279
    %5339 = vmatprep.subr.bf16.mxu0 0
    %5340 = vmatpush1.bf16.msra.mxu0 %v5280
    %5341 = vmatprep.subr.bf16.mxu0 0
    %5342 = vmatpush1.bf16.msra.mxu0 %v5281
    %5343 = vmatprep.subr.bf16.mxu0 0
    %5344 = vmatpush1.bf16.msra.mxu0 %v5282
    %5345 = vmatprep.subr.bf16.mxu0 0
    %5346 = vmatpush1.bf16.msra.mxu0 %v5283
    %5347 = vmatprep.subr.bf16.mxu0 0
    %5348 = vmatpush1.bf16.msra.mxu0 %v5284
    %5349 = vmatprep.subr.bf16.mxu0 0
    %5350 = vmatpush1.bf16.msra.mxu0 0
    %5351 = vmatprep.subr.bf16.mxu0 0
    %5352 = vmatpush1.bf16.msra.mxu0 0
    %5353 = vmatprep.subr.bf16.mxu0 0
    %5354 = vmatpush1.bf16.msra.mxu0 0
    %5355 = vmatprep.subr.bf16.mxu0 0
    %5356 = vmatpush1.bf16.msra.mxu0 0
    %5357 = vmatprep.subr.bf16.mxu0 0
    %5358 = vmatpush1.bf16.msra.mxu0 0
    %5359 = vmatprep.subr.bf16.mxu0 0
    %5360 = vmatpush1.bf16.msra.mxu0 0
    %5361 = vmatprep.subr.bf16.mxu0 0
    %5362 = vmatpush1.bf16.msra.mxu0 0
    %5363 = vmatprep.subr.bf16.mxu0 0
    %5364 = vmatpush1.bf16.msra.mxu0 0
    %5365 = vmatprep.subr.bf16.mxu0 0
    %5366 = vmatpush1.bf16.msra.mxu0 0
    %5367 = vmatprep.subr.bf16.mxu0 0
    %5368 = vmatpush1.bf16.msra.mxu0 0
    %5369 = vmatprep.mubr.bf16.mxu0 0
    %5370 = vmatmul.mubr.bf16.gmra.mrb[0].mxu0 %v5293
    %v5371 = vpop.f32.mrb[0].mxu0
    %v5372 = vadd.f32 0.0, %v5371
    %v5373 = vpop.f32.mrb[0].mxu0
    %v5374 = vpop.f32.mrb[0].mxu0
    %v5375 = vadd.f32 0.0, %v5374
    %v5376 = vpop.f32.mrb[0].mxu0
    %5377 = vmatprep.mubr.bf16.mxu0 0
    %5378 = vmatmul.mubr.bf16.gmra.mrb[0].mxu0 %v5296
    %v5379 = vpop.f32.mrb[0].mxu0
    %v5380 = vadd.f32 0.0, %v5379
    %v5381 = vpop.f32.mrb[0].mxu0
    %v5382 = vpop.f32.mrb[0].mxu0
    %v5383 = vadd.f32 0.0, %v5382
    %v5384 = vpop.f32.mrb[0].mxu0
    %5385 = vmatprep.mubr.bf16.mxu0 0
    %5386 = vmatmul.mubr.bf16.gmra.mrb[0].mxu0 %v5299
    %v5387 = vpop.f32.mrb[0].mxu0
    %v5388 = vadd.f32 0.0, %v5387
    %v5389 = vpop.f32.mrb[0].mxu0
    %v5390 = vpop.f32.mrb[0].mxu0
    %v5391 = vadd.f32 0.0, %v5390
    %v5392 = vpop.f32.mrb[0].mxu0
    %5393 = vmatprep.mubr.bf16.mxu0 0
    %5394 = vmatmul.mubr.bf16.gmra.mrb[0].mxu0 %v5302
    %v5395 = vpop.f32.mrb[0].mxu0
    %v5396 = vadd.f32 0.0, %v5395
    %v5397 = vpop.f32.mrb[0].mxu0
    %v5398 = vpop.f32.mrb[0].mxu0
    %v5399 = vadd.f32 0.0, %v5398
    %v5400 = vpop.f32.mrb[0].mxu0
    %5401 = vmatprep.mubr.bf16.mxu0 0
    %5402 = vmatmul.mubr.bf16.gmra.mrb[0].mxu0 %v5305
    %v5403 = vpop.f32.mrb[0].mxu0
    %v5404 = vadd.f32 0.0, %v5403
    %v5405 = vpop.f32.mrb[0].mxu0
    %v5406 = vpop.f32.mrb[0].mxu0
    %v5407 = vadd.f32 0.0, %v5406
    %v5408 = vpop.f32.mrb[0].mxu0
    %5409 = vmatprep.mubr.bf16.mxu0 0
    %5410 = vmatmul.mubr.bf16.gmra.mrb[0].mxu0 %v5308
    %v5411 = vpop.f32.mrb[0].mxu0
    %v5412 = vadd.f32 0.0, %v5411
    %v5413 = vpop.f32.mrb[0].mxu0
    %v5414 = vpop.f32.mrb[0].mxu0
    %v5415 = vadd.f32 0.0, %v5414
    %v5416 = vpop.f32.mrb[0].mxu0
    %5417 = vmatprep.mubr.bf16.mxu0 0
    %5418 = vmatmul.mubr.bf16.gmra.mrb[0].mxu0 %v5311
    %v5419 = vpop.f32.mrb[0].mxu0
    %v5420 = vadd.f32 0.0, %v5419
    %v5421 = vpop.f32.mrb[0].mxu0
    %v5422 = vpop.f32.mrb[0].mxu0
    %v5423 = vadd.f32 0.0, %v5422
    %v5424 = vpop.f32.mrb[0].mxu0
    %5425 = vmatprep.mubr.bf16.mxu0 0
    %5426 = vmatmul.mubr.bf16.gmra.mrb[0].mxu0 %v5314
    %v5427 = vpop.f32.mrb[0].mxu0
    %v5428 = vadd.f32 0.0, %v5427
    %v5429 = vpop.f32.mrb[0].mxu0
    %v5430 = vpop.f32.mrb[0].mxu0
    %v5431 = vadd.f32 0.0, %v5430
    %v5432 = vpop.f32.mrb[0].mxu0
    %5433 = vmatprep.mubr.bf16.mxu0 0
    %5434 = vmatmul.mubr.bf16.gmra.mrb[0].mxu0 %v5317
    %v5435 = vpop.f32.mrb[0].mxu0
    %v5436 = vadd.f32 0.0, %v5435
    %v5437 = vpop.f32.mrb[0].mxu0
    %v5438 = vpop.f32.mrb[0].mxu0
    %v5439 = vadd.f32 0.0, %v5438
    %v5440 = vpop.f32.mrb[0].mxu0
    %5441 = vmatprep.mubr.bf16.mxu0 0
    %5442 = vmatmul.mubr.bf16.gmra.mrb[0].mxu0 %v5320
    %v5443 = vpop.f32.mrb[0].mxu0
    %v5444 = vadd.f32 0.0, %v5443
    %v5445 = vpop.f32.mrb[0].mxu0
    %v5446 = vpop.f32.mrb[0].mxu0
    %v5447 = vadd.f32 0.0, %v5446
    %v5448 = vpop.f32.mrb[0].mxu0
    %5449 = vmatprep.mubr.bf16.mxu0 0
    %5450 = vmatmul.mubr.bf16.gmra.mrb[0].mxu0 %v5323
    %v5451 = vpop.f32.mrb[0].mxu0
    %v5452 = vadd.f32 0.0, %v5451
    %v5453 = vpop.f32.mrb[0].mxu0
    %v5454 = vpop.f32.mrb[0].mxu0
    %v5455 = vadd.f32 0.0, %v5454
    %v5456 = vpop.f32.mrb[0].mxu0
    %5457 = vmatprep.mubr.bf16.mxu0 0
    %5458 = vmatmul.mubr.bf16.gmra.mrb[0].mxu0 %v5326
    %v5459 = vpop.f32.mrb[0].mxu0
    %v5460 = vadd.f32 0.0, %v5459
    %v5461 = vpop.f32.mrb[0].mxu0
    %v5462 = vpop.f32.mrb[0].mxu0
    %v5463 = vadd.f32 0.0, %v5462
    %v5464 = vpop.f32.mrb[0].mxu0
    %5465 = vmatprep.mubr.bf16.mxu0 0
    %5466 = vmatmul.mubr.bf16.gmra.mrb[0].mxu0 %v5329
    %v5467 = vpop.f32.mrb[0].mxu0
    %v5468 = vadd.f32 0.0, %v5467
    %v5469 = vpop.f32.mrb[0].mxu0
    %v5470 = vpop.f32.mrb[0].mxu0
    %v5471 = vadd.f32 0.0, %v5470
    %v5472 = vpop.f32.mrb[0].mxu0
    %5473 = vmatprep.mubr.bf16.mxu0 0
    %5474 = vmatmul.mubr.bf16.gmra.mrb[0].mxu0 %v5332
    %v5475 = vpop.f32.mrb[0].mxu0
    %v5476 = vadd.f32 0.0, %v5475
    %v5477 = vpop.f32.mrb[0].mxu0
    %v5478 = vpop.f32.mrb[0].mxu0
    %v5479 = vadd.f32 0.0, %v5478
    %v5480 = vpop.f32.mrb[0].mxu0
    %5481 = vmatprep.mubr.bf16.mxu0 0
    %5482 = vmatmul.mubr.bf16.gmra.mrb[0].mxu0 %v5335
    %v5483 = vpop.f32.mrb[0].mxu0
    %v5484 = vadd.f32 0.0, %v5483
    %v5485 = vpop.f32.mrb[0].mxu0
    %v5486 = vpop.f32.mrb[0].mxu0
    %v5487 = vadd.f32 0.0, %v5486
    %v5488 = vpop.f32.mrb[0].mxu0
    %5489 = vdwg.mxu0
    %5490 = vst.msk [vmem:[#allocation6] sm:$0xff] %vm4211, %v5372
    %5491 = vst.msk [vmem:[#allocation6 + $0x8] sm:$0xff] %vm4211, %v5375
    %5492 = vst.msk [vmem:[#allocation6 + $0x10] sm:$0xff] %vm4211, %v5380
    %5493 = vst.msk [vmem:[#allocation6 + $0x18] sm:$0xff] %vm4211, %v5383
    %5494 = vst.msk [vmem:[#allocation6 + $0x20] sm:$0xff] %vm4211, %v5388
    %5495 = vst.msk [vmem:[#allocation6 + $0x28] sm:$0xff] %vm4211, %v5391
    %5496 = vst.msk [vmem:[#allocation6 + $0x30] sm:$0xff] %vm4211, %v5396
    %5497 = vst.msk [vmem:[#allocation6 + $0x38] sm:$0xff] %vm4211, %v5399
    %5498 = vst.msk [vmem:[#allocation6 + $0x40] sm:$0xff] %vm4211, %v5404
    %5499 = vst.msk [vmem:[#allocation6 + $0x48] sm:$0xff] %vm4211, %v5407
    %5500 = vst.msk [vmem:[#allocation6 + $0x50] sm:$0xff] %vm4211, %v5412
    %5501 = vst.msk [vmem:[#allocation6 + $0x58] sm:$0xff] %vm4211, %v5415
    %5502 = vst.msk [vmem:[#allocation6 + $0x60] sm:$0xff] %vm4211, %v5420
    %5503 = vst.msk [vmem:[#allocation6 + $0x68] sm:$0xff] %vm4211, %v5423
    %5504 = vst.msk [vmem:[#allocation6 + $0x70] sm:$0xff] %vm4211, %v5428
    %5505 = vst.msk [vmem:[#allocation6 + $0x78] sm:$0xff] %vm4211, %v5431
    %5506 = vst.msk [vmem:[#allocation6 + $0x80] sm:$0xff] %vm4211, %v5436
    %5507 = vst.msk [vmem:[#allocation6 + $0x88] sm:$0xff] %vm4211, %v5439
    %5508 = vst.msk [vmem:[#allocation6 + $0x90] sm:$0xff] %vm4211, %v5444
    %5509 = vst.msk [vmem:[#allocation6 + $0x98] sm:$0xff] %vm4211, %v5447
    %5510 = vst.msk [vmem:[#allocation6 + $0xa0] sm:$0xff] %vm4211, %v5452
    %5511 = vst.msk [vmem:[#allocation6 + $0xa8] sm:$0xff] %vm4211, %v5455
    %5512 = vst.msk [vmem:[#allocation6 + $0xb0] sm:$0xff] %vm4211, %v5460
    %5513 = vst.msk [vmem:[#allocation6 + $0xb8] sm:$0xff] %vm4211, %v5463
    %5514 = vst.msk [vmem:[#allocation6 + $0xc0] sm:$0xff] %vm4211, %v5468
    %5515 = vst.msk [vmem:[#allocation6 + $0xc8] sm:$0xff] %vm4211, %v5471
    %5516 = vst.msk [vmem:[#allocation6 + $0xd0] sm:$0xff] %vm4211, %v5476
    %5517 = vst.msk [vmem:[#allocation6 + $0xd8] sm:$0xff] %vm4211, %v5479
    %5518 = vst.msk [vmem:[#allocation6 + $0xe0] sm:$0xff] %vm4211, %v5484
    %5519 = vst.msk [vmem:[#allocation6 + $0xe8] sm:$0xff] %vm4211, %v5487
    %v5520 = vld [vmem:[#allocation6] ss:$4 sm:$0xff]
    %s5521 = scalar_lea.vmem [#allocation6], 32
    %v5522 = vld [vmem:[%s5521] ss:$4 sm:$0xff]
    %s5523 = scalar_lea.vmem [#allocation6], 64
    %v5524 = vld [vmem:[%s5523] ss:$4 sm:$0xff]
    %s5525 = scalar_lea.vmem [#allocation6], 96
    %v5526 = vld [vmem:[%s5525] ss:$4 sm:$0xff]
    %s5527 = scalar_lea.vmem [#allocation6], 128
    %v5528 = vld [vmem:[%s5527] ss:$4 sm:$0xff]
    %s5529 = scalar_lea.vmem [#allocation6], 160
    %v5530 = vld [vmem:[%s5529] ss:$4 sm:$0xff]
    %s5531 = scalar_lea.vmem [#allocation6], 192
    %v5532 = vld [vmem:[%s5531] ss:$4 sm:$0xff]
    %s5533 = scalar_lea.vmem [#allocation6], 224
    %v5534 = vld [vmem:[%s5533] ss:$4 sm:$0xf]
    %s5535 = scalar_lea.vmem [#allocation6], 1
    %v5536 = vld [vmem:[%s5535] ss:$4 sm:$0xff]
    %s5537 = scalar_lea.vmem [#allocation6], 33
    %v5538 = vld [vmem:[%s5537] ss:$4 sm:$0xff]
    %s5539 = scalar_lea.vmem [#allocation6], 65
    %v5540 = vld [vmem:[%s5539] ss:$4 sm:$0xff]
    %s5541 = scalar_lea.vmem [#allocation6], 97
    %v5542 = vld [vmem:[%s5541] ss:$4 sm:$0xff]
    %s5543 = scalar_lea.vmem [#allocation6], 129
    %v5544 = vld [vmem:[%s5543] ss:$4 sm:$0xff]
    %s5545 = scalar_lea.vmem [#allocation6], 161
    %v5546 = vld [vmem:[%s5545] ss:$4 sm:$0xff]
    %s5547 = scalar_lea.vmem [#allocation6], 193
    %v5548 = vld [vmem:[%s5547] ss:$4 sm:$0xff]
    %s5549 = scalar_lea.vmem [#allocation6], 225
    %v5550 = vld [vmem:[%s5549] ss:$4 sm:$0xf]
    %v5551 = vmax.f32 %v5520, %v5536
    %v5552 = vmax.f32 %v5522, %v5538
    %v5553 = vmax.f32 %v5524, %v5540
    %v5554 = vmax.f32 %v5526, %v5542
    %v5555 = vmax.f32 %v5528, %v5544
    %v5556 = vmax.f32 %v5530, %v5546
    %v5557 = vmax.f32 %v5532, %v5548
    %v5558 = vmax.f32 %v5534, %v5550
    %s5559 = scalar_lea.vmem [#allocation6], 2
    %v5560 = vld [vmem:[%s5559] ss:$4 sm:$0xff]
    %s5561 = scalar_lea.vmem [#allocation6], 34
    %v5562 = vld [vmem:[%s5561] ss:$4 sm:$0xff]
    %s5563 = scalar_lea.vmem [#allocation6], 66
    %v5564 = vld [vmem:[%s5563] ss:$4 sm:$0xff]
    %s5565 = scalar_lea.vmem [#allocation6], 98
    %v5566 = vld [vmem:[%s5565] ss:$4 sm:$0xff]
    %s5567 = scalar_lea.vmem [#allocation6], 130
    %v5568 = vld [vmem:[%s5567] ss:$4 sm:$0xff]
    %s5569 = scalar_lea.vmem [#allocation6], 162
    %v5570 = vld [vmem:[%s5569] ss:$4 sm:$0xff]
    %s5571 = scalar_lea.vmem [#allocation6], 194
    %v5572 = vld [vmem:[%s5571] ss:$4 sm:$0xff]
    %s5573 = scalar_lea.vmem [#allocation6], 226
    %v5574 = vld [vmem:[%s5573] ss:$4 sm:$0xf]
    %s5575 = scalar_lea.vmem [#allocation6], 3
    %v5576 = vld [vmem:[%s5575] ss:$4 sm:$0xff]
    %s5577 = scalar_lea.vmem [#allocation6], 35
    %v5578 = vld [vmem:[%s5577] ss:$4 sm:$0xff]
    %s5579 = scalar_lea.vmem [#allocation6], 67
    %v5580 = vld [vmem:[%s5579] ss:$4 sm:$0xff]
    %s5581 = scalar_lea.vmem [#allocation6], 99
    %v5582 = vld [vmem:[%s5581] ss:$4 sm:$0xff]
    %s5583 = scalar_lea.vmem [#allocation6], 131
    %v5584 = vld [vmem:[%s5583] ss:$4 sm:$0xff]
    %s5585 = scalar_lea.vmem [#allocation6], 163
    %v5586 = vld [vmem:[%s5585] ss:$4 sm:$0xff]
    %s5587 = scalar_lea.vmem [#allocation6], 195
    %v5588 = vld [vmem:[%s5587] ss:$4 sm:$0xff]
    %s5589 = scalar_lea.vmem [#allocation6], 227
    %v5590 = vld [vmem:[%s5589] ss:$4 sm:$0xf]
    %v5591 = vmax.f32 %v5560, %v5576
    %v5592 = vmax.f32 %v5562, %v5578
    %v5593 = vmax.f32 %v5564, %v5580
    %v5594 = vmax.f32 %v5566, %v5582
    %v5595 = vmax.f32 %v5568, %v5584
    %v5596 = vmax.f32 %v5570, %v5586
    %v5597 = vmax.f32 %v5572, %v5588
    %v5598 = vmax.f32 %v5574, %v5590
    %v5599 = vmax.f32 %v5551, %v5591
    %v5600 = vmax.f32 %v5552, %v5592
    %v5601 = vmax.f32 %v5553, %v5593
    %v5602 = vmax.f32 %v5554, %v5594
    %v5603 = vmax.f32 %v5555, %v5595
    %v5604 = vmax.f32 %v5556, %v5596
    %v5605 = vmax.f32 %v5557, %v5597
    %v5606 = vmax.f32 %v5558, %v5598
    %v5607 = vld [vmem:[%s4] sm:$0x1]
    %v5609 = vlaneseq
    %v5610 = vshrl.u32 %v5609, 7
    %v5611 = vsub.s32 0, %v5610
    %v5612 = vrot.slane %v5607, %v5611
    %v5614 = vadd.f32 %v5599, %v5612
    %v5615 = vadd.f32 %v5600, %v5612
    %v5616 = vadd.f32 %v5601, %v5612
    %v5617 = vadd.f32 %v5602, %v5612
    %v5618 = vadd.f32 %v5603, %v5612
    %v5619 = vadd.f32 %v5604, %v5612
    %v5620 = vadd.f32 %v5605, %v5612
    %v5621 = vadd.f32 %v5606, %v5612
    %v5622 = vmax.f32 %v5614, 0.0
    %v5623 = vmax.f32 %v5615, 0.0
    %v5624 = vmax.f32 %v5616, 0.0
    %v5625 = vmax.f32 %v5617, 0.0
    %v5626 = vmax.f32 %v5618, 0.0
    %v5627 = vmax.f32 %v5619, 0.0
    %v5628 = vmax.f32 %v5620, 0.0
    %v5629 = vmax.f32 %v5621, 0.0
    %5630 = vst.msk [vmem:[#allocation7] sm:$0xff] %vm4211, %v5622
    %5631 = vst.msk [vmem:[#allocation7 + $0x8] sm:$0xff] %vm4211, %v5623
    %5632 = vst.msk [vmem:[#allocation7 + $0x10] sm:$0xff] %vm4211, %v5624
    %5633 = vst.msk [vmem:[#allocation7 + $0x18] sm:$0xff] %vm4211, %v5625
    %5634 = vst.msk [vmem:[#allocation7 + $0x20] sm:$0xff] %vm4211, %v5626
    %5635 = vst.msk [vmem:[#allocation7 + $0x28] sm:$0xff] %vm4211, %v5627
    %5636 = vst.msk [vmem:[#allocation7 + $0x30] sm:$0xff] %vm4211, %v5628
    %vm5637 = vcmask 257024
    %5638 = vst.msk [vmem:[#allocation7 + $0x38] sm:$0xf] %vm5637, %v5629
    %v5639 = vld [vmem:[#allocation7] sm:$0xff]
    %v5640 = vld [vmem:[#allocation7 + $0x8] sm:$0xff]
    %v5641 = vld [vmem:[#allocation7 + $0x10] sm:$0xff]
    %v5642 = vld [vmem:[#allocation7 + $0x18] sm:$0xf]
    %5643 = vst.msk [vmem:[#allocation8] sm:$0xff] %vm4211, %v5639
    %5644 = vst.msk [vmem:[#allocation8 + $0x8] sm:$0xff] %vm4211, %v5640
    %5645 = vst.msk [vmem:[#allocation8 + $0x10] sm:$0xff] %vm4211, %v5641
    %5646 = vst.msk [vmem:[#allocation8 + $0x18] sm:$0xf] %vm5637, %v5642
    %v5647 = vld [vmem:[#allocation7 + $0x1] sm:$0xff]
    %v5648 = vld [vmem:[#allocation7 + $0x9] sm:$0xff]
    %v5649 = vld [vmem:[#allocation7 + $0x11] sm:$0xff]
    %v5650 = vld [vmem:[#allocation7 + $0x19] sm:$0xf]
    %5655 = vrot.lane.b32.xlu0 %v5647, 32
    %v5656 = vpop.permute.xlu0 %5655
    %5657 = vrot.lane.b32.xlu0 %v5648, 32
    %v5658 = vpop.permute.xlu0 %5657
    %5659 = vrot.lane.b32.xlu0 %v5649, 32
    %v5660 = vpop.permute.xlu0 %5659
    %5661 = vrot.lane.b32.xlu0 %v5650, 32
    %v5662 = vpop.permute.xlu0 %5661
    %5667 = vst.msk [vmem:[#allocation8] sm:$0xff] %vm4881, %v5656
    %5668 = vst.msk [vmem:[#allocation8 + $0x8] sm:$0xff] %vm4881, %v5658
    %5669 = vst.msk [vmem:[#allocation8 + $0x10] sm:$0xff] %vm4881, %v5660
    %vm5670 = vcmask 519424
    %5671 = vst.msk [vmem:[#allocation8 + $0x18] sm:$0xf] %vm5670, %v5662
    %v5672 = vld [vmem:[#allocation7 + $0x2] sm:$0xff]
    %v5673 = vld [vmem:[#allocation7 + $0xa] sm:$0xff]
    %v5674 = vld [vmem:[#allocation7 + $0x12] sm:$0xff]
    %v5675 = vld [vmem:[#allocation7 + $0x1a] sm:$0xf]
    %5680 = vrot.lane.b32.xlu0 %v5672, 64
    %v5681 = vpop.permute.xlu0 %5680
    %5682 = vrot.lane.b32.xlu0 %v5673, 64
    %v5683 = vpop.permute.xlu0 %5682
    %5684 = vrot.lane.b32.xlu0 %v5674, 64
    %v5685 = vpop.permute.xlu0 %5684
    %5686 = vrot.lane.b32.xlu0 %v5675, 64
    %v5687 = vpop.permute.xlu0 %5686
    %5692 = vst.msk [vmem:[#allocation8] sm:$0xff] %vm4972, %v5681
    %5693 = vst.msk [vmem:[#allocation8 + $0x8] sm:$0xff] %vm4972, %v5683
    %5694 = vst.msk [vmem:[#allocation8 + $0x10] sm:$0xff] %vm4972, %v5685
    %vm5695 = vcmask 781824
    %5696 = vst.msk [vmem:[#allocation8 + $0x18] sm:$0xf] %vm5695, %v5687
    %v5697 = vld [vmem:[#allocation7 + $0x1e] sm:$0xff]
    %v5698 = vld [vmem:[#allocation7 + $0x26] sm:$0xff]
    %v5699 = vld [vmem:[#allocation7 + $0x2e] sm:$0xff]
    %v5700 = vld [vmem:[#allocation7 + $0x36] sm:$0xf]
    %5701 = vst.msk [vmem:[#allocation8 + $0x1c] sm:$0xff] %vm4211, %v5697
    %5702 = vst.msk [vmem:[#allocation8 + $0x24] sm:$0xff] %vm4211, %v5698
    %5703 = vst.msk [vmem:[#allocation8 + $0x2c] sm:$0xff] %vm4211, %v5699
    %5704 = vst.msk [vmem:[#allocation8 + $0x34] sm:$0xf] %vm5637, %v5700
    %v5705 = vld [vmem:[#allocation7 + $0x1f] sm:$0xff]
    %v5706 = vld [vmem:[#allocation7 + $0x27] sm:$0xff]
    %v5707 = vld [vmem:[#allocation7 + $0x2f] sm:$0xff]
    %v5708 = vld [vmem:[#allocation7 + $0x37] sm:$0xf]
    %5713 = vrot.lane.b32.xlu0 %v5705, 32
    %v5714 = vpop.permute.xlu0 %5713
    %5715 = vrot.lane.b32.xlu0 %v5706, 32
    %v5716 = vpop.permute.xlu0 %5715
    %5717 = vrot.lane.b32.xlu0 %v5707, 32
    %v5718 = vpop.permute.xlu0 %5717
    %5719 = vrot.lane.b32.xlu0 %v5708, 32
    %v5720 = vpop.permute.xlu0 %5719
    %5725 = vst.msk [vmem:[#allocation8 + $0x1c] sm:$0xff] %vm4881, %v5714
    %5726 = vst.msk [vmem:[#allocation8 + $0x24] sm:$0xff] %vm4881, %v5716
    %5727 = vst.msk [vmem:[#allocation8 + $0x2c] sm:$0xff] %vm4881, %v5718
    %5728 = vst.msk [vmem:[#allocation8 + $0x34] sm:$0xf] %vm5670, %v5720
    %v5729 = vld [vmem:[#allocation7 + $0x20] sm:$0xff]
    %v5730 = vld [vmem:[#allocation7 + $0x28] sm:$0xff]
    %v5731 = vld [vmem:[#allocation7 + $0x30] sm:$0xff]
    %v5732 = vld [vmem:[#allocation7 + $0x38] sm:$0xf]
    %5737 = vrot.lane.b32.xlu0 %v5729, 64
    %v5738 = vpop.permute.xlu0 %5737
    %5739 = vrot.lane.b32.xlu0 %v5730, 64
    %v5740 = vpop.permute.xlu0 %5739
    %5741 = vrot.lane.b32.xlu0 %v5731, 64
    %v5742 = vpop.permute.xlu0 %5741
    %5743 = vrot.lane.b32.xlu0 %v5732, 64
    %v5744 = vpop.permute.xlu0 %5743
    %5749 = vst.msk [vmem:[#allocation8 + $0x1c] sm:$0xff] %vm4972, %v5738
    %5750 = vst.msk [vmem:[#allocation8 + $0x24] sm:$0xff] %vm4972, %v5740
    %5751 = vst.msk [vmem:[#allocation8 + $0x2c] sm:$0xff] %vm4972, %v5742
    %5752 = vst.msk [vmem:[#allocation8 + $0x34] sm:$0xf] %vm5695, %v5744
    %v5753 = vld [vmem:[#allocation8] sm:$0xff]
    %v5754 = vld [vmem:[#allocation8 + $0x8] sm:$0xff]
    %v5755 = vld [vmem:[#allocation8 + $0x10] sm:$0xff]
    %v5756 = vld [vmem:[#allocation8 + $0x18] sm:$0xff]
    %v5757 = vld [vmem:[#allocation8 + $0x20] sm:$0xff]
    %v5758 = vld [vmem:[#allocation8 + $0x28] sm:$0xff]
    %v5759 = vld [vmem:[#allocation8 + $0x30] sm:$0xff]
    %v5760 = vpack.c.bf16 %v5754, %v5753
    %v5761 = vpack.c.bf16 %v5756, %v5755
    %v5762 = vpack.c.bf16 %v5758, %v5757
    %v5763 = vpack.c.bf16 %v5759, %v5759
    %v5764 = vld [vmem:[%s5] sm:$0xf]
    %v5765 = vld [vmem:[%s5 + $0x4] sm:$0xf]
    %v5766 = vld [vmem:[%s5 + $0x8] sm:$0xf]
    %v5767 = vld [vmem:[%s5 + $0xc] sm:$0xf]
    %v5768 = vld [vmem:[%s5 + $0x10] sm:$0xf]
    %v5769 = vld [vmem:[%s5 + $0x14] sm:$0xf]
    %v5770 = vld [vmem:[%s5 + $0x18] sm:$0xf]
    %v5771 = vld [vmem:[%s5 + $0x1c] sm:$0xf]
    %v5772 = vld [vmem:[%s5 + $0x20] sm:$0xf]
    %v5773 = vld [vmem:[%s5 + $0x24] sm:$0xf]
    %v5774 = vld [vmem:[%s5 + $0x28] sm:$0xf]
    %v5775 = vld [vmem:[%s5 + $0x2c] sm:$0xf]
    %v5788 = vunpack.c.l.b16 %v5764
    %v5789 = vunpack.c.l.b16 %v5765
    %v5790 = vunpack.c.l.b16 %v5766
    %v5791 = vunpack.c.l.b16 %v5767
    %v5792 = vunpack.c.l.b16 %v5768
    %v5793 = vunpack.c.l.b16 %v5769
    %v5794 = vunpack.c.l.b16 %v5770
    %v5795 = vunpack.c.l.b16 %v5771
    %v5796 = vunpack.c.l.b16 %v5772
    %v5797 = vunpack.c.l.b16 %v5773
    %v5798 = vunpack.c.l.b16 %v5774
    %v5799 = vunpack.c.l.b16 %v5775
    %v5800 = vpack.c.b16 %v5789, %v5788
    %v5801 = vpack.c.b16 %v5791, %v5790
    %v5802 = vpack.c.b16 %v5793, %v5792
    %v5803 = vpack.c.b16 %v5795, %v5794
    %v5804 = vpack.c.b16 %v5797, %v5796
    %v5805 = vpack.c.b16 %v5799, %v5798
    %v5813 = vsel %vm5291, %v5760, 0
    %v5816 = vsel %vm5291, %v5761, 0
    %v5819 = vsel %vm5291, %v5762, 0
    %v5822 = vsel %vm5291, %v5763, 0
    %5824 = vmatprep.subr.bf16.mxu0 0
    %5825 = vmatpush1.bf16.msra.mxu0 %v5800
    %5826 = vmatprep.subr.bf16.mxu0 0
    %5827 = vmatpush1.bf16.msra.mxu0 %v5801
    %5828 = vmatprep.subr.bf16.mxu0 0
    %5829 = vmatpush1.bf16.msra.mxu0 %v5802
    %5830 = vmatprep.subr.bf16.mxu0 0
    %5831 = vmatpush1.bf16.msra.mxu0 %v5803
    %5832 = vmatprep.subr.bf16.mxu0 0
    %5833 = vmatpush1.bf16.msra.mxu0 %v5804
    %5834 = vmatprep.subr.bf16.mxu0 0
    %5835 = vmatpush1.bf16.msra.mxu0 %v5805
    %5836 = vmatprep.subr.bf16.mxu0 0
    %5837 = vmatpush1.bf16.msra.mxu0 0
    %5838 = vmatprep.subr.bf16.mxu0 0
    %5839 = vmatpush1.bf16.msra.mxu0 0
    %5840 = vmatprep.subr.bf16.mxu0 0
    %5841 = vmatpush1.bf16.msra.mxu0 0
    %5842 = vmatprep.subr.bf16.mxu0 0
    %5843 = vmatpush1.bf16.msra.mxu0 0
    %5844 = vmatprep.subr.bf16.mxu0 0
    %5845 = vmatpush1.bf16.msra.mxu0 0
    %5846 = vmatprep.subr.bf16.mxu0 0
    %5847 = vmatpush1.bf16.msra.mxu0 0
    %5848 = vmatprep.subr.bf16.mxu0 0
    %5849 = vmatpush1.bf16.msra.mxu0 0
    %5850 = vmatprep.subr.bf16.mxu0 0
    %5851 = vmatpush1.bf16.msra.mxu0 0
    %5852 = vmatprep.subr.bf16.mxu0 0
    %5853 = vmatpush1.bf16.msra.mxu0 0
    %5854 = vmatprep.subr.bf16.mxu0 0
    %5855 = vmatpush1.bf16.msra.mxu0 0
    %5856 = vmatprep.mubr.bf16.mxu0 0
    %5857 = vmatmul.mubr.bf16.gmra.mrb[0].mxu0 %v5813
    %v5858 = vpop.f32.mrb[0].mxu0
    %v5859 = vadd.f32 0.0, %v5858
    %v5860 = vpop.f32.mrb[0].mxu0
    %v5861 = vpop.f32.mrb[0].mxu0
    %v5862 = vadd.f32 0.0, %v5861
    %v5863 = vpop.f32.mrb[0].mxu0
    %5864 = vmatprep.mubr.bf16.mxu0 0
    %5865 = vmatmul.mubr.bf16.gmra.mrb[0].mxu0 %v5816
    %v5866 = vpop.f32.mrb[0].mxu0
    %v5867 = vadd.f32 0.0, %v5866
    %v5868 = vpop.f32.mrb[0].mxu0
    %v5869 = vpop.f32.mrb[0].mxu0
    %v5870 = vadd.f32 0.0, %v5869
    %v5871 = vpop.f32.mrb[0].mxu0
    %5872 = vmatprep.mubr.bf16.mxu0 0
    %5873 = vmatmul.mubr.bf16.gmra.mrb[0].mxu0 %v5819
    %v5874 = vpop.f32.mrb[0].mxu0
    %v5875 = vadd.f32 0.0, %v5874
    %v5876 = vpop.f32.mrb[0].mxu0
    %v5877 = vpop.f32.mrb[0].mxu0
    %v5878 = vadd.f32 0.0, %v5877
    %v5879 = vpop.f32.mrb[0].mxu0
    %5880 = vmatprep.mubr.bf16.mxu0 0
    %5881 = vmatmul.mubr.bf16.gmra.mrb[0].mxu0 %v5822
    %v5882 = vpop.f32.mrb[0].mxu0
    %v5883 = vadd.f32 0.0, %v5882
    %v5884 = vpop.f32.mrb[0].mxu0
    %v5885 = vpop.f32.mrb[0].mxu0
    %v5886 = vpop.f32.mrb[0].mxu0
    %5887 = vdwg.mxu0
    %vm5888 = vcmask 523264
    %5889 = vst.msk [vmem:[#allocation9] sm:$0xff] %vm5888, %v5859
    %5890 = vst.msk [vmem:[#allocation9 + $0x8] sm:$0xff] %vm5888, %v5862
    %5891 = vst.msk [vmem:[#allocation9 + $0x10] sm:$0xff] %vm5888, %v5867
    %5892 = vst.msk [vmem:[#allocation9 + $0x18] sm:$0xff] %vm5888, %v5870
    %5893 = vst.msk [vmem:[#allocation9 + $0x20] sm:$0xff] %vm5888, %v5875
    %5894 = vst.msk [vmem:[#allocation9 + $0x28] sm:$0xff] %vm5888, %v5878
    %5895 = vst.msk [vmem:[#allocation9 + $0x30] sm:$0xff] %vm5888, %v5883
    %v5896 = vld [vmem:[#allocation9] ss:$4 sm:$0xff]
    %s5897 = scalar_lea.vmem [#allocation9], 32
    %v5898 = vld [vmem:[%s5897] ss:$4 sm:$0x3f]
    %s5899 = scalar_lea.vmem [#allocation9], 1
    %v5900 = vld [vmem:[%s5899] ss:$4 sm:$0xff]
    %s5901 = scalar_lea.vmem [#allocation9], 33
    %v5902 = vld [vmem:[%s5901] ss:$4 sm:$0x3f]
    %v5903 = vmax.f32 %v5896, %v5900
    %v5904 = vmax.f32 %v5898, %v5902
    %s5905 = scalar_lea.vmem [#allocation9], 2
    %v5906 = vld [vmem:[%s5905] ss:$4 sm:$0xff]
    %s5907 = scalar_lea.vmem [#allocation9], 34
    %v5908 = vld [vmem:[%s5907] ss:$4 sm:$0x3f]
    %s5909 = scalar_lea.vmem [#allocation9], 3
    %v5910 = vld [vmem:[%s5909] ss:$4 sm:$0xff]
    %s5911 = scalar_lea.vmem [#allocation9], 35
    %v5912 = vld [vmem:[%s5911] ss:$4 sm:$0x3f]
    %v5913 = vmax.f32 %v5906, %v5910
    %v5914 = vmax.f32 %v5908, %v5912
    %v5915 = vmax.f32 %v5903, %v5913
    %v5916 = vmax.f32 %v5904, %v5914
    %v5917 = vld [vmem:[%s6] sm:$0x1]
    %v5919 = vlaneseq
    %v5920 = vshrl.u32 %v5919, 7
    %v5921 = vsub.s32 0, %v5920
    %v5922 = vrot.slane %v5917, %v5921
    %v5924 = vadd.f32 %v5915, %v5922
    %v5925 = vadd.f32 %v5916, %v5922
    %v5926 = vmax.f32 %v5924, 0.0
    %v5927 = vmax.f32 %v5925, 0.0
    %5928 = vst.msk [vmem:[#allocation10] sm:$0xff] %vm5888, %v5926
    %vm5929 = vcmask 521216
    %5930 = vst.msk [vmem:[#allocation10 + $0x8] sm:$0x3f] %vm5929, %v5927
    %v5931 = vld [vmem:[#allocation10] sm:$0xf]
    %vm5932 = vcmask 519168
    %5933 = vst.msk [vmem:[#allocation11] sm:$0xf] %vm5932, %v5931
    %v5934 = vld [vmem:[#allocation10 + $0x1] sm:$0xf]
    %5936 = vrot.lane.b32.xlu0 %v5934, 64
    %v5937 = vpop.permute.xlu0 %5936
    %vm5939 = vcmask 1043968
    %5940 = vst.msk [vmem:[#allocation11] sm:$0xf] %vm5939, %v5937
    %v5941 = vld [vmem:[#allocation10 + $0x2] sm:$0xf]
    %5942 = vst.msk [vmem:[#allocation11 + $0x8] sm:$0xf] %vm5932, %v5941
    %v5943 = vld [vmem:[#allocation10 + $0x7] sm:$0xf]
    %v5945 = vrot.slane %v5943, 4
    %vm5947 = vcmask 523268
    %5948 = vst.msk [vmem:[#allocation11] sm:$0xf0] %vm5947, %v5945
    %v5949 = vld [vmem:[#allocation10 + $0x8] sm:$0xf]
    %v5951 = vrot.slane %v5949, 4
    %5952 = vrot.lane.b32.xlu0 %v5951, 64
    %v5953 = vpop.permute.xlu0 %5952
    %vm5955 = vcmask 1048068
    %5956 = vst.msk [vmem:[#allocation11] sm:$0xf0] %vm5955, %v5953
    %v5957 = vld [vmem:[#allocation10 + $0x9] sm:$0xf]
    %v5959 = vrot.slane %v5957, 4
    %5961 = vst.msk [vmem:[#allocation11 + $0x8] sm:$0xf0] %vm5947, %v5959
    %v5962 = vld [vmem:[#allocation11] sm:$0xff]
    %v5963 = vld [vmem:[#allocation11 + $0x8] sm:$0xff]
    %v5964 = vpack.c.bf16 %v5962, %v5962
    %v5965 = vpack.c.bf16 %v5963, %v5963
    %v5966 = vld [vmem:[%s7] sm:$0xf]
    %v5967 = vld [vmem:[%s7 + $0x4] sm:$0xf]
    %v5968 = vld [vmem:[%s7 + $0x8] sm:$0xf]
    %v5969 = vld [vmem:[%s7 + $0xc] sm:$0xf]
    %v5970 = vld [vmem:[%s7 + $0x10] sm:$0xf]
    %v5971 = vld [vmem:[%s7 + $0x14] sm:$0xf]
    %v5972 = vld [vmem:[%s7 + $0x18] sm:$0xf]
    %v5973 = vld [vmem:[%s7 + $0x1c] sm:$0xf]
    %v5974 = vld [vmem:[%s7 + $0x20] sm:$0xf]
    %v5975 = vld [vmem:[%s7 + $0x24] sm:$0xf]
    %v5976 = vld [vmem:[%s7 + $0x28] sm:$0xf]
    %v5977 = vld [vmem:[%s7 + $0x2c] sm:$0xf]
    %v5978 = vld [vmem:[%s7 + $0x30] sm:$0xf]
    %v5979 = vld [vmem:[%s7 + $0x34] sm:$0xf]
    %v5980 = vld [vmem:[%s7 + $0x38] sm:$0xf]
    %v5981 = vld [vmem:[%s7 + $0x3c] sm:$0xf]
    %v5982 = vld [vmem:[%s7 + $0x40] sm:$0xf]
    %v5983 = vld [vmem:[%s7 + $0x44] sm:$0xf]
    %v5984 = vld [vmem:[%s7 + $0x48] sm:$0xf]
    %v5985 = vld [vmem:[%s7 + $0x4c] sm:$0xf]
    %v5986 = vld [vmem:[%s7 + $0x50] sm:$0xf]
    %v5987 = vld [vmem:[%s7 + $0x54] sm:$0xf]
    %v5988 = vld [vmem:[%s7 + $0x58] sm:$0xf]
    %v5989 = vld [vmem:[%s7 + $0x5c] sm:$0xf]
    %v6014 = vunpack.c.l.b16 %v5966
    %v6015 = vunpack.c.l.b16 %v5967
    %v6016 = vunpack.c.l.b16 %v5968
    %v6017 = vunpack.c.l.b16 %v5969
    %v6018 = vunpack.c.l.b16 %v5970
    %v6019 = vunpack.c.l.b16 %v5971
    %v6020 = vunpack.c.l.b16 %v5972
    %v6021 = vunpack.c.l.b16 %v5973
    %v6022 = vunpack.c.l.b16 %v5974
    %v6023 = vunpack.c.l.b16 %v5975
    %v6024 = vunpack.c.l.b16 %v5976
    %v6025 = vunpack.c.l.b16 %v5977
    %v6026 = vunpack.c.l.b16 %v5978
    %v6027 = vunpack.c.l.b16 %v5979
    %v6028 = vunpack.c.l.b16 %v5980
    %v6029 = vunpack.c.l.b16 %v5981
    %v6030 = vunpack.c.l.b16 %v5982
    %v6031 = vunpack.c.l.b16 %v5983
    %v6032 = vunpack.c.l.b16 %v5984
    %v6033 = vunpack.c.l.b16 %v5985
    %v6034 = vunpack.c.l.b16 %v5986
    %v6035 = vunpack.c.l.b16 %v5987
    %v6036 = vunpack.c.l.b16 %v5988
    %v6037 = vunpack.c.l.b16 %v5989
    %v6038 = vpack.c.b16 %v6015, %v6014
    %v6039 = vpack.c.b16 %v6017, %v6016
    %v6040 = vpack.c.b16 %v6019, %v6018
    %v6041 = vpack.c.b16 %v6021, %v6020
    %v6042 = vpack.c.b16 %v6023, %v6022
    %v6043 = vpack.c.b16 %v6025, %v6024
    %v6044 = vpack.c.b16 %v6027, %v6026
    %v6045 = vpack.c.b16 %v6029, %v6028
    %v6046 = vpack.c.b16 %v6031, %v6030
    %v6047 = vpack.c.b16 %v6033, %v6032
    %v6048 = vpack.c.b16 %v6035, %v6034
    %v6049 = vpack.c.b16 %v6037, %v6036
    %v6063 = vsel %vm5888, %v5965, 0
    %6065 = vmatprep.subr.bf16.mxu0 0
    %6066 = vmatpush1.bf16.msra.mxu0 %v6038
    %6067 = vmatprep.subr.bf16.mxu0 0
    %6068 = vmatpush1.bf16.msra.mxu0 %v6039
    %6069 = vmatprep.subr.bf16.mxu0 0
    %6070 = vmatpush1.bf16.msra.mxu0 %v6040
    %6071 = vmatprep.subr.bf16.mxu0 0
    %6072 = vmatpush1.bf16.msra.mxu0 %v6041
    %6073 = vmatprep.subr.bf16.mxu0 0
    %6074 = vmatpush1.bf16.msra.mxu0 %v6042
    %6075 = vmatprep.subr.bf16.mxu0 0
    %6076 = vmatpush1.bf16.msra.mxu0 %v6043
    %6077 = vmatprep.subr.bf16.mxu0 0
    %6078 = vmatpush1.bf16.msra.mxu0 %v6044
    %6079 = vmatprep.subr.bf16.mxu0 0
    %6080 = vmatpush1.bf16.msra.mxu0 %v6045
    %6081 = vmatprep.subr.bf16.mxu0 0
    %6082 = vmatpush1.bf16.msra.mxu0 %v6046
    %6083 = vmatprep.subr.bf16.mxu0 0
    %6084 = vmatpush1.bf16.msra.mxu0 %v6047
    %6085 = vmatprep.subr.bf16.mxu0 0
    %6086 = vmatpush1.bf16.msra.mxu0 %v6048
    %6087 = vmatprep.subr.bf16.mxu0 0
    %6088 = vmatpush1.bf16.msra.mxu0 %v6049
    %6089 = vmatprep.subr.bf16.mxu0 0
    %6090 = vmatpush1.bf16.msra.mxu0 0
    %6091 = vmatprep.subr.bf16.mxu0 0
    %6092 = vmatpush1.bf16.msra.mxu0 0
    %6093 = vmatprep.subr.bf16.mxu0 0
    %6094 = vmatpush1.bf16.msra.mxu0 0
    %6095 = vmatprep.subr.bf16.mxu0 0
    %6096 = vmatpush1.bf16.msra.mxu0 0
    %6097 = vmatprep.mubr.bf16.mxu0 %v6063
    %6098 = vmatmul.mubr.bf16.gmra.mrb[0].mxu0 %v5964
    %v6099 = vpop.f32.mrb[0].mxu0
    %v6100 = vadd.f32 0.0, %v6099
    %v6101 = vpop.f32.mrb[0].mxu0
    %v6102 = vpop.f32.mrb[0].mxu0
    %v6103 = vpop.f32.mrb[0].mxu0
    %6104 = vdwg.mxu0
    %6105 = vst.msk [vmem:[#allocation12] sm:$0xff] %vm5888, %v6100
    %v6106 = vld [vmem:[#allocation12] ss:$4 sm:$0x3]
    %s6107 = scalar_lea.vmem [#allocation12], 1
    %v6108 = vld [vmem:[%s6107] ss:$4 sm:$0x3]
    %v6109 = vmax.f32 %v6106, %v6108
    %s6110 = scalar_lea.vmem [#allocation12], 2
    %v6111 = vld [vmem:[%s6110] ss:$4 sm:$0x3]
    %s6112 = scalar_lea.vmem [#allocation12], 3
    %v6113 = vld [vmem:[%s6112] ss:$4 sm:$0x3]
    %v6114 = vmax.f32 %v6111, %v6113
    %v6115 = vmax.f32 %v6109, %v6114
    %v6116 = vld [vmem:[%s8] sm:$0x1]
    %v6118 = vlaneseq
    %v6119 = vshrl.u32 %v6118, 7
    %v6120 = vsub.s32 0, %v6119
    %v6121 = vrot.slane %v6116, %v6120
    %v6123 = vadd.f32 %v6115, %v6121
    %v6124 = vmax.f32 %v6123, 0.0
    %v6125 = vld [vmem:[%s9] sm:$0xff]
    %v6126 = vld [vmem:[%s9 + $0x8] sm:$0xff]
    %v6127 = vld [vmem:[%s9 + $0x10] sm:$0xff]
    %v6128 = vld [vmem:[%s9 + $0x18] sm:$0xff]
    %v6129 = vld [vmem:[%s9 + $0x20] sm:$0xff]
    %v6130 = vld [vmem:[%s9 + $0x28] sm:$0xff]
    %v6131 = vld [vmem:[%s9 + $0x30] sm:$0xff]
    %v6132 = vld [vmem:[%s9 + $0x38] sm:$0xff]
    %v6133 = vld [vmem:[%s10] sm:$0x1]
    %v6135 = vlaneseq
    %v6136 = vshrl.u32 %v6135, 7
    %v6137 = vsub.s32 0, %v6136
    %v6138 = vrot.slane %v6133, %v6137
    %v6141 = vsel %vm5888, %v6124, 0
    %6143 = vmatprep.subr.mxu0 0.0
    %6144 = vmatpush1.msra.mxu0 %v6125
    %6145 = vmatprep.subr.mxu0 0.0
    %6146 = vmatpush1.msra.mxu0 %v6126
    %6147 = vmatprep.subr.mxu0 0.0
    %6148 = vmatpush1.msra.mxu0 %v6127
    %6149 = vmatprep.subr.mxu0 0.0
    %6150 = vmatpush1.msra.mxu0 %v6128
    %6151 = vmatprep.subr.mxu0 0.0
    %6152 = vmatpush1.msra.mxu0 %v6129
    %6153 = vmatprep.subr.mxu0 0.0
    %6154 = vmatpush1.msra.mxu0 %v6130
    %6155 = vmatprep.subr.mxu0 0.0
    %6156 = vmatpush1.msra.mxu0 %v6131
    %6157 = vmatprep.subr.mxu0 0.0
    %6158 = vmatpush1.msra.mxu0 %v6132
    %6159 = vmatprep.subr.mxu0 0.0
    %6160 = vmatpush1.msra.mxu0 0.0
    %6161 = vmatprep.subr.mxu0 0.0
    %6162 = vmatpush1.msra.mxu0 0.0
    %6163 = vmatprep.subr.mxu0 0.0
    %6164 = vmatpush1.msra.mxu0 0.0
    %6165 = vmatprep.subr.mxu0 0.0
    %6166 = vmatpush1.msra.mxu0 0.0
    %6167 = vmatprep.subr.mxu0 0.0
    %6168 = vmatpush1.msra.mxu0 0.0
    %6169 = vmatprep.subr.mxu0 0.0
    %6170 = vmatpush1.msra.mxu0 0.0
    %6171 = vmatprep.subr.mxu0 0.0
    %6172 = vmatpush1.msra.mxu0 0.0
    %6173 = vmatprep.subr.mxu0 0.0
    %6174 = vmatpush1.msra.mxu0 0.0
    %6175 = vmatprep.subr.mxu0 0.0
    %6176 = vmatpush1.msra.mxu0 0.0
    %6177 = vmatprep.subr.mxu0 0.0
    %6178 = vmatpush1.msra.mxu0 0.0
    %6179 = vmatprep.subr.mxu0 0.0
    %6180 = vmatpush1.msra.mxu0 0.0
    %6181 = vmatprep.subr.mxu0 0.0
    %6182 = vmatpush1.msra.mxu0 0.0
    %6183 = vmatprep.subr.mxu0 0.0
    %6184 = vmatpush1.msra.mxu0 0.0
    %6185 = vmatprep.subr.mxu0 0.0
    %6186 = vmatpush1.msra.mxu0 0.0
    %6187 = vmatprep.subr.mxu0 0.0
    %6188 = vmatpush1.msra.mxu0 0.0
    %6189 = vmatprep.subr.mxu0 0.0
    %6190 = vmatpush1.msra.mxu0 0.0
    %6191 = vmatprep.subr.mxu0 0.0
    %6192 = vmatpush1.msra.mxu0 0.0
    %6193 = vmatprep.subr.mxu0 0.0
    %6194 = vmatpush1.msra.mxu0 0.0
    %6195 = vmatprep.subr.mxu0 0.0
    %6196 = vmatpush1.msra.mxu0 0.0
    %6197 = vmatprep.subr.mxu0 0.0
    %6198 = vmatpush1.msra.mxu0 0.0
    %6199 = vmatprep.subr.mxu0 0.0
    %6200 = vmatpush1.msra.mxu0 0.0
    %6201 = vmatprep.subr.mxu0 0.0
    %6202 = vmatpush1.msra.mxu0 0.0
    %6203 = vmatprep.subr.mxu0 0.0
    %6204 = vmatpush1.msra.mxu0 0.0
    %6205 = vmatprep.subr.mxu0 0.0
    %6206 = vmatpush1.msra.mxu0 0.0
    %6207 = vmatprep.mubr.f32.mxu0 0.0
    %6208 = vmatmul.mubr.f32.gmra.mrb[0].mxu0 %v6141
    %v6209 = vpop.f32.mrb[0].mxu0
    %v6210 = vadd.f32 %v6138, %v6209
    %v6211 = vpop.f32.mrb[0].mxu0
    %6212 = vdwg.mxu0
    %vm6213 = vcmask 1041408
    %v6214 = vsel %vm6213, %v6210, -inf
    %6215 = vmax.xlane.f32.xlu0 %v6214
    %v6216 = vpop.xlane.xlu0 %6215
    %v6217 = vsub.f32 %v6210, %v6216
    %v6218 = vmul.f32 %v6217, 1.442695
    %v6219 = vpow.pop %v6218
    %v6220 = vsel %vm6213, %v6219, 0.0
    %6221 = vadd.xlane.f32.xlu0 %v6220
    %v6222 = vpop.xlane.xlu0 %6221
    %v6223 = vlog2.pop %v6222
    %v6224 = vmul.f32 %v6223, 0.6931472
    %v6225 = vsub.f32 %v6217, %v6224
    %6226 = vst [vmem:[#allocation13] sm:$0x3] %v6225
    // Predicated region
    $region46: #{m5_forward.1} parent=1 // pred_check
      _
    $region47: #{m5_forward.1} parent=1 // pred_check_branch
      %6228 = sbr.rel (0) target = $region49
    $region48: #{m5_forward.1} parent=1 // pred_region
      %s6230 = ssub.s32 32, 32
      %6231 = vsyncadd [#allocation14], %s6230
      %s6233 = sshll.u32 [#allocation13], 4
      %s6234 = int_to_ptr.vmem [resolvable:$true] %s6233
      %6236 = dma.vmem_to_hbm [thread:$0]  %s6234, 32, %s11, [#allocation14]
    $region49: #{m5_forward.1} parent=1 // pred_fallthru
      _
    // Predicated region
    $region50: #{m5_forward.1} parent=1 // pred_check
      _
    $region51: #{m5_forward.1} parent=1 // pred_check_branch
      %6238 = sbr.rel (0) target = $region53
    $region52: #{m5_forward.1} parent=1 // pred_region
      %6239 = dma.done [#allocation14], 32
    $region53: #{m5_forward.1} parent=1 // pred_fallthru
      _
    %6240 = vsyncpa [#allocation14], 1

</llo_original>
